<compile_context>
chip_gen: v7x
topology: tpu7x:2x2x1
jax: 0.10.0
libtpu: 0.0.40
codegen_flags: <defaults>
</compile_context>

<pallas_src>
import jax
import jax.numpy as jnp
from jax.experimental import pallas as pl
from jax.experimental.pallas import tpu as pltpu


# Set to jnp.bfloat16 to halve the HBM->VMEM DMA of the big fc weights (the T-Net
# fc stack then carries ~bf16 error; the correctness tolerance below auto-loosens).
MATMUL_DTYPE = jnp.float32


# ----------------------------------------------------------------------------- #
# small in-kernel helpers
# ----------------------------------------------------------------------------- #
def _dot(a, w):
    """MXU matmul with f32 accumulation (activation cast to the weight dtype)."""
    return jnp.dot(a.astype(w.dtype), w, preferred_element_type=jnp.float32)


def _matmul_small_k(x, w):
    """(M, K) @ (K, N) for tiny K (K = point_dim = 3) via VPU broadcast-FMAs."""
    acc = x[:, 0:1] * w[0:1, :]
    for i in range(1, x.shape[1]):
        acc = acc + x[:, i:i + 1] * w[i:i + 1, :]
    return acc


# ----------------------------------------------------------------------------- #
# the single fused Pallas kernel
# ----------------------------------------------------------------------------- #
def fused_pointnet_kernel(
    # ---- inputs ----
    x_ref,                                                    # (B*N, D)
    ti_w1_ref, ti_b1_ref,                                     # input T-Net conv_1
    ti_w2_ref, ti_b2_ref,                                     # input T-Net conv_2
    ti_wf1_ref, ti_bf1_ref,                                   # input T-Net fc_1
    fold1_w_ref, fold1_b_ref,                                 # fc_2 (+I) folded with conv_1
    c1_b_ref,                                                 # backbone conv_1 bias
    c2_w_ref, c2_b_ref,                                       # backbone conv_2
    tf_w1_ref, tf_b1_ref,                                     # feature T-Net conv_1
    tf_w2_ref, tf_b2_ref,                                     # feature T-Net conv_2
    tf_wf1_hbm, tf_bf1_ref,                                   # feature T-Net fc_1 (W in HBM)
    tf_wf2_hbm, tf_bf2_ref,                                   # feature T-Net fc_2 (W in HBM, +I in bias)
    c3_w_ref, c3_b_ref,                                       # backbone conv_3
    c4_w_ref, c4_b_ref,                                       # backbone conv_4
    # ---- outputs ----
    gfeat_ref,                                                # (B, 128)   global feature
    tfeat_ref,                                                # (B, 64, 64) feature transform
    # ---- scratch ----
    wf1_vmem, wf2_vmem, dma_sem,
):
    m, d = x_ref.shape
    bsz = gfeat_ref.shape[0]
    n = m // bsz

    # Kick off the DMA of the two big, late-use fc weights so the multi-MiB transfer
    # overlaps all of the conv / T-Net compute below (and is single-buffered).
    cp_wf1 = pltpu.make_async_copy(tf_wf1_hbm, wf1_vmem, dma_sem.at[0])
    cp_wf2 = pltpu.make_async_copy(tf_wf2_hbm, wf2_vmem, dma_sem.at[1])
    cp_wf1.start()
    cp_wf2.start()

    x = x_ref[...]                                                          # (M, D)

    # -------- input T-Net: conv_1 -> conv_2 -> max-pool -> fc_1 ----------------
    h = jnp.maximum(_matmul_small_k(x, ti_w1_ref[...]) + ti_b1_ref[...], 0.0)   # (M, 64)
    h = jnp.maximum(_dot(h, ti_w2_ref[...]) + ti_b2_ref[...], 0.0)              # (M, 512)
    pooled1 = jnp.max(h.reshape(bsz, n, 512), axis=1)                           # (B, 512)
    g1 = jnp.maximum(_dot(pooled1, ti_wf1_ref[...]) + ti_bf1_ref[...], 0.0)     # (B, 256)

    # Folded per-batch conv_1 weight: wm1[b, i*64+c] == (T_in[b] @ W1_conv1)[i, c]
    # (fc_2, its bias, the "+I" and the bmm are all absorbed into fold1_w / fold1_b)
    wm1 = _dot(g1, fold1_w_ref[...]) + fold1_b_ref[...]                         # (B, D*64)

    # -------- backbone conv_1 (bmm folded, K=D -> VPU FMAs, fully batched) + conv_2
    x3 = x.reshape(bsz, n, d)                                                   # (B, N, D)
    acc = x3[:, :, 0:1] * wm1[:, 0:64].reshape(bsz, 1, 64)
    for k in range(1, d):
        acc = acc + x3[:, :, k:k + 1] * wm1[:, k * 64:(k + 1) * 64].reshape(bsz, 1, 64)
    h1 = jnp.maximum(acc + c1_b_ref[...], 0.0).reshape(m, 64)                   # (M, 64)
    f = jnp.maximum(_dot(h1, c2_w_ref[...]) + c2_b_ref[...], 0.0)               # (M, 64) local feats

    # -------- feature T-Net (on the VMEM-resident local features) ---------------
    t = jnp.maximum(_dot(f, tf_w1_ref[...]) + tf_b1_ref[...], 0.0)              # (M, 64)
    t = jnp.maximum(_dot(t, tf_w2_ref[...]) + tf_b2_ref[...], 0.0)              # (M, 512)
    pooled2 = jnp.max(t.reshape(bsz, n, 512), axis=1)                           # (B, 512)

    cp_wf1.wait()
    g2 = jnp.maximum(_dot(pooled2, wf1_vmem[...]) + tf_bf1_ref[...], 0.0)       # (B, 256)
    cp_wf2.wait()
    t_flat = _dot(g2, wf2_vmem[...]) + tf_bf2_ref[...]                          # (B, 4096), "+I" folded

    # Write the feature-transform output; the row stores double as the explicit
    # (1,4096) -> (64,64) relayout needed for the folded conv_3 matmul below.
    for b in range(bsz):
        for i in range(64):
            tfeat_ref[b, i:i + 1, :] = t_flat[b:b + 1, i * 64:(i + 1) * 64]

    # -------- backbone conv_3 (bmm folded) + conv_4 + max-pool ------------------
    c3_b = c3_b_ref[...]
    c4_w = c4_w_ref[...]
    c4_b = c4_b_ref[...]
    for b in range(bsz):
        wm3 = _dot(tfeat_ref[b], c3_w_ref[...])                                 # T_feat[b] @ W3
        fb = f[b * n:(b + 1) * n, :]                                            # (N, 64)
        h3 = jnp.maximum(_dot(fb, wm3) + c3_b, 0.0)                             # (N, 64)
        h4 = jnp.maximum(_dot(h3, c4_w) + c4_b, 0.0)                            # (N, 128)
        gfeat_ref[b:b + 1, :] = jnp.max(h4, axis=0, keepdims=True)              # lane-dense store


# ----------------------------------------------------------------------------- #
# pallas_call plumbing
# ----------------------------------------------------------------------------- #
def _full_block(shape):
    zeros = (0,) * len(shape)
    return pl.BlockSpec(shape, lambda i, _z=zeros: _z)


def base_pointnet_forward(x, p):
    """x: (B, N, D) points -> (global_feature (B, 128), feature_transform (B, 64, 64))."""
    B, N, D = x.shape
    f32 = jnp.float32
    x_flat = x.reshape(B * N, D)

    args = (
        x_flat,
        p["ti_w1"], p["ti_b1"], p["ti_w2"], p["ti_b2"], p["ti_wf1"], p["ti_bf1"],
        p["fold1_w"], p["fold1_b"],
        p["c1_b"], p["c2_w"], p["c2_b"],
        p["tf_w1"], p["tf_b1"], p["tf_w2"], p["tf_b2"],
        p["tf_wf1"], p["tf_bf1"], p["tf_wf2"], p["tf_bf2"],
        p["c3_w"], p["c3_b"], p["c4_w"], p["c4_b"],
    )
    # tf_wf1 (512x256) and tf_wf2 (256x4096) stay in HBM and are prefetched in-kernel.
    any_idx = {16, 18}
    in_specs = [
        pl.BlockSpec(memory_space=pl.ANY) if i in any_idx else _full_block(a.shape)
        for i, a in enumerate(args)
    ]

    gfeat, tfeat = pl.pallas_call(
        fused_pointnet_kernel,
        out_shape=(jax.ShapeDtypeStruct((B, 128), f32),
                   jax.ShapeDtypeStruct((B, 64, 64), f32)),
        grid=(1,),
        in_specs=in_specs,
        out_specs=(_full_block((B, 128)), _full_block((B, 64, 64))),
        scratch_shapes=[
            pltpu.VMEM(p["tf_wf1"].shape, p["tf_wf1"].dtype),
            pltpu.VMEM(p["tf_wf2"].shape, p["tf_wf2"].dtype),
            pltpu.SemaphoreType.DMA((2,)),
        ],
        compiler_params=pltpu.CompilerParams(
            dimension_semantics=("arbitrary",),
            vmem_limit_bytes=32 * 1024 * 1024,   # avoid v5e's 16 MiB scoped default
        ),
    )(*args)
    return gfeat, tfeat


# ----------------------------------------------------------------------------- #
# Parameter construction (deterministic, synthetic; BN folded in inference mode)
# ----------------------------------------------------------------------------- #
def _fold_bn(W, b, gamma, beta, mean, var, eps=1e-5):
    s = gamma / jnp.sqrt(var + eps)
    W_eff = W * s[None, :]
    b_eff = b * s + beta - mean * s
    return W_eff.astype(jnp.float32), b_eff.reshape(1, -1).astype(jnp.float32)


def make_conv_bn(key, cin, cout):
    k1, k2, k3, k4, k5, k6 = jax.random.split(key, 6)
    W = 0.10 * jax.random.normal(k1, (cin, cout), jnp.float32)
    b = 0.05 * jax.random.normal(k2, (cout,), jnp.float32)
    gamma = 1.0 + 0.10 * jax.random.normal(k3, (cout,), jnp.float32)
    beta = 0.05 * jax.random.normal(k4, (cout,), jnp.float32)
    mean = 0.05 * jax.random.normal(k5, (cout,), jnp.float32)
    var = 1.0 + 0.20 * jax.random.uniform(k6, (cout,), jnp.float32)
    return _fold_bn(W, b, gamma, beta, mean, var)


def make_linear(key, cin, cout):
    k1, k2 = jax.random.split(key)
    W = 0.05 * jax.random.normal(k1, (cin, cout), jnp.float32)
    b = 0.05 * jax.random.normal(k2, (cout,), jnp.float32)
    return W, b.reshape(1, -1)


def make_tnet_params(key, input_dim, output_dim):
    k1, k2, k3, k4 = jax.random.split(key, 4)
    w1, b1 = make_conv_bn(k1, input_dim, 64)                    # conv_1 + bn_1
    w2, b2 = make_conv_bn(k2, 64, 512)                          # conv_2 + bn_2
    wf1, bf1 = make_conv_bn(k3, 512, 256)                       # fc_1 + bn_3
    wf2, bf2 = make_linear(k4, 256, output_dim * output_dim)    # fc_2 (no BN)
    return (w1, b1, w2, b2, wf1, bf1, wf2, bf2)


def make_base_pointnet_params(key, point_dimension):
    ks = jax.random.split(key, 6)
    return {
        "tnet_in": make_tnet_params(ks[0], point_dimension, point_dimension),
        "tnet_feat": make_tnet_params(ks[1], 64, 64),
        "conv1": make_conv_bn(ks[2], point_dimension, 64),
        "conv2": make_conv_bn(ks[3], 64, 64),
        "conv3": make_conv_bn(ks[4], 64, 64),
        "conv4": make_conv_bn(ks[5], 64, 128),
    }


def prepare_fused_params(raw, point_dim):
    """One-time static folds (done at parameter-build time, never per forward call):
       input-T-Net fc_2 + "+I" + bmm folded into conv_1, "+I" folded into the feature
       T-Net fc_2 bias, and the large matmul weights pre-cast to MATMUL_DTYPE."""
    D = point_dim
    ti_w1, ti_b1, ti_w2, ti_b2, ti_wf1, ti_bf1, ti_wf2, ti_bf2 = raw["tnet_in"]
    tf_w1, tf_b1, tf_w2, tf_b2, tf_wf1, tf_bf1, tf_wf2, tf_bf2 = raw["tnet_feat"]
    c1_w, c1_b = raw["conv1"]
    c2_w, c2_b = raw["conv2"]
    c3_w, c3_b = raw["conv3"]
    c4_w, c4_b = raw["conv4"]

    # rowmajor(T_in[b] @ W1_conv1) == g1[b] @ fold1_w + fold1_b
    fold1_w = jnp.einsum("pde,ec->pdc",
                         ti_wf2.reshape(256, D, D), c1_w).reshape(256, D * 64)
    fold1_b = ((ti_bf2.reshape(D, D) + jnp.eye(D, dtype=jnp.float32)) @ c1_w
               ).reshape(1, D * 64)
    # fold the "+ identity" of the feature T-Net into its fc_2 bias
    tf_bf2_id = tf_bf2 + jnp.eye(64, dtype=jnp.float32).reshape(1, 64 * 64)

    big = lambda w: w.astype(MATMUL_DTYPE)   # pre-cast (no in-kernel astype of weight DMAs)
    return {
        "ti_w1": ti_w1, "ti_b1": ti_b1,
        "ti_w2": big(ti_w2), "ti_b2": ti_b2,
        "ti_wf1": big(ti_wf1), "ti_bf1": ti_bf1,
        "fold1_w": fold1_w, "fold1_b": fold1_b,
        "c1_b": c1_b, "c2_w": c2_w, "c2_b": c2_b,
        "tf_w1": tf_w1, "tf_b1": tf_b1,
        "tf_w2": big(tf_w2), "tf_b2": tf_b2,
        "tf_wf1": big(tf_wf1), "tf_bf1": tf_bf1,
        "tf_wf2": big(tf_wf2), "tf_bf2": tf_bf2_id,
        "c3_w": c3_w, "c3_b": c3_b, "c4_w": c4_w, "c4_b": c4_b,
    }


# ----------------------------------------------------------------------------- #
# Pure-JAX reference (unfused, mirrors the PyTorch forward with folded BN)
# ----------------------------------------------------------------------------- #
def _tnet_ref(x, p, out_dim):
    w1, b1, w2, b2, wf1, bf1, wf2, bf2 = p
    h = jnp.maximum(x @ w1 + b1, 0.0)
    h = jnp.maximum(h @ w2 + b2, 0.0)
    v = jnp.max(h, axis=1)                                       # MaxPool1d(num_points)
    g = jnp.maximum(v @ wf1 + bf1, 0.0)
    t = g @ wf2 + bf2
    return t.reshape(-1, out_dim, out_dim) + jnp.eye(out_dim, dtype=jnp.float32)


def base_pointnet_reference(x, raw):
    t_in = _tnet_ref(x, raw["tnet_in"], x.shape[-1])
    h = jnp.einsum("bnd,bde->bne", x, t_in)
    w, b = raw["conv1"]; h = jnp.maximum(h @ w + b, 0.0)
    w, b = raw["conv2"]; f = jnp.maximum(h @ w + b, 0.0)
    t_feat = _tnet_ref(f, raw["tnet_feat"], 64)
    h = jnp.einsum("bnd,bde->bne", f, t_feat)
    w, b = raw["conv3"]; h = jnp.maximum(h @ w + b, 0.0)
    w, b = raw["conv4"]; h = jnp.maximum(h @ w + b, 0.0)
    return jnp.max(h, axis=1), t_feat


# ----------------------------------------------------------------------------- #
# main
# ----------------------------------------------------------------------------- #
if __name__ == "__main__":
    key = jax.random.PRNGKey(0)
    k_param, k_data = jax.random.split(key)

    B, N, D = 2, 64, 3          # batch, num_points, point_dimension (B*N = 128 MXU rows)
    raw = make_base_pointnet_params(k_param, D)
    params = prepare_fused_params(raw, D)
    x = jax.random.normal(k_data, (B, N, D), jnp.float32)

    fwd = jax.jit(base_pointnet_forward)
    global_feat, feature_transform = fwd(x, params)
    jax.block_until_ready(global_feat)
    jax.block_until_ready(feature_transform)

    assert global_feat.shape == (B, 128)
    assert feature_transform.shape == (B, 64, 64)
    assert bool(jnp.all(jnp.isfinite(global_feat)))
    assert bool(jnp.all(jnp.isfinite(feature_transform)))

    # correctness vs. unfused pure-JAX reference
    g_ref, t_ref = base_pointnet_reference(x, raw)
    if MATMUL_DTYPE == jnp.float32:
        rtol, atol = 1e-3, 5e-4
    else:  # bf16 weights
        rtol, atol = 5e-2, 5e-2
    assert bool(jnp.allclose(global_feat, g_ref, rtol=rtol, atol=atol)), "global feature mismatch"
    assert bool(jnp.allclose(feature_transform, t_ref, rtol=rtol, atol=atol)), "feature transform mismatch"

    print("KERNEL_OK")
</pallas_src>

<mosaic_0001>
module attributes {stable_mosaic.version = 11 : i64} {
  func.func @fused_pointnet_kernel(%arg0: i32, %arg1: memref<128x3xf32, #tpu.memory_space<vmem>>, %arg2: memref<3x64xf32, #tpu.memory_space<vmem>>, %arg3: memref<1x64xf32, #tpu.memory_space<vmem>>, %arg4: memref<64x512xf32, #tpu.memory_space<vmem>>, %arg5: memref<1x512xf32, #tpu.memory_space<vmem>>, %arg6: memref<512x256xf32, #tpu.memory_space<vmem>>, %arg7: memref<1x256xf32, #tpu.memory_space<vmem>>, %arg8: memref<256x192xf32, #tpu.memory_space<vmem>>, %arg9: memref<1x192xf32, #tpu.memory_space<vmem>>, %arg10: memref<1x64xf32, #tpu.memory_space<vmem>>, %arg11: memref<64x64xf32, #tpu.memory_space<vmem>>, %arg12: memref<1x64xf32, #tpu.memory_space<vmem>>, %arg13: memref<64x64xf32, #tpu.memory_space<vmem>>, %arg14: memref<1x64xf32, #tpu.memory_space<vmem>>, %arg15: memref<64x512xf32, #tpu.memory_space<vmem>>, %arg16: memref<1x512xf32, #tpu.memory_space<vmem>>, %arg17: memref<512x256xf32, #tpu.memory_space<any>>, %arg18: memref<1x256xf32, #tpu.memory_space<vmem>>, %arg19: memref<256x4096xf32, #tpu.memory_space<any>>, %arg20: memref<1x4096xf32, #tpu.memory_space<vmem>>, %arg21: memref<64x64xf32, #tpu.memory_space<vmem>>, %arg22: memref<1x64xf32, #tpu.memory_space<vmem>>, %arg23: memref<64x128xf32, #tpu.memory_space<vmem>>, %arg24: memref<1x128xf32, #tpu.memory_space<vmem>>, %arg25: memref<2x128xf32, #tpu.memory_space<vmem>>, %arg26: memref<2x64x64xf32, #tpu.memory_space<vmem>>, %arg27: memref<512x256xf32, #tpu.memory_space<vmem>>, %arg28: memref<256x4096xf32, #tpu.memory_space<vmem>>, %arg29: memref<2x!tpu.dma_semaphore, #tpu.memory_space<semaphore_mem>>) attributes {dimension_semantics = [#tpu.dimension_semantics<arbitrary>], iteration_bounds = array<i64: 1>, scalar_prefetch = 0 : i64, scratch_operands = 3 : i64, tpu.core_type = #tpu.core_type<tc>, window_params = [{pipeline_mode = #tpu.pipeline_mode<synchronous>, transform_indices = @transform_0, window_bounds = array<i64: 128, 3>}, {pipeline_mode = #tpu.pipeline_mode<synchronous>, transform_indices = @transform_1, window_bounds = array<i64: 3, 64>}, {pipeline_mode = #tpu.pipeline_mode<synchronous>, transform_indices = @transform_2, window_bounds = array<i64: 1, 64>}, {pipeline_mode = #tpu.pipeline_mode<synchronous>, transform_indices = @transform_3, window_bounds = array<i64: 64, 512>}, {pipeline_mode = #tpu.pipeline_mode<synchronous>, transform_indices = @transform_4, window_bounds = array<i64: 1, 512>}, {pipeline_mode = #tpu.pipeline_mode<synchronous>, transform_indices = @transform_5, window_bounds = array<i64: 512, 256>}, {pipeline_mode = #tpu.pipeline_mode<synchronous>, transform_indices = @transform_6, window_bounds = array<i64: 1, 256>}, {pipeline_mode = #tpu.pipeline_mode<synchronous>, transform_indices = @transform_7, window_bounds = array<i64: 256, 192>}, {pipeline_mode = #tpu.pipeline_mode<synchronous>, transform_indices = @transform_8, window_bounds = array<i64: 1, 192>}, {pipeline_mode = #tpu.pipeline_mode<synchronous>, transform_indices = @transform_9, window_bounds = array<i64: 1, 64>}, {pipeline_mode = #tpu.pipeline_mode<synchronous>, transform_indices = @transform_10, window_bounds = array<i64: 64, 64>}, {pipeline_mode = #tpu.pipeline_mode<synchronous>, transform_indices = @transform_11, window_bounds = array<i64: 1, 64>}, {pipeline_mode = #tpu.pipeline_mode<synchronous>, transform_indices = @transform_12, window_bounds = array<i64: 64, 64>}, {pipeline_mode = #tpu.pipeline_mode<synchronous>, transform_indices = @transform_13, window_bounds = array<i64: 1, 64>}, {pipeline_mode = #tpu.pipeline_mode<synchronous>, transform_indices = @transform_14, window_bounds = array<i64: 64, 512>}, {pipeline_mode = #tpu.pipeline_mode<synchronous>, transform_indices = @transform_15, window_bounds = array<i64: 1, 512>}, {}, {pipeline_mode = #tpu.pipeline_mode<synchronous>, transform_indices = @transform_17, window_bounds = array<i64: 1, 256>}, {}, {pipeline_mode = #tpu.pipeline_mode<synchronous>, transform_indices = @transform_19, window_bounds = array<i64: 1, 4096>}, {pipeline_mode = #tpu.pipeline_mode<synchronous>, transform_indices = @transform_20, window_bounds = array<i64: 64, 64>}, {pipeline_mode = #tpu.pipeline_mode<synchronous>, transform_indices = @transform_21, window_bounds = array<i64: 1, 64>}, {pipeline_mode = #tpu.pipeline_mode<synchronous>, transform_indices = @transform_22, window_bounds = array<i64: 64, 128>}, {pipeline_mode = #tpu.pipeline_mode<synchronous>, transform_indices = @transform_23, window_bounds = array<i64: 1, 128>}, {pipeline_mode = #tpu.pipeline_mode<synchronous>, transform_indices = @transform_24, window_bounds = array<i64: 2, 128>}, {pipeline_mode = #tpu.pipeline_mode<synchronous>, transform_indices = @transform_25, window_bounds = array<i64: 2, 64, 64>}]} {
    %c0_i32 = arith.constant 0 : i32
    %0 = tpu.memref_slice %arg29[%c0_i32] : memref<2x!tpu.dma_semaphore, #tpu.memory_space<semaphore_mem>> -> memref<1x!tpu.dma_semaphore, #tpu.memory_space<semaphore_mem>>
    %1 = tpu.memref_squeeze %0 : memref<1x!tpu.dma_semaphore, #tpu.memory_space<semaphore_mem>> -> memref<!tpu.dma_semaphore, #tpu.memory_space<semaphore_mem>>
    tpu.enqueue_dma source(%arg17 : memref<512x256xf32, #tpu.memory_space<any>>) target(%arg27 : memref<512x256xf32, #tpu.memory_space<vmem>>) target_semaphore(%1 : memref<!tpu.dma_semaphore, #tpu.memory_space<semaphore_mem>>)
    %c1_i32 = arith.constant 1 : i32
    %2 = tpu.memref_slice %arg29[%c1_i32] : memref<2x!tpu.dma_semaphore, #tpu.memory_space<semaphore_mem>> -> memref<1x!tpu.dma_semaphore, #tpu.memory_space<semaphore_mem>>
    %3 = tpu.memref_squeeze %2 : memref<1x!tpu.dma_semaphore, #tpu.memory_space<semaphore_mem>> -> memref<!tpu.dma_semaphore, #tpu.memory_space<semaphore_mem>>
    tpu.enqueue_dma source(%arg19 : memref<256x4096xf32, #tpu.memory_space<any>>) target(%arg28 : memref<256x4096xf32, #tpu.memory_space<vmem>>) target_semaphore(%3 : memref<!tpu.dma_semaphore, #tpu.memory_space<semaphore_mem>>)
    %c0 = arith.constant 0 : index
    %c0_0 = arith.constant 0 : index
    %4 = vector.load %arg1[%c0, %c0_0] : memref<128x3xf32, #tpu.memory_space<vmem>>, vector<128x3xf32>
    %c0_1 = arith.constant 0 : index
    %c0_2 = arith.constant 0 : index
    %5 = vector.load %arg2[%c0_1, %c0_2] : memref<3x64xf32, #tpu.memory_space<vmem>>, vector<3x64xf32>
    %6 = vector.extract_strided_slice %4 {offsets = [0, 0], sizes = [128, 1], strides = [1, 1]} : vector<128x3xf32> to vector<128x1xf32>
    %7 = vector.extract_strided_slice %5 {offsets = [0, 0], sizes = [1, 64], strides = [1, 1]} : vector<3x64xf32> to vector<1x64xf32>
    %8 = vector.broadcast %6 : vector<128x1xf32> to vector<128x64xf32>
    %9 = vector.broadcast %7 : vector<1x64xf32> to vector<128x64xf32>
    %10 = arith.mulf %8, %9 : vector<128x64xf32>
    %11 = vector.extract_strided_slice %4 {offsets = [0, 1], sizes = [128, 1], strides = [1, 1]} : vector<128x3xf32> to vector<128x1xf32>
    %12 = vector.extract_strided_slice %5 {offsets = [1, 0], sizes = [1, 64], strides = [1, 1]} : vector<3x64xf32> to vector<1x64xf32>
    %13 = vector.broadcast %11 : vector<128x1xf32> to vector<128x64xf32>
    %14 = vector.broadcast %12 : vector<1x64xf32> to vector<128x64xf32>
    %15 = arith.mulf %13, %14 : vector<128x64xf32>
    %16 = arith.addf %10, %15 : vector<128x64xf32>
    %17 = vector.extract_strided_slice %4 {offsets = [0, 2], sizes = [128, 1], strides = [1, 1]} : vector<128x3xf32> to vector<128x1xf32>
    %18 = vector.extract_strided_slice %5 {offsets = [2, 0], sizes = [1, 64], strides = [1, 1]} : vector<3x64xf32> to vector<1x64xf32>
    %19 = vector.broadcast %17 : vector<128x1xf32> to vector<128x64xf32>
    %20 = vector.broadcast %18 : vector<1x64xf32> to vector<128x64xf32>
    %21 = arith.mulf %19, %20 : vector<128x64xf32>
    %22 = arith.addf %16, %21 : vector<128x64xf32>
    %c0_3 = arith.constant 0 : index
    %c0_4 = arith.constant 0 : index
    %23 = vector.load %arg3[%c0_3, %c0_4] : memref<1x64xf32, #tpu.memory_space<vmem>>, vector<1x64xf32>
    %24 = vector.broadcast %23 : vector<1x64xf32> to vector<128x64xf32>
    %25 = arith.addf %22, %24 : vector<128x64xf32>
    %cst = arith.constant 0.000000e+00 : f32
    %26 = vector.broadcast %cst : f32 to vector<128x64xf32>
    %27 = arith.maximumf %25, %26 : vector<128x64xf32>
    %c0_5 = arith.constant 0 : index
    %c0_6 = arith.constant 0 : index
    %28 = vector.load %arg4[%c0_5, %c0_6] : memref<64x512xf32, #tpu.memory_space<vmem>>, vector<64x512xf32>
    %cst_7 = arith.constant dense<0.000000e+00> : vector<128x512xf32>
    %29 = tpu.matmul %27, %28, %cst_7 {dimension_numbers = #tpu.dot_dimension_numbers<[1], [0], [0], [1], [0, 0, 1, 1], [], []>} : vector<128x64xf32>, vector<64x512xf32>, vector<128x512xf32> -> vector<128x512xf32>
    %c0_8 = arith.constant 0 : index
    %c0_9 = arith.constant 0 : index
    %30 = vector.load %arg5[%c0_8, %c0_9] : memref<1x512xf32, #tpu.memory_space<vmem>>, vector<1x512xf32>
    %31 = vector.broadcast %30 : vector<1x512xf32> to vector<128x512xf32>
    %32 = arith.addf %29, %31 : vector<128x512xf32>
    %cst_10 = arith.constant 0.000000e+00 : f32
    %33 = vector.broadcast %cst_10 : f32 to vector<128x512xf32>
    %34 = arith.maximumf %32, %33 : vector<128x512xf32>
    %35 = vector.shape_cast %34 : vector<128x512xf32> to vector<2x64x512xf32>
    %cst_11 = arith.constant dense<0xFF800000> : vector<2x512xf32>
    %36 = vector.multi_reduction <maximumf>, %35, %cst_11 [1] : vector<2x64x512xf32> to vector<2x512xf32>
    %c0_12 = arith.constant 0 : index
    %c0_13 = arith.constant 0 : index
    %37 = vector.load %arg6[%c0_12, %c0_13] : memref<512x256xf32, #tpu.memory_space<vmem>>, vector<512x256xf32>
    %cst_14 = arith.constant dense<0.000000e+00> : vector<2x256xf32>
    %38 = tpu.matmul %36, %37, %cst_14 {dimension_numbers = #tpu.dot_dimension_numbers<[1], [0], [0], [1], [0, 0, 1, 1], [], []>} : vector<2x512xf32>, vector<512x256xf32>, vector<2x256xf32> -> vector<2x256xf32>
    %c0_15 = arith.constant 0 : index
    %c0_16 = arith.constant 0 : index
    %39 = vector.load %arg7[%c0_15, %c0_16] : memref<1x256xf32, #tpu.memory_space<vmem>>, vector<1x256xf32>
    %40 = vector.broadcast %39 : vector<1x256xf32> to vector<2x256xf32>
    %41 = arith.addf %38, %40 : vector<2x256xf32>
    %cst_17 = arith.constant 0.000000e+00 : f32
    %42 = vector.broadcast %cst_17 : f32 to vector<2x256xf32>
    %43 = arith.maximumf %41, %42 : vector<2x256xf32>
    %c0_18 = arith.constant 0 : index
    %c0_19 = arith.constant 0 : index
    %44 = vector.load %arg8[%c0_18, %c0_19] : memref<256x192xf32, #tpu.memory_space<vmem>>, vector<256x192xf32>
    %cst_20 = arith.constant dense<0.000000e+00> : vector<2x192xf32>
    %45 = tpu.matmul %43, %44, %cst_20 {dimension_numbers = #tpu.dot_dimension_numbers<[1], [0], [0], [1], [0, 0, 1, 1], [], []>} : vector<2x256xf32>, vector<256x192xf32>, vector<2x192xf32> -> vector<2x192xf32>
    %c0_21 = arith.constant 0 : index
    %c0_22 = arith.constant 0 : index
    %46 = vector.load %arg9[%c0_21, %c0_22] : memref<1x192xf32, #tpu.memory_space<vmem>>, vector<1x192xf32>
    %47 = vector.broadcast %46 : vector<1x192xf32> to vector<2x192xf32>
    %48 = arith.addf %45, %47 : vector<2x192xf32>
    %49 = vector.shape_cast %4 : vector<128x3xf32> to vector<2x64x3xf32>
    %50 = vector.extract_strided_slice %49 {offsets = [0, 0, 0], sizes = [2, 64, 1], strides = [1, 1, 1]} : vector<2x64x3xf32> to vector<2x64x1xf32>
    %51 = vector.extract_strided_slice %48 {offsets = [0, 0], sizes = [2, 64], strides = [1, 1]} : vector<2x192xf32> to vector<2x64xf32>
    %52 = vector.shape_cast %51 : vector<2x64xf32> to vector<2x1x64xf32>
    %53 = vector.broadcast %50 : vector<2x64x1xf32> to vector<2x64x64xf32>
    %54 = vector.broadcast %52 : vector<2x1x64xf32> to vector<2x64x64xf32>
    %55 = arith.mulf %53, %54 : vector<2x64x64xf32>
    %56 = vector.extract_strided_slice %49 {offsets = [0, 0, 1], sizes = [2, 64, 1], strides = [1, 1, 1]} : vector<2x64x3xf32> to vector<2x64x1xf32>
    %57 = vector.extract_strided_slice %48 {offsets = [0, 64], sizes = [2, 64], strides = [1, 1]} : vector<2x192xf32> to vector<2x64xf32>
    %58 = vector.shape_cast %57 : vector<2x64xf32> to vector<2x1x64xf32>
    %59 = vector.broadcast %56 : vector<2x64x1xf32> to vector<2x64x64xf32>
    %60 = vector.broadcast %58 : vector<2x1x64xf32> to vector<2x64x64xf32>
    %61 = arith.mulf %59, %60 : vector<2x64x64xf32>
    %62 = arith.addf %55, %61 : vector<2x64x64xf32>
    %63 = vector.extract_strided_slice %49 {offsets = [0, 0, 2], sizes = [2, 64, 1], strides = [1, 1, 1]} : vector<2x64x3xf32> to vector<2x64x1xf32>
    %64 = vector.extract_strided_slice %48 {offsets = [0, 128], sizes = [2, 64], strides = [1, 1]} : vector<2x192xf32> to vector<2x64xf32>
    %65 = vector.shape_cast %64 : vector<2x64xf32> to vector<2x1x64xf32>
    %66 = vector.broadcast %63 : vector<2x64x1xf32> to vector<2x64x64xf32>
    %67 = vector.broadcast %65 : vector<2x1x64xf32> to vector<2x64x64xf32>
    %68 = arith.mulf %66, %67 : vector<2x64x64xf32>
    %69 = arith.addf %62, %68 : vector<2x64x64xf32>
    %c0_23 = arith.constant 0 : index
    %c0_24 = arith.constant 0 : index
    %70 = vector.load %arg10[%c0_23, %c0_24] : memref<1x64xf32, #tpu.memory_space<vmem>>, vector<1x64xf32>
    %71 = vector.shape_cast %70 : vector<1x64xf32> to vector<1x1x64xf32>
    %72 = vector.broadcast %71 : vector<1x1x64xf32> to vector<2x64x64xf32>
    %73 = arith.addf %69, %72 : vector<2x64x64xf32>
    %cst_25 = arith.constant 0.000000e+00 : f32
    %74 = vector.broadcast %cst_25 : f32 to vector<2x64x64xf32>
    %75 = arith.maximumf %73, %74 : vector<2x64x64xf32>
    %76 = vector.shape_cast %75 : vector<2x64x64xf32> to vector<128x64xf32>
    %c0_26 = arith.constant 0 : index
    %c0_27 = arith.constant 0 : index
    %77 = vector.load %arg11[%c0_26, %c0_27] : memref<64x64xf32, #tpu.memory_space<vmem>>, vector<64x64xf32>
    %cst_28 = arith.constant dense<0.000000e+00> : vector<128x64xf32>
    %78 = tpu.matmul %76, %77, %cst_28 {dimension_numbers = #tpu.dot_dimension_numbers<[1], [0], [0], [1], [0, 0, 1, 1], [], []>} : vector<128x64xf32>, vector<64x64xf32>, vector<128x64xf32> -> vector<128x64xf32>
    %c0_29 = arith.constant 0 : index
    %c0_30 = arith.constant 0 : index
    %79 = vector.load %arg12[%c0_29, %c0_30] : memref<1x64xf32, #tpu.memory_space<vmem>>, vector<1x64xf32>
    %80 = vector.broadcast %79 : vector<1x64xf32> to vector<128x64xf32>
    %81 = arith.addf %78, %80 : vector<128x64xf32>
    %cst_31 = arith.constant 0.000000e+00 : f32
    %82 = vector.broadcast %cst_31 : f32 to vector<128x64xf32>
    %83 = arith.maximumf %81, %82 : vector<128x64xf32>
    %c0_32 = arith.constant 0 : index
    %c0_33 = arith.constant 0 : index
    %84 = vector.load %arg13[%c0_32, %c0_33] : memref<64x64xf32, #tpu.memory_space<vmem>>, vector<64x64xf32>
    %cst_34 = arith.constant dense<0.000000e+00> : vector<128x64xf32>
    %85 = tpu.matmul %83, %84, %cst_34 {dimension_numbers = #tpu.dot_dimension_numbers<[1], [0], [0], [1], [0, 0, 1, 1], [], []>} : vector<128x64xf32>, vector<64x64xf32>, vector<128x64xf32> -> vector<128x64xf32>
    %c0_35 = arith.constant 0 : index
    %c0_36 = arith.constant 0 : index
    %86 = vector.load %arg14[%c0_35, %c0_36] : memref<1x64xf32, #tpu.memory_space<vmem>>, vector<1x64xf32>
    %87 = vector.broadcast %86 : vector<1x64xf32> to vector<128x64xf32>
    %88 = arith.addf %85, %87 : vector<128x64xf32>
    %cst_37 = arith.constant 0.000000e+00 : f32
    %89 = vector.broadcast %cst_37 : f32 to vector<128x64xf32>
    %90 = arith.maximumf %88, %89 : vector<128x64xf32>
    %c0_38 = arith.constant 0 : index
    %c0_39 = arith.constant 0 : index
    %91 = vector.load %arg15[%c0_38, %c0_39] : memref<64x512xf32, #tpu.memory_space<vmem>>, vector<64x512xf32>
    %cst_40 = arith.constant dense<0.000000e+00> : vector<128x512xf32>
    %92 = tpu.matmul %90, %91, %cst_40 {dimension_numbers = #tpu.dot_dimension_numbers<[1], [0], [0], [1], [0, 0, 1, 1], [], []>} : vector<128x64xf32>, vector<64x512xf32>, vector<128x512xf32> -> vector<128x512xf32>
    %c0_41 = arith.constant 0 : index
    %c0_42 = arith.constant 0 : index
    %93 = vector.load %arg16[%c0_41, %c0_42] : memref<1x512xf32, #tpu.memory_space<vmem>>, vector<1x512xf32>
    %94 = vector.broadcast %93 : vector<1x512xf32> to vector<128x512xf32>
    %95 = arith.addf %92, %94 : vector<128x512xf32>
    %cst_43 = arith.constant 0.000000e+00 : f32
    %96 = vector.broadcast %cst_43 : f32 to vector<128x512xf32>
    %97 = arith.maximumf %95, %96 : vector<128x512xf32>
    %98 = vector.shape_cast %97 : vector<128x512xf32> to vector<2x64x512xf32>
    %cst_44 = arith.constant dense<0xFF800000> : vector<2x512xf32>
    %99 = vector.multi_reduction <maximumf>, %98, %cst_44 [1] : vector<2x64x512xf32> to vector<2x512xf32>
    %c0_i32_45 = arith.constant 0 : i32
    %100 = tpu.memref_slice %arg29[%c0_i32_45] : memref<2x!tpu.dma_semaphore, #tpu.memory_space<semaphore_mem>> -> memref<1x!tpu.dma_semaphore, #tpu.memory_space<semaphore_mem>>
    %101 = tpu.memref_squeeze %100 : memref<1x!tpu.dma_semaphore, #tpu.memory_space<semaphore_mem>> -> memref<!tpu.dma_semaphore, #tpu.memory_space<semaphore_mem>>
    tpu.wait_dma2 semaphore(%101 : memref<!tpu.dma_semaphore, #tpu.memory_space<semaphore_mem>>) src(%arg17 : memref<512x256xf32, #tpu.memory_space<any>>) dst(%arg27 : memref<512x256xf32, #tpu.memory_space<vmem>>)
    %c0_46 = arith.constant 0 : index
    %c0_47 = arith.constant 0 : index
    %102 = vector.load %arg27[%c0_46, %c0_47] : memref<512x256xf32, #tpu.memory_space<vmem>>, vector<512x256xf32>
    %cst_48 = arith.constant dense<0.000000e+00> : vector<2x256xf32>
    %103 = tpu.matmul %99, %102, %cst_48 {dimension_numbers = #tpu.dot_dimension_numbers<[1], [0], [0], [1], [0, 0, 1, 1], [], []>} : vector<2x512xf32>, vector<512x256xf32>, vector<2x256xf32> -> vector<2x256xf32>
    %c0_49 = arith.constant 0 : index
    %c0_50 = arith.constant 0 : index
    %104 = vector.load %arg18[%c0_49, %c0_50] : memref<1x256xf32, #tpu.memory_space<vmem>>, vector<1x256xf32>
    %105 = vector.broadcast %104 : vector<1x256xf32> to vector<2x256xf32>
    %106 = arith.addf %103, %105 : vector<2x256xf32>
    %cst_51 = arith.constant 0.000000e+00 : f32
    %107 = vector.broadcast %cst_51 : f32 to vector<2x256xf32>
    %108 = arith.maximumf %106, %107 : vector<2x256xf32>
    %c1_i32_52 = arith.constant 1 : i32
    %109 = tpu.memref_slice %arg29[%c1_i32_52] : memref<2x!tpu.dma_semaphore, #tpu.memory_space<semaphore_mem>> -> memref<1x!tpu.dma_semaphore, #tpu.memory_space<semaphore_mem>>
    %110 = tpu.memref_squeeze %109 : memref<1x!tpu.dma_semaphore, #tpu.memory_space<semaphore_mem>> -> memref<!tpu.dma_semaphore, #tpu.memory_space<semaphore_mem>>
    tpu.wait_dma2 semaphore(%110 : memref<!tpu.dma_semaphore, #tpu.memory_space<semaphore_mem>>) src(%arg19 : memref<256x4096xf32, #tpu.memory_space<any>>) dst(%arg28 : memref<256x4096xf32, #tpu.memory_space<vmem>>)
    %c0_53 = arith.constant 0 : index
    %c0_54 = arith.constant 0 : index
    %111 = vector.load %arg28[%c0_53, %c0_54] : memref<256x4096xf32, #tpu.memory_space<vmem>>, vector<256x4096xf32>
    %cst_55 = arith.constant dense<0.000000e+00> : vector<2x4096xf32>
    %112 = tpu.matmul %108, %111, %cst_55 {dimension_numbers = #tpu.dot_dimension_numbers<[1], [0], [0], [1], [0, 0, 1, 1], [], []>} : vector<2x256xf32>, vector<256x4096xf32>, vector<2x4096xf32> -> vector<2x4096xf32>
    %c0_56 = arith.constant 0 : index
    %c0_57 = arith.constant 0 : index
    %113 = vector.load %arg20[%c0_56, %c0_57] : memref<1x4096xf32, #tpu.memory_space<vmem>>, vector<1x4096xf32>
    %114 = vector.broadcast %113 : vector<1x4096xf32> to vector<2x4096xf32>
    %115 = arith.addf %112, %114 : vector<2x4096xf32>
    %116 = vector.extract_strided_slice %115 {offsets = [0, 0], sizes = [1, 64], strides = [1, 1]} : vector<2x4096xf32> to vector<1x64xf32>
    %c0_58 = arith.constant 0 : index
    %c0_59 = arith.constant 0 : index
    %c0_60 = arith.constant 0 : index
    %117 = vector.load %arg26[%c0_58, %c0_59, %c0_60] : memref<2x64x64xf32, #tpu.memory_space<vmem>>, vector<1x1x64xf32>
    %118 = vector.shape_cast %117 : vector<1x1x64xf32> to vector<1x64xf32>
    %119 = vector.shape_cast %116 : vector<1x64xf32> to vector<1x1x64xf32>
    tpu.vector_store %arg26[%c0_58, %c0_59, %c0_60], %119 {strides = array<i32>} : memref<2x64x64xf32, #tpu.memory_space<vmem>>, vector<1x1x64xf32>,
    %120 = vector.extract_strided_slice %115 {offsets = [0, 64], sizes = [1, 64], strides = [1, 1]} : vector<2x4096xf32> to vector<1x64xf32>
    %c0_61 = arith.constant 0 : index
    %c1 = arith.constant 1 : index
    %c0_62 = arith.constant 0 : index
    %121 = vector.load %arg26[%c0_61, %c1, %c0_62] : memref<2x64x64xf32, #tpu.memory_space<vmem>>, vector<1x1x64xf32>
    %122 = vector.shape_cast %121 : vector<1x1x64xf32> to vector<1x64xf32>
    %123 = vector.shape_cast %120 : vector<1x64xf32> to vector<1x1x64xf32>
    tpu.vector_store %arg26[%c0_61, %c1, %c0_62], %123 {strides = array<i32>} : memref<2x64x64xf32, #tpu.memory_space<vmem>>, vector<1x1x64xf32>,
    %124 = vector.extract_strided_slice %115 {offsets = [0, 128], sizes = [1, 64], strides = [1, 1]} : vector<2x4096xf32> to vector<1x64xf32>
    %c0_63 = arith.constant 0 : index
    %c2 = arith.constant 2 : index
    %c0_64 = arith.constant 0 : index
    %125 = vector.load %arg26[%c0_63, %c2, %c0_64] : memref<2x64x64xf32, #tpu.memory_space<vmem>>, vector<1x1x64xf32>
    %126 = vector.shape_cast %125 : vector<1x1x64xf32> to vector<1x64xf32>
    %127 = vector.shape_cast %124 : vector<1x64xf32> to vector<1x1x64xf32>
    tpu.vector_store %arg26[%c0_63, %c2, %c0_64], %127 {strides = array<i32>} : memref<2x64x64xf32, #tpu.memory_space<vmem>>, vector<1x1x64xf32>,
    %128 = vector.extract_strided_slice %115 {offsets = [0, 192], sizes = [1, 64], strides = [1, 1]} : vector<2x4096xf32> to vector<1x64xf32>
    %c0_65 = arith.constant 0 : index
    %c3 = arith.constant 3 : index
    %c0_66 = arith.constant 0 : index
    %129 = vector.load %arg26[%c0_65, %c3, %c0_66] : memref<2x64x64xf32, #tpu.memory_space<vmem>>, vector<1x1x64xf32>
    %130 = vector.shape_cast %129 : vector<1x1x64xf32> to vector<1x64xf32>
    %131 = vector.shape_cast %128 : vector<1x64xf32> to vector<1x1x64xf32>
    tpu.vector_store %arg26[%c0_65, %c3, %c0_66], %131 {strides = array<i32>} : memref<2x64x64xf32, #tpu.memory_space<vmem>>, vector<1x1x64xf32>,
    %132 = vector.extract_strided_slice %115 {offsets = [0, 256], sizes = [1, 64], strides = [1, 1]} : vector<2x4096xf32> to vector<1x64xf32>
    %c0_67 = arith.constant 0 : index
    %c4 = arith.constant 4 : index
    %c0_68 = arith.constant 0 : index
    %133 = vector.load %arg26[%c0_67, %c4, %c0_68] : memref<2x64x64xf32, #tpu.memory_space<vmem>>, vector<1x1x64xf32>
    %134 = vector.shape_cast %133 : vector<1x1x64xf32> to vector<1x64xf32>
    %135 = vector.shape_cast %132 : vector<1x64xf32> to vector<1x1x64xf32>
    tpu.vector_store %arg26[%c0_67, %c4, %c0_68], %135 {strides = array<i32>} : memref<2x64x64xf32, #tpu.memory_space<vmem>>, vector<1x1x64xf32>,
    %136 = vector.extract_strided_slice %115 {offsets = [0, 320], sizes = [1, 64], strides = [1, 1]} : vector<2x4096xf32> to vector<1x64xf32>
    %c0_69 = arith.constant 0 : index
    %c5 = arith.constant 5 : index
    %c0_70 = arith.constant 0 : index
    %137 = vector.load %arg26[%c0_69, %c5, %c0_70] : memref<2x64x64xf32, #tpu.memory_space<vmem>>, vector<1x1x64xf32>
    %138 = vector.shape_cast %137 : vector<1x1x64xf32> to vector<1x64xf32>
    %139 = vector.shape_cast %136 : vector<1x64xf32> to vector<1x1x64xf32>
    tpu.vector_store %arg26[%c0_69, %c5, %c0_70], %139 {strides = array<i32>} : memref<2x64x64xf32, #tpu.memory_space<vmem>>, vector<1x1x64xf32>,
    %140 = vector.extract_strided_slice %115 {offsets = [0, 384], sizes = [1, 64], strides = [1, 1]} : vector<2x4096xf32> to vector<1x64xf32>
    %c0_71 = arith.constant 0 : index
    %c6 = arith.constant 6 : index
    %c0_72 = arith.constant 0 : index
    %141 = vector.load %arg26[%c0_71, %c6, %c0_72] : memref<2x64x64xf32, #tpu.memory_space<vmem>>, vector<1x1x64xf32>
    %142 = vector.shape_cast %141 : vector<1x1x64xf32> to vector<1x64xf32>
    %143 = vector.shape_cast %140 : vector<1x64xf32> to vector<1x1x64xf32>
    tpu.vector_store %arg26[%c0_71, %c6, %c0_72], %143 {strides = array<i32>} : memref<2x64x64xf32, #tpu.memory_space<vmem>>, vector<1x1x64xf32>,
    %144 = vector.extract_strided_slice %115 {offsets = [0, 448], sizes = [1, 64], strides = [1, 1]} : vector<2x4096xf32> to vector<1x64xf32>
    %c0_73 = arith.constant 0 : index
    %c7 = arith.constant 7 : index
    %c0_74 = arith.constant 0 : index
    %145 = vector.load %arg26[%c0_73, %c7, %c0_74] : memref<2x64x64xf32, #tpu.memory_space<vmem>>, vector<1x1x64xf32>
    %146 = vector.shape_cast %145 : vector<1x1x64xf32> to vector<1x64xf32>
    %147 = vector.shape_cast %144 : vector<1x64xf32> to vector<1x1x64xf32>
    tpu.vector_store %arg26[%c0_73, %c7, %c0_74], %147 {strides = array<i32>} : memref<2x64x64xf32, #tpu.memory_space<vmem>>, vector<1x1x64xf32>,
    %148 = vector.extract_strided_slice %115 {offsets = [0, 512], sizes = [1, 64], strides = [1, 1]} : vector<2x4096xf32> to vector<1x64xf32>
    %c0_75 = arith.constant 0 : index
    %c8 = arith.constant 8 : index
    %c0_76 = arith.constant 0 : index
    %149 = vector.load %arg26[%c0_75, %c8, %c0_76] : memref<2x64x64xf32, #tpu.memory_space<vmem>>, vector<1x1x64xf32>
    %150 = vector.shape_cast %149 : vector<1x1x64xf32> to vector<1x64xf32>
    %151 = vector.shape_cast %148 : vector<1x64xf32> to vector<1x1x64xf32>
    tpu.vector_store %arg26[%c0_75, %c8, %c0_76], %151 {strides = array<i32>} : memref<2x64x64xf32, #tpu.memory_space<vmem>>, vector<1x1x64xf32>,
    %152 = vector.extract_strided_slice %115 {offsets = [0, 576], sizes = [1, 64], strides = [1, 1]} : vector<2x4096xf32> to vector<1x64xf32>
    %c0_77 = arith.constant 0 : index
    %c9 = arith.constant 9 : index
    %c0_78 = arith.constant 0 : index
    %153 = vector.load %arg26[%c0_77, %c9, %c0_78] : memref<2x64x64xf32, #tpu.memory_space<vmem>>, vector<1x1x64xf32>
    %154 = vector.shape_cast %153 : vector<1x1x64xf32> to vector<1x64xf32>
    %155 = vector.shape_cast %152 : vector<1x64xf32> to vector<1x1x64xf32>
    tpu.vector_store %arg26[%c0_77, %c9, %c0_78], %155 {strides = array<i32>} : memref<2x64x64xf32, #tpu.memory_space<vmem>>, vector<1x1x64xf32>,
    %156 = vector.extract_strided_slice %115 {offsets = [0, 640], sizes = [1, 64], strides = [1, 1]} : vector<2x4096xf32> to vector<1x64xf32>
    %c0_79 = arith.constant 0 : index
    %c10 = arith.constant 10 : index
    %c0_80 = arith.constant 0 : index
    %157 = vector.load %arg26[%c0_79, %c10, %c0_80] : memref<2x64x64xf32, #tpu.memory_space<vmem>>, vector<1x1x64xf32>
    %158 = vector.shape_cast %157 : vector<1x1x64xf32> to vector<1x64xf32>
    %159 = vector.shape_cast %156 : vector<1x64xf32> to vector<1x1x64xf32>
    tpu.vector_store %arg26[%c0_79, %c10, %c0_80], %159 {strides = array<i32>} : memref<2x64x64xf32, #tpu.memory_space<vmem>>, vector<1x1x64xf32>,
    %160 = vector.extract_strided_slice %115 {offsets = [0, 704], sizes = [1, 64], strides = [1, 1]} : vector<2x4096xf32> to vector<1x64xf32>
    %c0_81 = arith.constant 0 : index
    %c11 = arith.constant 11 : index
    %c0_82 = arith.constant 0 : index
    %161 = vector.load %arg26[%c0_81, %c11, %c0_82] : memref<2x64x64xf32, #tpu.memory_space<vmem>>, vector<1x1x64xf32>
    %162 = vector.shape_cast %161 : vector<1x1x64xf32> to vector<1x64xf32>
    %163 = vector.shape_cast %160 : vector<1x64xf32> to vector<1x1x64xf32>
    tpu.vector_store %arg26[%c0_81, %c11, %c0_82], %163 {strides = array<i32>} : memref<2x64x64xf32, #tpu.memory_space<vmem>>, vector<1x1x64xf32>,
    %164 = vector.extract_strided_slice %115 {offsets = [0, 768], sizes = [1, 64], strides = [1, 1]} : vector<2x4096xf32> to vector<1x64xf32>
    %c0_83 = arith.constant 0 : index
    %c12 = arith.constant 12 : index
    %c0_84 = arith.constant 0 : index
    %165 = vector.load %arg26[%c0_83, %c12, %c0_84] : memref<2x64x64xf32, #tpu.memory_space<vmem>>, vector<1x1x64xf32>
    %166 = vector.shape_cast %165 : vector<1x1x64xf32> to vector<1x64xf32>
    %167 = vector.shape_cast %164 : vector<1x64xf32> to vector<1x1x64xf32>
    tpu.vector_store %arg26[%c0_83, %c12, %c0_84], %167 {strides = array<i32>} : memref<2x64x64xf32, #tpu.memory_space<vmem>>, vector<1x1x64xf32>,
    %168 = vector.extract_strided_slice %115 {offsets = [0, 832], sizes = [1, 64], strides = [1, 1]} : vector<2x4096xf32> to vector<1x64xf32>
    %c0_85 = arith.constant 0 : index
    %c13 = arith.constant 13 : index
    %c0_86 = arith.constant 0 : index
    %169 = vector.load %arg26[%c0_85, %c13, %c0_86] : memref<2x64x64xf32, #tpu.memory_space<vmem>>, vector<1x1x64xf32>
    %170 = vector.shape_cast %169 : vector<1x1x64xf32> to vector<1x64xf32>
    %171 = vector.shape_cast %168 : vector<1x64xf32> to vector<1x1x64xf32>
    tpu.vector_store %arg26[%c0_85, %c13, %c0_86], %171 {strides = array<i32>} : memref<2x64x64xf32, #tpu.memory_space<vmem>>, vector<1x1x64xf32>,
    %172 = vector.extract_strided_slice %115 {offsets = [0, 896], sizes = [1, 64], strides = [1, 1]} : vector<2x4096xf32> to vector<1x64xf32>
    %c0_87 = arith.constant 0 : index
    %c14 = arith.constant 14 : index
    %c0_88 = arith.constant 0 : index
    %173 = vector.load %arg26[%c0_87, %c14, %c0_88] : memref<2x64x64xf32, #tpu.memory_space<vmem>>, vector<1x1x64xf32>
    %174 = vector.shape_cast %173 : vector<1x1x64xf32> to vector<1x64xf32>
    %175 = vector.shape_cast %172 : vector<1x64xf32> to vector<1x1x64xf32>
    tpu.vector_store %arg26[%c0_87, %c14, %c0_88], %175 {strides = array<i32>} : memref<2x64x64xf32, #tpu.memory_space<vmem>>, vector<1x1x64xf32>,
    %176 = vector.extract_strided_slice %115 {offsets = [0, 960], sizes = [1, 64], strides = [1, 1]} : vector<2x4096xf32> to vector<1x64xf32>
    %c0_89 = arith.constant 0 : index
    %c15 = arith.constant 15 : index
    %c0_90 = arith.constant 0 : index
    %177 = vector.load %arg26[%c0_89, %c15, %c0_90] : memref<2x64x64xf32, #tpu.memory_space<vmem>>, vector<1x1x64xf32>
    %178 = vector.shape_cast %177 : vector<1x1x64xf32> to vector<1x64xf32>
    %179 = vector.shape_cast %176 : vector<1x64xf32> to vector<1x1x64xf32>
    tpu.vector_store %arg26[%c0_89, %c15, %c0_90], %179 {strides = array<i32>} : memref<2x64x64xf32, #tpu.memory_space<vmem>>, vector<1x1x64xf32>,
    %180 = vector.extract_strided_slice %115 {offsets = [0, 1024], sizes = [1, 64], strides = [1, 1]} : vector<2x4096xf32> to vector<1x64xf32>
    %c0_91 = arith.constant 0 : index
    %c16 = arith.constant 16 : index
    %c0_92 = arith.constant 0 : index
    %181 = vector.load %arg26[%c0_91, %c16, %c0_92] : memref<2x64x64xf32, #tpu.memory_space<vmem>>, vector<1x1x64xf32>
    %182 = vector.shape_cast %181 : vector<1x1x64xf32> to vector<1x64xf32>
    %183 = vector.shape_cast %180 : vector<1x64xf32> to vector<1x1x64xf32>
    tpu.vector_store %arg26[%c0_91, %c16, %c0_92], %183 {strides = array<i32>} : memref<2x64x64xf32, #tpu.memory_space<vmem>>, vector<1x1x64xf32>,
    %184 = vector.extract_strided_slice %115 {offsets = [0, 1088], sizes = [1, 64], strides = [1, 1]} : vector<2x4096xf32> to vector<1x64xf32>
    %c0_93 = arith.constant 0 : index
    %c17 = arith.constant 17 : index
    %c0_94 = arith.constant 0 : index
    %185 = vector.load %arg26[%c0_93, %c17, %c0_94] : memref<2x64x64xf32, #tpu.memory_space<vmem>>, vector<1x1x64xf32>
    %186 = vector.shape_cast %185 : vector<1x1x64xf32> to vector<1x64xf32>
    %187 = vector.shape_cast %184 : vector<1x64xf32> to vector<1x1x64xf32>
    tpu.vector_store %arg26[%c0_93, %c17, %c0_94], %187 {strides = array<i32>} : memref<2x64x64xf32, #tpu.memory_space<vmem>>, vector<1x1x64xf32>,
    %188 = vector.extract_strided_slice %115 {offsets = [0, 1152], sizes = [1, 64], strides = [1, 1]} : vector<2x4096xf32> to vector<1x64xf32>
    %c0_95 = arith.constant 0 : index
    %c18 = arith.constant 18 : index
    %c0_96 = arith.constant 0 : index
    %189 = vector.load %arg26[%c0_95, %c18, %c0_96] : memref<2x64x64xf32, #tpu.memory_space<vmem>>, vector<1x1x64xf32>
    %190 = vector.shape_cast %189 : vector<1x1x64xf32> to vector<1x64xf32>
    %191 = vector.shape_cast %188 : vector<1x64xf32> to vector<1x1x64xf32>
    tpu.vector_store %arg26[%c0_95, %c18, %c0_96], %191 {strides = array<i32>} : memref<2x64x64xf32, #tpu.memory_space<vmem>>, vector<1x1x64xf32>,
    %192 = vector.extract_strided_slice %115 {offsets = [0, 1216], sizes = [1, 64], strides = [1, 1]} : vector<2x4096xf32> to vector<1x64xf32>
    %c0_97 = arith.constant 0 : index
    %c19 = arith.constant 19 : index
    %c0_98 = arith.constant 0 : index
    %193 = vector.load %arg26[%c0_97, %c19, %c0_98] : memref<2x64x64xf32, #tpu.memory_space<vmem>>, vector<1x1x64xf32>
    %194 = vector.shape_cast %193 : vector<1x1x64xf32> to vector<1x64xf32>
    %195 = vector.shape_cast %192 : vector<1x64xf32> to vector<1x1x64xf32>
    tpu.vector_store %arg26[%c0_97, %c19, %c0_98], %195 {strides = array<i32>} : memref<2x64x64xf32, #tpu.memory_space<vmem>>, vector<1x1x64xf32>,
    %196 = vector.extract_strided_slice %115 {offsets = [0, 1280], sizes = [1, 64], strides = [1, 1]} : vector<2x4096xf32> to vector<1x64xf32>
    %c0_99 = arith.constant 0 : index
    %c20 = arith.constant 20 : index
    %c0_100 = arith.constant 0 : index
    %197 = vector.load %arg26[%c0_99, %c20, %c0_100] : memref<2x64x64xf32, #tpu.memory_space<vmem>>, vector<1x1x64xf32>
    %198 = vector.shape_cast %197 : vector<1x1x64xf32> to vector<1x64xf32>
    %199 = vector.shape_cast %196 : vector<1x64xf32> to vector<1x1x64xf32>
    tpu.vector_store %arg26[%c0_99, %c20, %c0_100], %199 {strides = array<i32>} : memref<2x64x64xf32, #tpu.memory_space<vmem>>, vector<1x1x64xf32>,
    %200 = vector.extract_strided_slice %115 {offsets = [0, 1344], sizes = [1, 64], strides = [1, 1]} : vector<2x4096xf32> to vector<1x64xf32>
    %c0_101 = arith.constant 0 : index
    %c21 = arith.constant 21 : index
    %c0_102 = arith.constant 0 : index
    %201 = vector.load %arg26[%c0_101, %c21, %c0_102] : memref<2x64x64xf32, #tpu.memory_space<vmem>>, vector<1x1x64xf32>
    %202 = vector.shape_cast %201 : vector<1x1x64xf32> to vector<1x64xf32>
    %203 = vector.shape_cast %200 : vector<1x64xf32> to vector<1x1x64xf32>
    tpu.vector_store %arg26[%c0_101, %c21, %c0_102], %203 {strides = array<i32>} : memref<2x64x64xf32, #tpu.memory_space<vmem>>, vector<1x1x64xf32>,
    %204 = vector.extract_strided_slice %115 {offsets = [0, 1408], sizes = [1, 64], strides = [1, 1]} : vector<2x4096xf32> to vector<1x64xf32>
    %c0_103 = arith.constant 0 : index
    %c22 = arith.constant 22 : index
    %c0_104 = arith.constant 0 : index
    %205 = vector.load %arg26[%c0_103, %c22, %c0_104] : memref<2x64x64xf32, #tpu.memory_space<vmem>>, vector<1x1x64xf32>
    %206 = vector.shape_cast %205 : vector<1x1x64xf32> to vector<1x64xf32>
    %207 = vector.shape_cast %204 : vector<1x64xf32> to vector<1x1x64xf32>
    tpu.vector_store %arg26[%c0_103, %c22, %c0_104], %207 {strides = array<i32>} : memref<2x64x64xf32, #tpu.memory_space<vmem>>, vector<1x1x64xf32>,
    %208 = vector.extract_strided_slice %115 {offsets = [0, 1472], sizes = [1, 64], strides = [1, 1]} : vector<2x4096xf32> to vector<1x64xf32>
    %c0_105 = arith.constant 0 : index
    %c23 = arith.constant 23 : index
    %c0_106 = arith.constant 0 : index
    %209 = vector.load %arg26[%c0_105, %c23, %c0_106] : memref<2x64x64xf32, #tpu.memory_space<vmem>>, vector<1x1x64xf32>
    %210 = vector.shape_cast %209 : vector<1x1x64xf32> to vector<1x64xf32>
    %211 = vector.shape_cast %208 : vector<1x64xf32> to vector<1x1x64xf32>
    tpu.vector_store %arg26[%c0_105, %c23, %c0_106], %211 {strides = array<i32>} : memref<2x64x64xf32, #tpu.memory_space<vmem>>, vector<1x1x64xf32>,
    %212 = vector.extract_strided_slice %115 {offsets = [0, 1536], sizes = [1, 64], strides = [1, 1]} : vector<2x4096xf32> to vector<1x64xf32>
    %c0_107 = arith.constant 0 : index
    %c24 = arith.constant 24 : index
    %c0_108 = arith.constant 0 : index
    %213 = vector.load %arg26[%c0_107, %c24, %c0_108] : memref<2x64x64xf32, #tpu.memory_space<vmem>>, vector<1x1x64xf32>
    %214 = vector.shape_cast %213 : vector<1x1x64xf32> to vector<1x64xf32>
    %215 = vector.shape_cast %212 : vector<1x64xf32> to vector<1x1x64xf32>
    tpu.vector_store %arg26[%c0_107, %c24, %c0_108], %215 {strides = array<i32>} : memref<2x64x64xf32, #tpu.memory_space<vmem>>, vector<1x1x64xf32>,
    %216 = vector.extract_strided_slice %115 {offsets = [0, 1600], sizes = [1, 64], strides = [1, 1]} : vector<2x4096xf32> to vector<1x64xf32>
    %c0_109 = arith.constant 0 : index
    %c25 = arith.constant 25 : index
    %c0_110 = arith.constant 0 : index
    %217 = vector.load %arg26[%c0_109, %c25, %c0_110] : memref<2x64x64xf32, #tpu.memory_space<vmem>>, vector<1x1x64xf32>
    %218 = vector.shape_cast %217 : vector<1x1x64xf32> to vector<1x64xf32>
    %219 = vector.shape_cast %216 : vector<1x64xf32> to vector<1x1x64xf32>
    tpu.vector_store %arg26[%c0_109, %c25, %c0_110], %219 {strides = array<i32>} : memref<2x64x64xf32, #tpu.memory_space<vmem>>, vector<1x1x64xf32>,
    %220 = vector.extract_strided_slice %115 {offsets = [0, 1664], sizes = [1, 64], strides = [1, 1]} : vector<2x4096xf32> to vector<1x64xf32>
    %c0_111 = arith.constant 0 : index
    %c26 = arith.constant 26 : index
    %c0_112 = arith.constant 0 : index
    %221 = vector.load %arg26[%c0_111, %c26, %c0_112] : memref<2x64x64xf32, #tpu.memory_space<vmem>>, vector<1x1x64xf32>
    %222 = vector.shape_cast %221 : vector<1x1x64xf32> to vector<1x64xf32>
    %223 = vector.shape_cast %220 : vector<1x64xf32> to vector<1x1x64xf32>
    tpu.vector_store %arg26[%c0_111, %c26, %c0_112], %223 {strides = array<i32>} : memref<2x64x64xf32, #tpu.memory_space<vmem>>, vector<1x1x64xf32>,
    %224 = vector.extract_strided_slice %115 {offsets = [0, 1728], sizes = [1, 64], strides = [1, 1]} : vector<2x4096xf32> to vector<1x64xf32>
    %c0_113 = arith.constant 0 : index
    %c27 = arith.constant 27 : index
    %c0_114 = arith.constant 0 : index
    %225 = vector.load %arg26[%c0_113, %c27, %c0_114] : memref<2x64x64xf32, #tpu.memory_space<vmem>>, vector<1x1x64xf32>
    %226 = vector.shape_cast %225 : vector<1x1x64xf32> to vector<1x64xf32>
    %227 = vector.shape_cast %224 : vector<1x64xf32> to vector<1x1x64xf32>
    tpu.vector_store %arg26[%c0_113, %c27, %c0_114], %227 {strides = array<i32>} : memref<2x64x64xf32, #tpu.memory_space<vmem>>, vector<1x1x64xf32>,
    %228 = vector.extract_strided_slice %115 {offsets = [0, 1792], sizes = [1, 64], strides = [1, 1]} : vector<2x4096xf32> to vector<1x64xf32>
    %c0_115 = arith.constant 0 : index
    %c28 = arith.constant 28 : index
    %c0_116 = arith.constant 0 : index
    %229 = vector.load %arg26[%c0_115, %c28, %c0_116] : memref<2x64x64xf32, #tpu.memory_space<vmem>>, vector<1x1x64xf32>
    %230 = vector.shape_cast %229 : vector<1x1x64xf32> to vector<1x64xf32>
    %231 = vector.shape_cast %228 : vector<1x64xf32> to vector<1x1x64xf32>
    tpu.vector_store %arg26[%c0_115, %c28, %c0_116], %231 {strides = array<i32>} : memref<2x64x64xf32, #tpu.memory_space<vmem>>, vector<1x1x64xf32>,
    %232 = vector.extract_strided_slice %115 {offsets = [0, 1856], sizes = [1, 64], strides = [1, 1]} : vector<2x4096xf32> to vector<1x64xf32>
    %c0_117 = arith.constant 0 : index
    %c29 = arith.constant 29 : index
    %c0_118 = arith.constant 0 : index
    %233 = vector.load %arg26[%c0_117, %c29, %c0_118] : memref<2x64x64xf32, #tpu.memory_space<vmem>>, vector<1x1x64xf32>
    %234 = vector.shape_cast %233 : vector<1x1x64xf32> to vector<1x64xf32>
    %235 = vector.shape_cast %232 : vector<1x64xf32> to vector<1x1x64xf32>
    tpu.vector_store %arg26[%c0_117, %c29, %c0_118], %235 {strides = array<i32>} : memref<2x64x64xf32, #tpu.memory_space<vmem>>, vector<1x1x64xf32>,
    %236 = vector.extract_strided_slice %115 {offsets = [0, 1920], sizes = [1, 64], strides = [1, 1]} : vector<2x4096xf32> to vector<1x64xf32>
    %c0_119 = arith.constant 0 : index
    %c30 = arith.constant 30 : index
    %c0_120 = arith.constant 0 : index
    %237 = vector.load %arg26[%c0_119, %c30, %c0_120] : memref<2x64x64xf32, #tpu.memory_space<vmem>>, vector<1x1x64xf32>
    %238 = vector.shape_cast %237 : vector<1x1x64xf32> to vector<1x64xf32>
    %239 = vector.shape_cast %236 : vector<1x64xf32> to vector<1x1x64xf32>
    tpu.vector_store %arg26[%c0_119, %c30, %c0_120], %239 {strides = array<i32>} : memref<2x64x64xf32, #tpu.memory_space<vmem>>, vector<1x1x64xf32>,
    %240 = vector.extract_strided_slice %115 {offsets = [0, 1984], sizes = [1, 64], strides = [1, 1]} : vector<2x4096xf32> to vector<1x64xf32>
    %c0_121 = arith.constant 0 : index
    %c31 = arith.constant 31 : index
    %c0_122 = arith.constant 0 : index
    %241 = vector.load %arg26[%c0_121, %c31, %c0_122] : memref<2x64x64xf32, #tpu.memory_space<vmem>>, vector<1x1x64xf32>
    %242 = vector.shape_cast %241 : vector<1x1x64xf32> to vector<1x64xf32>
    %243 = vector.shape_cast %240 : vector<1x64xf32> to vector<1x1x64xf32>
    tpu.vector_store %arg26[%c0_121, %c31, %c0_122], %243 {strides = array<i32>} : memref<2x64x64xf32, #tpu.memory_space<vmem>>, vector<1x1x64xf32>,
    %244 = vector.extract_strided_slice %115 {offsets = [0, 2048], sizes = [1, 64], strides = [1, 1]} : vector<2x4096xf32> to vector<1x64xf32>
    %c0_123 = arith.constant 0 : index
    %c32 = arith.constant 32 : index
    %c0_124 = arith.constant 0 : index
    %245 = vector.load %arg26[%c0_123, %c32, %c0_124] : memref<2x64x64xf32, #tpu.memory_space<vmem>>, vector<1x1x64xf32>
    %246 = vector.shape_cast %245 : vector<1x1x64xf32> to vector<1x64xf32>
    %247 = vector.shape_cast %244 : vector<1x64xf32> to vector<1x1x64xf32>
    tpu.vector_store %arg26[%c0_123, %c32, %c0_124], %247 {strides = array<i32>} : memref<2x64x64xf32, #tpu.memory_space<vmem>>, vector<1x1x64xf32>,
    %248 = vector.extract_strided_slice %115 {offsets = [0, 2112], sizes = [1, 64], strides = [1, 1]} : vector<2x4096xf32> to vector<1x64xf32>
    %c0_125 = arith.constant 0 : index
    %c33 = arith.constant 33 : index
    %c0_126 = arith.constant 0 : index
    %249 = vector.load %arg26[%c0_125, %c33, %c0_126] : memref<2x64x64xf32, #tpu.memory_space<vmem>>, vector<1x1x64xf32>
    %250 = vector.shape_cast %249 : vector<1x1x64xf32> to vector<1x64xf32>
    %251 = vector.shape_cast %248 : vector<1x64xf32> to vector<1x1x64xf32>
    tpu.vector_store %arg26[%c0_125, %c33, %c0_126], %251 {strides = array<i32>} : memref<2x64x64xf32, #tpu.memory_space<vmem>>, vector<1x1x64xf32>,
    %252 = vector.extract_strided_slice %115 {offsets = [0, 2176], sizes = [1, 64], strides = [1, 1]} : vector<2x4096xf32> to vector<1x64xf32>
    %c0_127 = arith.constant 0 : index
    %c34 = arith.constant 34 : index
    %c0_128 = arith.constant 0 : index
    %253 = vector.load %arg26[%c0_127, %c34, %c0_128] : memref<2x64x64xf32, #tpu.memory_space<vmem>>, vector<1x1x64xf32>
    %254 = vector.shape_cast %253 : vector<1x1x64xf32> to vector<1x64xf32>
    %255 = vector.shape_cast %252 : vector<1x64xf32> to vector<1x1x64xf32>
    tpu.vector_store %arg26[%c0_127, %c34, %c0_128], %255 {strides = array<i32>} : memref<2x64x64xf32, #tpu.memory_space<vmem>>, vector<1x1x64xf32>,
    %256 = vector.extract_strided_slice %115 {offsets = [0, 2240], sizes = [1, 64], strides = [1, 1]} : vector<2x4096xf32> to vector<1x64xf32>
    %c0_129 = arith.constant 0 : index
    %c35 = arith.constant 35 : index
    %c0_130 = arith.constant 0 : index
    %257 = vector.load %arg26[%c0_129, %c35, %c0_130] : memref<2x64x64xf32, #tpu.memory_space<vmem>>, vector<1x1x64xf32>
    %258 = vector.shape_cast %257 : vector<1x1x64xf32> to vector<1x64xf32>
    %259 = vector.shape_cast %256 : vector<1x64xf32> to vector<1x1x64xf32>
    tpu.vector_store %arg26[%c0_129, %c35, %c0_130], %259 {strides = array<i32>} : memref<2x64x64xf32, #tpu.memory_space<vmem>>, vector<1x1x64xf32>,
    %260 = vector.extract_strided_slice %115 {offsets = [0, 2304], sizes = [1, 64], strides = [1, 1]} : vector<2x4096xf32> to vector<1x64xf32>
    %c0_131 = arith.constant 0 : index
    %c36 = arith.constant 36 : index
    %c0_132 = arith.constant 0 : index
    %261 = vector.load %arg26[%c0_131, %c36, %c0_132] : memref<2x64x64xf32, #tpu.memory_space<vmem>>, vector<1x1x64xf32>
    %262 = vector.shape_cast %261 : vector<1x1x64xf32> to vector<1x64xf32>
    %263 = vector.shape_cast %260 : vector<1x64xf32> to vector<1x1x64xf32>
    tpu.vector_store %arg26[%c0_131, %c36, %c0_132], %263 {strides = array<i32>} : memref<2x64x64xf32, #tpu.memory_space<vmem>>, vector<1x1x64xf32>,
    %264 = vector.extract_strided_slice %115 {offsets = [0, 2368], sizes = [1, 64], strides = [1, 1]} : vector<2x4096xf32> to vector<1x64xf32>
    %c0_133 = arith.constant 0 : index
    %c37 = arith.constant 37 : index
    %c0_134 = arith.constant 0 : index
    %265 = vector.load %arg26[%c0_133, %c37, %c0_134] : memref<2x64x64xf32, #tpu.memory_space<vmem>>, vector<1x1x64xf32>
    %266 = vector.shape_cast %265 : vector<1x1x64xf32> to vector<1x64xf32>
    %267 = vector.shape_cast %264 : vector<1x64xf32> to vector<1x1x64xf32>
    tpu.vector_store %arg26[%c0_133, %c37, %c0_134], %267 {strides = array<i32>} : memref<2x64x64xf32, #tpu.memory_space<vmem>>, vector<1x1x64xf32>,
    %268 = vector.extract_strided_slice %115 {offsets = [0, 2432], sizes = [1, 64], strides = [1, 1]} : vector<2x4096xf32> to vector<1x64xf32>
    %c0_135 = arith.constant 0 : index
    %c38 = arith.constant 38 : index
    %c0_136 = arith.constant 0 : index
    %269 = vector.load %arg26[%c0_135, %c38, %c0_136] : memref<2x64x64xf32, #tpu.memory_space<vmem>>, vector<1x1x64xf32>
    %270 = vector.shape_cast %269 : vector<1x1x64xf32> to vector<1x64xf32>
    %271 = vector.shape_cast %268 : vector<1x64xf32> to vector<1x1x64xf32>
    tpu.vector_store %arg26[%c0_135, %c38, %c0_136], %271 {strides = array<i32>} : memref<2x64x64xf32, #tpu.memory_space<vmem>>, vector<1x1x64xf32>,
    %272 = vector.extract_strided_slice %115 {offsets = [0, 2496], sizes = [1, 64], strides = [1, 1]} : vector<2x4096xf32> to vector<1x64xf32>
    %c0_137 = arith.constant 0 : index
    %c39 = arith.constant 39 : index
    %c0_138 = arith.constant 0 : index
    %273 = vector.load %arg26[%c0_137, %c39, %c0_138] : memref<2x64x64xf32, #tpu.memory_space<vmem>>, vector<1x1x64xf32>
    %274 = vector.shape_cast %273 : vector<1x1x64xf32> to vector<1x64xf32>
    %275 = vector.shape_cast %272 : vector<1x64xf32> to vector<1x1x64xf32>
    tpu.vector_store %arg26[%c0_137, %c39, %c0_138], %275 {strides = array<i32>} : memref<2x64x64xf32, #tpu.memory_space<vmem>>, vector<1x1x64xf32>,
    %276 = vector.extract_strided_slice %115 {offsets = [0, 2560], sizes = [1, 64], strides = [1, 1]} : vector<2x4096xf32> to vector<1x64xf32>
    %c0_139 = arith.constant 0 : index
    %c40 = arith.constant 40 : index
    %c0_140 = arith.constant 0 : index
    %277 = vector.load %arg26[%c0_139, %c40, %c0_140] : memref<2x64x64xf32, #tpu.memory_space<vmem>>, vector<1x1x64xf32>
    %278 = vector.shape_cast %277 : vector<1x1x64xf32> to vector<1x64xf32>
    %279 = vector.shape_cast %276 : vector<1x64xf32> to vector<1x1x64xf32>
    tpu.vector_store %arg26[%c0_139, %c40, %c0_140], %279 {strides = array<i32>} : memref<2x64x64xf32, #tpu.memory_space<vmem>>, vector<1x1x64xf32>,
    %280 = vector.extract_strided_slice %115 {offsets = [0, 2624], sizes = [1, 64], strides = [1, 1]} : vector<2x4096xf32> to vector<1x64xf32>
    %c0_141 = arith.constant 0 : index
    %c41 = arith.constant 41 : index
    %c0_142 = arith.constant 0 : index
    %281 = vector.load %arg26[%c0_141, %c41, %c0_142] : memref<2x64x64xf32, #tpu.memory_space<vmem>>, vector<1x1x64xf32>
    %282 = vector.shape_cast %281 : vector<1x1x64xf32> to vector<1x64xf32>
    %283 = vector.shape_cast %280 : vector<1x64xf32> to vector<1x1x64xf32>
    tpu.vector_store %arg26[%c0_141, %c41, %c0_142], %283 {strides = array<i32>} : memref<2x64x64xf32, #tpu.memory_space<vmem>>, vector<1x1x64xf32>,
    %284 = vector.extract_strided_slice %115 {offsets = [0, 2688], sizes = [1, 64], strides = [1, 1]} : vector<2x4096xf32> to vector<1x64xf32>
    %c0_143 = arith.constant 0 : index
    %c42 = arith.constant 42 : index
    %c0_144 = arith.constant 0 : index
    %285 = vector.load %arg26[%c0_143, %c42, %c0_144] : memref<2x64x64xf32, #tpu.memory_space<vmem>>, vector<1x1x64xf32>
    %286 = vector.shape_cast %285 : vector<1x1x64xf32> to vector<1x64xf32>
    %287 = vector.shape_cast %284 : vector<1x64xf32> to vector<1x1x64xf32>
    tpu.vector_store %arg26[%c0_143, %c42, %c0_144], %287 {strides = array<i32>} : memref<2x64x64xf32, #tpu.memory_space<vmem>>, vector<1x1x64xf32>,
    %288 = vector.extract_strided_slice %115 {offsets = [0, 2752], sizes = [1, 64], strides = [1, 1]} : vector<2x4096xf32> to vector<1x64xf32>
    %c0_145 = arith.constant 0 : index
    %c43 = arith.constant 43 : index
    %c0_146 = arith.constant 0 : index
    %289 = vector.load %arg26[%c0_145, %c43, %c0_146] : memref<2x64x64xf32, #tpu.memory_space<vmem>>, vector<1x1x64xf32>
    %290 = vector.shape_cast %289 : vector<1x1x64xf32> to vector<1x64xf32>
    %291 = vector.shape_cast %288 : vector<1x64xf32> to vector<1x1x64xf32>
    tpu.vector_store %arg26[%c0_145, %c43, %c0_146], %291 {strides = array<i32>} : memref<2x64x64xf32, #tpu.memory_space<vmem>>, vector<1x1x64xf32>,
    %292 = vector.extract_strided_slice %115 {offsets = [0, 2816], sizes = [1, 64], strides = [1, 1]} : vector<2x4096xf32> to vector<1x64xf32>
    %c0_147 = arith.constant 0 : index
    %c44 = arith.constant 44 : index
    %c0_148 = arith.constant 0 : index
    %293 = vector.load %arg26[%c0_147, %c44, %c0_148] : memref<2x64x64xf32, #tpu.memory_space<vmem>>, vector<1x1x64xf32>
    %294 = vector.shape_cast %293 : vector<1x1x64xf32> to vector<1x64xf32>
    %295 = vector.shape_cast %292 : vector<1x64xf32> to vector<1x1x64xf32>
    tpu.vector_store %arg26[%c0_147, %c44, %c0_148], %295 {strides = array<i32>} : memref<2x64x64xf32, #tpu.memory_space<vmem>>, vector<1x1x64xf32>,
    %296 = vector.extract_strided_slice %115 {offsets = [0, 2880], sizes = [1, 64], strides = [1, 1]} : vector<2x4096xf32> to vector<1x64xf32>
    %c0_149 = arith.constant 0 : index
    %c45 = arith.constant 45 : index
    %c0_150 = arith.constant 0 : index
    %297 = vector.load %arg26[%c0_149, %c45, %c0_150] : memref<2x64x64xf32, #tpu.memory_space<vmem>>, vector<1x1x64xf32>
    %298 = vector.shape_cast %297 : vector<1x1x64xf32> to vector<1x64xf32>
    %299 = vector.shape_cast %296 : vector<1x64xf32> to vector<1x1x64xf32>
    tpu.vector_store %arg26[%c0_149, %c45, %c0_150], %299 {strides = array<i32>} : memref<2x64x64xf32, #tpu.memory_space<vmem>>, vector<1x1x64xf32>,
    %300 = vector.extract_strided_slice %115 {offsets = [0, 2944], sizes = [1, 64], strides = [1, 1]} : vector<2x4096xf32> to vector<1x64xf32>
    %c0_151 = arith.constant 0 : index
    %c46 = arith.constant 46 : index
    %c0_152 = arith.constant 0 : index
    %301 = vector.load %arg26[%c0_151, %c46, %c0_152] : memref<2x64x64xf32, #tpu.memory_space<vmem>>, vector<1x1x64xf32>
    %302 = vector.shape_cast %301 : vector<1x1x64xf32> to vector<1x64xf32>
    %303 = vector.shape_cast %300 : vector<1x64xf32> to vector<1x1x64xf32>
    tpu.vector_store %arg26[%c0_151, %c46, %c0_152], %303 {strides = array<i32>} : memref<2x64x64xf32, #tpu.memory_space<vmem>>, vector<1x1x64xf32>,
    %304 = vector.extract_strided_slice %115 {offsets = [0, 3008], sizes = [1, 64], strides = [1, 1]} : vector<2x4096xf32> to vector<1x64xf32>
    %c0_153 = arith.constant 0 : index
    %c47 = arith.constant 47 : index
    %c0_154 = arith.constant 0 : index
    %305 = vector.load %arg26[%c0_153, %c47, %c0_154] : memref<2x64x64xf32, #tpu.memory_space<vmem>>, vector<1x1x64xf32>
    %306 = vector.shape_cast %305 : vector<1x1x64xf32> to vector<1x64xf32>
    %307 = vector.shape_cast %304 : vector<1x64xf32> to vector<1x1x64xf32>
    tpu.vector_store %arg26[%c0_153, %c47, %c0_154], %307 {strides = array<i32>} : memref<2x64x64xf32, #tpu.memory_space<vmem>>, vector<1x1x64xf32>,
    %308 = vector.extract_strided_slice %115 {offsets = [0, 3072], sizes = [1, 64], strides = [1, 1]} : vector<2x4096xf32> to vector<1x64xf32>
    %c0_155 = arith.constant 0 : index
    %c48 = arith.constant 48 : index
    %c0_156 = arith.constant 0 : index
    %309 = vector.load %arg26[%c0_155, %c48, %c0_156] : memref<2x64x64xf32, #tpu.memory_space<vmem>>, vector<1x1x64xf32>
    %310 = vector.shape_cast %309 : vector<1x1x64xf32> to vector<1x64xf32>
    %311 = vector.shape_cast %308 : vector<1x64xf32> to vector<1x1x64xf32>
    tpu.vector_store %arg26[%c0_155, %c48, %c0_156], %311 {strides = array<i32>} : memref<2x64x64xf32, #tpu.memory_space<vmem>>, vector<1x1x64xf32>,
    %312 = vector.extract_strided_slice %115 {offsets = [0, 3136], sizes = [1, 64], strides = [1, 1]} : vector<2x4096xf32> to vector<1x64xf32>
    %c0_157 = arith.constant 0 : index
    %c49 = arith.constant 49 : index
    %c0_158 = arith.constant 0 : index
    %313 = vector.load %arg26[%c0_157, %c49, %c0_158] : memref<2x64x64xf32, #tpu.memory_space<vmem>>, vector<1x1x64xf32>
    %314 = vector.shape_cast %313 : vector<1x1x64xf32> to vector<1x64xf32>
    %315 = vector.shape_cast %312 : vector<1x64xf32> to vector<1x1x64xf32>
    tpu.vector_store %arg26[%c0_157, %c49, %c0_158], %315 {strides = array<i32>} : memref<2x64x64xf32, #tpu.memory_space<vmem>>, vector<1x1x64xf32>,
    %316 = vector.extract_strided_slice %115 {offsets = [0, 3200], sizes = [1, 64], strides = [1, 1]} : vector<2x4096xf32> to vector<1x64xf32>
    %c0_159 = arith.constant 0 : index
    %c50 = arith.constant 50 : index
    %c0_160 = arith.constant 0 : index
    %317 = vector.load %arg26[%c0_159, %c50, %c0_160] : memref<2x64x64xf32, #tpu.memory_space<vmem>>, vector<1x1x64xf32>
    %318 = vector.shape_cast %317 : vector<1x1x64xf32> to vector<1x64xf32>
    %319 = vector.shape_cast %316 : vector<1x64xf32> to vector<1x1x64xf32>
    tpu.vector_store %arg26[%c0_159, %c50, %c0_160], %319 {strides = array<i32>} : memref<2x64x64xf32, #tpu.memory_space<vmem>>, vector<1x1x64xf32>,
    %320 = vector.extract_strided_slice %115 {offsets = [0, 3264], sizes = [1, 64], strides = [1, 1]} : vector<2x4096xf32> to vector<1x64xf32>
    %c0_161 = arith.constant 0 : index
    %c51 = arith.constant 51 : index
    %c0_162 = arith.constant 0 : index
    %321 = vector.load %arg26[%c0_161, %c51, %c0_162] : memref<2x64x64xf32, #tpu.memory_space<vmem>>, vector<1x1x64xf32>
    %322 = vector.shape_cast %321 : vector<1x1x64xf32> to vector<1x64xf32>
    %323 = vector.shape_cast %320 : vector<1x64xf32> to vector<1x1x64xf32>
    tpu.vector_store %arg26[%c0_161, %c51, %c0_162], %323 {strides = array<i32>} : memref<2x64x64xf32, #tpu.memory_space<vmem>>, vector<1x1x64xf32>,
    %324 = vector.extract_strided_slice %115 {offsets = [0, 3328], sizes = [1, 64], strides = [1, 1]} : vector<2x4096xf32> to vector<1x64xf32>
    %c0_163 = arith.constant 0 : index
    %c52 = arith.constant 52 : index
    %c0_164 = arith.constant 0 : index
    %325 = vector.load %arg26[%c0_163, %c52, %c0_164] : memref<2x64x64xf32, #tpu.memory_space<vmem>>, vector<1x1x64xf32>
    %326 = vector.shape_cast %325 : vector<1x1x64xf32> to vector<1x64xf32>
    %327 = vector.shape_cast %324 : vector<1x64xf32> to vector<1x1x64xf32>
    tpu.vector_store %arg26[%c0_163, %c52, %c0_164], %327 {strides = array<i32>} : memref<2x64x64xf32, #tpu.memory_space<vmem>>, vector<1x1x64xf32>,
    %328 = vector.extract_strided_slice %115 {offsets = [0, 3392], sizes = [1, 64], strides = [1, 1]} : vector<2x4096xf32> to vector<1x64xf32>
    %c0_165 = arith.constant 0 : index
    %c53 = arith.constant 53 : index
    %c0_166 = arith.constant 0 : index
    %329 = vector.load %arg26[%c0_165, %c53, %c0_166] : memref<2x64x64xf32, #tpu.memory_space<vmem>>, vector<1x1x64xf32>
    %330 = vector.shape_cast %329 : vector<1x1x64xf32> to vector<1x64xf32>
    %331 = vector.shape_cast %328 : vector<1x64xf32> to vector<1x1x64xf32>
    tpu.vector_store %arg26[%c0_165, %c53, %c0_166], %331 {strides = array<i32>} : memref<2x64x64xf32, #tpu.memory_space<vmem>>, vector<1x1x64xf32>,
    %332 = vector.extract_strided_slice %115 {offsets = [0, 3456], sizes = [1, 64], strides = [1, 1]} : vector<2x4096xf32> to vector<1x64xf32>
    %c0_167 = arith.constant 0 : index
    %c54 = arith.constant 54 : index
    %c0_168 = arith.constant 0 : index
    %333 = vector.load %arg26[%c0_167, %c54, %c0_168] : memref<2x64x64xf32, #tpu.memory_space<vmem>>, vector<1x1x64xf32>
    %334 = vector.shape_cast %333 : vector<1x1x64xf32> to vector<1x64xf32>
    %335 = vector.shape_cast %332 : vector<1x64xf32> to vector<1x1x64xf32>
    tpu.vector_store %arg26[%c0_167, %c54, %c0_168], %335 {strides = array<i32>} : memref<2x64x64xf32, #tpu.memory_space<vmem>>, vector<1x1x64xf32>,
    %336 = vector.extract_strided_slice %115 {offsets = [0, 3520], sizes = [1, 64], strides = [1, 1]} : vector<2x4096xf32> to vector<1x64xf32>
    %c0_169 = arith.constant 0 : index
    %c55 = arith.constant 55 : index
    %c0_170 = arith.constant 0 : index
    %337 = vector.load %arg26[%c0_169, %c55, %c0_170] : memref<2x64x64xf32, #tpu.memory_space<vmem>>, vector<1x1x64xf32>
    %338 = vector.shape_cast %337 : vector<1x1x64xf32> to vector<1x64xf32>
    %339 = vector.shape_cast %336 : vector<1x64xf32> to vector<1x1x64xf32>
    tpu.vector_store %arg26[%c0_169, %c55, %c0_170], %339 {strides = array<i32>} : memref<2x64x64xf32, #tpu.memory_space<vmem>>, vector<1x1x64xf32>,
    %340 = vector.extract_strided_slice %115 {offsets = [0, 3584], sizes = [1, 64], strides = [1, 1]} : vector<2x4096xf32> to vector<1x64xf32>
    %c0_171 = arith.constant 0 : index
    %c56 = arith.constant 56 : index
    %c0_172 = arith.constant 0 : index
    %341 = vector.load %arg26[%c0_171, %c56, %c0_172] : memref<2x64x64xf32, #tpu.memory_space<vmem>>, vector<1x1x64xf32>
    %342 = vector.shape_cast %341 : vector<1x1x64xf32> to vector<1x64xf32>
    %343 = vector.shape_cast %340 : vector<1x64xf32> to vector<1x1x64xf32>
    tpu.vector_store %arg26[%c0_171, %c56, %c0_172], %343 {strides = array<i32>} : memref<2x64x64xf32, #tpu.memory_space<vmem>>, vector<1x1x64xf32>,
    %344 = vector.extract_strided_slice %115 {offsets = [0, 3648], sizes = [1, 64], strides = [1, 1]} : vector<2x4096xf32> to vector<1x64xf32>
    %c0_173 = arith.constant 0 : index
    %c57 = arith.constant 57 : index
    %c0_174 = arith.constant 0 : index
    %345 = vector.load %arg26[%c0_173, %c57, %c0_174] : memref<2x64x64xf32, #tpu.memory_space<vmem>>, vector<1x1x64xf32>
    %346 = vector.shape_cast %345 : vector<1x1x64xf32> to vector<1x64xf32>
    %347 = vector.shape_cast %344 : vector<1x64xf32> to vector<1x1x64xf32>
    tpu.vector_store %arg26[%c0_173, %c57, %c0_174], %347 {strides = array<i32>} : memref<2x64x64xf32, #tpu.memory_space<vmem>>, vector<1x1x64xf32>,
    %348 = vector.extract_strided_slice %115 {offsets = [0, 3712], sizes = [1, 64], strides = [1, 1]} : vector<2x4096xf32> to vector<1x64xf32>
    %c0_175 = arith.constant 0 : index
    %c58 = arith.constant 58 : index
    %c0_176 = arith.constant 0 : index
    %349 = vector.load %arg26[%c0_175, %c58, %c0_176] : memref<2x64x64xf32, #tpu.memory_space<vmem>>, vector<1x1x64xf32>
    %350 = vector.shape_cast %349 : vector<1x1x64xf32> to vector<1x64xf32>
    %351 = vector.shape_cast %348 : vector<1x64xf32> to vector<1x1x64xf32>
    tpu.vector_store %arg26[%c0_175, %c58, %c0_176], %351 {strides = array<i32>} : memref<2x64x64xf32, #tpu.memory_space<vmem>>, vector<1x1x64xf32>,
    %352 = vector.extract_strided_slice %115 {offsets = [0, 3776], sizes = [1, 64], strides = [1, 1]} : vector<2x4096xf32> to vector<1x64xf32>
    %c0_177 = arith.constant 0 : index
    %c59 = arith.constant 59 : index
    %c0_178 = arith.constant 0 : index
    %353 = vector.load %arg26[%c0_177, %c59, %c0_178] : memref<2x64x64xf32, #tpu.memory_space<vmem>>, vector<1x1x64xf32>
    %354 = vector.shape_cast %353 : vector<1x1x64xf32> to vector<1x64xf32>
    %355 = vector.shape_cast %352 : vector<1x64xf32> to vector<1x1x64xf32>
    tpu.vector_store %arg26[%c0_177, %c59, %c0_178], %355 {strides = array<i32>} : memref<2x64x64xf32, #tpu.memory_space<vmem>>, vector<1x1x64xf32>,
    %356 = vector.extract_strided_slice %115 {offsets = [0, 3840], sizes = [1, 64], strides = [1, 1]} : vector<2x4096xf32> to vector<1x64xf32>
    %c0_179 = arith.constant 0 : index
    %c60 = arith.constant 60 : index
    %c0_180 = arith.constant 0 : index
    %357 = vector.load %arg26[%c0_179, %c60, %c0_180] : memref<2x64x64xf32, #tpu.memory_space<vmem>>, vector<1x1x64xf32>
    %358 = vector.shape_cast %357 : vector<1x1x64xf32> to vector<1x64xf32>
    %359 = vector.shape_cast %356 : vector<1x64xf32> to vector<1x1x64xf32>
    tpu.vector_store %arg26[%c0_179, %c60, %c0_180], %359 {strides = array<i32>} : memref<2x64x64xf32, #tpu.memory_space<vmem>>, vector<1x1x64xf32>,
    %360 = vector.extract_strided_slice %115 {offsets = [0, 3904], sizes = [1, 64], strides = [1, 1]} : vector<2x4096xf32> to vector<1x64xf32>
    %c0_181 = arith.constant 0 : index
    %c61 = arith.constant 61 : index
    %c0_182 = arith.constant 0 : index
    %361 = vector.load %arg26[%c0_181, %c61, %c0_182] : memref<2x64x64xf32, #tpu.memory_space<vmem>>, vector<1x1x64xf32>
    %362 = vector.shape_cast %361 : vector<1x1x64xf32> to vector<1x64xf32>
    %363 = vector.shape_cast %360 : vector<1x64xf32> to vector<1x1x64xf32>
    tpu.vector_store %arg26[%c0_181, %c61, %c0_182], %363 {strides = array<i32>} : memref<2x64x64xf32, #tpu.memory_space<vmem>>, vector<1x1x64xf32>,
    %364 = vector.extract_strided_slice %115 {offsets = [0, 3968], sizes = [1, 64], strides = [1, 1]} : vector<2x4096xf32> to vector<1x64xf32>
    %c0_183 = arith.constant 0 : index
    %c62 = arith.constant 62 : index
    %c0_184 = arith.constant 0 : index
    %365 = vector.load %arg26[%c0_183, %c62, %c0_184] : memref<2x64x64xf32, #tpu.memory_space<vmem>>, vector<1x1x64xf32>
    %366 = vector.shape_cast %365 : vector<1x1x64xf32> to vector<1x64xf32>
    %367 = vector.shape_cast %364 : vector<1x64xf32> to vector<1x1x64xf32>
    tpu.vector_store %arg26[%c0_183, %c62, %c0_184], %367 {strides = array<i32>} : memref<2x64x64xf32, #tpu.memory_space<vmem>>, vector<1x1x64xf32>,
    %368 = vector.extract_strided_slice %115 {offsets = [0, 4032], sizes = [1, 64], strides = [1, 1]} : vector<2x4096xf32> to vector<1x64xf32>
    %c0_185 = arith.constant 0 : index
    %c63 = arith.constant 63 : index
    %c0_186 = arith.constant 0 : index
    %369 = vector.load %arg26[%c0_185, %c63, %c0_186] : memref<2x64x64xf32, #tpu.memory_space<vmem>>, vector<1x1x64xf32>
    %370 = vector.shape_cast %369 : vector<1x1x64xf32> to vector<1x64xf32>
    %371 = vector.shape_cast %368 : vector<1x64xf32> to vector<1x1x64xf32>
    tpu.vector_store %arg26[%c0_185, %c63, %c0_186], %371 {strides = array<i32>} : memref<2x64x64xf32, #tpu.memory_space<vmem>>, vector<1x1x64xf32>,
    %372 = vector.extract_strided_slice %115 {offsets = [1, 0], sizes = [1, 64], strides = [1, 1]} : vector<2x4096xf32> to vector<1x64xf32>
    %c1_187 = arith.constant 1 : index
    %c0_188 = arith.constant 0 : index
    %c0_189 = arith.constant 0 : index
    %373 = vector.load %arg26[%c1_187, %c0_188, %c0_189] : memref<2x64x64xf32, #tpu.memory_space<vmem>>, vector<1x1x64xf32>
    %374 = vector.shape_cast %373 : vector<1x1x64xf32> to vector<1x64xf32>
    %375 = vector.shape_cast %372 : vector<1x64xf32> to vector<1x1x64xf32>
    tpu.vector_store %arg26[%c1_187, %c0_188, %c0_189], %375 {strides = array<i32>} : memref<2x64x64xf32, #tpu.memory_space<vmem>>, vector<1x1x64xf32>,
    %376 = vector.extract_strided_slice %115 {offsets = [1, 64], sizes = [1, 64], strides = [1, 1]} : vector<2x4096xf32> to vector<1x64xf32>
    %c1_190 = arith.constant 1 : index
    %c1_191 = arith.constant 1 : index
    %c0_192 = arith.constant 0 : index
    %377 = vector.load %arg26[%c1_190, %c1_191, %c0_192] : memref<2x64x64xf32, #tpu.memory_space<vmem>>, vector<1x1x64xf32>
    %378 = vector.shape_cast %377 : vector<1x1x64xf32> to vector<1x64xf32>
    %379 = vector.shape_cast %376 : vector<1x64xf32> to vector<1x1x64xf32>
    tpu.vector_store %arg26[%c1_190, %c1_191, %c0_192], %379 {strides = array<i32>} : memref<2x64x64xf32, #tpu.memory_space<vmem>>, vector<1x1x64xf32>,
    %380 = vector.extract_strided_slice %115 {offsets = [1, 128], sizes = [1, 64], strides = [1, 1]} : vector<2x4096xf32> to vector<1x64xf32>
    %c1_193 = arith.constant 1 : index
    %c2_194 = arith.constant 2 : index
    %c0_195 = arith.constant 0 : index
    %381 = vector.load %arg26[%c1_193, %c2_194, %c0_195] : memref<2x64x64xf32, #tpu.memory_space<vmem>>, vector<1x1x64xf32>
    %382 = vector.shape_cast %381 : vector<1x1x64xf32> to vector<1x64xf32>
    %383 = vector.shape_cast %380 : vector<1x64xf32> to vector<1x1x64xf32>
    tpu.vector_store %arg26[%c1_193, %c2_194, %c0_195], %383 {strides = array<i32>} : memref<2x64x64xf32, #tpu.memory_space<vmem>>, vector<1x1x64xf32>,
    %384 = vector.extract_strided_slice %115 {offsets = [1, 192], sizes = [1, 64], strides = [1, 1]} : vector<2x4096xf32> to vector<1x64xf32>
    %c1_196 = arith.constant 1 : index
    %c3_197 = arith.constant 3 : index
    %c0_198 = arith.constant 0 : index
    %385 = vector.load %arg26[%c1_196, %c3_197, %c0_198] : memref<2x64x64xf32, #tpu.memory_space<vmem>>, vector<1x1x64xf32>
    %386 = vector.shape_cast %385 : vector<1x1x64xf32> to vector<1x64xf32>
    %387 = vector.shape_cast %384 : vector<1x64xf32> to vector<1x1x64xf32>
    tpu.vector_store %arg26[%c1_196, %c3_197, %c0_198], %387 {strides = array<i32>} : memref<2x64x64xf32, #tpu.memory_space<vmem>>, vector<1x1x64xf32>,
    %388 = vector.extract_strided_slice %115 {offsets = [1, 256], sizes = [1, 64], strides = [1, 1]} : vector<2x4096xf32> to vector<1x64xf32>
    %c1_199 = arith.constant 1 : index
    %c4_200 = arith.constant 4 : index
    %c0_201 = arith.constant 0 : index
    %389 = vector.load %arg26[%c1_199, %c4_200, %c0_201] : memref<2x64x64xf32, #tpu.memory_space<vmem>>, vector<1x1x64xf32>
    %390 = vector.shape_cast %389 : vector<1x1x64xf32> to vector<1x64xf32>
    %391 = vector.shape_cast %388 : vector<1x64xf32> to vector<1x1x64xf32>
    tpu.vector_store %arg26[%c1_199, %c4_200, %c0_201], %391 {strides = array<i32>} : memref<2x64x64xf32, #tpu.memory_space<vmem>>, vector<1x1x64xf32>,
    %392 = vector.extract_strided_slice %115 {offsets = [1, 320], sizes = [1, 64], strides = [1, 1]} : vector<2x4096xf32> to vector<1x64xf32>
    %c1_202 = arith.constant 1 : index
    %c5_203 = arith.constant 5 : index
    %c0_204 = arith.constant 0 : index
    %393 = vector.load %arg26[%c1_202, %c5_203, %c0_204] : memref<2x64x64xf32, #tpu.memory_space<vmem>>, vector<1x1x64xf32>
    %394 = vector.shape_cast %393 : vector<1x1x64xf32> to vector<1x64xf32>
    %395 = vector.shape_cast %392 : vector<1x64xf32> to vector<1x1x64xf32>
    tpu.vector_store %arg26[%c1_202, %c5_203, %c0_204], %395 {strides = array<i32>} : memref<2x64x64xf32, #tpu.memory_space<vmem>>, vector<1x1x64xf32>,
    %396 = vector.extract_strided_slice %115 {offsets = [1, 384], sizes = [1, 64], strides = [1, 1]} : vector<2x4096xf32> to vector<1x64xf32>
    %c1_205 = arith.constant 1 : index
    %c6_206 = arith.constant 6 : index
    %c0_207 = arith.constant 0 : index
    %397 = vector.load %arg26[%c1_205, %c6_206, %c0_207] : memref<2x64x64xf32, #tpu.memory_space<vmem>>, vector<1x1x64xf32>
    %398 = vector.shape_cast %397 : vector<1x1x64xf32> to vector<1x64xf32>
    %399 = vector.shape_cast %396 : vector<1x64xf32> to vector<1x1x64xf32>
    tpu.vector_store %arg26[%c1_205, %c6_206, %c0_207], %399 {strides = array<i32>} : memref<2x64x64xf32, #tpu.memory_space<vmem>>, vector<1x1x64xf32>,
    %400 = vector.extract_strided_slice %115 {offsets = [1, 448], sizes = [1, 64], strides = [1, 1]} : vector<2x4096xf32> to vector<1x64xf32>
    %c1_208 = arith.constant 1 : index
    %c7_209 = arith.constant 7 : index
    %c0_210 = arith.constant 0 : index
    %401 = vector.load %arg26[%c1_208, %c7_209, %c0_210] : memref<2x64x64xf32, #tpu.memory_space<vmem>>, vector<1x1x64xf32>
    %402 = vector.shape_cast %401 : vector<1x1x64xf32> to vector<1x64xf32>
    %403 = vector.shape_cast %400 : vector<1x64xf32> to vector<1x1x64xf32>
    tpu.vector_store %arg26[%c1_208, %c7_209, %c0_210], %403 {strides = array<i32>} : memref<2x64x64xf32, #tpu.memory_space<vmem>>, vector<1x1x64xf32>,
    %404 = vector.extract_strided_slice %115 {offsets = [1, 512], sizes = [1, 64], strides = [1, 1]} : vector<2x4096xf32> to vector<1x64xf32>
    %c1_211 = arith.constant 1 : index
    %c8_212 = arith.constant 8 : index
    %c0_213 = arith.constant 0 : index
    %405 = vector.load %arg26[%c1_211, %c8_212, %c0_213] : memref<2x64x64xf32, #tpu.memory_space<vmem>>, vector<1x1x64xf32>
    %406 = vector.shape_cast %405 : vector<1x1x64xf32> to vector<1x64xf32>
    %407 = vector.shape_cast %404 : vector<1x64xf32> to vector<1x1x64xf32>
    tpu.vector_store %arg26[%c1_211, %c8_212, %c0_213], %407 {strides = array<i32>} : memref<2x64x64xf32, #tpu.memory_space<vmem>>, vector<1x1x64xf32>,
    %408 = vector.extract_strided_slice %115 {offsets = [1, 576], sizes = [1, 64], strides = [1, 1]} : vector<2x4096xf32> to vector<1x64xf32>
    %c1_214 = arith.constant 1 : index
    %c9_215 = arith.constant 9 : index
    %c0_216 = arith.constant 0 : index
    %409 = vector.load %arg26[%c1_214, %c9_215, %c0_216] : memref<2x64x64xf32, #tpu.memory_space<vmem>>, vector<1x1x64xf32>
    %410 = vector.shape_cast %409 : vector<1x1x64xf32> to vector<1x64xf32>
    %411 = vector.shape_cast %408 : vector<1x64xf32> to vector<1x1x64xf32>
    tpu.vector_store %arg26[%c1_214, %c9_215, %c0_216], %411 {strides = array<i32>} : memref<2x64x64xf32, #tpu.memory_space<vmem>>, vector<1x1x64xf32>,
    %412 = vector.extract_strided_slice %115 {offsets = [1, 640], sizes = [1, 64], strides = [1, 1]} : vector<2x4096xf32> to vector<1x64xf32>
    %c1_217 = arith.constant 1 : index
    %c10_218 = arith.constant 10 : index
    %c0_219 = arith.constant 0 : index
    %413 = vector.load %arg26[%c1_217, %c10_218, %c0_219] : memref<2x64x64xf32, #tpu.memory_space<vmem>>, vector<1x1x64xf32>
    %414 = vector.shape_cast %413 : vector<1x1x64xf32> to vector<1x64xf32>
    %415 = vector.shape_cast %412 : vector<1x64xf32> to vector<1x1x64xf32>
    tpu.vector_store %arg26[%c1_217, %c10_218, %c0_219], %415 {strides = array<i32>} : memref<2x64x64xf32, #tpu.memory_space<vmem>>, vector<1x1x64xf32>,
    %416 = vector.extract_strided_slice %115 {offsets = [1, 704], sizes = [1, 64], strides = [1, 1]} : vector<2x4096xf32> to vector<1x64xf32>
    %c1_220 = arith.constant 1 : index
    %c11_221 = arith.constant 11 : index
    %c0_222 = arith.constant 0 : index
    %417 = vector.load %arg26[%c1_220, %c11_221, %c0_222] : memref<2x64x64xf32, #tpu.memory_space<vmem>>, vector<1x1x64xf32>
    %418 = vector.shape_cast %417 : vector<1x1x64xf32> to vector<1x64xf32>
    %419 = vector.shape_cast %416 : vector<1x64xf32> to vector<1x1x64xf32>
    tpu.vector_store %arg26[%c1_220, %c11_221, %c0_222], %419 {strides = array<i32>} : memref<2x64x64xf32, #tpu.memory_space<vmem>>, vector<1x1x64xf32>,
    %420 = vector.extract_strided_slice %115 {offsets = [1, 768], sizes = [1, 64], strides = [1, 1]} : vector<2x4096xf32> to vector<1x64xf32>
    %c1_223 = arith.constant 1 : index
    %c12_224 = arith.constant 12 : index
    %c0_225 = arith.constant 0 : index
    %421 = vector.load %arg26[%c1_223, %c12_224, %c0_225] : memref<2x64x64xf32, #tpu.memory_space<vmem>>, vector<1x1x64xf32>
    %422 = vector.shape_cast %421 : vector<1x1x64xf32> to vector<1x64xf32>
    %423 = vector.shape_cast %420 : vector<1x64xf32> to vector<1x1x64xf32>
    tpu.vector_store %arg26[%c1_223, %c12_224, %c0_225], %423 {strides = array<i32>} : memref<2x64x64xf32, #tpu.memory_space<vmem>>, vector<1x1x64xf32>,
    %424 = vector.extract_strided_slice %115 {offsets = [1, 832], sizes = [1, 64], strides = [1, 1]} : vector<2x4096xf32> to vector<1x64xf32>
    %c1_226 = arith.constant 1 : index
    %c13_227 = arith.constant 13 : index
    %c0_228 = arith.constant 0 : index
    %425 = vector.load %arg26[%c1_226, %c13_227, %c0_228] : memref<2x64x64xf32, #tpu.memory_space<vmem>>, vector<1x1x64xf32>
    %426 = vector.shape_cast %425 : vector<1x1x64xf32> to vector<1x64xf32>
    %427 = vector.shape_cast %424 : vector<1x64xf32> to vector<1x1x64xf32>
    tpu.vector_store %arg26[%c1_226, %c13_227, %c0_228], %427 {strides = array<i32>} : memref<2x64x64xf32, #tpu.memory_space<vmem>>, vector<1x1x64xf32>,
    %428 = vector.extract_strided_slice %115 {offsets = [1, 896], sizes = [1, 64], strides = [1, 1]} : vector<2x4096xf32> to vector<1x64xf32>
    %c1_229 = arith.constant 1 : index
    %c14_230 = arith.constant 14 : index
    %c0_231 = arith.constant 0 : index
    %429 = vector.load %arg26[%c1_229, %c14_230, %c0_231] : memref<2x64x64xf32, #tpu.memory_space<vmem>>, vector<1x1x64xf32>
    %430 = vector.shape_cast %429 : vector<1x1x64xf32> to vector<1x64xf32>
    %431 = vector.shape_cast %428 : vector<1x64xf32> to vector<1x1x64xf32>
    tpu.vector_store %arg26[%c1_229, %c14_230, %c0_231], %431 {strides = array<i32>} : memref<2x64x64xf32, #tpu.memory_space<vmem>>, vector<1x1x64xf32>,
    %432 = vector.extract_strided_slice %115 {offsets = [1, 960], sizes = [1, 64], strides = [1, 1]} : vector<2x4096xf32> to vector<1x64xf32>
    %c1_232 = arith.constant 1 : index
    %c15_233 = arith.constant 15 : index
    %c0_234 = arith.constant 0 : index
    %433 = vector.load %arg26[%c1_232, %c15_233, %c0_234] : memref<2x64x64xf32, #tpu.memory_space<vmem>>, vector<1x1x64xf32>
    %434 = vector.shape_cast %433 : vector<1x1x64xf32> to vector<1x64xf32>
    %435 = vector.shape_cast %432 : vector<1x64xf32> to vector<1x1x64xf32>
    tpu.vector_store %arg26[%c1_232, %c15_233, %c0_234], %435 {strides = array<i32>} : memref<2x64x64xf32, #tpu.memory_space<vmem>>, vector<1x1x64xf32>,
    %436 = vector.extract_strided_slice %115 {offsets = [1, 1024], sizes = [1, 64], strides = [1, 1]} : vector<2x4096xf32> to vector<1x64xf32>
    %c1_235 = arith.constant 1 : index
    %c16_236 = arith.constant 16 : index
    %c0_237 = arith.constant 0 : index
    %437 = vector.load %arg26[%c1_235, %c16_236, %c0_237] : memref<2x64x64xf32, #tpu.memory_space<vmem>>, vector<1x1x64xf32>
    %438 = vector.shape_cast %437 : vector<1x1x64xf32> to vector<1x64xf32>
    %439 = vector.shape_cast %436 : vector<1x64xf32> to vector<1x1x64xf32>
    tpu.vector_store %arg26[%c1_235, %c16_236, %c0_237], %439 {strides = array<i32>} : memref<2x64x64xf32, #tpu.memory_space<vmem>>, vector<1x1x64xf32>,
    %440 = vector.extract_strided_slice %115 {offsets = [1, 1088], sizes = [1, 64], strides = [1, 1]} : vector<2x4096xf32> to vector<1x64xf32>
    %c1_238 = arith.constant 1 : index
    %c17_239 = arith.constant 17 : index
    %c0_240 = arith.constant 0 : index
    %441 = vector.load %arg26[%c1_238, %c17_239, %c0_240] : memref<2x64x64xf32, #tpu.memory_space<vmem>>, vector<1x1x64xf32>
    %442 = vector.shape_cast %441 : vector<1x1x64xf32> to vector<1x64xf32>
    %443 = vector.shape_cast %440 : vector<1x64xf32> to vector<1x1x64xf32>
    tpu.vector_store %arg26[%c1_238, %c17_239, %c0_240], %443 {strides = array<i32>} : memref<2x64x64xf32, #tpu.memory_space<vmem>>, vector<1x1x64xf32>,
    %444 = vector.extract_strided_slice %115 {offsets = [1, 1152], sizes = [1, 64], strides = [1, 1]} : vector<2x4096xf32> to vector<1x64xf32>
    %c1_241 = arith.constant 1 : index
    %c18_242 = arith.constant 18 : index
    %c0_243 = arith.constant 0 : index
    %445 = vector.load %arg26[%c1_241, %c18_242, %c0_243] : memref<2x64x64xf32, #tpu.memory_space<vmem>>, vector<1x1x64xf32>
    %446 = vector.shape_cast %445 : vector<1x1x64xf32> to vector<1x64xf32>
    %447 = vector.shape_cast %444 : vector<1x64xf32> to vector<1x1x64xf32>
    tpu.vector_store %arg26[%c1_241, %c18_242, %c0_243], %447 {strides = array<i32>} : memref<2x64x64xf32, #tpu.memory_space<vmem>>, vector<1x1x64xf32>,
    %448 = vector.extract_strided_slice %115 {offsets = [1, 1216], sizes = [1, 64], strides = [1, 1]} : vector<2x4096xf32> to vector<1x64xf32>
    %c1_244 = arith.constant 1 : index
    %c19_245 = arith.constant 19 : index
    %c0_246 = arith.constant 0 : index
    %449 = vector.load %arg26[%c1_244, %c19_245, %c0_246] : memref<2x64x64xf32, #tpu.memory_space<vmem>>, vector<1x1x64xf32>
    %450 = vector.shape_cast %449 : vector<1x1x64xf32> to vector<1x64xf32>
    %451 = vector.shape_cast %448 : vector<1x64xf32> to vector<1x1x64xf32>
    tpu.vector_store %arg26[%c1_244, %c19_245, %c0_246], %451 {strides = array<i32>} : memref<2x64x64xf32, #tpu.memory_space<vmem>>, vector<1x1x64xf32>,
    %452 = vector.extract_strided_slice %115 {offsets = [1, 1280], sizes = [1, 64], strides = [1, 1]} : vector<2x4096xf32> to vector<1x64xf32>
    %c1_247 = arith.constant 1 : index
    %c20_248 = arith.constant 20 : index
    %c0_249 = arith.constant 0 : index
    %453 = vector.load %arg26[%c1_247, %c20_248, %c0_249] : memref<2x64x64xf32, #tpu.memory_space<vmem>>, vector<1x1x64xf32>
    %454 = vector.shape_cast %453 : vector<1x1x64xf32> to vector<1x64xf32>
    %455 = vector.shape_cast %452 : vector<1x64xf32> to vector<1x1x64xf32>
    tpu.vector_store %arg26[%c1_247, %c20_248, %c0_249], %455 {strides = array<i32>} : memref<2x64x64xf32, #tpu.memory_space<vmem>>, vector<1x1x64xf32>,
    %456 = vector.extract_strided_slice %115 {offsets = [1, 1344], sizes = [1, 64], strides = [1, 1]} : vector<2x4096xf32> to vector<1x64xf32>
    %c1_250 = arith.constant 1 : index
    %c21_251 = arith.constant 21 : index
    %c0_252 = arith.constant 0 : index
    %457 = vector.load %arg26[%c1_250, %c21_251, %c0_252] : memref<2x64x64xf32, #tpu.memory_space<vmem>>, vector<1x1x64xf32>
    %458 = vector.shape_cast %457 : vector<1x1x64xf32> to vector<1x64xf32>
    %459 = vector.shape_cast %456 : vector<1x64xf32> to vector<1x1x64xf32>
    tpu.vector_store %arg26[%c1_250, %c21_251, %c0_252], %459 {strides = array<i32>} : memref<2x64x64xf32, #tpu.memory_space<vmem>>, vector<1x1x64xf32>,
    %460 = vector.extract_strided_slice %115 {offsets = [1, 1408], sizes = [1, 64], strides = [1, 1]} : vector<2x4096xf32> to vector<1x64xf32>
    %c1_253 = arith.constant 1 : index
    %c22_254 = arith.constant 22 : index
    %c0_255 = arith.constant 0 : index
    %461 = vector.load %arg26[%c1_253, %c22_254, %c0_255] : memref<2x64x64xf32, #tpu.memory_space<vmem>>, vector<1x1x64xf32>
    %462 = vector.shape_cast %461 : vector<1x1x64xf32> to vector<1x64xf32>
    %463 = vector.shape_cast %460 : vector<1x64xf32> to vector<1x1x64xf32>
    tpu.vector_store %arg26[%c1_253, %c22_254, %c0_255], %463 {strides = array<i32>} : memref<2x64x64xf32, #tpu.memory_space<vmem>>, vector<1x1x64xf32>,
    %464 = vector.extract_strided_slice %115 {offsets = [1, 1472], sizes = [1, 64], strides = [1, 1]} : vector<2x4096xf32> to vector<1x64xf32>
    %c1_256 = arith.constant 1 : index
    %c23_257 = arith.constant 23 : index
    %c0_258 = arith.constant 0 : index
    %465 = vector.load %arg26[%c1_256, %c23_257, %c0_258] : memref<2x64x64xf32, #tpu.memory_space<vmem>>, vector<1x1x64xf32>
    %466 = vector.shape_cast %465 : vector<1x1x64xf32> to vector<1x64xf32>
    %467 = vector.shape_cast %464 : vector<1x64xf32> to vector<1x1x64xf32>
    tpu.vector_store %arg26[%c1_256, %c23_257, %c0_258], %467 {strides = array<i32>} : memref<2x64x64xf32, #tpu.memory_space<vmem>>, vector<1x1x64xf32>,
    %468 = vector.extract_strided_slice %115 {offsets = [1, 1536], sizes = [1, 64], strides = [1, 1]} : vector<2x4096xf32> to vector<1x64xf32>
    %c1_259 = arith.constant 1 : index
    %c24_260 = arith.constant 24 : index
    %c0_261 = arith.constant 0 : index
    %469 = vector.load %arg26[%c1_259, %c24_260, %c0_261] : memref<2x64x64xf32, #tpu.memory_space<vmem>>, vector<1x1x64xf32>
    %470 = vector.shape_cast %469 : vector<1x1x64xf32> to vector<1x64xf32>
    %471 = vector.shape_cast %468 : vector<1x64xf32> to vector<1x1x64xf32>
    tpu.vector_store %arg26[%c1_259, %c24_260, %c0_261], %471 {strides = array<i32>} : memref<2x64x64xf32, #tpu.memory_space<vmem>>, vector<1x1x64xf32>,
    %472 = vector.extract_strided_slice %115 {offsets = [1, 1600], sizes = [1, 64], strides = [1, 1]} : vector<2x4096xf32> to vector<1x64xf32>
    %c1_262 = arith.constant 1 : index
    %c25_263 = arith.constant 25 : index
    %c0_264 = arith.constant 0 : index
    %473 = vector.load %arg26[%c1_262, %c25_263, %c0_264] : memref<2x64x64xf32, #tpu.memory_space<vmem>>, vector<1x1x64xf32>
    %474 = vector.shape_cast %473 : vector<1x1x64xf32> to vector<1x64xf32>
    %475 = vector.shape_cast %472 : vector<1x64xf32> to vector<1x1x64xf32>
    tpu.vector_store %arg26[%c1_262, %c25_263, %c0_264], %475 {strides = array<i32>} : memref<2x64x64xf32, #tpu.memory_space<vmem>>, vector<1x1x64xf32>,
    %476 = vector.extract_strided_slice %115 {offsets = [1, 1664], sizes = [1, 64], strides = [1, 1]} : vector<2x4096xf32> to vector<1x64xf32>
    %c1_265 = arith.constant 1 : index
    %c26_266 = arith.constant 26 : index
    %c0_267 = arith.constant 0 : index
    %477 = vector.load %arg26[%c1_265, %c26_266, %c0_267] : memref<2x64x64xf32, #tpu.memory_space<vmem>>, vector<1x1x64xf32>
    %478 = vector.shape_cast %477 : vector<1x1x64xf32> to vector<1x64xf32>
    %479 = vector.shape_cast %476 : vector<1x64xf32> to vector<1x1x64xf32>
    tpu.vector_store %arg26[%c1_265, %c26_266, %c0_267], %479 {strides = array<i32>} : memref<2x64x64xf32, #tpu.memory_space<vmem>>, vector<1x1x64xf32>,
    %480 = vector.extract_strided_slice %115 {offsets = [1, 1728], sizes = [1, 64], strides = [1, 1]} : vector<2x4096xf32> to vector<1x64xf32>
    %c1_268 = arith.constant 1 : index
    %c27_269 = arith.constant 27 : index
    %c0_270 = arith.constant 0 : index
    %481 = vector.load %arg26[%c1_268, %c27_269, %c0_270] : memref<2x64x64xf32, #tpu.memory_space<vmem>>, vector<1x1x64xf32>
    %482 = vector.shape_cast %481 : vector<1x1x64xf32> to vector<1x64xf32>
    %483 = vector.shape_cast %480 : vector<1x64xf32> to vector<1x1x64xf32>
    tpu.vector_store %arg26[%c1_268, %c27_269, %c0_270], %483 {strides = array<i32>} : memref<2x64x64xf32, #tpu.memory_space<vmem>>, vector<1x1x64xf32>,
    %484 = vector.extract_strided_slice %115 {offsets = [1, 1792], sizes = [1, 64], strides = [1, 1]} : vector<2x4096xf32> to vector<1x64xf32>
    %c1_271 = arith.constant 1 : index
    %c28_272 = arith.constant 28 : index
    %c0_273 = arith.constant 0 : index
    %485 = vector.load %arg26[%c1_271, %c28_272, %c0_273] : memref<2x64x64xf32, #tpu.memory_space<vmem>>, vector<1x1x64xf32>
    %486 = vector.shape_cast %485 : vector<1x1x64xf32> to vector<1x64xf32>
    %487 = vector.shape_cast %484 : vector<1x64xf32> to vector<1x1x64xf32>
    tpu.vector_store %arg26[%c1_271, %c28_272, %c0_273], %487 {strides = array<i32>} : memref<2x64x64xf32, #tpu.memory_space<vmem>>, vector<1x1x64xf32>,
    %488 = vector.extract_strided_slice %115 {offsets = [1, 1856], sizes = [1, 64], strides = [1, 1]} : vector<2x4096xf32> to vector<1x64xf32>
    %c1_274 = arith.constant 1 : index
    %c29_275 = arith.constant 29 : index
    %c0_276 = arith.constant 0 : index
    %489 = vector.load %arg26[%c1_274, %c29_275, %c0_276] : memref<2x64x64xf32, #tpu.memory_space<vmem>>, vector<1x1x64xf32>
    %490 = vector.shape_cast %489 : vector<1x1x64xf32> to vector<1x64xf32>
    %491 = vector.shape_cast %488 : vector<1x64xf32> to vector<1x1x64xf32>
    tpu.vector_store %arg26[%c1_274, %c29_275, %c0_276], %491 {strides = array<i32>} : memref<2x64x64xf32, #tpu.memory_space<vmem>>, vector<1x1x64xf32>,
    %492 = vector.extract_strided_slice %115 {offsets = [1, 1920], sizes = [1, 64], strides = [1, 1]} : vector<2x4096xf32> to vector<1x64xf32>
    %c1_277 = arith.constant 1 : index
    %c30_278 = arith.constant 30 : index
    %c0_279 = arith.constant 0 : index
    %493 = vector.load %arg26[%c1_277, %c30_278, %c0_279] : memref<2x64x64xf32, #tpu.memory_space<vmem>>, vector<1x1x64xf32>
    %494 = vector.shape_cast %493 : vector<1x1x64xf32> to vector<1x64xf32>
    %495 = vector.shape_cast %492 : vector<1x64xf32> to vector<1x1x64xf32>
    tpu.vector_store %arg26[%c1_277, %c30_278, %c0_279], %495 {strides = array<i32>} : memref<2x64x64xf32, #tpu.memory_space<vmem>>, vector<1x1x64xf32>,
    %496 = vector.extract_strided_slice %115 {offsets = [1, 1984], sizes = [1, 64], strides = [1, 1]} : vector<2x4096xf32> to vector<1x64xf32>
    %c1_280 = arith.constant 1 : index
    %c31_281 = arith.constant 31 : index
    %c0_282 = arith.constant 0 : index
    %497 = vector.load %arg26[%c1_280, %c31_281, %c0_282] : memref<2x64x64xf32, #tpu.memory_space<vmem>>, vector<1x1x64xf32>
    %498 = vector.shape_cast %497 : vector<1x1x64xf32> to vector<1x64xf32>
    %499 = vector.shape_cast %496 : vector<1x64xf32> to vector<1x1x64xf32>
    tpu.vector_store %arg26[%c1_280, %c31_281, %c0_282], %499 {strides = array<i32>} : memref<2x64x64xf32, #tpu.memory_space<vmem>>, vector<1x1x64xf32>,
    %500 = vector.extract_strided_slice %115 {offsets = [1, 2048], sizes = [1, 64], strides = [1, 1]} : vector<2x4096xf32> to vector<1x64xf32>
    %c1_283 = arith.constant 1 : index
    %c32_284 = arith.constant 32 : index
    %c0_285 = arith.constant 0 : index
    %501 = vector.load %arg26[%c1_283, %c32_284, %c0_285] : memref<2x64x64xf32, #tpu.memory_space<vmem>>, vector<1x1x64xf32>
    %502 = vector.shape_cast %501 : vector<1x1x64xf32> to vector<1x64xf32>
    %503 = vector.shape_cast %500 : vector<1x64xf32> to vector<1x1x64xf32>
    tpu.vector_store %arg26[%c1_283, %c32_284, %c0_285], %503 {strides = array<i32>} : memref<2x64x64xf32, #tpu.memory_space<vmem>>, vector<1x1x64xf32>,
    %504 = vector.extract_strided_slice %115 {offsets = [1, 2112], sizes = [1, 64], strides = [1, 1]} : vector<2x4096xf32> to vector<1x64xf32>
    %c1_286 = arith.constant 1 : index
    %c33_287 = arith.constant 33 : index
    %c0_288 = arith.constant 0 : index
    %505 = vector.load %arg26[%c1_286, %c33_287, %c0_288] : memref<2x64x64xf32, #tpu.memory_space<vmem>>, vector<1x1x64xf32>
    %506 = vector.shape_cast %505 : vector<1x1x64xf32> to vector<1x64xf32>
    %507 = vector.shape_cast %504 : vector<1x64xf32> to vector<1x1x64xf32>
    tpu.vector_store %arg26[%c1_286, %c33_287, %c0_288], %507 {strides = array<i32>} : memref<2x64x64xf32, #tpu.memory_space<vmem>>, vector<1x1x64xf32>,
    %508 = vector.extract_strided_slice %115 {offsets = [1, 2176], sizes = [1, 64], strides = [1, 1]} : vector<2x4096xf32> to vector<1x64xf32>
    %c1_289 = arith.constant 1 : index
    %c34_290 = arith.constant 34 : index
    %c0_291 = arith.constant 0 : index
    %509 = vector.load %arg26[%c1_289, %c34_290, %c0_291] : memref<2x64x64xf32, #tpu.memory_space<vmem>>, vector<1x1x64xf32>
    %510 = vector.shape_cast %509 : vector<1x1x64xf32> to vector<1x64xf32>
    %511 = vector.shape_cast %508 : vector<1x64xf32> to vector<1x1x64xf32>
    tpu.vector_store %arg26[%c1_289, %c34_290, %c0_291], %511 {strides = array<i32>} : memref<2x64x64xf32, #tpu.memory_space<vmem>>, vector<1x1x64xf32>,
    %512 = vector.extract_strided_slice %115 {offsets = [1, 2240], sizes = [1, 64], strides = [1, 1]} : vector<2x4096xf32> to vector<1x64xf32>
    %c1_292 = arith.constant 1 : index
    %c35_293 = arith.constant 35 : index
    %c0_294 = arith.constant 0 : index
    %513 = vector.load %arg26[%c1_292, %c35_293, %c0_294] : memref<2x64x64xf32, #tpu.memory_space<vmem>>, vector<1x1x64xf32>
    %514 = vector.shape_cast %513 : vector<1x1x64xf32> to vector<1x64xf32>
    %515 = vector.shape_cast %512 : vector<1x64xf32> to vector<1x1x64xf32>
    tpu.vector_store %arg26[%c1_292, %c35_293, %c0_294], %515 {strides = array<i32>} : memref<2x64x64xf32, #tpu.memory_space<vmem>>, vector<1x1x64xf32>,
    %516 = vector.extract_strided_slice %115 {offsets = [1, 2304], sizes = [1, 64], strides = [1, 1]} : vector<2x4096xf32> to vector<1x64xf32>
    %c1_295 = arith.constant 1 : index
    %c36_296 = arith.constant 36 : index
    %c0_297 = arith.constant 0 : index
    %517 = vector.load %arg26[%c1_295, %c36_296, %c0_297] : memref<2x64x64xf32, #tpu.memory_space<vmem>>, vector<1x1x64xf32>
    %518 = vector.shape_cast %517 : vector<1x1x64xf32> to vector<1x64xf32>
    %519 = vector.shape_cast %516 : vector<1x64xf32> to vector<1x1x64xf32>
    tpu.vector_store %arg26[%c1_295, %c36_296, %c0_297], %519 {strides = array<i32>} : memref<2x64x64xf32, #tpu.memory_space<vmem>>, vector<1x1x64xf32>,
    %520 = vector.extract_strided_slice %115 {offsets = [1, 2368], sizes = [1, 64], strides = [1, 1]} : vector<2x4096xf32> to vector<1x64xf32>
    %c1_298 = arith.constant 1 : index
    %c37_299 = arith.constant 37 : index
    %c0_300 = arith.constant 0 : index
    %521 = vector.load %arg26[%c1_298, %c37_299, %c0_300] : memref<2x64x64xf32, #tpu.memory_space<vmem>>, vector<1x1x64xf32>
    %522 = vector.shape_cast %521 : vector<1x1x64xf32> to vector<1x64xf32>
    %523 = vector.shape_cast %520 : vector<1x64xf32> to vector<1x1x64xf32>
    tpu.vector_store %arg26[%c1_298, %c37_299, %c0_300], %523 {strides = array<i32>} : memref<2x64x64xf32, #tpu.memory_space<vmem>>, vector<1x1x64xf32>,
    %524 = vector.extract_strided_slice %115 {offsets = [1, 2432], sizes = [1, 64], strides = [1, 1]} : vector<2x4096xf32> to vector<1x64xf32>
    %c1_301 = arith.constant 1 : index
    %c38_302 = arith.constant 38 : index
    %c0_303 = arith.constant 0 : index
    %525 = vector.load %arg26[%c1_301, %c38_302, %c0_303] : memref<2x64x64xf32, #tpu.memory_space<vmem>>, vector<1x1x64xf32>
    %526 = vector.shape_cast %525 : vector<1x1x64xf32> to vector<1x64xf32>
    %527 = vector.shape_cast %524 : vector<1x64xf32> to vector<1x1x64xf32>
    tpu.vector_store %arg26[%c1_301, %c38_302, %c0_303], %527 {strides = array<i32>} : memref<2x64x64xf32, #tpu.memory_space<vmem>>, vector<1x1x64xf32>,
    %528 = vector.extract_strided_slice %115 {offsets = [1, 2496], sizes = [1, 64], strides = [1, 1]} : vector<2x4096xf32> to vector<1x64xf32>
    %c1_304 = arith.constant 1 : index
    %c39_305 = arith.constant 39 : index
    %c0_306 = arith.constant 0 : index
    %529 = vector.load %arg26[%c1_304, %c39_305, %c0_306] : memref<2x64x64xf32, #tpu.memory_space<vmem>>, vector<1x1x64xf32>
    %530 = vector.shape_cast %529 : vector<1x1x64xf32> to vector<1x64xf32>
    %531 = vector.shape_cast %528 : vector<1x64xf32> to vector<1x1x64xf32>
    tpu.vector_store %arg26[%c1_304, %c39_305, %c0_306], %531 {strides = array<i32>} : memref<2x64x64xf32, #tpu.memory_space<vmem>>, vector<1x1x64xf32>,
    %532 = vector.extract_strided_slice %115 {offsets = [1, 2560], sizes = [1, 64], strides = [1, 1]} : vector<2x4096xf32> to vector<1x64xf32>
    %c1_307 = arith.constant 1 : index
    %c40_308 = arith.constant 40 : index
    %c0_309 = arith.constant 0 : index
    %533 = vector.load %arg26[%c1_307, %c40_308, %c0_309] : memref<2x64x64xf32, #tpu.memory_space<vmem>>, vector<1x1x64xf32>
    %534 = vector.shape_cast %533 : vector<1x1x64xf32> to vector<1x64xf32>
    %535 = vector.shape_cast %532 : vector<1x64xf32> to vector<1x1x64xf32>
    tpu.vector_store %arg26[%c1_307, %c40_308, %c0_309], %535 {strides = array<i32>} : memref<2x64x64xf32, #tpu.memory_space<vmem>>, vector<1x1x64xf32>,
    %536 = vector.extract_strided_slice %115 {offsets = [1, 2624], sizes = [1, 64], strides = [1, 1]} : vector<2x4096xf32> to vector<1x64xf32>
    %c1_310 = arith.constant 1 : index
    %c41_311 = arith.constant 41 : index
    %c0_312 = arith.constant 0 : index
    %537 = vector.load %arg26[%c1_310, %c41_311, %c0_312] : memref<2x64x64xf32, #tpu.memory_space<vmem>>, vector<1x1x64xf32>
    %538 = vector.shape_cast %537 : vector<1x1x64xf32> to vector<1x64xf32>
    %539 = vector.shape_cast %536 : vector<1x64xf32> to vector<1x1x64xf32>
    tpu.vector_store %arg26[%c1_310, %c41_311, %c0_312], %539 {strides = array<i32>} : memref<2x64x64xf32, #tpu.memory_space<vmem>>, vector<1x1x64xf32>,
    %540 = vector.extract_strided_slice %115 {offsets = [1, 2688], sizes = [1, 64], strides = [1, 1]} : vector<2x4096xf32> to vector<1x64xf32>
    %c1_313 = arith.constant 1 : index
    %c42_314 = arith.constant 42 : index
    %c0_315 = arith.constant 0 : index
    %541 = vector.load %arg26[%c1_313, %c42_314, %c0_315] : memref<2x64x64xf32, #tpu.memory_space<vmem>>, vector<1x1x64xf32>
    %542 = vector.shape_cast %541 : vector<1x1x64xf32> to vector<1x64xf32>
    %543 = vector.shape_cast %540 : vector<1x64xf32> to vector<1x1x64xf32>
    tpu.vector_store %arg26[%c1_313, %c42_314, %c0_315], %543 {strides = array<i32>} : memref<2x64x64xf32, #tpu.memory_space<vmem>>, vector<1x1x64xf32>,
    %544 = vector.extract_strided_slice %115 {offsets = [1, 2752], sizes = [1, 64], strides = [1, 1]} : vector<2x4096xf32> to vector<1x64xf32>
    %c1_316 = arith.constant 1 : index
    %c43_317 = arith.constant 43 : index
    %c0_318 = arith.constant 0 : index
    %545 = vector.load %arg26[%c1_316, %c43_317, %c0_318] : memref<2x64x64xf32, #tpu.memory_space<vmem>>, vector<1x1x64xf32>
    %546 = vector.shape_cast %545 : vector<1x1x64xf32> to vector<1x64xf32>
    %547 = vector.shape_cast %544 : vector<1x64xf32> to vector<1x1x64xf32>
    tpu.vector_store %arg26[%c1_316, %c43_317, %c0_318], %547 {strides = array<i32>} : memref<2x64x64xf32, #tpu.memory_space<vmem>>, vector<1x1x64xf32>,
    %548 = vector.extract_strided_slice %115 {offsets = [1, 2816], sizes = [1, 64], strides = [1, 1]} : vector<2x4096xf32> to vector<1x64xf32>
    %c1_319 = arith.constant 1 : index
    %c44_320 = arith.constant 44 : index
    %c0_321 = arith.constant 0 : index
    %549 = vector.load %arg26[%c1_319, %c44_320, %c0_321] : memref<2x64x64xf32, #tpu.memory_space<vmem>>, vector<1x1x64xf32>
    %550 = vector.shape_cast %549 : vector<1x1x64xf32> to vector<1x64xf32>
    %551 = vector.shape_cast %548 : vector<1x64xf32> to vector<1x1x64xf32>
    tpu.vector_store %arg26[%c1_319, %c44_320, %c0_321], %551 {strides = array<i32>} : memref<2x64x64xf32, #tpu.memory_space<vmem>>, vector<1x1x64xf32>,
    %552 = vector.extract_strided_slice %115 {offsets = [1, 2880], sizes = [1, 64], strides = [1, 1]} : vector<2x4096xf32> to vector<1x64xf32>
    %c1_322 = arith.constant 1 : index
    %c45_323 = arith.constant 45 : index
    %c0_324 = arith.constant 0 : index
    %553 = vector.load %arg26[%c1_322, %c45_323, %c0_324] : memref<2x64x64xf32, #tpu.memory_space<vmem>>, vector<1x1x64xf32>
    %554 = vector.shape_cast %553 : vector<1x1x64xf32> to vector<1x64xf32>
    %555 = vector.shape_cast %552 : vector<1x64xf32> to vector<1x1x64xf32>
    tpu.vector_store %arg26[%c1_322, %c45_323, %c0_324], %555 {strides = array<i32>} : memref<2x64x64xf32, #tpu.memory_space<vmem>>, vector<1x1x64xf32>,
    %556 = vector.extract_strided_slice %115 {offsets = [1, 2944], sizes = [1, 64], strides = [1, 1]} : vector<2x4096xf32> to vector<1x64xf32>
    %c1_325 = arith.constant 1 : index
    %c46_326 = arith.constant 46 : index
    %c0_327 = arith.constant 0 : index
    %557 = vector.load %arg26[%c1_325, %c46_326, %c0_327] : memref<2x64x64xf32, #tpu.memory_space<vmem>>, vector<1x1x64xf32>
    %558 = vector.shape_cast %557 : vector<1x1x64xf32> to vector<1x64xf32>
    %559 = vector.shape_cast %556 : vector<1x64xf32> to vector<1x1x64xf32>
    tpu.vector_store %arg26[%c1_325, %c46_326, %c0_327], %559 {strides = array<i32>} : memref<2x64x64xf32, #tpu.memory_space<vmem>>, vector<1x1x64xf32>,
    %560 = vector.extract_strided_slice %115 {offsets = [1, 3008], sizes = [1, 64], strides = [1, 1]} : vector<2x4096xf32> to vector<1x64xf32>
    %c1_328 = arith.constant 1 : index
    %c47_329 = arith.constant 47 : index
    %c0_330 = arith.constant 0 : index
    %561 = vector.load %arg26[%c1_328, %c47_329, %c0_330] : memref<2x64x64xf32, #tpu.memory_space<vmem>>, vector<1x1x64xf32>
    %562 = vector.shape_cast %561 : vector<1x1x64xf32> to vector<1x64xf32>
    %563 = vector.shape_cast %560 : vector<1x64xf32> to vector<1x1x64xf32>
    tpu.vector_store %arg26[%c1_328, %c47_329, %c0_330], %563 {strides = array<i32>} : memref<2x64x64xf32, #tpu.memory_space<vmem>>, vector<1x1x64xf32>,
    %564 = vector.extract_strided_slice %115 {offsets = [1, 3072], sizes = [1, 64], strides = [1, 1]} : vector<2x4096xf32> to vector<1x64xf32>
    %c1_331 = arith.constant 1 : index
    %c48_332 = arith.constant 48 : index
    %c0_333 = arith.constant 0 : index
    %565 = vector.load %arg26[%c1_331, %c48_332, %c0_333] : memref<2x64x64xf32, #tpu.memory_space<vmem>>, vector<1x1x64xf32>
    %566 = vector.shape_cast %565 : vector<1x1x64xf32> to vector<1x64xf32>
    %567 = vector.shape_cast %564 : vector<1x64xf32> to vector<1x1x64xf32>
    tpu.vector_store %arg26[%c1_331, %c48_332, %c0_333], %567 {strides = array<i32>} : memref<2x64x64xf32, #tpu.memory_space<vmem>>, vector<1x1x64xf32>,
    %568 = vector.extract_strided_slice %115 {offsets = [1, 3136], sizes = [1, 64], strides = [1, 1]} : vector<2x4096xf32> to vector<1x64xf32>
    %c1_334 = arith.constant 1 : index
    %c49_335 = arith.constant 49 : index
    %c0_336 = arith.constant 0 : index
    %569 = vector.load %arg26[%c1_334, %c49_335, %c0_336] : memref<2x64x64xf32, #tpu.memory_space<vmem>>, vector<1x1x64xf32>
    %570 = vector.shape_cast %569 : vector<1x1x64xf32> to vector<1x64xf32>
    %571 = vector.shape_cast %568 : vector<1x64xf32> to vector<1x1x64xf32>
    tpu.vector_store %arg26[%c1_334, %c49_335, %c0_336], %571 {strides = array<i32>} : memref<2x64x64xf32, #tpu.memory_space<vmem>>, vector<1x1x64xf32>,
    %572 = vector.extract_strided_slice %115 {offsets = [1, 3200], sizes = [1, 64], strides = [1, 1]} : vector<2x4096xf32> to vector<1x64xf32>
    %c1_337 = arith.constant 1 : index
    %c50_338 = arith.constant 50 : index
    %c0_339 = arith.constant 0 : index
    %573 = vector.load %arg26[%c1_337, %c50_338, %c0_339] : memref<2x64x64xf32, #tpu.memory_space<vmem>>, vector<1x1x64xf32>
    %574 = vector.shape_cast %573 : vector<1x1x64xf32> to vector<1x64xf32>
    %575 = vector.shape_cast %572 : vector<1x64xf32> to vector<1x1x64xf32>
    tpu.vector_store %arg26[%c1_337, %c50_338, %c0_339], %575 {strides = array<i32>} : memref<2x64x64xf32, #tpu.memory_space<vmem>>, vector<1x1x64xf32>,
    %576 = vector.extract_strided_slice %115 {offsets = [1, 3264], sizes = [1, 64], strides = [1, 1]} : vector<2x4096xf32> to vector<1x64xf32>
    %c1_340 = arith.constant 1 : index
    %c51_341 = arith.constant 51 : index
    %c0_342 = arith.constant 0 : index
    %577 = vector.load %arg26[%c1_340, %c51_341, %c0_342] : memref<2x64x64xf32, #tpu.memory_space<vmem>>, vector<1x1x64xf32>
    %578 = vector.shape_cast %577 : vector<1x1x64xf32> to vector<1x64xf32>
    %579 = vector.shape_cast %576 : vector<1x64xf32> to vector<1x1x64xf32>
    tpu.vector_store %arg26[%c1_340, %c51_341, %c0_342], %579 {strides = array<i32>} : memref<2x64x64xf32, #tpu.memory_space<vmem>>, vector<1x1x64xf32>,
    %580 = vector.extract_strided_slice %115 {offsets = [1, 3328], sizes = [1, 64], strides = [1, 1]} : vector<2x4096xf32> to vector<1x64xf32>
    %c1_343 = arith.constant 1 : index
    %c52_344 = arith.constant 52 : index
    %c0_345 = arith.constant 0 : index
    %581 = vector.load %arg26[%c1_343, %c52_344, %c0_345] : memref<2x64x64xf32, #tpu.memory_space<vmem>>, vector<1x1x64xf32>
    %582 = vector.shape_cast %581 : vector<1x1x64xf32> to vector<1x64xf32>
    %583 = vector.shape_cast %580 : vector<1x64xf32> to vector<1x1x64xf32>
    tpu.vector_store %arg26[%c1_343, %c52_344, %c0_345], %583 {strides = array<i32>} : memref<2x64x64xf32, #tpu.memory_space<vmem>>, vector<1x1x64xf32>,
    %584 = vector.extract_strided_slice %115 {offsets = [1, 3392], sizes = [1, 64], strides = [1, 1]} : vector<2x4096xf32> to vector<1x64xf32>
    %c1_346 = arith.constant 1 : index
    %c53_347 = arith.constant 53 : index
    %c0_348 = arith.constant 0 : index
    %585 = vector.load %arg26[%c1_346, %c53_347, %c0_348] : memref<2x64x64xf32, #tpu.memory_space<vmem>>, vector<1x1x64xf32>
    %586 = vector.shape_cast %585 : vector<1x1x64xf32> to vector<1x64xf32>
    %587 = vector.shape_cast %584 : vector<1x64xf32> to vector<1x1x64xf32>
    tpu.vector_store %arg26[%c1_346, %c53_347, %c0_348], %587 {strides = array<i32>} : memref<2x64x64xf32, #tpu.memory_space<vmem>>, vector<1x1x64xf32>,
    %588 = vector.extract_strided_slice %115 {offsets = [1, 3456], sizes = [1, 64], strides = [1, 1]} : vector<2x4096xf32> to vector<1x64xf32>
    %c1_349 = arith.constant 1 : index
    %c54_350 = arith.constant 54 : index
    %c0_351 = arith.constant 0 : index
    %589 = vector.load %arg26[%c1_349, %c54_350, %c0_351] : memref<2x64x64xf32, #tpu.memory_space<vmem>>, vector<1x1x64xf32>
    %590 = vector.shape_cast %589 : vector<1x1x64xf32> to vector<1x64xf32>
    %591 = vector.shape_cast %588 : vector<1x64xf32> to vector<1x1x64xf32>
    tpu.vector_store %arg26[%c1_349, %c54_350, %c0_351], %591 {strides = array<i32>} : memref<2x64x64xf32, #tpu.memory_space<vmem>>, vector<1x1x64xf32>,
    %592 = vector.extract_strided_slice %115 {offsets = [1, 3520], sizes = [1, 64], strides = [1, 1]} : vector<2x4096xf32> to vector<1x64xf32>
    %c1_352 = arith.constant 1 : index
    %c55_353 = arith.constant 55 : index
    %c0_354 = arith.constant 0 : index
    %593 = vector.load %arg26[%c1_352, %c55_353, %c0_354] : memref<2x64x64xf32, #tpu.memory_space<vmem>>, vector<1x1x64xf32>
    %594 = vector.shape_cast %593 : vector<1x1x64xf32> to vector<1x64xf32>
    %595 = vector.shape_cast %592 : vector<1x64xf32> to vector<1x1x64xf32>
    tpu.vector_store %arg26[%c1_352, %c55_353, %c0_354], %595 {strides = array<i32>} : memref<2x64x64xf32, #tpu.memory_space<vmem>>, vector<1x1x64xf32>,
    %596 = vector.extract_strided_slice %115 {offsets = [1, 3584], sizes = [1, 64], strides = [1, 1]} : vector<2x4096xf32> to vector<1x64xf32>
    %c1_355 = arith.constant 1 : index
    %c56_356 = arith.constant 56 : index
    %c0_357 = arith.constant 0 : index
    %597 = vector.load %arg26[%c1_355, %c56_356, %c0_357] : memref<2x64x64xf32, #tpu.memory_space<vmem>>, vector<1x1x64xf32>
    %598 = vector.shape_cast %597 : vector<1x1x64xf32> to vector<1x64xf32>
    %599 = vector.shape_cast %596 : vector<1x64xf32> to vector<1x1x64xf32>
    tpu.vector_store %arg26[%c1_355, %c56_356, %c0_357], %599 {strides = array<i32>} : memref<2x64x64xf32, #tpu.memory_space<vmem>>, vector<1x1x64xf32>,
    %600 = vector.extract_strided_slice %115 {offsets = [1, 3648], sizes = [1, 64], strides = [1, 1]} : vector<2x4096xf32> to vector<1x64xf32>
    %c1_358 = arith.constant 1 : index
    %c57_359 = arith.constant 57 : index
    %c0_360 = arith.constant 0 : index
    %601 = vector.load %arg26[%c1_358, %c57_359, %c0_360] : memref<2x64x64xf32, #tpu.memory_space<vmem>>, vector<1x1x64xf32>
    %602 = vector.shape_cast %601 : vector<1x1x64xf32> to vector<1x64xf32>
    %603 = vector.shape_cast %600 : vector<1x64xf32> to vector<1x1x64xf32>
    tpu.vector_store %arg26[%c1_358, %c57_359, %c0_360], %603 {strides = array<i32>} : memref<2x64x64xf32, #tpu.memory_space<vmem>>, vector<1x1x64xf32>,
    %604 = vector.extract_strided_slice %115 {offsets = [1, 3712], sizes = [1, 64], strides = [1, 1]} : vector<2x4096xf32> to vector<1x64xf32>
    %c1_361 = arith.constant 1 : index
    %c58_362 = arith.constant 58 : index
    %c0_363 = arith.constant 0 : index
    %605 = vector.load %arg26[%c1_361, %c58_362, %c0_363] : memref<2x64x64xf32, #tpu.memory_space<vmem>>, vector<1x1x64xf32>
    %606 = vector.shape_cast %605 : vector<1x1x64xf32> to vector<1x64xf32>
    %607 = vector.shape_cast %604 : vector<1x64xf32> to vector<1x1x64xf32>
    tpu.vector_store %arg26[%c1_361, %c58_362, %c0_363], %607 {strides = array<i32>} : memref<2x64x64xf32, #tpu.memory_space<vmem>>, vector<1x1x64xf32>,
    %608 = vector.extract_strided_slice %115 {offsets = [1, 3776], sizes = [1, 64], strides = [1, 1]} : vector<2x4096xf32> to vector<1x64xf32>
    %c1_364 = arith.constant 1 : index
    %c59_365 = arith.constant 59 : index
    %c0_366 = arith.constant 0 : index
    %609 = vector.load %arg26[%c1_364, %c59_365, %c0_366] : memref<2x64x64xf32, #tpu.memory_space<vmem>>, vector<1x1x64xf32>
    %610 = vector.shape_cast %609 : vector<1x1x64xf32> to vector<1x64xf32>
    %611 = vector.shape_cast %608 : vector<1x64xf32> to vector<1x1x64xf32>
    tpu.vector_store %arg26[%c1_364, %c59_365, %c0_366], %611 {strides = array<i32>} : memref<2x64x64xf32, #tpu.memory_space<vmem>>, vector<1x1x64xf32>,
    %612 = vector.extract_strided_slice %115 {offsets = [1, 3840], sizes = [1, 64], strides = [1, 1]} : vector<2x4096xf32> to vector<1x64xf32>
    %c1_367 = arith.constant 1 : index
    %c60_368 = arith.constant 60 : index
    %c0_369 = arith.constant 0 : index
    %613 = vector.load %arg26[%c1_367, %c60_368, %c0_369] : memref<2x64x64xf32, #tpu.memory_space<vmem>>, vector<1x1x64xf32>
    %614 = vector.shape_cast %613 : vector<1x1x64xf32> to vector<1x64xf32>
    %615 = vector.shape_cast %612 : vector<1x64xf32> to vector<1x1x64xf32>
    tpu.vector_store %arg26[%c1_367, %c60_368, %c0_369], %615 {strides = array<i32>} : memref<2x64x64xf32, #tpu.memory_space<vmem>>, vector<1x1x64xf32>,
    %616 = vector.extract_strided_slice %115 {offsets = [1, 3904], sizes = [1, 64], strides = [1, 1]} : vector<2x4096xf32> to vector<1x64xf32>
    %c1_370 = arith.constant 1 : index
    %c61_371 = arith.constant 61 : index
    %c0_372 = arith.constant 0 : index
    %617 = vector.load %arg26[%c1_370, %c61_371, %c0_372] : memref<2x64x64xf32, #tpu.memory_space<vmem>>, vector<1x1x64xf32>
    %618 = vector.shape_cast %617 : vector<1x1x64xf32> to vector<1x64xf32>
    %619 = vector.shape_cast %616 : vector<1x64xf32> to vector<1x1x64xf32>
    tpu.vector_store %arg26[%c1_370, %c61_371, %c0_372], %619 {strides = array<i32>} : memref<2x64x64xf32, #tpu.memory_space<vmem>>, vector<1x1x64xf32>,
    %620 = vector.extract_strided_slice %115 {offsets = [1, 3968], sizes = [1, 64], strides = [1, 1]} : vector<2x4096xf32> to vector<1x64xf32>
    %c1_373 = arith.constant 1 : index
    %c62_374 = arith.constant 62 : index
    %c0_375 = arith.constant 0 : index
    %621 = vector.load %arg26[%c1_373, %c62_374, %c0_375] : memref<2x64x64xf32, #tpu.memory_space<vmem>>, vector<1x1x64xf32>
    %622 = vector.shape_cast %621 : vector<1x1x64xf32> to vector<1x64xf32>
    %623 = vector.shape_cast %620 : vector<1x64xf32> to vector<1x1x64xf32>
    tpu.vector_store %arg26[%c1_373, %c62_374, %c0_375], %623 {strides = array<i32>} : memref<2x64x64xf32, #tpu.memory_space<vmem>>, vector<1x1x64xf32>,
    %624 = vector.extract_strided_slice %115 {offsets = [1, 4032], sizes = [1, 64], strides = [1, 1]} : vector<2x4096xf32> to vector<1x64xf32>
    %c1_376 = arith.constant 1 : index
    %c63_377 = arith.constant 63 : index
    %c0_378 = arith.constant 0 : index
    %625 = vector.load %arg26[%c1_376, %c63_377, %c0_378] : memref<2x64x64xf32, #tpu.memory_space<vmem>>, vector<1x1x64xf32>
    %626 = vector.shape_cast %625 : vector<1x1x64xf32> to vector<1x64xf32>
    %627 = vector.shape_cast %624 : vector<1x64xf32> to vector<1x1x64xf32>
    tpu.vector_store %arg26[%c1_376, %c63_377, %c0_378], %627 {strides = array<i32>} : memref<2x64x64xf32, #tpu.memory_space<vmem>>, vector<1x1x64xf32>,
    %c0_379 = arith.constant 0 : index
    %c0_380 = arith.constant 0 : index
    %628 = vector.load %arg22[%c0_379, %c0_380] : memref<1x64xf32, #tpu.memory_space<vmem>>, vector<1x64xf32>
    %c0_381 = arith.constant 0 : index
    %c0_382 = arith.constant 0 : index
    %629 = vector.load %arg23[%c0_381, %c0_382] : memref<64x128xf32, #tpu.memory_space<vmem>>, vector<64x128xf32>
    %c0_383 = arith.constant 0 : index
    %c0_384 = arith.constant 0 : index
    %630 = vector.load %arg24[%c0_383, %c0_384] : memref<1x128xf32, #tpu.memory_space<vmem>>, vector<1x128xf32>
    %c0_385 = arith.constant 0 : index
    %c0_386 = arith.constant 0 : index
    %c0_387 = arith.constant 0 : index
    %631 = vector.load %arg26[%c0_385, %c0_386, %c0_387] : memref<2x64x64xf32, #tpu.memory_space<vmem>>, vector<1x64x64xf32>
    %632 = vector.shape_cast %631 : vector<1x64x64xf32> to vector<64x64xf32>
    %c0_388 = arith.constant 0 : index
    %c0_389 = arith.constant 0 : index
    %633 = vector.load %arg21[%c0_388, %c0_389] : memref<64x64xf32, #tpu.memory_space<vmem>>, vector<64x64xf32>
    %cst_390 = arith.constant dense<0.000000e+00> : vector<64x64xf32>
    %634 = tpu.matmul %632, %633, %cst_390 {dimension_numbers = #tpu.dot_dimension_numbers<[1], [0], [0], [1], [0, 0, 1, 1], [], []>} : vector<64x64xf32>, vector<64x64xf32>, vector<64x64xf32> -> vector<64x64xf32>
    %635 = vector.extract_strided_slice %83 {offsets = [0, 0], sizes = [64, 64], strides = [1, 1]} : vector<128x64xf32> to vector<64x64xf32>
    %cst_391 = arith.constant dense<0.000000e+00> : vector<64x64xf32>
    %636 = tpu.matmul %635, %634, %cst_391 {dimension_numbers = #tpu.dot_dimension_numbers<[1], [0], [0], [1], [0, 0, 1, 1], [], []>} : vector<64x64xf32>, vector<64x64xf32>, vector<64x64xf32> -> vector<64x64xf32>
    %637 = vector.broadcast %628 : vector<1x64xf32> to vector<64x64xf32>
    %638 = arith.addf %636, %637 : vector<64x64xf32>
    %cst_392 = arith.constant 0.000000e+00 : f32
    %639 = vector.broadcast %cst_392 : f32 to vector<64x64xf32>
    %640 = arith.maximumf %638, %639 : vector<64x64xf32>
    %cst_393 = arith.constant dense<0.000000e+00> : vector<64x128xf32>
    %641 = tpu.matmul %640, %629, %cst_393 {dimension_numbers = #tpu.dot_dimension_numbers<[1], [0], [0], [1], [0, 0, 1, 1], [], []>} : vector<64x64xf32>, vector<64x128xf32>, vector<64x128xf32> -> vector<64x128xf32>
    %642 = vector.broadcast %630 : vector<1x128xf32> to vector<64x128xf32>
    %643 = arith.addf %641, %642 : vector<64x128xf32>
    %cst_394 = arith.constant 0.000000e+00 : f32
    %644 = vector.broadcast %cst_394 : f32 to vector<64x128xf32>
    %645 = arith.maximumf %643, %644 : vector<64x128xf32>
    %cst_395 = arith.constant dense<0xFF800000> : vector<128xf32>
    %646 = vector.multi_reduction <maximumf>, %645, %cst_395 [0] : vector<64x128xf32> to vector<128xf32>
    %647 = vector.shape_cast %646 : vector<128xf32> to vector<1x128xf32>
    %c0_396 = arith.constant 0 : index
    %c0_397 = arith.constant 0 : index
    %648 = vector.load %arg25[%c0_396, %c0_397] : memref<2x128xf32, #tpu.memory_space<vmem>>, vector<1x128xf32>
    tpu.vector_store %arg25[%c0_396, %c0_397], %647 {strides = array<i32>} : memref<2x128xf32, #tpu.memory_space<vmem>>, vector<1x128xf32>,
    %c1_398 = arith.constant 1 : index
    %c0_399 = arith.constant 0 : index
    %c0_400 = arith.constant 0 : index
    %649 = vector.load %arg26[%c1_398, %c0_399, %c0_400] : memref<2x64x64xf32, #tpu.memory_space<vmem>>, vector<1x64x64xf32>
    %650 = vector.shape_cast %649 : vector<1x64x64xf32> to vector<64x64xf32>
    %c0_401 = arith.constant 0 : index
    %c0_402 = arith.constant 0 : index
    %651 = vector.load %arg21[%c0_401, %c0_402] : memref<64x64xf32, #tpu.memory_space<vmem>>, vector<64x64xf32>
    %cst_403 = arith.constant dense<0.000000e+00> : vector<64x64xf32>
    %652 = tpu.matmul %650, %651, %cst_403 {dimension_numbers = #tpu.dot_dimension_numbers<[1], [0], [0], [1], [0, 0, 1, 1], [], []>} : vector<64x64xf32>, vector<64x64xf32>, vector<64x64xf32> -> vector<64x64xf32>
    %653 = vector.extract_strided_slice %83 {offsets = [64, 0], sizes = [64, 64], strides = [1, 1]} : vector<128x64xf32> to vector<64x64xf32>
    %cst_404 = arith.constant dense<0.000000e+00> : vector<64x64xf32>
    %654 = tpu.matmul %653, %652, %cst_404 {dimension_numbers = #tpu.dot_dimension_numbers<[1], [0], [0], [1], [0, 0, 1, 1], [], []>} : vector<64x64xf32>, vector<64x64xf32>, vector<64x64xf32> -> vector<64x64xf32>
    %655 = vector.broadcast %628 : vector<1x64xf32> to vector<64x64xf32>
    %656 = arith.addf %654, %655 : vector<64x64xf32>
    %cst_405 = arith.constant 0.000000e+00 : f32
    %657 = vector.broadcast %cst_405 : f32 to vector<64x64xf32>
    %658 = arith.maximumf %656, %657 : vector<64x64xf32>
    %cst_406 = arith.constant dense<0.000000e+00> : vector<64x128xf32>
    %659 = tpu.matmul %658, %629, %cst_406 {dimension_numbers = #tpu.dot_dimension_numbers<[1], [0], [0], [1], [0, 0, 1, 1], [], []>} : vector<64x64xf32>, vector<64x128xf32>, vector<64x128xf32> -> vector<64x128xf32>
    %660 = vector.broadcast %630 : vector<1x128xf32> to vector<64x128xf32>
    %661 = arith.addf %659, %660 : vector<64x128xf32>
    %cst_407 = arith.constant 0.000000e+00 : f32
    %662 = vector.broadcast %cst_407 : f32 to vector<64x128xf32>
    %663 = arith.maximumf %661, %662 : vector<64x128xf32>
    %cst_408 = arith.constant dense<0xFF800000> : vector<128xf32>
    %664 = vector.multi_reduction <maximumf>, %663, %cst_408 [0] : vector<64x128xf32> to vector<128xf32>
    %665 = vector.shape_cast %664 : vector<128xf32> to vector<1x128xf32>
    %c1_409 = arith.constant 1 : index
    %c0_410 = arith.constant 0 : index
    %666 = vector.load %arg25[%c1_409, %c0_410] : memref<2x128xf32, #tpu.memory_space<vmem>>, vector<1x128xf32>
    tpu.vector_store %arg25[%c1_409, %c0_410], %665 {strides = array<i32>} : memref<2x128xf32, #tpu.memory_space<vmem>>, vector<1x128xf32>,
    return
  }
  func.func @transform_0(%arg0: i32) -> (i32, i32) {
    %c0_i32 = arith.constant 0 : i32
    %c0_i32_0 = arith.constant 0 : i32
    %c0_i32_1 = arith.constant 0 : i32
    return %c0_i32, %c0_i32_0 : i32, i32
  }
  func.func @transform_1(%arg0: i32) -> (i32, i32) {
    %c0_i32 = arith.constant 0 : i32
    %c0_i32_0 = arith.constant 0 : i32
    %c0_i32_1 = arith.constant 0 : i32
    return %c0_i32, %c0_i32_0 : i32, i32
  }
  func.func @transform_2(%arg0: i32) -> (i32, i32) {
    %c0_i32 = arith.constant 0 : i32
    %c0_i32_0 = arith.constant 0 : i32
    %c0_i32_1 = arith.constant 0 : i32
    return %c0_i32, %c0_i32_0 : i32, i32
  }
  func.func @transform_3(%arg0: i32) -> (i32, i32) {
    %c0_i32 = arith.constant 0 : i32
    %c0_i32_0 = arith.constant 0 : i32
    %c0_i32_1 = arith.constant 0 : i32
    return %c0_i32, %c0_i32_0 : i32, i32
  }
  func.func @transform_4(%arg0: i32) -> (i32, i32) {
    %c0_i32 = arith.constant 0 : i32
    %c0_i32_0 = arith.constant 0 : i32
    %c0_i32_1 = arith.constant 0 : i32
    return %c0_i32, %c0_i32_0 : i32, i32
  }
  func.func @transform_5(%arg0: i32) -> (i32, i32) {
    %c0_i32 = arith.constant 0 : i32
    %c0_i32_0 = arith.constant 0 : i32
    %c0_i32_1 = arith.constant 0 : i32
    return %c0_i32, %c0_i32_0 : i32, i32
  }
  func.func @transform_6(%arg0: i32) -> (i32, i32) {
    %c0_i32 = arith.constant 0 : i32
    %c0_i32_0 = arith.constant 0 : i32
    %c0_i32_1 = arith.constant 0 : i32
    return %c0_i32, %c0_i32_0 : i32, i32
  }
  func.func @transform_7(%arg0: i32) -> (i32, i32) {
    %c0_i32 = arith.constant 0 : i32
    %c0_i32_0 = arith.constant 0 : i32
    %c0_i32_1 = arith.constant 0 : i32
    return %c0_i32, %c0_i32_0 : i32, i32
  }
  func.func @transform_8(%arg0: i32) -> (i32, i32) {
    %c0_i32 = arith.constant 0 : i32
    %c0_i32_0 = arith.constant 0 : i32
    %c0_i32_1 = arith.constant 0 : i32
    return %c0_i32, %c0_i32_0 : i32, i32
  }
  func.func @transform_9(%arg0: i32) -> (i32, i32) {
    %c0_i32 = arith.constant 0 : i32
    %c0_i32_0 = arith.constant 0 : i32
    %c0_i32_1 = arith.constant 0 : i32
    return %c0_i32, %c0_i32_0 : i32, i32
  }
  func.func @transform_10(%arg0: i32) -> (i32, i32) {
    %c0_i32 = arith.constant 0 : i32
    %c0_i32_0 = arith.constant 0 : i32
    %c0_i32_1 = arith.constant 0 : i32
    return %c0_i32, %c0_i32_0 : i32, i32
  }
  func.func @transform_11(%arg0: i32) -> (i32, i32) {
    %c0_i32 = arith.constant 0 : i32
    %c0_i32_0 = arith.constant 0 : i32
    %c0_i32_1 = arith.constant 0 : i32
    return %c0_i32, %c0_i32_0 : i32, i32
  }
  func.func @transform_12(%arg0: i32) -> (i32, i32) {
    %c0_i32 = arith.constant 0 : i32
    %c0_i32_0 = arith.constant 0 : i32
    %c0_i32_1 = arith.constant 0 : i32
    return %c0_i32, %c0_i32_0 : i32, i32
  }
  func.func @transform_13(%arg0: i32) -> (i32, i32) {
    %c0_i32 = arith.constant 0 : i32
    %c0_i32_0 = arith.constant 0 : i32
    %c0_i32_1 = arith.constant 0 : i32
    return %c0_i32, %c0_i32_0 : i32, i32
  }
  func.func @transform_14(%arg0: i32) -> (i32, i32) {
    %c0_i32 = arith.constant 0 : i32
    %c0_i32_0 = arith.constant 0 : i32
    %c0_i32_1 = arith.constant 0 : i32
    return %c0_i32, %c0_i32_0 : i32, i32
  }
  func.func @transform_15(%arg0: i32) -> (i32, i32) {
    %c0_i32 = arith.constant 0 : i32
    %c0_i32_0 = arith.constant 0 : i32
    %c0_i32_1 = arith.constant 0 : i32
    return %c0_i32, %c0_i32_0 : i32, i32
  }
  func.func @transform_17(%arg0: i32) -> (i32, i32) {
    %c0_i32 = arith.constant 0 : i32
    %c0_i32_0 = arith.constant 0 : i32
    %c0_i32_1 = arith.constant 0 : i32
    return %c0_i32, %c0_i32_0 : i32, i32
  }
  func.func @transform_19(%arg0: i32) -> (i32, i32) {
    %c0_i32 = arith.constant 0 : i32
    %c0_i32_0 = arith.constant 0 : i32
    %c0_i32_1 = arith.constant 0 : i32
    return %c0_i32, %c0_i32_0 : i32, i32
  }
  func.func @transform_20(%arg0: i32) -> (i32, i32) {
    %c0_i32 = arith.constant 0 : i32
    %c0_i32_0 = arith.constant 0 : i32
    %c0_i32_1 = arith.constant 0 : i32
    return %c0_i32, %c0_i32_0 : i32, i32
  }
  func.func @transform_21(%arg0: i32) -> (i32, i32) {
    %c0_i32 = arith.constant 0 : i32
    %c0_i32_0 = arith.constant 0 : i32
    %c0_i32_1 = arith.constant 0 : i32
    return %c0_i32, %c0_i32_0 : i32, i32
  }
  func.func @transform_22(%arg0: i32) -> (i32, i32) {
    %c0_i32 = arith.constant 0 : i32
    %c0_i32_0 = arith.constant 0 : i32
    %c0_i32_1 = arith.constant 0 : i32
    return %c0_i32, %c0_i32_0 : i32, i32
  }
  func.func @transform_23(%arg0: i32) -> (i32, i32) {
    %c0_i32 = arith.constant 0 : i32
    %c0_i32_0 = arith.constant 0 : i32
    %c0_i32_1 = arith.constant 0 : i32
    return %c0_i32, %c0_i32_0 : i32, i32
  }
  func.func @transform_24(%arg0: i32) -> (i32, i32) {
    %c0_i32 = arith.constant 0 : i32
    %c0_i32_0 = arith.constant 0 : i32
    %c0_i32_1 = arith.constant 0 : i32
    return %c0_i32, %c0_i32_0 : i32, i32
  }
  func.func @transform_25(%arg0: i32) -> (i32, i32, i32) {
    %c0_i32 = arith.constant 0 : i32
    %c0_i32_0 = arith.constant 0 : i32
    %c0_i32_1 = arith.constant 0 : i32
    %c0_i32_2 = arith.constant 0 : i32
    return %c0_i32, %c0_i32_0, %c0_i32_1 : i32, i32, i32
  }
}

</mosaic_0001>

<llo_original>
// kernel: base_pointnet_forward.1
$region0: #{base_pointnet_forward.1}
  #allocation0 [shape = 'u32[]', space=smem, size = 0x4, offset = 0x4, fixed_abs, tag = 'smem constant byte address 0x4 - core index']
  #allocation1 [shape = 'u32[144,128]{1,0:T(1,128)}', space=vmem, size = 0x12000, scoped, tag = 'internal scratch']
  #allocation2 [shape = 'f32[512,256]{1,0:T(8,128)}', space=vmem, size = 0x80000, scoped, tag = 'scratch operand']
  #allocation3 [shape = 'f32[256,4096]{1,0:T(8,128)}', space=vmem, size = 0x400000, scoped, tag = 'scratch operand']
  #allocation4 [shape = 's32[2]{0}', space=sflag, size = 0x8, scoped, tag = 'scratch operand']
  #allocation40 [shape = 's32[]', space=sflag, size = 0x4, offset = 0, fixed_abs, tag = 'sflag constant byte address 0x0 - dummy sync flag']
  #allocation41 [shape = 's32[]', space=sflag, size = 0x4, offset = 0, fixed_abs, tag = 'sflag constant byte address 0x0 - dummy sync flag']
  #allocation42 [shape = 'u32[]', space=smem, size = 0x4, offset = 0x44, fixed_abs, tag = 'smem constant byte address 0x44 - assertion arg 0']
  #allocation43 [shape = 'u32[]', space=smem, size = 0x4, offset = 0x48, fixed_abs, tag = 'smem constant byte address 0x48 - assertion arg 1']
  #allocation44 [shape = 's32[]', space=sflag, size = 0x4, offset = 0, fixed_abs, tag = 'sflag constant byte address 0x0 - dummy sync flag']
  #allocation45 [shape = 's32[]', space=sflag, size = 0x4, offset = 0, fixed_abs, tag = 'sflag constant byte address 0x0 - dummy sync flag']
  %s0 = inlined_call_operand.vmem [shape: f32[128,3], index: 0, kind: input, shape index: {}]
  %s1 = inlined_call_operand.hbm [shape: f32[3,64], index: 1, kind: input, shape index: {}]
  %s2 = inlined_call_operand.hbm [shape: f32[1,64], index: 2, kind: input, shape index: {}]
  %s3 = inlined_call_operand.hbm [shape: f32[64,512], index: 3, kind: input, shape index: {}]
  %s4 = inlined_call_operand.hbm [shape: f32[1,512], index: 4, kind: input, shape index: {}]
  %s5 = inlined_call_operand.hbm [shape: f32[512,256], index: 5, kind: input, shape index: {}]
  %s6 = inlined_call_operand.hbm [shape: f32[1,256], index: 6, kind: input, shape index: {}]
  %s7 = inlined_call_operand.vmem [shape: f32[256,192], index: 7, kind: input, shape index: {}]
  %s8 = inlined_call_operand.hbm [shape: f32[1,192], index: 8, kind: input, shape index: {}]
  %s9 = inlined_call_operand.hbm [shape: f32[1,64], index: 9, kind: input, shape index: {}]
  %s10 = inlined_call_operand.hbm [shape: f32[64,64], index: 10, kind: input, shape index: {}]
  %s11 = inlined_call_operand.hbm [shape: f32[1,64], index: 11, kind: input, shape index: {}]
  %s12 = inlined_call_operand.hbm [shape: f32[64,64], index: 12, kind: input, shape index: {}]
  %s13 = inlined_call_operand.hbm [shape: f32[1,64], index: 13, kind: input, shape index: {}]
  %s14 = inlined_call_operand.hbm [shape: f32[64,512], index: 14, kind: input, shape index: {}]
  %s15 = inlined_call_operand.hbm [shape: f32[1,512], index: 15, kind: input, shape index: {}]
  %s16 = inlined_call_operand.hbm [shape: f32[512,256], index: 16, kind: input, shape index: {}]
  %s17 = inlined_call_operand.hbm [shape: f32[1,256], index: 17, kind: input, shape index: {}]
  %s18 = inlined_call_operand.hbm [shape: f32[256,4096], index: 18, kind: input, shape index: {}]
  %s19 = inlined_call_operand.hbm [shape: f32[1,4096], index: 19, kind: input, shape index: {}]
  %s20 = inlined_call_operand.hbm [shape: f32[64,64], index: 20, kind: input, shape index: {}]
  %s21 = inlined_call_operand.hbm [shape: f32[1,64], index: 21, kind: input, shape index: {}]
  %s22 = inlined_call_operand.hbm [shape: f32[64,128], index: 22, kind: input, shape index: {}]
  %s23 = inlined_call_operand.hbm [shape: f32[1,128], index: 23, kind: input, shape index: {}]
  %s24 = inlined_call_operand.hbm [shape: f32[2,128], index: 24, kind: output, shape index: {0}]
  %s25 = inlined_call_operand.hbm [shape: f32[2,64,64], index: 25, kind: output, shape index: {1}]
  %26 = xla_tuple %s24, %s25
  %s27 = sld [smem:[#allocation0]]
  $region194: #{base_pointnet_forward.1} parent=0
    _
  %s29 = ssub.s32 1, %s27
  %s30 = scalar_select 0, %s29, %s27
  $region1: #{base_pointnet_forward.1} parent=0
    #allocation5 [shape = 'u8[2048]{0}', space=vmem, size = 0x800, scoped, tag = 'input window, operand 1, single buffered']
    #allocation6 [shape = 's32[1]{0}', space=sflag, size = 0x4, scoped, tag = 'scoped memory for base_pointnet_forward.1']
    #allocation7 [shape = 's32[1]{0}', space=sflag, size = 0x4, scoped, tag = 'scoped memory for base_pointnet_forward.1']
    #allocation8 [shape = 'u8[512]{0}', space=vmem, size = 0x400, scoped, tag = 'input window, operand 2, single buffered']
    #allocation9 [shape = 's32[1]{0}', space=sflag, size = 0x4, scoped, tag = 'scoped memory for base_pointnet_forward.1']
    #allocation10 [shape = 'u8[131072]{0}', space=vmem, size = 0x20000, scoped, tag = 'input window, operand 3, single buffered']
    #allocation11 [shape = 'u8[2048]{0}', space=vmem, size = 0x800, scoped, tag = 'input window, operand 4, single buffered']
    #allocation12 [shape = 's32[1]{0}', space=sflag, size = 0x4, scoped, tag = 'scoped memory for base_pointnet_forward.1']
    #allocation13 [shape = 'u8[524288]{0}', space=vmem, size = 0x80000, scoped, tag = 'input window, operand 5, single buffered']
    #allocation14 [shape = 'u8[1024]{0}', space=vmem, size = 0x400, scoped, tag = 'input window, operand 6, single buffered']
    #allocation15 [shape = 's32[1]{0}', space=sflag, size = 0x4, scoped, tag = 'scoped memory for base_pointnet_forward.1']
    #allocation16 [shape = 'u8[1024]{0}', space=vmem, size = 0x400, scoped, tag = 'input window, operand 8, single buffered']
    #allocation17 [shape = 'u8[512]{0}', space=vmem, size = 0x400, scoped, tag = 'input window, operand 9, single buffered']
    #allocation18 [shape = 's32[1]{0}', space=sflag, size = 0x4, scoped, tag = 'scoped memory for base_pointnet_forward.1']
    #allocation19 [shape = 'u8[32768]{0}', space=vmem, size = 0x8000, scoped, tag = 'input window, operand 10, single buffered']
    #allocation20 [shape = 'u8[512]{0}', space=vmem, size = 0x400, scoped, tag = 'input window, operand 11, single buffered']
    #allocation21 [shape = 's32[1]{0}', space=sflag, size = 0x4, scoped, tag = 'scoped memory for base_pointnet_forward.1']
    #allocation22 [shape = 'u8[32768]{0}', space=vmem, size = 0x8000, scoped, tag = 'input window, operand 12, single buffered']
    #allocation23 [shape = 'u8[512]{0}', space=vmem, size = 0x400, scoped, tag = 'input window, operand 13, single buffered']
    #allocation24 [shape = 's32[1]{0}', space=sflag, size = 0x4, scoped, tag = 'scoped memory for base_pointnet_forward.1']
    #allocation25 [shape = 'u8[131072]{0}', space=vmem, size = 0x20000, scoped, tag = 'input window, operand 14, single buffered']
    #allocation26 [shape = 'u8[2048]{0}', space=vmem, size = 0x800, scoped, tag = 'input window, operand 15, single buffered']
    #allocation27 [shape = 's32[1]{0}', space=sflag, size = 0x4, scoped, tag = 'scoped memory for base_pointnet_forward.1']
    #allocation28 [shape = 'u8[1024]{0}', space=vmem, size = 0x400, scoped, tag = 'input window, operand 17, single buffered']
    #allocation29 [shape = 'u8[16384]{0}', space=vmem, size = 0x4000, scoped, tag = 'input window, operand 19, single buffered']
    #allocation30 [shape = 's32[1]{0}', space=sflag, size = 0x4, scoped, tag = 'scoped memory for base_pointnet_forward.1']
    #allocation31 [shape = 'u8[32768]{0}', space=vmem, size = 0x8000, scoped, tag = 'input window, operand 20, single buffered']
    #allocation32 [shape = 'u8[512]{0}', space=vmem, size = 0x400, scoped, tag = 'input window, operand 21, single buffered']
    #allocation33 [shape = 's32[1]{0}', space=sflag, size = 0x4, scoped, tag = 'scoped memory for base_pointnet_forward.1']
    #allocation34 [shape = 'u8[32768]{0}', space=vmem, size = 0x8000, scoped, tag = 'input window, operand 22, single buffered']
    #allocation35 [shape = 'u8[512]{0}', space=vmem, size = 0x400, scoped, tag = 'input window, operand 23, single buffered']
    #allocation36 [shape = 's32[1]{0}', space=sflag, size = 0x4, scoped, tag = 'scoped memory for base_pointnet_forward.1']
    #allocation37 [shape = 'u8[1024]{0}', space=vmem, size = 0x400, scoped, tag = 'output window, operand 0, single buffered']
    #allocation38 [shape = 'u8[65536]{0}', space=vmem, size = 0x10000, scoped, tag = 'output window, operand 1, single buffered']
    #allocation39 [shape = 's32[1]{0}', space=sflag, size = 0x4, scoped, tag = 'scoped memory for base_pointnet_forward.1']
    %31 = vsyncpa [#allocation6], 0
    %32 = vsyncpa [#allocation9], 0
    %33 = vsyncpa [#allocation12], 0
    %34 = vsyncpa [#allocation15], 0
    %35 = vsyncpa [#allocation18], 0
    %36 = vsyncpa [#allocation21], 0
    %37 = vsyncpa [#allocation24], 0
    %38 = vsyncpa [#allocation27], 0
    %39 = vsyncpa [#allocation30], 0
    %40 = vsyncpa [#allocation33], 0
    %41 = vsyncpa [#allocation36], 0
    %42 = vsyncpa [#allocation7], 0
    %43 = vsyncpa [#allocation39], 0
    // Predicated region
    $region2: #{base_pointnet_forward.1} parent=1 // pred_check
      _
    $region3: #{base_pointnet_forward.1} parent=1 // pred_check_branch
      %45 = sbr.rel (0) target = $region5
    $region4: #{base_pointnet_forward.1} parent=1 // pred_region
      _
    $region5: #{base_pointnet_forward.1} parent=1 // pred_fallthru
      _
    // Predicated region
    $region6: #{base_pointnet_forward.1} parent=1 // pred_check
      _
    $region7: #{base_pointnet_forward.1} parent=1 // pred_check_branch
      %47 = sbr.rel (0) target = $region9
    $region8: #{base_pointnet_forward.1} parent=1 // pred_region
      %s49 = ssub.s32 64, 64
      %50 = vsyncadd [#allocation6], %s49
      %s52 = sshll.u32 [#allocation5], 4
      %s53 = int_to_ptr.vmem [resolvable:$true] %s52
      %55 = dma.hbm_to_vmem [thread:$0]  %s1, 64, %s53, [#allocation6]
    $region9: #{base_pointnet_forward.1} parent=1 // pred_fallthru
      _
    // Predicated region
    $region10: #{base_pointnet_forward.1} parent=1 // pred_check
      _
    $region11: #{base_pointnet_forward.1} parent=1 // pred_check_branch
      %57 = sbr.rel (0) target = $region13
    $region12: #{base_pointnet_forward.1} parent=1 // pred_region
      %s59 = ssub.s32 16, 16
      %60 = vsyncadd [#allocation9], %s59
      %s62 = sshll.u32 [#allocation8], 4
      %s63 = int_to_ptr.vmem [resolvable:$true] %s62
      %65 = dma.hbm_to_vmem [thread:$0]  %s2, 16, %s63, [#allocation9]
    $region13: #{base_pointnet_forward.1} parent=1 // pred_fallthru
      _
    // Predicated region
    $region14: #{base_pointnet_forward.1} parent=1 // pred_check
      _
    $region15: #{base_pointnet_forward.1} parent=1 // pred_check_branch
      %67 = sbr.rel (0) target = $region17
    $region16: #{base_pointnet_forward.1} parent=1 // pred_region
      %s69 = ssub.s32 4096, 4096
      %70 = vsyncadd [#allocation9], %s69
      %s71 = sshll.u32 [#allocation10], 4
      %s72 = int_to_ptr.vmem [resolvable:$true] %s71
      %77 = dma.hbm_to_vmem [thread:$0]  %s3, 4096, %s72, [#allocation9], 512, 512, 32
    $region17: #{base_pointnet_forward.1} parent=1 // pred_fallthru
      _
    // Predicated region
    $region18: #{base_pointnet_forward.1} parent=1 // pred_check
      _
    $region19: #{base_pointnet_forward.1} parent=1 // pred_check_branch
      %79 = sbr.rel (0) target = $region21
    $region20: #{base_pointnet_forward.1} parent=1 // pred_region
      %s81 = ssub.s32 64, 64
      %82 = vsyncadd [#allocation12], %s81
      %s84 = sshll.u32 [#allocation11], 4
      %s85 = int_to_ptr.vmem [resolvable:$true] %s84
      %87 = dma.hbm_to_vmem [thread:$0]  %s4, 64, %s85, [#allocation12]
    $region21: #{base_pointnet_forward.1} parent=1 // pred_fallthru
      _
    // Predicated region
    $region22: #{base_pointnet_forward.1} parent=1 // pred_check
      _
    $region23: #{base_pointnet_forward.1} parent=1 // pred_check_branch
      %89 = sbr.rel (0) target = $region25
    $region24: #{base_pointnet_forward.1} parent=1 // pred_region
      %s91 = ssub.s32 16384, 16384
      %92 = vsyncadd [#allocation12], %s91
      %s93 = sshll.u32 [#allocation13], 4
      %s94 = int_to_ptr.vmem [resolvable:$true] %s93
      %99 = dma.hbm_to_vmem [thread:$0]  %s5, 16384, %s94, [#allocation12], 256, 256, 16
    $region25: #{base_pointnet_forward.1} parent=1 // pred_fallthru
      _
    // Predicated region
    $region26: #{base_pointnet_forward.1} parent=1 // pred_check
      _
    $region27: #{base_pointnet_forward.1} parent=1 // pred_check_branch
      %101 = sbr.rel (0) target = $region29
    $region28: #{base_pointnet_forward.1} parent=1 // pred_region
      %s103 = ssub.s32 32, 32
      %104 = vsyncadd [#allocation15], %s103
      %s106 = sshll.u32 [#allocation14], 4
      %s107 = int_to_ptr.vmem [resolvable:$true] %s106
      %109 = dma.hbm_to_vmem [thread:$0]  %s6, 32, %s107, [#allocation15]
    $region29: #{base_pointnet_forward.1} parent=1 // pred_fallthru
      _
    // Predicated region
    $region30: #{base_pointnet_forward.1} parent=1 // pred_check
      _
    $region31: #{base_pointnet_forward.1} parent=1 // pred_check_branch
      %111 = sbr.rel (0) target = $region33
    $region32: #{base_pointnet_forward.1} parent=1 // pred_region
      _
    $region33: #{base_pointnet_forward.1} parent=1 // pred_fallthru
      _
    // Predicated region
    $region34: #{base_pointnet_forward.1} parent=1 // pred_check
      _
    $region35: #{base_pointnet_forward.1} parent=1 // pred_check_branch
      %113 = sbr.rel (0) target = $region37
    $region36: #{base_pointnet_forward.1} parent=1 // pred_region
      %s115 = ssub.s32 32, 32
      %116 = vsyncadd [#allocation15], %s115
      %s118 = sshll.u32 [#allocation16], 4
      %s119 = int_to_ptr.vmem [resolvable:$true] %s118
      %121 = dma.hbm_to_vmem [thread:$0]  %s8, 32, %s119, [#allocation15]
    $region37: #{base_pointnet_forward.1} parent=1 // pred_fallthru
      _
    // Predicated region
    $region38: #{base_pointnet_forward.1} parent=1 // pred_check
      _
    $region39: #{base_pointnet_forward.1} parent=1 // pred_check_branch
      %123 = sbr.rel (0) target = $region41
    $region40: #{base_pointnet_forward.1} parent=1 // pred_region
      %s125 = ssub.s32 16, 16
      %126 = vsyncadd [#allocation18], %s125
      %s128 = sshll.u32 [#allocation17], 4
      %s129 = int_to_ptr.vmem [resolvable:$true] %s128
      %131 = dma.hbm_to_vmem [thread:$0]  %s9, 16, %s129, [#allocation18]
    $region41: #{base_pointnet_forward.1} parent=1 // pred_fallthru
      _
    // Predicated region
    $region42: #{base_pointnet_forward.1} parent=1 // pred_check
      _
    $region43: #{base_pointnet_forward.1} parent=1 // pred_check_branch
      %133 = sbr.rel (0) target = $region45
    $region44: #{base_pointnet_forward.1} parent=1 // pred_region
      %s135 = ssub.s32 1024, 1024
      %136 = vsyncadd [#allocation18], %s135
      %s137 = sshll.u32 [#allocation19], 4
      %s138 = int_to_ptr.vmem [resolvable:$true] %s137
      %143 = dma.hbm_to_vmem [thread:$0]  %s10, 1024, %s138, [#allocation18], 128, 128, 8
    $region45: #{base_pointnet_forward.1} parent=1 // pred_fallthru
      _
    // Predicated region
    $region46: #{base_pointnet_forward.1} parent=1 // pred_check
      _
    $region47: #{base_pointnet_forward.1} parent=1 // pred_check_branch
      %145 = sbr.rel (0) target = $region49
    $region48: #{base_pointnet_forward.1} parent=1 // pred_region
      %s147 = ssub.s32 16, 16
      %148 = vsyncadd [#allocation21], %s147
      %s150 = sshll.u32 [#allocation20], 4
      %s151 = int_to_ptr.vmem [resolvable:$true] %s150
      %153 = dma.hbm_to_vmem [thread:$0]  %s11, 16, %s151, [#allocation21]
    $region49: #{base_pointnet_forward.1} parent=1 // pred_fallthru
      _
    // Predicated region
    $region50: #{base_pointnet_forward.1} parent=1 // pred_check
      _
    $region51: #{base_pointnet_forward.1} parent=1 // pred_check_branch
      %155 = sbr.rel (0) target = $region53
    $region52: #{base_pointnet_forward.1} parent=1 // pred_region
      %s157 = ssub.s32 1024, 1024
      %158 = vsyncadd [#allocation21], %s157
      %s159 = sshll.u32 [#allocation22], 4
      %s160 = int_to_ptr.vmem [resolvable:$true] %s159
      %165 = dma.hbm_to_vmem [thread:$0]  %s12, 1024, %s160, [#allocation21], 128, 128, 8
    $region53: #{base_pointnet_forward.1} parent=1 // pred_fallthru
      _
    // Predicated region
    $region54: #{base_pointnet_forward.1} parent=1 // pred_check
      _
    $region55: #{base_pointnet_forward.1} parent=1 // pred_check_branch
      %167 = sbr.rel (0) target = $region57
    $region56: #{base_pointnet_forward.1} parent=1 // pred_region
      %s169 = ssub.s32 16, 16
      %170 = vsyncadd [#allocation24], %s169
      %s172 = sshll.u32 [#allocation23], 4
      %s173 = int_to_ptr.vmem [resolvable:$true] %s172
      %175 = dma.hbm_to_vmem [thread:$0]  %s13, 16, %s173, [#allocation24]
    $region57: #{base_pointnet_forward.1} parent=1 // pred_fallthru
      _
    // Predicated region
    $region58: #{base_pointnet_forward.1} parent=1 // pred_check
      _
    $region59: #{base_pointnet_forward.1} parent=1 // pred_check_branch
      %177 = sbr.rel (0) target = $region61
    $region60: #{base_pointnet_forward.1} parent=1 // pred_region
      %s179 = ssub.s32 4096, 4096
      %180 = vsyncadd [#allocation24], %s179
      %s181 = sshll.u32 [#allocation25], 4
      %s182 = int_to_ptr.vmem [resolvable:$true] %s181
      %187 = dma.hbm_to_vmem [thread:$0]  %s14, 4096, %s182, [#allocation24], 512, 512, 32
    $region61: #{base_pointnet_forward.1} parent=1 // pred_fallthru
      _
    // Predicated region
    $region62: #{base_pointnet_forward.1} parent=1 // pred_check
      _
    $region63: #{base_pointnet_forward.1} parent=1 // pred_check_branch
      %189 = sbr.rel (0) target = $region65
    $region64: #{base_pointnet_forward.1} parent=1 // pred_region
      %s191 = ssub.s32 64, 64
      %192 = vsyncadd [#allocation27], %s191
      %s194 = sshll.u32 [#allocation26], 4
      %s195 = int_to_ptr.vmem [resolvable:$true] %s194
      %197 = dma.hbm_to_vmem [thread:$0]  %s15, 64, %s195, [#allocation27]
    $region65: #{base_pointnet_forward.1} parent=1 // pred_fallthru
      _
    // Predicated region
    $region66: #{base_pointnet_forward.1} parent=1 // pred_check
      _
    $region67: #{base_pointnet_forward.1} parent=1 // pred_check_branch
      %199 = sbr.rel (0) target = $region69
    $region68: #{base_pointnet_forward.1} parent=1 // pred_region
      %s201 = ssub.s32 32, 32
      %202 = vsyncadd [#allocation27], %s201
      %s204 = sshll.u32 [#allocation28], 4
      %s205 = int_to_ptr.vmem [resolvable:$true] %s204
      %207 = dma.hbm_to_vmem [thread:$0]  %s17, 32, %s205, [#allocation27]
    $region69: #{base_pointnet_forward.1} parent=1 // pred_fallthru
      _
    // Predicated region
    $region70: #{base_pointnet_forward.1} parent=1 // pred_check
      _
    $region71: #{base_pointnet_forward.1} parent=1 // pred_check_branch
      %209 = sbr.rel (0) target = $region73
    $region72: #{base_pointnet_forward.1} parent=1 // pred_region
      %s211 = ssub.s32 512, 512
      %212 = vsyncadd [#allocation30], %s211
      %s214 = sshll.u32 [#allocation29], 4
      %s215 = int_to_ptr.vmem [resolvable:$true] %s214
      %217 = dma.hbm_to_vmem [thread:$0]  %s19, 512, %s215, [#allocation30]
    $region73: #{base_pointnet_forward.1} parent=1 // pred_fallthru
      _
    // Predicated region
    $region74: #{base_pointnet_forward.1} parent=1 // pred_check
      _
    $region75: #{base_pointnet_forward.1} parent=1 // pred_check_branch
      %219 = sbr.rel (0) target = $region77
    $region76: #{base_pointnet_forward.1} parent=1 // pred_region
      %s221 = ssub.s32 1024, 1024
      %222 = vsyncadd [#allocation30], %s221
      %s223 = sshll.u32 [#allocation31], 4
      %s224 = int_to_ptr.vmem [resolvable:$true] %s223
      %229 = dma.hbm_to_vmem [thread:$0]  %s20, 1024, %s224, [#allocation30], 128, 128, 8
    $region77: #{base_pointnet_forward.1} parent=1 // pred_fallthru
      _
    // Predicated region
    $region78: #{base_pointnet_forward.1} parent=1 // pred_check
      _
    $region79: #{base_pointnet_forward.1} parent=1 // pred_check_branch
      %231 = sbr.rel (0) target = $region81
    $region80: #{base_pointnet_forward.1} parent=1 // pred_region
      %s233 = ssub.s32 16, 16
      %234 = vsyncadd [#allocation33], %s233
      %s236 = sshll.u32 [#allocation32], 4
      %s237 = int_to_ptr.vmem [resolvable:$true] %s236
      %239 = dma.hbm_to_vmem [thread:$0]  %s21, 16, %s237, [#allocation33]
    $region81: #{base_pointnet_forward.1} parent=1 // pred_fallthru
      _
    // Predicated region
    $region82: #{base_pointnet_forward.1} parent=1 // pred_check
      _
    $region83: #{base_pointnet_forward.1} parent=1 // pred_check_branch
      %241 = sbr.rel (0) target = $region85
    $region84: #{base_pointnet_forward.1} parent=1 // pred_region
      %s243 = ssub.s32 1024, 1024
      %244 = vsyncadd [#allocation33], %s243
      %s245 = sshll.u32 [#allocation34], 4
      %s246 = int_to_ptr.vmem [resolvable:$true] %s245
      %251 = dma.hbm_to_vmem [thread:$0]  %s22, 1024, %s246, [#allocation33], 128, 128, 8
    $region85: #{base_pointnet_forward.1} parent=1 // pred_fallthru
      _
    // Predicated region
    $region86: #{base_pointnet_forward.1} parent=1 // pred_check
      _
    $region87: #{base_pointnet_forward.1} parent=1 // pred_check_branch
      %253 = sbr.rel (0) target = $region89
    $region88: #{base_pointnet_forward.1} parent=1 // pred_region
      %s255 = ssub.s32 16, 16
      %256 = vsyncadd [#allocation36], %s255
      %s258 = sshll.u32 [#allocation35], 4
      %s259 = int_to_ptr.vmem [resolvable:$true] %s258
      %261 = dma.hbm_to_vmem [thread:$0]  %s23, 16, %s259, [#allocation36]
    $region89: #{base_pointnet_forward.1} parent=1 // pred_fallthru
      _
    // Predicated region
    $region90: #{base_pointnet_forward.1} parent=1 // pred_check
      _
    $region91: #{base_pointnet_forward.1} parent=1 // pred_check_branch
      %263 = sbr.rel (0) target = $region93
    $region92: #{base_pointnet_forward.1} parent=1 // pred_region
      %264 = dma.done [#allocation6], 64
    $region93: #{base_pointnet_forward.1} parent=1 // pred_fallthru
      _
    // Predicated region
    $region94: #{base_pointnet_forward.1} parent=1 // pred_check
      _
    $region95: #{base_pointnet_forward.1} parent=1 // pred_check_branch
      %266 = sbr.rel (0) target = $region97
    $region96: #{base_pointnet_forward.1} parent=1 // pred_region
      %267 = dma.done [#allocation9], 16
    $region97: #{base_pointnet_forward.1} parent=1 // pred_fallthru
      _
    // Predicated region
    $region98: #{base_pointnet_forward.1} parent=1 // pred_check
      _
    $region99: #{base_pointnet_forward.1} parent=1 // pred_check_branch
      %269 = sbr.rel (0) target = $region101
    $region100: #{base_pointnet_forward.1} parent=1 // pred_region
      %270 = dma.done [#allocation9], 4096
    $region101: #{base_pointnet_forward.1} parent=1 // pred_fallthru
      _
    // Predicated region
    $region102: #{base_pointnet_forward.1} parent=1 // pred_check
      _
    $region103: #{base_pointnet_forward.1} parent=1 // pred_check_branch
      %272 = sbr.rel (0) target = $region105
    $region104: #{base_pointnet_forward.1} parent=1 // pred_region
      %273 = dma.done [#allocation12], 64
    $region105: #{base_pointnet_forward.1} parent=1 // pred_fallthru
      _
    // Predicated region
    $region106: #{base_pointnet_forward.1} parent=1 // pred_check
      _
    $region107: #{base_pointnet_forward.1} parent=1 // pred_check_branch
      %275 = sbr.rel (0) target = $region109
    $region108: #{base_pointnet_forward.1} parent=1 // pred_region
      %276 = dma.done [#allocation12], 16384
    $region109: #{base_pointnet_forward.1} parent=1 // pred_fallthru
      _
    // Predicated region
    $region110: #{base_pointnet_forward.1} parent=1 // pred_check
      _
    $region111: #{base_pointnet_forward.1} parent=1 // pred_check_branch
      %278 = sbr.rel (0) target = $region113
    $region112: #{base_pointnet_forward.1} parent=1 // pred_region
      %279 = dma.done [#allocation15], 32
    $region113: #{base_pointnet_forward.1} parent=1 // pred_fallthru
      _
    // Predicated region
    $region114: #{base_pointnet_forward.1} parent=1 // pred_check
      _
    $region115: #{base_pointnet_forward.1} parent=1 // pred_check_branch
      %281 = sbr.rel (0) target = $region117
    $region116: #{base_pointnet_forward.1} parent=1 // pred_region
      %282 = dma.done [#allocation15], 32
    $region117: #{base_pointnet_forward.1} parent=1 // pred_fallthru
      _
    // Predicated region
    $region118: #{base_pointnet_forward.1} parent=1 // pred_check
      _
    $region119: #{base_pointnet_forward.1} parent=1 // pred_check_branch
      %284 = sbr.rel (0) target = $region121
    $region120: #{base_pointnet_forward.1} parent=1 // pred_region
      %285 = dma.done [#allocation18], 16
    $region121: #{base_pointnet_forward.1} parent=1 // pred_fallthru
      _
    // Predicated region
    $region122: #{base_pointnet_forward.1} parent=1 // pred_check
      _
    $region123: #{base_pointnet_forward.1} parent=1 // pred_check_branch
      %287 = sbr.rel (0) target = $region125
    $region124: #{base_pointnet_forward.1} parent=1 // pred_region
      %288 = dma.done [#allocation18], 1024
    $region125: #{base_pointnet_forward.1} parent=1 // pred_fallthru
      _
    // Predicated region
    $region126: #{base_pointnet_forward.1} parent=1 // pred_check
      _
    $region127: #{base_pointnet_forward.1} parent=1 // pred_check_branch
      %290 = sbr.rel (0) target = $region129
    $region128: #{base_pointnet_forward.1} parent=1 // pred_region
      %291 = dma.done [#allocation21], 16
    $region129: #{base_pointnet_forward.1} parent=1 // pred_fallthru
      _
    // Predicated region
    $region130: #{base_pointnet_forward.1} parent=1 // pred_check
      _
    $region131: #{base_pointnet_forward.1} parent=1 // pred_check_branch
      %293 = sbr.rel (0) target = $region133
    $region132: #{base_pointnet_forward.1} parent=1 // pred_region
      %294 = dma.done [#allocation21], 1024
    $region133: #{base_pointnet_forward.1} parent=1 // pred_fallthru
      _
    // Predicated region
    $region134: #{base_pointnet_forward.1} parent=1 // pred_check
      _
    $region135: #{base_pointnet_forward.1} parent=1 // pred_check_branch
      %296 = sbr.rel (0) target = $region137
    $region136: #{base_pointnet_forward.1} parent=1 // pred_region
      %297 = dma.done [#allocation24], 16
    $region137: #{base_pointnet_forward.1} parent=1 // pred_fallthru
      _
    // Predicated region
    $region138: #{base_pointnet_forward.1} parent=1 // pred_check
      _
    $region139: #{base_pointnet_forward.1} parent=1 // pred_check_branch
      %299 = sbr.rel (0) target = $region141
    $region140: #{base_pointnet_forward.1} parent=1 // pred_region
      %300 = dma.done [#allocation24], 4096
    $region141: #{base_pointnet_forward.1} parent=1 // pred_fallthru
      _
    // Predicated region
    $region142: #{base_pointnet_forward.1} parent=1 // pred_check
      _
    $region143: #{base_pointnet_forward.1} parent=1 // pred_check_branch
      %302 = sbr.rel (0) target = $region145
    $region144: #{base_pointnet_forward.1} parent=1 // pred_region
      %303 = dma.done [#allocation27], 64
    $region145: #{base_pointnet_forward.1} parent=1 // pred_fallthru
      _
    // Predicated region
    $region146: #{base_pointnet_forward.1} parent=1 // pred_check
      _
    $region147: #{base_pointnet_forward.1} parent=1 // pred_check_branch
      %305 = sbr.rel (0) target = $region149
    $region148: #{base_pointnet_forward.1} parent=1 // pred_region
      %306 = dma.done [#allocation27], 32
    $region149: #{base_pointnet_forward.1} parent=1 // pred_fallthru
      _
    // Predicated region
    $region150: #{base_pointnet_forward.1} parent=1 // pred_check
      _
    $region151: #{base_pointnet_forward.1} parent=1 // pred_check_branch
      %308 = sbr.rel (0) target = $region153
    $region152: #{base_pointnet_forward.1} parent=1 // pred_region
      %309 = dma.done [#allocation30], 512
    $region153: #{base_pointnet_forward.1} parent=1 // pred_fallthru
      _
    // Predicated region
    $region154: #{base_pointnet_forward.1} parent=1 // pred_check
      _
    $region155: #{base_pointnet_forward.1} parent=1 // pred_check_branch
      %311 = sbr.rel (0) target = $region157
    $region156: #{base_pointnet_forward.1} parent=1 // pred_region
      %312 = dma.done [#allocation30], 1024
    $region157: #{base_pointnet_forward.1} parent=1 // pred_fallthru
      _
    // Predicated region
    $region158: #{base_pointnet_forward.1} parent=1 // pred_check
      _
    $region159: #{base_pointnet_forward.1} parent=1 // pred_check_branch
      %314 = sbr.rel (0) target = $region161
    $region160: #{base_pointnet_forward.1} parent=1 // pred_region
      %315 = dma.done [#allocation33], 16
    $region161: #{base_pointnet_forward.1} parent=1 // pred_fallthru
      _
    // Predicated region
    $region162: #{base_pointnet_forward.1} parent=1 // pred_check
      _
    $region163: #{base_pointnet_forward.1} parent=1 // pred_check_branch
      %317 = sbr.rel (0) target = $region165
    $region164: #{base_pointnet_forward.1} parent=1 // pred_region
      %318 = dma.done [#allocation33], 1024
    $region165: #{base_pointnet_forward.1} parent=1 // pred_fallthru
      _
    // Predicated region
    $region166: #{base_pointnet_forward.1} parent=1 // pred_check
      _
    $region167: #{base_pointnet_forward.1} parent=1 // pred_check_branch
      %320 = sbr.rel (0) target = $region169
    $region168: #{base_pointnet_forward.1} parent=1 // pred_region
      %321 = dma.done [#allocation36], 16
    $region169: #{base_pointnet_forward.1} parent=1 // pred_fallthru
      _
    // Predicated region
    $region170: #{base_pointnet_forward.1} parent=1 // pred_check
      _
    $region171: #{base_pointnet_forward.1} parent=1 // pred_check_branch
      %323 = sbr.rel target = $region173
    $region172: #{base_pointnet_forward.1} parent=1 // pred_region
      %324 = sst [smem:[#allocation42]] [#allocation41]
      %325 = sst [smem:[#allocation43]] [#allocation40]
    $region173: #{base_pointnet_forward.1} parent=1 // pred_fallthru
      _
    %327 = shalt.err (0)
    %s329 = sshll.u32 [#allocation2], 4
    %s330 = int_to_ptr.vmem [resolvable:$true] %s329
    %332 = dma.hbm_to_vmem [thread:$0]  %s16, 16384, %s330, [#allocation4]
    %s333 = scalar_lea.sflag [#allocation4], 1
    // Predicated region
    $region174: #{base_pointnet_forward.1} parent=1 // pred_check
      _
    $region175: #{base_pointnet_forward.1} parent=1 // pred_check_branch
      %335 = sbr.rel target = $region177
    $region176: #{base_pointnet_forward.1} parent=1 // pred_region
      %336 = sst [smem:[#allocation42]] [#allocation45]
      %337 = sst [smem:[#allocation43]] [#allocation44]
    $region177: #{base_pointnet_forward.1} parent=1 // pred_fallthru
      _
    %339 = shalt.err (0)
    %s341 = sshll.u32 [#allocation3], 4
    %s342 = int_to_ptr.vmem [resolvable:$true] %s341
    %344 = dma.hbm_to_vmem [thread:$0]  %s18, 131072, %s342, %s333
    %v345 = vld [vmem:[%s0] sm:$0xff]
    %v346 = vld [vmem:[%s0 + $0x8] sm:$0xff]
    %v347 = vld [vmem:[%s0 + $0x10] sm:$0xff]
    %v348 = vld [vmem:[%s0 + $0x18] sm:$0xff]
    %v349 = vld [vmem:[%s0 + $0x20] sm:$0xff]
    %v350 = vld [vmem:[%s0 + $0x28] sm:$0xff]
    %v351 = vld [vmem:[%s0 + $0x30] sm:$0xff]
    %v352 = vld [vmem:[%s0 + $0x38] sm:$0xff]
    %v353 = vld [vmem:[%s0 + $0x40] sm:$0xff]
    %v354 = vld [vmem:[%s0 + $0x48] sm:$0xff]
    %v355 = vld [vmem:[%s0 + $0x50] sm:$0xff]
    %v356 = vld [vmem:[%s0 + $0x58] sm:$0xff]
    %v357 = vld [vmem:[%s0 + $0x60] sm:$0xff]
    %v358 = vld [vmem:[%s0 + $0x68] sm:$0xff]
    %v359 = vld [vmem:[%s0 + $0x70] sm:$0xff]
    %v360 = vld [vmem:[%s0 + $0x78] sm:$0xff]
    %v361 = vld [vmem:[#allocation5] sm:$0x7]
    %363 = vset.pattern.permute.xlu0 0
    %364 = vperm.xlu0 %363, %v345
    %v365 = vpop.permute.xlu0 %364
    %368 = vset.pattern.permute.xlu0 0
    %369 = vperm.xlu0 %368, %v346
    %v370 = vpop.permute.xlu0 %369
    %373 = vset.pattern.permute.xlu0 0
    %374 = vperm.xlu0 %373, %v347
    %v375 = vpop.permute.xlu0 %374
    %378 = vset.pattern.permute.xlu0 0
    %379 = vperm.xlu0 %378, %v348
    %v380 = vpop.permute.xlu0 %379
    %383 = vset.pattern.permute.xlu0 0
    %384 = vperm.xlu0 %383, %v349
    %v385 = vpop.permute.xlu0 %384
    %388 = vset.pattern.permute.xlu0 0
    %389 = vperm.xlu0 %388, %v350
    %v390 = vpop.permute.xlu0 %389
    %393 = vset.pattern.permute.xlu0 0
    %394 = vperm.xlu0 %393, %v351
    %v395 = vpop.permute.xlu0 %394
    %398 = vset.pattern.permute.xlu0 0
    %399 = vperm.xlu0 %398, %v352
    %v400 = vpop.permute.xlu0 %399
    %403 = vset.pattern.permute.xlu0 0
    %404 = vperm.xlu0 %403, %v353
    %v405 = vpop.permute.xlu0 %404
    %408 = vset.pattern.permute.xlu0 0
    %409 = vperm.xlu0 %408, %v354
    %v410 = vpop.permute.xlu0 %409
    %413 = vset.pattern.permute.xlu0 0
    %414 = vperm.xlu0 %413, %v355
    %v415 = vpop.permute.xlu0 %414
    %418 = vset.pattern.permute.xlu0 0
    %419 = vperm.xlu0 %418, %v356
    %v420 = vpop.permute.xlu0 %419
    %423 = vset.pattern.permute.xlu0 0
    %424 = vperm.xlu0 %423, %v357
    %v425 = vpop.permute.xlu0 %424
    %428 = vset.pattern.permute.xlu0 0
    %429 = vperm.xlu0 %428, %v358
    %v430 = vpop.permute.xlu0 %429
    %433 = vset.pattern.permute.xlu0 0
    %434 = vperm.xlu0 %433, %v359
    %v435 = vpop.permute.xlu0 %434
    %438 = vset.pattern.permute.xlu0 0
    %439 = vperm.xlu0 %438, %v360
    %v440 = vpop.permute.xlu0 %439
    %v442 = vlaneseq
    %v443 = vshrl.u32 %v442, 7
    %v444 = vsub.s32 0, %v443
    %v445 = vrot.slane %v361, %v444
    %v446 = vmul.f32 %v365, %v445
    %v447 = vmul.f32 %v370, %v445
    %v448 = vmul.f32 %v375, %v445
    %v449 = vmul.f32 %v380, %v445
    %v450 = vmul.f32 %v385, %v445
    %v451 = vmul.f32 %v390, %v445
    %v452 = vmul.f32 %v395, %v445
    %v453 = vmul.f32 %v400, %v445
    %v454 = vmul.f32 %v405, %v445
    %v455 = vmul.f32 %v410, %v445
    %v456 = vmul.f32 %v415, %v445
    %v457 = vmul.f32 %v420, %v445
    %v458 = vmul.f32 %v425, %v445
    %v459 = vmul.f32 %v430, %v445
    %v460 = vmul.f32 %v435, %v445
    %v461 = vmul.f32 %v440, %v445
    %462 = vset.pattern.permute.xlu0 1
    %463 = vperm.xlu0 %462, %v345
    %v464 = vpop.permute.xlu0 %463
    %466 = vset.pattern.permute.xlu0 1
    %467 = vperm.xlu0 %466, %v346
    %v468 = vpop.permute.xlu0 %467
    %470 = vset.pattern.permute.xlu0 1
    %471 = vperm.xlu0 %470, %v347
    %v472 = vpop.permute.xlu0 %471
    %474 = vset.pattern.permute.xlu0 1
    %475 = vperm.xlu0 %474, %v348
    %v476 = vpop.permute.xlu0 %475
    %478 = vset.pattern.permute.xlu0 1
    %479 = vperm.xlu0 %478, %v349
    %v480 = vpop.permute.xlu0 %479
    %482 = vset.pattern.permute.xlu0 1
    %483 = vperm.xlu0 %482, %v350
    %v484 = vpop.permute.xlu0 %483
    %486 = vset.pattern.permute.xlu0 1
    %487 = vperm.xlu0 %486, %v351
    %v488 = vpop.permute.xlu0 %487
    %490 = vset.pattern.permute.xlu0 1
    %491 = vperm.xlu0 %490, %v352
    %v492 = vpop.permute.xlu0 %491
    %494 = vset.pattern.permute.xlu0 1
    %495 = vperm.xlu0 %494, %v353
    %v496 = vpop.permute.xlu0 %495
    %498 = vset.pattern.permute.xlu0 1
    %499 = vperm.xlu0 %498, %v354
    %v500 = vpop.permute.xlu0 %499
    %502 = vset.pattern.permute.xlu0 1
    %503 = vperm.xlu0 %502, %v355
    %v504 = vpop.permute.xlu0 %503
    %506 = vset.pattern.permute.xlu0 1
    %507 = vperm.xlu0 %506, %v356
    %v508 = vpop.permute.xlu0 %507
    %510 = vset.pattern.permute.xlu0 1
    %511 = vperm.xlu0 %510, %v357
    %v512 = vpop.permute.xlu0 %511
    %514 = vset.pattern.permute.xlu0 1
    %515 = vperm.xlu0 %514, %v358
    %v516 = vpop.permute.xlu0 %515
    %518 = vset.pattern.permute.xlu0 1
    %519 = vperm.xlu0 %518, %v359
    %v520 = vpop.permute.xlu0 %519
    %522 = vset.pattern.permute.xlu0 1
    %523 = vperm.xlu0 %522, %v360
    %v524 = vpop.permute.xlu0 %523
    %v526 = vlaneseq
    %v527 = vshrl.u32 %v526, 7
    %v528 = vsub.s32 1, %v527
    %v529 = vrot.slane %v361, %v528
    %v530 = vmul.f32 %v464, %v529
    %v531 = vmul.f32 %v468, %v529
    %v532 = vmul.f32 %v472, %v529
    %v533 = vmul.f32 %v476, %v529
    %v534 = vmul.f32 %v480, %v529
    %v535 = vmul.f32 %v484, %v529
    %v536 = vmul.f32 %v488, %v529
    %v537 = vmul.f32 %v492, %v529
    %v538 = vmul.f32 %v496, %v529
    %v539 = vmul.f32 %v500, %v529
    %v540 = vmul.f32 %v504, %v529
    %v541 = vmul.f32 %v508, %v529
    %v542 = vmul.f32 %v512, %v529
    %v543 = vmul.f32 %v516, %v529
    %v544 = vmul.f32 %v520, %v529
    %v545 = vmul.f32 %v524, %v529
    %v546 = vadd.f32 %v446, %v530
    %v547 = vadd.f32 %v447, %v531
    %v548 = vadd.f32 %v448, %v532
    %v549 = vadd.f32 %v449, %v533
    %v550 = vadd.f32 %v450, %v534
    %v551 = vadd.f32 %v451, %v535
    %v552 = vadd.f32 %v452, %v536
    %v553 = vadd.f32 %v453, %v537
    %v554 = vadd.f32 %v454, %v538
    %v555 = vadd.f32 %v455, %v539
    %v556 = vadd.f32 %v456, %v540
    %v557 = vadd.f32 %v457, %v541
    %v558 = vadd.f32 %v458, %v542
    %v559 = vadd.f32 %v459, %v543
    %v560 = vadd.f32 %v460, %v544
    %v561 = vadd.f32 %v461, %v545
    %562 = vset.pattern.permute.xlu0 2
    %563 = vperm.xlu0 %562, %v345
    %v564 = vpop.permute.xlu0 %563
    %566 = vset.pattern.permute.xlu0 2
    %567 = vperm.xlu0 %566, %v346
    %v568 = vpop.permute.xlu0 %567
    %570 = vset.pattern.permute.xlu0 2
    %571 = vperm.xlu0 %570, %v347
    %v572 = vpop.permute.xlu0 %571
    %574 = vset.pattern.permute.xlu0 2
    %575 = vperm.xlu0 %574, %v348
    %v576 = vpop.permute.xlu0 %575
    %578 = vset.pattern.permute.xlu0 2
    %579 = vperm.xlu0 %578, %v349
    %v580 = vpop.permute.xlu0 %579
    %582 = vset.pattern.permute.xlu0 2
    %583 = vperm.xlu0 %582, %v350
    %v584 = vpop.permute.xlu0 %583
    %586 = vset.pattern.permute.xlu0 2
    %587 = vperm.xlu0 %586, %v351
    %v588 = vpop.permute.xlu0 %587
    %590 = vset.pattern.permute.xlu0 2
    %591 = vperm.xlu0 %590, %v352
    %v592 = vpop.permute.xlu0 %591
    %594 = vset.pattern.permute.xlu0 2
    %595 = vperm.xlu0 %594, %v353
    %v596 = vpop.permute.xlu0 %595
    %598 = vset.pattern.permute.xlu0 2
    %599 = vperm.xlu0 %598, %v354
    %v600 = vpop.permute.xlu0 %599
    %602 = vset.pattern.permute.xlu0 2
    %603 = vperm.xlu0 %602, %v355
    %v604 = vpop.permute.xlu0 %603
    %606 = vset.pattern.permute.xlu0 2
    %607 = vperm.xlu0 %606, %v356
    %v608 = vpop.permute.xlu0 %607
    %610 = vset.pattern.permute.xlu0 2
    %611 = vperm.xlu0 %610, %v357
    %v612 = vpop.permute.xlu0 %611
    %614 = vset.pattern.permute.xlu0 2
    %615 = vperm.xlu0 %614, %v358
    %v616 = vpop.permute.xlu0 %615
    %618 = vset.pattern.permute.xlu0 2
    %619 = vperm.xlu0 %618, %v359
    %v620 = vpop.permute.xlu0 %619
    %622 = vset.pattern.permute.xlu0 2
    %623 = vperm.xlu0 %622, %v360
    %v624 = vpop.permute.xlu0 %623
    %v626 = vlaneseq
    %v627 = vshrl.u32 %v626, 7
    %v628 = vsub.s32 2, %v627
    %v629 = vrot.slane %v361, %v628
    %v630 = vmul.f32 %v564, %v629
    %v631 = vmul.f32 %v568, %v629
    %v632 = vmul.f32 %v572, %v629
    %v633 = vmul.f32 %v576, %v629
    %v634 = vmul.f32 %v580, %v629
    %v635 = vmul.f32 %v584, %v629
    %v636 = vmul.f32 %v588, %v629
    %v637 = vmul.f32 %v592, %v629
    %v638 = vmul.f32 %v596, %v629
    %v639 = vmul.f32 %v600, %v629
    %v640 = vmul.f32 %v604, %v629
    %v641 = vmul.f32 %v608, %v629
    %v642 = vmul.f32 %v612, %v629
    %v643 = vmul.f32 %v616, %v629
    %v644 = vmul.f32 %v620, %v629
    %v645 = vmul.f32 %v624, %v629
    %v646 = vadd.f32 %v546, %v630
    %v647 = vadd.f32 %v547, %v631
    %v648 = vadd.f32 %v548, %v632
    %v649 = vadd.f32 %v549, %v633
    %v650 = vadd.f32 %v550, %v634
    %v651 = vadd.f32 %v551, %v635
    %v652 = vadd.f32 %v552, %v636
    %v653 = vadd.f32 %v553, %v637
    %v654 = vadd.f32 %v554, %v638
    %v655 = vadd.f32 %v555, %v639
    %v656 = vadd.f32 %v556, %v640
    %v657 = vadd.f32 %v557, %v641
    %v658 = vadd.f32 %v558, %v642
    %v659 = vadd.f32 %v559, %v643
    %v660 = vadd.f32 %v560, %v644
    %v661 = vadd.f32 %v561, %v645
    %v662 = vld [vmem:[#allocation8] sm:$0x1]
    %v664 = vlaneseq
    %v665 = vshrl.u32 %v664, 7
    %v666 = vsub.s32 0, %v665
    %v667 = vrot.slane %v662, %v666
    %v669 = vadd.f32 %v646, %v667
    %v670 = vadd.f32 %v647, %v667
    %v671 = vadd.f32 %v648, %v667
    %v672 = vadd.f32 %v649, %v667
    %v673 = vadd.f32 %v650, %v667
    %v674 = vadd.f32 %v651, %v667
    %v675 = vadd.f32 %v652, %v667
    %v676 = vadd.f32 %v653, %v667
    %v677 = vadd.f32 %v654, %v667
    %v678 = vadd.f32 %v655, %v667
    %v679 = vadd.f32 %v656, %v667
    %v680 = vadd.f32 %v657, %v667
    %v681 = vadd.f32 %v658, %v667
    %v682 = vadd.f32 %v659, %v667
    %v683 = vadd.f32 %v660, %v667
    %v684 = vadd.f32 %v661, %v667
    %v685 = vmax.f32 %v669, 0.0
    %v686 = vmax.f32 %v670, 0.0
    %v687 = vmax.f32 %v671, 0.0
    %v688 = vmax.f32 %v672, 0.0
    %v689 = vmax.f32 %v673, 0.0
    %v690 = vmax.f32 %v674, 0.0
    %v691 = vmax.f32 %v675, 0.0
    %v692 = vmax.f32 %v676, 0.0
    %v693 = vmax.f32 %v677, 0.0
    %v694 = vmax.f32 %v678, 0.0
    %v695 = vmax.f32 %v679, 0.0
    %v696 = vmax.f32 %v680, 0.0
    %v697 = vmax.f32 %v681, 0.0
    %v698 = vmax.f32 %v682, 0.0
    %v699 = vmax.f32 %v683, 0.0
    %v700 = vmax.f32 %v684, 0.0
    %v701 = vld [vmem:[#allocation10] sm:$0xff]
    %v702 = vld [vmem:[#allocation10 + $0x8] sm:$0xff]
    %v703 = vld [vmem:[#allocation10 + $0x10] sm:$0xff]
    %v704 = vld [vmem:[#allocation10 + $0x18] sm:$0xff]
    %v705 = vld [vmem:[#allocation10 + $0x20] sm:$0xff]
    %v706 = vld [vmem:[#allocation10 + $0x28] sm:$0xff]
    %v707 = vld [vmem:[#allocation10 + $0x30] sm:$0xff]
    %v708 = vld [vmem:[#allocation10 + $0x38] sm:$0xff]
    %v709 = vld [vmem:[#allocation10 + $0x40] sm:$0xff]
    %v710 = vld [vmem:[#allocation10 + $0x48] sm:$0xff]
    %v711 = vld [vmem:[#allocation10 + $0x50] sm:$0xff]
    %v712 = vld [vmem:[#allocation10 + $0x58] sm:$0xff]
    %v713 = vld [vmem:[#allocation10 + $0x60] sm:$0xff]
    %v714 = vld [vmem:[#allocation10 + $0x68] sm:$0xff]
    %v715 = vld [vmem:[#allocation10 + $0x70] sm:$0xff]
    %v716 = vld [vmem:[#allocation10 + $0x78] sm:$0xff]
    %v717 = vld [vmem:[#allocation10 + $0x80] sm:$0xff]
    %v718 = vld [vmem:[#allocation10 + $0x88] sm:$0xff]
    %v719 = vld [vmem:[#allocation10 + $0x90] sm:$0xff]
    %v720 = vld [vmem:[#allocation10 + $0x98] sm:$0xff]
    %v721 = vld [vmem:[#allocation10 + $0xa0] sm:$0xff]
    %v722 = vld [vmem:[#allocation10 + $0xa8] sm:$0xff]
    %v723 = vld [vmem:[#allocation10 + $0xb0] sm:$0xff]
    %v724 = vld [vmem:[#allocation10 + $0xb8] sm:$0xff]
    %v725 = vld [vmem:[#allocation10 + $0xc0] sm:$0xff]
    %v726 = vld [vmem:[#allocation10 + $0xc8] sm:$0xff]
    %v727 = vld [vmem:[#allocation10 + $0xd0] sm:$0xff]
    %v728 = vld [vmem:[#allocation10 + $0xd8] sm:$0xff]
    %v729 = vld [vmem:[#allocation10 + $0xe0] sm:$0xff]
    %v730 = vld [vmem:[#allocation10 + $0xe8] sm:$0xff]
    %v731 = vld [vmem:[#allocation10 + $0xf0] sm:$0xff]
    %v732 = vld [vmem:[#allocation10 + $0xf8] sm:$0xff]
    %v733 = vld [vmem:[#allocation11] sm:$0xf]
    %v735 = vlaneseq
    %v736 = vshrl.u32 %v735, 7
    %v737 = vsub.s32 0, %v736
    %v738 = vrot.slane %v733, %v737
    %v739 = vlaneseq
    %v740 = vshrl.u32 %v739, 7
    %v741 = vsub.s32 1, %v740
    %v742 = vrot.slane %v733, %v741
    %v743 = vlaneseq
    %v744 = vshrl.u32 %v743, 7
    %v745 = vsub.s32 2, %v744
    %v746 = vrot.slane %v733, %v745
    %v747 = vlaneseq
    %v748 = vshrl.u32 %v747, 7
    %v749 = vsub.s32 3, %v748
    %v750 = vrot.slane %v733, %v749
    %vm755 = vcmask 523264
    %v757 = vsel %vm755, %v685, 0
    %v760 = vsel %vm755, %v686, 0
    %v763 = vsel %vm755, %v687, 0
    %v766 = vsel %vm755, %v688, 0
    %v769 = vsel %vm755, %v689, 0
    %v772 = vsel %vm755, %v690, 0
    %v775 = vsel %vm755, %v691, 0
    %v778 = vsel %vm755, %v692, 0
    %v781 = vsel %vm755, %v693, 0
    %v784 = vsel %vm755, %v694, 0
    %v787 = vsel %vm755, %v695, 0
    %v790 = vsel %vm755, %v696, 0
    %v793 = vsel %vm755, %v697, 0
    %v796 = vsel %vm755, %v698, 0
    %v799 = vsel %vm755, %v699, 0
    %v802 = vsel %vm755, %v700, 0
    %804 = vmatprep.subr.mxu0 %v702
    %805 = vmatpush1.msra.mxu0 %v701
    %806 = vmatprep.subr.mxu0 %v706
    %807 = vmatpush1.msra.mxu0 %v705
    %808 = vmatprep.subr.mxu0 %v710
    %809 = vmatpush1.msra.mxu0 %v709
    %810 = vmatprep.subr.mxu0 %v714
    %811 = vmatpush1.msra.mxu0 %v713
    %812 = vmatprep.subr.mxu0 %v718
    %813 = vmatpush1.msra.mxu0 %v717
    %814 = vmatprep.subr.mxu0 %v722
    %815 = vmatpush1.msra.mxu0 %v721
    %816 = vmatprep.subr.mxu0 %v726
    %817 = vmatpush1.msra.mxu0 %v725
    %818 = vmatprep.subr.mxu0 %v730
    %819 = vmatpush1.msra.mxu0 %v729
    %820 = vmatprep.subr.mxu0 0.0
    %821 = vmatpush1.msra.mxu0 0.0
    %822 = vmatprep.subr.mxu0 0.0
    %823 = vmatpush1.msra.mxu0 0.0
    %824 = vmatprep.subr.mxu0 0.0
    %825 = vmatpush1.msra.mxu0 0.0
    %826 = vmatprep.subr.mxu0 0.0
    %827 = vmatpush1.msra.mxu0 0.0
    %828 = vmatprep.subr.mxu0 0.0
    %829 = vmatpush1.msra.mxu0 0.0
    %830 = vmatprep.subr.mxu0 0.0
    %831 = vmatpush1.msra.mxu0 0.0
    %832 = vmatprep.subr.mxu0 0.0
    %833 = vmatpush1.msra.mxu0 0.0
    %834 = vmatprep.subr.mxu0 0.0
    %835 = vmatpush1.msra.mxu0 0.0
    %836 = vmatprep.subr.mxu0 0.0
    %837 = vmatpush1.msra.mxu0 0.0
    %838 = vmatprep.subr.mxu0 0.0
    %839 = vmatpush1.msra.mxu0 0.0
    %840 = vmatprep.subr.mxu0 0.0
    %841 = vmatpush1.msra.mxu0 0.0
    %842 = vmatprep.subr.mxu0 0.0
    %843 = vmatpush1.msra.mxu0 0.0
    %844 = vmatprep.subr.mxu0 0.0
    %845 = vmatpush1.msra.mxu0 0.0
    %846 = vmatprep.subr.mxu0 0.0
    %847 = vmatpush1.msra.mxu0 0.0
    %848 = vmatprep.subr.mxu0 0.0
    %849 = vmatpush1.msra.mxu0 0.0
    %850 = vmatprep.subr.mxu0 0.0
    %851 = vmatpush1.msra.mxu0 0.0
    %852 = vmatprep.subr.mxu0 0.0
    %853 = vmatpush1.msra.mxu0 0.0
    %854 = vmatprep.subr.mxu0 0.0
    %855 = vmatpush1.msra.mxu0 0.0
    %856 = vmatprep.subr.mxu0 0.0
    %857 = vmatpush1.msra.mxu0 0.0
    %858 = vmatprep.subr.mxu0 0.0
    %859 = vmatpush1.msra.mxu0 0.0
    %860 = vmatprep.subr.mxu0 0.0
    %861 = vmatpush1.msra.mxu0 0.0
    %862 = vmatprep.subr.mxu0 0.0
    %863 = vmatpush1.msra.mxu0 0.0
    %864 = vmatprep.subr.mxu0 0.0
    %865 = vmatpush1.msra.mxu0 0.0
    %866 = vmatprep.subr.mxu0 0.0
    %867 = vmatpush1.msra.mxu0 0.0
    %868 = vmatprep.mubr.f32.mxu0 0.0
    %869 = vmatmul.mubr.f32.gmra.mrb[0].mxu0 %v757
    %v870 = vpop.f32.mrb[0].mxu0
    %v871 = vadd.f32 %v738, %v870
    %v872 = vpop.f32.mrb[0].mxu0
    %v873 = vadd.f32 %v742, %v872
    %874 = vmatprep.mubr.f32.mxu0 0.0
    %875 = vmatmul.mubr.f32.gmra.mrb[0].mxu0 %v760
    %v876 = vpop.f32.mrb[0].mxu0
    %v877 = vadd.f32 %v738, %v876
    %v878 = vpop.f32.mrb[0].mxu0
    %v879 = vadd.f32 %v742, %v878
    %880 = vmatprep.mubr.f32.mxu0 0.0
    %881 = vmatmul.mubr.f32.gmra.mrb[0].mxu0 %v763
    %v882 = vpop.f32.mrb[0].mxu0
    %v883 = vadd.f32 %v738, %v882
    %v884 = vpop.f32.mrb[0].mxu0
    %v885 = vadd.f32 %v742, %v884
    %886 = vmatprep.mubr.f32.mxu0 0.0
    %887 = vmatmul.mubr.f32.gmra.mrb[0].mxu0 %v766
    %v888 = vpop.f32.mrb[0].mxu0
    %v889 = vadd.f32 %v738, %v888
    %v890 = vpop.f32.mrb[0].mxu0
    %v891 = vadd.f32 %v742, %v890
    %892 = vmatprep.mubr.f32.mxu0 0.0
    %893 = vmatmul.mubr.f32.gmra.mrb[0].mxu0 %v769
    %v894 = vpop.f32.mrb[0].mxu0
    %v895 = vadd.f32 %v738, %v894
    %v896 = vpop.f32.mrb[0].mxu0
    %v897 = vadd.f32 %v742, %v896
    %898 = vmatprep.mubr.f32.mxu0 0.0
    %899 = vmatmul.mubr.f32.gmra.mrb[0].mxu0 %v772
    %v900 = vpop.f32.mrb[0].mxu0
    %v901 = vadd.f32 %v738, %v900
    %v902 = vpop.f32.mrb[0].mxu0
    %v903 = vadd.f32 %v742, %v902
    %904 = vmatprep.mubr.f32.mxu0 0.0
    %905 = vmatmul.mubr.f32.gmra.mrb[0].mxu0 %v775
    %v906 = vpop.f32.mrb[0].mxu0
    %v907 = vadd.f32 %v738, %v906
    %v908 = vpop.f32.mrb[0].mxu0
    %v909 = vadd.f32 %v742, %v908
    %910 = vmatprep.mubr.f32.mxu0 0.0
    %911 = vmatmul.mubr.f32.gmra.mrb[0].mxu0 %v778
    %v912 = vpop.f32.mrb[0].mxu0
    %v913 = vadd.f32 %v738, %v912
    %v914 = vpop.f32.mrb[0].mxu0
    %v915 = vadd.f32 %v742, %v914
    %916 = vmatprep.mubr.f32.mxu0 0.0
    %917 = vmatmul.mubr.f32.gmra.mrb[0].mxu0 %v781
    %v918 = vpop.f32.mrb[0].mxu0
    %v919 = vadd.f32 %v738, %v918
    %v920 = vpop.f32.mrb[0].mxu0
    %v921 = vadd.f32 %v742, %v920
    %922 = vmatprep.mubr.f32.mxu0 0.0
    %923 = vmatmul.mubr.f32.gmra.mrb[0].mxu0 %v784
    %v924 = vpop.f32.mrb[0].mxu0
    %v925 = vadd.f32 %v738, %v924
    %v926 = vpop.f32.mrb[0].mxu0
    %v927 = vadd.f32 %v742, %v926
    %928 = vmatprep.mubr.f32.mxu0 0.0
    %929 = vmatmul.mubr.f32.gmra.mrb[0].mxu0 %v787
    %v930 = vpop.f32.mrb[0].mxu0
    %v931 = vadd.f32 %v738, %v930
    %v932 = vpop.f32.mrb[0].mxu0
    %v933 = vadd.f32 %v742, %v932
    %934 = vmatprep.mubr.f32.mxu0 0.0
    %935 = vmatmul.mubr.f32.gmra.mrb[0].mxu0 %v790
    %v936 = vpop.f32.mrb[0].mxu0
    %v937 = vadd.f32 %v738, %v936
    %v938 = vpop.f32.mrb[0].mxu0
    %v939 = vadd.f32 %v742, %v938
    %940 = vmatprep.mubr.f32.mxu0 0.0
    %941 = vmatmul.mubr.f32.gmra.mrb[0].mxu0 %v793
    %v942 = vpop.f32.mrb[0].mxu0
    %v943 = vadd.f32 %v738, %v942
    %v944 = vpop.f32.mrb[0].mxu0
    %v945 = vadd.f32 %v742, %v944
    %946 = vmatprep.mubr.f32.mxu0 0.0
    %947 = vmatmul.mubr.f32.gmra.mrb[0].mxu0 %v796
    %v948 = vpop.f32.mrb[0].mxu0
    %v949 = vadd.f32 %v738, %v948
    %v950 = vpop.f32.mrb[0].mxu0
    %v951 = vadd.f32 %v742, %v950
    %952 = vmatprep.mubr.f32.mxu0 0.0
    %953 = vmatmul.mubr.f32.gmra.mrb[0].mxu0 %v799
    %v954 = vpop.f32.mrb[0].mxu0
    %v955 = vadd.f32 %v738, %v954
    %v956 = vpop.f32.mrb[0].mxu0
    %v957 = vadd.f32 %v742, %v956
    %958 = vmatprep.mubr.f32.mxu0 0.0
    %959 = vmatmul.mubr.f32.gmra.mrb[0].mxu0 %v802
    %v960 = vpop.f32.mrb[0].mxu0
    %v961 = vadd.f32 %v738, %v960
    %v962 = vpop.f32.mrb[0].mxu0
    %v963 = vadd.f32 %v742, %v962
    %964 = vdwg.mxu0
    %965 = vmatprep.subr.mxu0 %v704
    %966 = vmatpush1.msra.mxu0 %v703
    %967 = vmatprep.subr.mxu0 %v708
    %968 = vmatpush1.msra.mxu0 %v707
    %969 = vmatprep.subr.mxu0 %v712
    %970 = vmatpush1.msra.mxu0 %v711
    %971 = vmatprep.subr.mxu0 %v716
    %972 = vmatpush1.msra.mxu0 %v715
    %973 = vmatprep.subr.mxu0 %v720
    %974 = vmatpush1.msra.mxu0 %v719
    %975 = vmatprep.subr.mxu0 %v724
    %976 = vmatpush1.msra.mxu0 %v723
    %977 = vmatprep.subr.mxu0 %v728
    %978 = vmatpush1.msra.mxu0 %v727
    %979 = vmatprep.subr.mxu0 %v732
    %980 = vmatpush1.msra.mxu0 %v731
    %981 = vmatprep.subr.mxu0 0.0
    %982 = vmatpush1.msra.mxu0 0.0
    %983 = vmatprep.subr.mxu0 0.0
    %984 = vmatpush1.msra.mxu0 0.0
    %985 = vmatprep.subr.mxu0 0.0
    %986 = vmatpush1.msra.mxu0 0.0
    %987 = vmatprep.subr.mxu0 0.0
    %988 = vmatpush1.msra.mxu0 0.0
    %989 = vmatprep.subr.mxu0 0.0
    %990 = vmatpush1.msra.mxu0 0.0
    %991 = vmatprep.subr.mxu0 0.0
    %992 = vmatpush1.msra.mxu0 0.0
    %993 = vmatprep.subr.mxu0 0.0
    %994 = vmatpush1.msra.mxu0 0.0
    %995 = vmatprep.subr.mxu0 0.0
    %996 = vmatpush1.msra.mxu0 0.0
    %997 = vmatprep.subr.mxu0 0.0
    %998 = vmatpush1.msra.mxu0 0.0
    %999 = vmatprep.subr.mxu0 0.0
    %1000 = vmatpush1.msra.mxu0 0.0
    %1001 = vmatprep.subr.mxu0 0.0
    %1002 = vmatpush1.msra.mxu0 0.0
    %1003 = vmatprep.subr.mxu0 0.0
    %1004 = vmatpush1.msra.mxu0 0.0
    %1005 = vmatprep.subr.mxu0 0.0
    %1006 = vmatpush1.msra.mxu0 0.0
    %1007 = vmatprep.subr.mxu0 0.0
    %1008 = vmatpush1.msra.mxu0 0.0
    %1009 = vmatprep.subr.mxu0 0.0
    %1010 = vmatpush1.msra.mxu0 0.0
    %1011 = vmatprep.subr.mxu0 0.0
    %1012 = vmatpush1.msra.mxu0 0.0
    %1013 = vmatprep.subr.mxu0 0.0
    %1014 = vmatpush1.msra.mxu0 0.0
    %1015 = vmatprep.subr.mxu0 0.0
    %1016 = vmatpush1.msra.mxu0 0.0
    %1017 = vmatprep.subr.mxu0 0.0
    %1018 = vmatpush1.msra.mxu0 0.0
    %1019 = vmatprep.subr.mxu0 0.0
    %1020 = vmatpush1.msra.mxu0 0.0
    %1021 = vmatprep.subr.mxu0 0.0
    %1022 = vmatpush1.msra.mxu0 0.0
    %1023 = vmatprep.subr.mxu0 0.0
    %1024 = vmatpush1.msra.mxu0 0.0
    %1025 = vmatprep.subr.mxu0 0.0
    %1026 = vmatpush1.msra.mxu0 0.0
    %1027 = vmatprep.subr.mxu0 0.0
    %1028 = vmatpush1.msra.mxu0 0.0
    %1029 = vmatprep.mubr.f32.mxu0 0.0
    %1030 = vmatmul.mubr.f32.gmra.mrb[0].mxu0 %v757
    %v1031 = vpop.f32.mrb[0].mxu0
    %v1032 = vadd.f32 %v746, %v1031
    %v1033 = vpop.f32.mrb[0].mxu0
    %v1034 = vadd.f32 %v750, %v1033
    %1035 = vmatprep.mubr.f32.mxu0 0.0
    %1036 = vmatmul.mubr.f32.gmra.mrb[0].mxu0 %v760
    %v1037 = vpop.f32.mrb[0].mxu0
    %v1038 = vadd.f32 %v746, %v1037
    %v1039 = vpop.f32.mrb[0].mxu0
    %v1040 = vadd.f32 %v750, %v1039
    %1041 = vmatprep.mubr.f32.mxu0 0.0
    %1042 = vmatmul.mubr.f32.gmra.mrb[0].mxu0 %v763
    %v1043 = vpop.f32.mrb[0].mxu0
    %v1044 = vadd.f32 %v746, %v1043
    %v1045 = vpop.f32.mrb[0].mxu0
    %v1046 = vadd.f32 %v750, %v1045
    %1047 = vmatprep.mubr.f32.mxu0 0.0
    %1048 = vmatmul.mubr.f32.gmra.mrb[0].mxu0 %v766
    %v1049 = vpop.f32.mrb[0].mxu0
    %v1050 = vadd.f32 %v746, %v1049
    %v1051 = vpop.f32.mrb[0].mxu0
    %v1052 = vadd.f32 %v750, %v1051
    %1053 = vmatprep.mubr.f32.mxu0 0.0
    %1054 = vmatmul.mubr.f32.gmra.mrb[0].mxu0 %v769
    %v1055 = vpop.f32.mrb[0].mxu0
    %v1056 = vadd.f32 %v746, %v1055
    %v1057 = vpop.f32.mrb[0].mxu0
    %v1058 = vadd.f32 %v750, %v1057
    %1059 = vmatprep.mubr.f32.mxu0 0.0
    %1060 = vmatmul.mubr.f32.gmra.mrb[0].mxu0 %v772
    %v1061 = vpop.f32.mrb[0].mxu0
    %v1062 = vadd.f32 %v746, %v1061
    %v1063 = vpop.f32.mrb[0].mxu0
    %v1064 = vadd.f32 %v750, %v1063
    %1065 = vmatprep.mubr.f32.mxu0 0.0
    %1066 = vmatmul.mubr.f32.gmra.mrb[0].mxu0 %v775
    %v1067 = vpop.f32.mrb[0].mxu0
    %v1068 = vadd.f32 %v746, %v1067
    %v1069 = vpop.f32.mrb[0].mxu0
    %v1070 = vadd.f32 %v750, %v1069
    %1071 = vmatprep.mubr.f32.mxu0 0.0
    %1072 = vmatmul.mubr.f32.gmra.mrb[0].mxu0 %v778
    %v1073 = vpop.f32.mrb[0].mxu0
    %v1074 = vadd.f32 %v746, %v1073
    %v1075 = vpop.f32.mrb[0].mxu0
    %v1076 = vadd.f32 %v750, %v1075
    %1077 = vmatprep.mubr.f32.mxu0 0.0
    %1078 = vmatmul.mubr.f32.gmra.mrb[0].mxu0 %v781
    %v1079 = vpop.f32.mrb[0].mxu0
    %v1080 = vadd.f32 %v746, %v1079
    %v1081 = vpop.f32.mrb[0].mxu0
    %v1082 = vadd.f32 %v750, %v1081
    %1083 = vmatprep.mubr.f32.mxu0 0.0
    %1084 = vmatmul.mubr.f32.gmra.mrb[0].mxu0 %v784
    %v1085 = vpop.f32.mrb[0].mxu0
    %v1086 = vadd.f32 %v746, %v1085
    %v1087 = vpop.f32.mrb[0].mxu0
    %v1088 = vadd.f32 %v750, %v1087
    %1089 = vmatprep.mubr.f32.mxu0 0.0
    %1090 = vmatmul.mubr.f32.gmra.mrb[0].mxu0 %v787
    %v1091 = vpop.f32.mrb[0].mxu0
    %v1092 = vadd.f32 %v746, %v1091
    %v1093 = vpop.f32.mrb[0].mxu0
    %v1094 = vadd.f32 %v750, %v1093
    %1095 = vmatprep.mubr.f32.mxu0 0.0
    %1096 = vmatmul.mubr.f32.gmra.mrb[0].mxu0 %v790
    %v1097 = vpop.f32.mrb[0].mxu0
    %v1098 = vadd.f32 %v746, %v1097
    %v1099 = vpop.f32.mrb[0].mxu0
    %v1100 = vadd.f32 %v750, %v1099
    %1101 = vmatprep.mubr.f32.mxu0 0.0
    %1102 = vmatmul.mubr.f32.gmra.mrb[0].mxu0 %v793
    %v1103 = vpop.f32.mrb[0].mxu0
    %v1104 = vadd.f32 %v746, %v1103
    %v1105 = vpop.f32.mrb[0].mxu0
    %v1106 = vadd.f32 %v750, %v1105
    %1107 = vmatprep.mubr.f32.mxu0 0.0
    %1108 = vmatmul.mubr.f32.gmra.mrb[0].mxu0 %v796
    %v1109 = vpop.f32.mrb[0].mxu0
    %v1110 = vadd.f32 %v746, %v1109
    %v1111 = vpop.f32.mrb[0].mxu0
    %v1112 = vadd.f32 %v750, %v1111
    %1113 = vmatprep.mubr.f32.mxu0 0.0
    %1114 = vmatmul.mubr.f32.gmra.mrb[0].mxu0 %v799
    %v1115 = vpop.f32.mrb[0].mxu0
    %v1116 = vadd.f32 %v746, %v1115
    %v1117 = vpop.f32.mrb[0].mxu0
    %v1118 = vadd.f32 %v750, %v1117
    %1119 = vmatprep.mubr.f32.mxu0 0.0
    %1120 = vmatmul.mubr.f32.gmra.mrb[0].mxu0 %v802
    %v1121 = vpop.f32.mrb[0].mxu0
    %v1122 = vadd.f32 %v746, %v1121
    %v1123 = vpop.f32.mrb[0].mxu0
    %v1124 = vadd.f32 %v750, %v1123
    %1125 = vdwg.mxu0
    %v1126 = vmax.f32 %v871, 0.0
    %v1127 = vmax.f32 %v873, 0.0
    %v1128 = vmax.f32 %v1032, 0.0
    %v1129 = vmax.f32 %v1034, 0.0
    %v1130 = vmax.f32 %v877, 0.0
    %v1131 = vmax.f32 %v879, 0.0
    %v1132 = vmax.f32 %v1038, 0.0
    %v1133 = vmax.f32 %v1040, 0.0
    %v1134 = vmax.f32 %v883, 0.0
    %v1135 = vmax.f32 %v885, 0.0
    %v1136 = vmax.f32 %v1044, 0.0
    %v1137 = vmax.f32 %v1046, 0.0
    %v1138 = vmax.f32 %v889, 0.0
    %v1139 = vmax.f32 %v891, 0.0
    %v1140 = vmax.f32 %v1050, 0.0
    %v1141 = vmax.f32 %v1052, 0.0
    %v1142 = vmax.f32 %v895, 0.0
    %v1143 = vmax.f32 %v897, 0.0
    %v1144 = vmax.f32 %v1056, 0.0
    %v1145 = vmax.f32 %v1058, 0.0
    %v1146 = vmax.f32 %v901, 0.0
    %v1147 = vmax.f32 %v903, 0.0
    %v1148 = vmax.f32 %v1062, 0.0
    %v1149 = vmax.f32 %v1064, 0.0
    %v1150 = vmax.f32 %v907, 0.0
    %v1151 = vmax.f32 %v909, 0.0
    %v1152 = vmax.f32 %v1068, 0.0
    %v1153 = vmax.f32 %v1070, 0.0
    %v1154 = vmax.f32 %v913, 0.0
    %v1155 = vmax.f32 %v915, 0.0
    %v1156 = vmax.f32 %v1074, 0.0
    %v1157 = vmax.f32 %v1076, 0.0
    %v1158 = vmax.f32 %v919, 0.0
    %v1159 = vmax.f32 %v921, 0.0
    %v1160 = vmax.f32 %v1080, 0.0
    %v1161 = vmax.f32 %v1082, 0.0
    %v1162 = vmax.f32 %v925, 0.0
    %v1163 = vmax.f32 %v927, 0.0
    %v1164 = vmax.f32 %v1086, 0.0
    %v1165 = vmax.f32 %v1088, 0.0
    %v1166 = vmax.f32 %v931, 0.0
    %v1167 = vmax.f32 %v933, 0.0
    %v1168 = vmax.f32 %v1092, 0.0
    %v1169 = vmax.f32 %v1094, 0.0
    %v1170 = vmax.f32 %v937, 0.0
    %v1171 = vmax.f32 %v939, 0.0
    %v1172 = vmax.f32 %v1098, 0.0
    %v1173 = vmax.f32 %v1100, 0.0
    %v1174 = vmax.f32 %v943, 0.0
    %v1175 = vmax.f32 %v945, 0.0
    %v1176 = vmax.f32 %v1104, 0.0
    %v1177 = vmax.f32 %v1106, 0.0
    %v1178 = vmax.f32 %v949, 0.0
    %v1179 = vmax.f32 %v951, 0.0
    %v1180 = vmax.f32 %v1110, 0.0
    %v1181 = vmax.f32 %v1112, 0.0
    %v1182 = vmax.f32 %v955, 0.0
    %v1183 = vmax.f32 %v957, 0.0
    %v1184 = vmax.f32 %v1116, 0.0
    %v1185 = vmax.f32 %v1118, 0.0
    %v1186 = vmax.f32 %v961, 0.0
    %v1187 = vmax.f32 %v963, 0.0
    %v1188 = vmax.f32 %v1122, 0.0
    %v1189 = vmax.f32 %v1124, 0.0
    %v1190 = vmax.f32 %v1126, %v1130
    %v1191 = vmax.f32 %v1190, %v1134
    %v1192 = vmax.f32 %v1191, %v1138
    %v1193 = vmax.f32 %v1192, %v1142
    %v1194 = vmax.f32 %v1193, %v1146
    %v1195 = vmax.f32 %v1194, %v1150
    %v1196 = vmax.f32 %v1195, %v1154
    %v1197 = vrot.slane %v1196, 4
    %v1198 = vmax.f32 %v1196, %v1197
    %v1199 = vrot.slane %v1198, 2
    %v1200 = vmax.f32 %v1198, %v1199
    %v1201 = vrot.slane %v1200, 1
    %v1202 = vmax.f32 %v1200, %v1201
    %v1203 = vmax.f32 %v1127, %v1131
    %v1204 = vmax.f32 %v1203, %v1135
    %v1205 = vmax.f32 %v1204, %v1139
    %v1206 = vmax.f32 %v1205, %v1143
    %v1207 = vmax.f32 %v1206, %v1147
    %v1208 = vmax.f32 %v1207, %v1151
    %v1209 = vmax.f32 %v1208, %v1155
    %v1210 = vrot.slane %v1209, 4
    %v1211 = vmax.f32 %v1209, %v1210
    %v1212 = vrot.slane %v1211, 2
    %v1213 = vmax.f32 %v1211, %v1212
    %v1214 = vrot.slane %v1213, 1
    %v1215 = vmax.f32 %v1213, %v1214
    %v1216 = vmax.f32 %v1128, %v1132
    %v1217 = vmax.f32 %v1216, %v1136
    %v1218 = vmax.f32 %v1217, %v1140
    %v1219 = vmax.f32 %v1218, %v1144
    %v1220 = vmax.f32 %v1219, %v1148
    %v1221 = vmax.f32 %v1220, %v1152
    %v1222 = vmax.f32 %v1221, %v1156
    %v1223 = vrot.slane %v1222, 4
    %v1224 = vmax.f32 %v1222, %v1223
    %v1225 = vrot.slane %v1224, 2
    %v1226 = vmax.f32 %v1224, %v1225
    %v1227 = vrot.slane %v1226, 1
    %v1228 = vmax.f32 %v1226, %v1227
    %v1229 = vmax.f32 %v1129, %v1133
    %v1230 = vmax.f32 %v1229, %v1137
    %v1231 = vmax.f32 %v1230, %v1141
    %v1232 = vmax.f32 %v1231, %v1145
    %v1233 = vmax.f32 %v1232, %v1149
    %v1234 = vmax.f32 %v1233, %v1153
    %v1235 = vmax.f32 %v1234, %v1157
    %v1236 = vrot.slane %v1235, 4
    %v1237 = vmax.f32 %v1235, %v1236
    %v1238 = vrot.slane %v1237, 2
    %v1239 = vmax.f32 %v1237, %v1238
    %v1240 = vrot.slane %v1239, 1
    %v1241 = vmax.f32 %v1239, %v1240
    %v1242 = vmax.f32 %v1158, %v1162
    %v1243 = vmax.f32 %v1242, %v1166
    %v1244 = vmax.f32 %v1243, %v1170
    %v1245 = vmax.f32 %v1244, %v1174
    %v1246 = vmax.f32 %v1245, %v1178
    %v1247 = vmax.f32 %v1246, %v1182
    %v1248 = vmax.f32 %v1247, %v1186
    %v1249 = vrot.slane %v1248, 4
    %v1250 = vmax.f32 %v1248, %v1249
    %v1251 = vrot.slane %v1250, 2
    %v1252 = vmax.f32 %v1250, %v1251
    %v1253 = vrot.slane %v1252, 1
    %v1254 = vmax.f32 %v1252, %v1253
    %v1255 = vmax.f32 %v1159, %v1163
    %v1256 = vmax.f32 %v1255, %v1167
    %v1257 = vmax.f32 %v1256, %v1171
    %v1258 = vmax.f32 %v1257, %v1175
    %v1259 = vmax.f32 %v1258, %v1179
    %v1260 = vmax.f32 %v1259, %v1183
    %v1261 = vmax.f32 %v1260, %v1187
    %v1262 = vrot.slane %v1261, 4
    %v1263 = vmax.f32 %v1261, %v1262
    %v1264 = vrot.slane %v1263, 2
    %v1265 = vmax.f32 %v1263, %v1264
    %v1266 = vrot.slane %v1265, 1
    %v1267 = vmax.f32 %v1265, %v1266
    %v1268 = vmax.f32 %v1160, %v1164
    %v1269 = vmax.f32 %v1268, %v1168
    %v1270 = vmax.f32 %v1269, %v1172
    %v1271 = vmax.f32 %v1270, %v1176
    %v1272 = vmax.f32 %v1271, %v1180
    %v1273 = vmax.f32 %v1272, %v1184
    %v1274 = vmax.f32 %v1273, %v1188
    %v1275 = vrot.slane %v1274, 4
    %v1276 = vmax.f32 %v1274, %v1275
    %v1277 = vrot.slane %v1276, 2
    %v1278 = vmax.f32 %v1276, %v1277
    %v1279 = vrot.slane %v1278, 1
    %v1280 = vmax.f32 %v1278, %v1279
    %v1281 = vmax.f32 %v1161, %v1165
    %v1282 = vmax.f32 %v1281, %v1169
    %v1283 = vmax.f32 %v1282, %v1173
    %v1284 = vmax.f32 %v1283, %v1177
    %v1285 = vmax.f32 %v1284, %v1181
    %v1286 = vmax.f32 %v1285, %v1185
    %v1287 = vmax.f32 %v1286, %v1189
    %v1288 = vrot.slane %v1287, 4
    %v1289 = vmax.f32 %v1287, %v1288
    %v1290 = vrot.slane %v1289, 2
    %v1291 = vmax.f32 %v1289, %v1290
    %v1292 = vrot.slane %v1291, 1
    %v1293 = vmax.f32 %v1291, %v1292
    %v1294 = vld [vmem:[#allocation13] sm:$0xff]
    %v1295 = vld [vmem:[#allocation13 + $0x8] sm:$0xff]
    %v1296 = vld [vmem:[#allocation13 + $0x10] sm:$0xff]
    %v1297 = vld [vmem:[#allocation13 + $0x18] sm:$0xff]
    %v1298 = vld [vmem:[#allocation13 + $0x20] sm:$0xff]
    %v1299 = vld [vmem:[#allocation13 + $0x28] sm:$0xff]
    %v1300 = vld [vmem:[#allocation13 + $0x30] sm:$0xff]
    %v1301 = vld [vmem:[#allocation13 + $0x38] sm:$0xff]
    %v1302 = vld [vmem:[#allocation13 + $0x40] sm:$0xff]
    %v1303 = vld [vmem:[#allocation13 + $0x48] sm:$0xff]
    %v1304 = vld [vmem:[#allocation13 + $0x50] sm:$0xff]
    %v1305 = vld [vmem:[#allocation13 + $0x58] sm:$0xff]
    %v1306 = vld [vmem:[#allocation13 + $0x60] sm:$0xff]
    %v1307 = vld [vmem:[#allocation13 + $0x68] sm:$0xff]
    %v1308 = vld [vmem:[#allocation13 + $0x70] sm:$0xff]
    %v1309 = vld [vmem:[#allocation13 + $0x78] sm:$0xff]
    %v1310 = vld [vmem:[#allocation13 + $0x80] sm:$0xff]
    %v1311 = vld [vmem:[#allocation13 + $0x88] sm:$0xff]
    %v1312 = vld [vmem:[#allocation13 + $0x90] sm:$0xff]
    %v1313 = vld [vmem:[#allocation13 + $0x98] sm:$0xff]
    %v1314 = vld [vmem:[#allocation13 + $0xa0] sm:$0xff]
    %v1315 = vld [vmem:[#allocation13 + $0xa8] sm:$0xff]
    %v1316 = vld [vmem:[#allocation13 + $0xb0] sm:$0xff]
    %v1317 = vld [vmem:[#allocation13 + $0xb8] sm:$0xff]
    %v1318 = vld [vmem:[#allocation13 + $0xc0] sm:$0xff]
    %v1319 = vld [vmem:[#allocation13 + $0xc8] sm:$0xff]
    %v1320 = vld [vmem:[#allocation13 + $0xd0] sm:$0xff]
    %v1321 = vld [vmem:[#allocation13 + $0xd8] sm:$0xff]
    %v1322 = vld [vmem:[#allocation13 + $0xe0] sm:$0xff]
    %v1323 = vld [vmem:[#allocation13 + $0xe8] sm:$0xff]
    %v1324 = vld [vmem:[#allocation13 + $0xf0] sm:$0xff]
    %v1325 = vld [vmem:[#allocation13 + $0xf8] sm:$0xff]
    %v1326 = vld [vmem:[#allocation13 + $0x100] sm:$0xff]
    %v1327 = vld [vmem:[#allocation13 + $0x108] sm:$0xff]
    %v1328 = vld [vmem:[#allocation13 + $0x110] sm:$0xff]
    %v1329 = vld [vmem:[#allocation13 + $0x118] sm:$0xff]
    %v1330 = vld [vmem:[#allocation13 + $0x120] sm:$0xff]
    %v1331 = vld [vmem:[#allocation13 + $0x128] sm:$0xff]
    %v1332 = vld [vmem:[#allocation13 + $0x130] sm:$0xff]
    %v1333 = vld [vmem:[#allocation13 + $0x138] sm:$0xff]
    %v1334 = vld [vmem:[#allocation13 + $0x140] sm:$0xff]
    %v1335 = vld [vmem:[#allocation13 + $0x148] sm:$0xff]
    %v1336 = vld [vmem:[#allocation13 + $0x150] sm:$0xff]
    %v1337 = vld [vmem:[#allocation13 + $0x158] sm:$0xff]
    %v1338 = vld [vmem:[#allocation13 + $0x160] sm:$0xff]
    %v1339 = vld [vmem:[#allocation13 + $0x168] sm:$0xff]
    %v1340 = vld [vmem:[#allocation13 + $0x170] sm:$0xff]
    %v1341 = vld [vmem:[#allocation13 + $0x178] sm:$0xff]
    %v1342 = vld [vmem:[#allocation13 + $0x180] sm:$0xff]
    %v1343 = vld [vmem:[#allocation13 + $0x188] sm:$0xff]
    %v1344 = vld [vmem:[#allocation13 + $0x190] sm:$0xff]
    %v1345 = vld [vmem:[#allocation13 + $0x198] sm:$0xff]
    %v1346 = vld [vmem:[#allocation13 + $0x1a0] sm:$0xff]
    %v1347 = vld [vmem:[#allocation13 + $0x1a8] sm:$0xff]
    %v1348 = vld [vmem:[#allocation13 + $0x1b0] sm:$0xff]
    %v1349 = vld [vmem:[#allocation13 + $0x1b8] sm:$0xff]
    %v1350 = vld [vmem:[#allocation13 + $0x1c0] sm:$0xff]
    %v1351 = vld [vmem:[#allocation13 + $0x1c8] sm:$0xff]
    %v1352 = vld [vmem:[#allocation13 + $0x1d0] sm:$0xff]
    %v1353 = vld [vmem:[#allocation13 + $0x1d8] sm:$0xff]
    %v1354 = vld [vmem:[#allocation13 + $0x1e0] sm:$0xff]
    %v1355 = vld [vmem:[#allocation13 + $0x1e8] sm:$0xff]
    %v1356 = vld [vmem:[#allocation13 + $0x1f0] sm:$0xff]
    %v1357 = vld [vmem:[#allocation13 + $0x1f8] sm:$0xff]
    %v1358 = vld [vmem:[#allocation13 + $0x200] sm:$0xff]
    %v1359 = vld [vmem:[#allocation13 + $0x208] sm:$0xff]
    %v1360 = vld [vmem:[#allocation13 + $0x210] sm:$0xff]
    %v1361 = vld [vmem:[#allocation13 + $0x218] sm:$0xff]
    %v1362 = vld [vmem:[#allocation13 + $0x220] sm:$0xff]
    %v1363 = vld [vmem:[#allocation13 + $0x228] sm:$0xff]
    %v1364 = vld [vmem:[#allocation13 + $0x230] sm:$0xff]
    %v1365 = vld [vmem:[#allocation13 + $0x238] sm:$0xff]
    %v1366 = vld [vmem:[#allocation13 + $0x240] sm:$0xff]
    %v1367 = vld [vmem:[#allocation13 + $0x248] sm:$0xff]
    %v1368 = vld [vmem:[#allocation13 + $0x250] sm:$0xff]
    %v1369 = vld [vmem:[#allocation13 + $0x258] sm:$0xff]
    %v1370 = vld [vmem:[#allocation13 + $0x260] sm:$0xff]
    %v1371 = vld [vmem:[#allocation13 + $0x268] sm:$0xff]
    %v1372 = vld [vmem:[#allocation13 + $0x270] sm:$0xff]
    %v1373 = vld [vmem:[#allocation13 + $0x278] sm:$0xff]
    %v1374 = vld [vmem:[#allocation13 + $0x280] sm:$0xff]
    %v1375 = vld [vmem:[#allocation13 + $0x288] sm:$0xff]
    %v1376 = vld [vmem:[#allocation13 + $0x290] sm:$0xff]
    %v1377 = vld [vmem:[#allocation13 + $0x298] sm:$0xff]
    %v1378 = vld [vmem:[#allocation13 + $0x2a0] sm:$0xff]
    %v1379 = vld [vmem:[#allocation13 + $0x2a8] sm:$0xff]
    %v1380 = vld [vmem:[#allocation13 + $0x2b0] sm:$0xff]
    %v1381 = vld [vmem:[#allocation13 + $0x2b8] sm:$0xff]
    %v1382 = vld [vmem:[#allocation13 + $0x2c0] sm:$0xff]
    %v1383 = vld [vmem:[#allocation13 + $0x2c8] sm:$0xff]
    %v1384 = vld [vmem:[#allocation13 + $0x2d0] sm:$0xff]
    %v1385 = vld [vmem:[#allocation13 + $0x2d8] sm:$0xff]
    %v1386 = vld [vmem:[#allocation13 + $0x2e0] sm:$0xff]
    %v1387 = vld [vmem:[#allocation13 + $0x2e8] sm:$0xff]
    %v1388 = vld [vmem:[#allocation13 + $0x2f0] sm:$0xff]
    %v1389 = vld [vmem:[#allocation13 + $0x2f8] sm:$0xff]
    %v1390 = vld [vmem:[#allocation13 + $0x300] sm:$0xff]
    %v1391 = vld [vmem:[#allocation13 + $0x308] sm:$0xff]
    %v1392 = vld [vmem:[#allocation13 + $0x310] sm:$0xff]
    %v1393 = vld [vmem:[#allocation13 + $0x318] sm:$0xff]
    %v1394 = vld [vmem:[#allocation13 + $0x320] sm:$0xff]
    %v1395 = vld [vmem:[#allocation13 + $0x328] sm:$0xff]
    %v1396 = vld [vmem:[#allocation13 + $0x330] sm:$0xff]
    %v1397 = vld [vmem:[#allocation13 + $0x338] sm:$0xff]
    %v1398 = vld [vmem:[#allocation13 + $0x340] sm:$0xff]
    %v1399 = vld [vmem:[#allocation13 + $0x348] sm:$0xff]
    %v1400 = vld [vmem:[#allocation13 + $0x350] sm:$0xff]
    %v1401 = vld [vmem:[#allocation13 + $0x358] sm:$0xff]
    %v1402 = vld [vmem:[#allocation13 + $0x360] sm:$0xff]
    %v1403 = vld [vmem:[#allocation13 + $0x368] sm:$0xff]
    %v1404 = vld [vmem:[#allocation13 + $0x370] sm:$0xff]
    %v1405 = vld [vmem:[#allocation13 + $0x378] sm:$0xff]
    %v1406 = vld [vmem:[#allocation13 + $0x380] sm:$0xff]
    %v1407 = vld [vmem:[#allocation13 + $0x388] sm:$0xff]
    %v1408 = vld [vmem:[#allocation13 + $0x390] sm:$0xff]
    %v1409 = vld [vmem:[#allocation13 + $0x398] sm:$0xff]
    %v1410 = vld [vmem:[#allocation13 + $0x3a0] sm:$0xff]
    %v1411 = vld [vmem:[#allocation13 + $0x3a8] sm:$0xff]
    %v1412 = vld [vmem:[#allocation13 + $0x3b0] sm:$0xff]
    %v1413 = vld [vmem:[#allocation13 + $0x3b8] sm:$0xff]
    %v1414 = vld [vmem:[#allocation13 + $0x3c0] sm:$0xff]
    %v1415 = vld [vmem:[#allocation13 + $0x3c8] sm:$0xff]
    %v1416 = vld [vmem:[#allocation13 + $0x3d0] sm:$0xff]
    %v1417 = vld [vmem:[#allocation13 + $0x3d8] sm:$0xff]
    %v1418 = vld [vmem:[#allocation13 + $0x3e0] sm:$0xff]
    %v1419 = vld [vmem:[#allocation13 + $0x3e8] sm:$0xff]
    %v1420 = vld [vmem:[#allocation13 + $0x3f0] sm:$0xff]
    %v1421 = vld [vmem:[#allocation13 + $0x3f8] sm:$0xff]
    %v1422 = vld [vmem:[#allocation14] sm:$0x3]
    %v1424 = vlaneseq
    %v1425 = vshrl.u32 %v1424, 7
    %v1426 = vsub.s32 0, %v1425
    %v1427 = vrot.slane %v1422, %v1426
    %v1428 = vlaneseq
    %v1429 = vshrl.u32 %v1428, 7
    %v1430 = vsub.s32 1, %v1429
    %v1431 = vrot.slane %v1422, %v1430
    %vm1442 = vcmask 1041409
    %v1443 = vsel %vm1442, %v1254, %v1202
    %v1444 = vsel %vm1442, %v1267, %v1215
    %v1445 = vsel %vm1442, %v1280, %v1228
    %v1446 = vsel %vm1442, %v1293, %v1241
    %1451 = vmatprep.subr.mxu0 %v1295
    %1452 = vmatpush1.msra.mxu0 %v1294
    %1453 = vmatprep.subr.mxu0 %v1297
    %1454 = vmatpush1.msra.mxu0 %v1296
    %1455 = vmatprep.subr.mxu0 %v1299
    %1456 = vmatpush1.msra.mxu0 %v1298
    %1457 = vmatprep.subr.mxu0 %v1301
    %1458 = vmatpush1.msra.mxu0 %v1300
    %1459 = vmatprep.subr.mxu0 %v1303
    %1460 = vmatpush1.msra.mxu0 %v1302
    %1461 = vmatprep.subr.mxu0 %v1305
    %1462 = vmatpush1.msra.mxu0 %v1304
    %1463 = vmatprep.subr.mxu0 %v1307
    %1464 = vmatpush1.msra.mxu0 %v1306
    %1465 = vmatprep.subr.mxu0 %v1309
    %1466 = vmatpush1.msra.mxu0 %v1308
    %1467 = vmatprep.subr.mxu0 %v1311
    %1468 = vmatpush1.msra.mxu0 %v1310
    %1469 = vmatprep.subr.mxu0 %v1313
    %1470 = vmatpush1.msra.mxu0 %v1312
    %1471 = vmatprep.subr.mxu0 %v1315
    %1472 = vmatpush1.msra.mxu0 %v1314
    %1473 = vmatprep.subr.mxu0 %v1317
    %1474 = vmatpush1.msra.mxu0 %v1316
    %1475 = vmatprep.subr.mxu0 %v1319
    %1476 = vmatpush1.msra.mxu0 %v1318
    %1477 = vmatprep.subr.mxu0 %v1321
    %1478 = vmatpush1.msra.mxu0 %v1320
    %1479 = vmatprep.subr.mxu0 %v1323
    %1480 = vmatpush1.msra.mxu0 %v1322
    %1481 = vmatprep.subr.mxu0 %v1325
    %1482 = vmatpush1.msra.mxu0 %v1324
    %1483 = vmatprep.subr.mxu0 %v1327
    %1484 = vmatpush1.msra.mxu0 %v1326
    %1485 = vmatprep.subr.mxu0 %v1329
    %1486 = vmatpush1.msra.mxu0 %v1328
    %1487 = vmatprep.subr.mxu0 %v1331
    %1488 = vmatpush1.msra.mxu0 %v1330
    %1489 = vmatprep.subr.mxu0 %v1333
    %1490 = vmatpush1.msra.mxu0 %v1332
    %1491 = vmatprep.subr.mxu0 %v1335
    %1492 = vmatpush1.msra.mxu0 %v1334
    %1493 = vmatprep.subr.mxu0 %v1337
    %1494 = vmatpush1.msra.mxu0 %v1336
    %1495 = vmatprep.subr.mxu0 %v1339
    %1496 = vmatpush1.msra.mxu0 %v1338
    %1497 = vmatprep.subr.mxu0 %v1341
    %1498 = vmatpush1.msra.mxu0 %v1340
    %1499 = vmatprep.subr.mxu0 %v1343
    %1500 = vmatpush1.msra.mxu0 %v1342
    %1501 = vmatprep.subr.mxu0 %v1345
    %1502 = vmatpush1.msra.mxu0 %v1344
    %1503 = vmatprep.subr.mxu0 %v1347
    %1504 = vmatpush1.msra.mxu0 %v1346
    %1505 = vmatprep.subr.mxu0 %v1349
    %1506 = vmatpush1.msra.mxu0 %v1348
    %1507 = vmatprep.subr.mxu0 %v1351
    %1508 = vmatpush1.msra.mxu0 %v1350
    %1509 = vmatprep.subr.mxu0 %v1353
    %1510 = vmatpush1.msra.mxu0 %v1352
    %1511 = vmatprep.subr.mxu0 %v1355
    %1512 = vmatpush1.msra.mxu0 %v1354
    %1513 = vmatprep.subr.mxu0 %v1357
    %1514 = vmatpush1.msra.mxu0 %v1356
    %1515 = vmatprep.mubr.f32.mxu0 %v1444
    %1516 = vmatmul.mubr.f32.gmra.mrb[0].mxu0 %v1443
    %v1517 = vpop.f32.mrb[0].mxu0
    %v1518 = vadd.f32 %v1427, %v1517
    %v1519 = vpop.f32.mrb[0].mxu0
    %v1520 = vadd.f32 %v1431, %v1519
    %1521 = vdwg.mxu0
    %1522 = vmatprep.subr.mxu0 %v1359
    %1523 = vmatpush1.msra.mxu0 %v1358
    %1524 = vmatprep.subr.mxu0 %v1361
    %1525 = vmatpush1.msra.mxu0 %v1360
    %1526 = vmatprep.subr.mxu0 %v1363
    %1527 = vmatpush1.msra.mxu0 %v1362
    %1528 = vmatprep.subr.mxu0 %v1365
    %1529 = vmatpush1.msra.mxu0 %v1364
    %1530 = vmatprep.subr.mxu0 %v1367
    %1531 = vmatpush1.msra.mxu0 %v1366
    %1532 = vmatprep.subr.mxu0 %v1369
    %1533 = vmatpush1.msra.mxu0 %v1368
    %1534 = vmatprep.subr.mxu0 %v1371
    %1535 = vmatpush1.msra.mxu0 %v1370
    %1536 = vmatprep.subr.mxu0 %v1373
    %1537 = vmatpush1.msra.mxu0 %v1372
    %1538 = vmatprep.subr.mxu0 %v1375
    %1539 = vmatpush1.msra.mxu0 %v1374
    %1540 = vmatprep.subr.mxu0 %v1377
    %1541 = vmatpush1.msra.mxu0 %v1376
    %1542 = vmatprep.subr.mxu0 %v1379
    %1543 = vmatpush1.msra.mxu0 %v1378
    %1544 = vmatprep.subr.mxu0 %v1381
    %1545 = vmatpush1.msra.mxu0 %v1380
    %1546 = vmatprep.subr.mxu0 %v1383
    %1547 = vmatpush1.msra.mxu0 %v1382
    %1548 = vmatprep.subr.mxu0 %v1385
    %1549 = vmatpush1.msra.mxu0 %v1384
    %1550 = vmatprep.subr.mxu0 %v1387
    %1551 = vmatpush1.msra.mxu0 %v1386
    %1552 = vmatprep.subr.mxu0 %v1389
    %1553 = vmatpush1.msra.mxu0 %v1388
    %1554 = vmatprep.subr.mxu0 %v1391
    %1555 = vmatpush1.msra.mxu0 %v1390
    %1556 = vmatprep.subr.mxu0 %v1393
    %1557 = vmatpush1.msra.mxu0 %v1392
    %1558 = vmatprep.subr.mxu0 %v1395
    %1559 = vmatpush1.msra.mxu0 %v1394
    %1560 = vmatprep.subr.mxu0 %v1397
    %1561 = vmatpush1.msra.mxu0 %v1396
    %1562 = vmatprep.subr.mxu0 %v1399
    %1563 = vmatpush1.msra.mxu0 %v1398
    %1564 = vmatprep.subr.mxu0 %v1401
    %1565 = vmatpush1.msra.mxu0 %v1400
    %1566 = vmatprep.subr.mxu0 %v1403
    %1567 = vmatpush1.msra.mxu0 %v1402
    %1568 = vmatprep.subr.mxu0 %v1405
    %1569 = vmatpush1.msra.mxu0 %v1404
    %1570 = vmatprep.subr.mxu0 %v1407
    %1571 = vmatpush1.msra.mxu0 %v1406
    %1572 = vmatprep.subr.mxu0 %v1409
    %1573 = vmatpush1.msra.mxu0 %v1408
    %1574 = vmatprep.subr.mxu0 %v1411
    %1575 = vmatpush1.msra.mxu0 %v1410
    %1576 = vmatprep.subr.mxu0 %v1413
    %1577 = vmatpush1.msra.mxu0 %v1412
    %1578 = vmatprep.subr.mxu0 %v1415
    %1579 = vmatpush1.msra.mxu0 %v1414
    %1580 = vmatprep.subr.mxu0 %v1417
    %1581 = vmatpush1.msra.mxu0 %v1416
    %1582 = vmatprep.subr.mxu0 %v1419
    %1583 = vmatpush1.msra.mxu0 %v1418
    %1584 = vmatprep.subr.mxu0 %v1421
    %1585 = vmatpush1.msra.mxu0 %v1420
    %1586 = vmatprep.mubr.f32.mxu0 %v1446
    %1587 = vmatmul.mubr.f32.gmra.mrb[0].mxu0 %v1445
    %v1588 = vpop.f32.mrb[0].mxu0
    %v1589 = vadd.f32 %v1518, %v1588
    %v1590 = vpop.f32.mrb[0].mxu0
    %v1591 = vadd.f32 %v1520, %v1590
    %1592 = vdwg.mxu0
    %v1593 = vmax.f32 %v1589, 0.0
    %v1594 = vmax.f32 %v1591, 0.0
    %v1595 = vld [vmem:[%s7] sm:$0xff]
    %v1596 = vld [vmem:[%s7 + $0x8] sm:$0xff]
    %v1597 = vld [vmem:[%s7 + $0x10] sm:$0xff]
    %v1598 = vld [vmem:[%s7 + $0x18] sm:$0xff]
    %v1599 = vld [vmem:[%s7 + $0x20] sm:$0xff]
    %v1600 = vld [vmem:[%s7 + $0x28] sm:$0xff]
    %v1601 = vld [vmem:[%s7 + $0x30] sm:$0xff]
    %v1602 = vld [vmem:[%s7 + $0x38] sm:$0xff]
    %v1603 = vld [vmem:[%s7 + $0x40] sm:$0xff]
    %v1604 = vld [vmem:[%s7 + $0x48] sm:$0xff]
    %v1605 = vld [vmem:[%s7 + $0x50] sm:$0xff]
    %v1606 = vld [vmem:[%s7 + $0x58] sm:$0xff]
    %v1607 = vld [vmem:[%s7 + $0x60] sm:$0xff]
    %v1608 = vld [vmem:[%s7 + $0x68] sm:$0xff]
    %v1609 = vld [vmem:[%s7 + $0x70] sm:$0xff]
    %v1610 = vld [vmem:[%s7 + $0x78] sm:$0xff]
    %v1611 = vld [vmem:[%s7 + $0x80] sm:$0xff]
    %v1612 = vld [vmem:[%s7 + $0x88] sm:$0xff]
    %v1613 = vld [vmem:[%s7 + $0x90] sm:$0xff]
    %v1614 = vld [vmem:[%s7 + $0x98] sm:$0xff]
    %v1615 = vld [vmem:[%s7 + $0xa0] sm:$0xff]
    %v1616 = vld [vmem:[%s7 + $0xa8] sm:$0xff]
    %v1617 = vld [vmem:[%s7 + $0xb0] sm:$0xff]
    %v1618 = vld [vmem:[%s7 + $0xb8] sm:$0xff]
    %v1619 = vld [vmem:[%s7 + $0xc0] sm:$0xff]
    %v1620 = vld [vmem:[%s7 + $0xc8] sm:$0xff]
    %v1621 = vld [vmem:[%s7 + $0xd0] sm:$0xff]
    %v1622 = vld [vmem:[%s7 + $0xd8] sm:$0xff]
    %v1623 = vld [vmem:[%s7 + $0xe0] sm:$0xff]
    %v1624 = vld [vmem:[%s7 + $0xe8] sm:$0xff]
    %v1625 = vld [vmem:[%s7 + $0xf0] sm:$0xff]
    %v1626 = vld [vmem:[%s7 + $0xf8] sm:$0xff]
    %v1627 = vld [vmem:[%s7 + $0x100] sm:$0xff]
    %v1628 = vld [vmem:[%s7 + $0x108] sm:$0xff]
    %v1629 = vld [vmem:[%s7 + $0x110] sm:$0xff]
    %v1630 = vld [vmem:[%s7 + $0x118] sm:$0xff]
    %v1631 = vld [vmem:[%s7 + $0x120] sm:$0xff]
    %v1632 = vld [vmem:[%s7 + $0x128] sm:$0xff]
    %v1633 = vld [vmem:[%s7 + $0x130] sm:$0xff]
    %v1634 = vld [vmem:[%s7 + $0x138] sm:$0xff]
    %v1635 = vld [vmem:[%s7 + $0x140] sm:$0xff]
    %v1636 = vld [vmem:[%s7 + $0x148] sm:$0xff]
    %v1637 = vld [vmem:[%s7 + $0x150] sm:$0xff]
    %v1638 = vld [vmem:[%s7 + $0x158] sm:$0xff]
    %v1639 = vld [vmem:[%s7 + $0x160] sm:$0xff]
    %v1640 = vld [vmem:[%s7 + $0x168] sm:$0xff]
    %v1641 = vld [vmem:[%s7 + $0x170] sm:$0xff]
    %v1642 = vld [vmem:[%s7 + $0x178] sm:$0xff]
    %v1643 = vld [vmem:[%s7 + $0x180] sm:$0xff]
    %v1644 = vld [vmem:[%s7 + $0x188] sm:$0xff]
    %v1645 = vld [vmem:[%s7 + $0x190] sm:$0xff]
    %v1646 = vld [vmem:[%s7 + $0x198] sm:$0xff]
    %v1647 = vld [vmem:[%s7 + $0x1a0] sm:$0xff]
    %v1648 = vld [vmem:[%s7 + $0x1a8] sm:$0xff]
    %v1649 = vld [vmem:[%s7 + $0x1b0] sm:$0xff]
    %v1650 = vld [vmem:[%s7 + $0x1b8] sm:$0xff]
    %v1651 = vld [vmem:[%s7 + $0x1c0] sm:$0xff]
    %v1652 = vld [vmem:[%s7 + $0x1c8] sm:$0xff]
    %v1653 = vld [vmem:[%s7 + $0x1d0] sm:$0xff]
    %v1654 = vld [vmem:[%s7 + $0x1d8] sm:$0xff]
    %v1655 = vld [vmem:[%s7 + $0x1e0] sm:$0xff]
    %v1656 = vld [vmem:[%s7 + $0x1e8] sm:$0xff]
    %v1657 = vld [vmem:[%s7 + $0x1f0] sm:$0xff]
    %v1658 = vld [vmem:[%s7 + $0x1f8] sm:$0xff]
    %v1659 = vld [vmem:[#allocation16] sm:$0x3]
    %v1661 = vlaneseq
    %v1662 = vshrl.u32 %v1661, 7
    %v1663 = vsub.s32 0, %v1662
    %v1664 = vrot.slane %v1659, %v1663
    %v1665 = vlaneseq
    %v1666 = vshrl.u32 %v1665, 7
    %v1667 = vsub.s32 1, %v1666
    %v1668 = vrot.slane %v1659, %v1667
    %1671 = vmatprep.subr.mxu0 %v1596
    %1672 = vmatpush1.msra.mxu0 %v1595
    %1673 = vmatprep.subr.mxu0 %v1598
    %1674 = vmatpush1.msra.mxu0 %v1597
    %1675 = vmatprep.subr.mxu0 %v1600
    %1676 = vmatpush1.msra.mxu0 %v1599
    %1677 = vmatprep.subr.mxu0 %v1602
    %1678 = vmatpush1.msra.mxu0 %v1601
    %1679 = vmatprep.subr.mxu0 %v1604
    %1680 = vmatpush1.msra.mxu0 %v1603
    %1681 = vmatprep.subr.mxu0 %v1606
    %1682 = vmatpush1.msra.mxu0 %v1605
    %1683 = vmatprep.subr.mxu0 %v1608
    %1684 = vmatpush1.msra.mxu0 %v1607
    %1685 = vmatprep.subr.mxu0 %v1610
    %1686 = vmatpush1.msra.mxu0 %v1609
    %1687 = vmatprep.subr.mxu0 %v1612
    %1688 = vmatpush1.msra.mxu0 %v1611
    %1689 = vmatprep.subr.mxu0 %v1614
    %1690 = vmatpush1.msra.mxu0 %v1613
    %1691 = vmatprep.subr.mxu0 %v1616
    %1692 = vmatpush1.msra.mxu0 %v1615
    %1693 = vmatprep.subr.mxu0 %v1618
    %1694 = vmatpush1.msra.mxu0 %v1617
    %1695 = vmatprep.subr.mxu0 %v1620
    %1696 = vmatpush1.msra.mxu0 %v1619
    %1697 = vmatprep.subr.mxu0 %v1622
    %1698 = vmatpush1.msra.mxu0 %v1621
    %1699 = vmatprep.subr.mxu0 %v1624
    %1700 = vmatpush1.msra.mxu0 %v1623
    %1701 = vmatprep.subr.mxu0 %v1626
    %1702 = vmatpush1.msra.mxu0 %v1625
    %1703 = vmatprep.subr.mxu0 %v1628
    %1704 = vmatpush1.msra.mxu0 %v1627
    %1705 = vmatprep.subr.mxu0 %v1630
    %1706 = vmatpush1.msra.mxu0 %v1629
    %1707 = vmatprep.subr.mxu0 %v1632
    %1708 = vmatpush1.msra.mxu0 %v1631
    %1709 = vmatprep.subr.mxu0 %v1634
    %1710 = vmatpush1.msra.mxu0 %v1633
    %1711 = vmatprep.subr.mxu0 %v1636
    %1712 = vmatpush1.msra.mxu0 %v1635
    %1713 = vmatprep.subr.mxu0 %v1638
    %1714 = vmatpush1.msra.mxu0 %v1637
    %1715 = vmatprep.subr.mxu0 %v1640
    %1716 = vmatpush1.msra.mxu0 %v1639
    %1717 = vmatprep.subr.mxu0 %v1642
    %1718 = vmatpush1.msra.mxu0 %v1641
    %1719 = vmatprep.subr.mxu0 %v1644
    %1720 = vmatpush1.msra.mxu0 %v1643
    %1721 = vmatprep.subr.mxu0 %v1646
    %1722 = vmatpush1.msra.mxu0 %v1645
    %1723 = vmatprep.subr.mxu0 %v1648
    %1724 = vmatpush1.msra.mxu0 %v1647
    %1725 = vmatprep.subr.mxu0 %v1650
    %1726 = vmatpush1.msra.mxu0 %v1649
    %1727 = vmatprep.subr.mxu0 %v1652
    %1728 = vmatpush1.msra.mxu0 %v1651
    %1729 = vmatprep.subr.mxu0 %v1654
    %1730 = vmatpush1.msra.mxu0 %v1653
    %1731 = vmatprep.subr.mxu0 %v1656
    %1732 = vmatpush1.msra.mxu0 %v1655
    %1733 = vmatprep.subr.mxu0 %v1658
    %1734 = vmatpush1.msra.mxu0 %v1657
    %1735 = vmatprep.mubr.f32.mxu0 %v1594
    %1736 = vmatmul.mubr.f32.gmra.mrb[0].mxu0 %v1593
    %v1737 = vpop.f32.mrb[0].mxu0
    %v1738 = vadd.f32 %v1664, %v1737
    %v1739 = vpop.f32.mrb[0].mxu0
    %v1740 = vadd.f32 %v1668, %v1739
    %1741 = vdwg.mxu0
    %v1744 = vunpack.c.l.s4 1966171168
    %v1745 = vunpack.c.0.s8 %v1744
    %v1746 = vlaneseq
    %v1747 = vshrl.u32 %v1746, 7
    %v1748 = vsub.s32 %v1745, %v1747
    %v1749 = vrot.slane %v1738, %v1748
    %v1750 = vcombine.high %v1749, %v1749
    %v1752 = vunpack.c.l.s4 1966171168
    %v1753 = vunpack.c.0.s8 %v1752
    %v1754 = vlaneseq
    %v1755 = vshrl.u32 %v1754, 7
    %v1756 = vsub.s32 %v1753, %v1755
    %v1757 = vrot.slane %v1749, %v1756
    %v1759 = vunpack.c.l.s4 1966171168
    %v1760 = vunpack.c.0.s8 %v1759
    %v1761 = vlaneseq
    %v1762 = vshrl.u32 %v1761, 7
    %v1763 = vsub.s32 %v1760, %v1762
    %v1764 = vrot.slane %v1750, %v1763
    %v1765 = vlaneseq
    %v1766 = vshrl.u32 %v1765, 7
    %v1767 = vsub.s32 0, %v1766
    %v1768 = vrot.slane %v1757, %v1767
    %v1769 = vlaneseq
    %v1770 = vshrl.u32 %v1769, 7
    %v1771 = vsub.s32 0, %v1770
    %v1772 = vrot.slane %v1764, %v1771
    %v1775 = vmul.f32 %v365, %v1768
    %v1776 = vmul.f32 %v370, %v1768
    %v1777 = vmul.f32 %v375, %v1768
    %v1778 = vmul.f32 %v380, %v1768
    %v1779 = vmul.f32 %v385, %v1768
    %v1780 = vmul.f32 %v390, %v1768
    %v1781 = vmul.f32 %v395, %v1768
    %v1782 = vmul.f32 %v400, %v1768
    %v1783 = vmul.f32 %v405, %v1772
    %v1784 = vmul.f32 %v410, %v1772
    %v1785 = vmul.f32 %v415, %v1772
    %v1786 = vmul.f32 %v420, %v1772
    %v1787 = vmul.f32 %v425, %v1772
    %v1788 = vmul.f32 %v430, %v1772
    %v1789 = vmul.f32 %v435, %v1772
    %v1790 = vmul.f32 %v440, %v1772
    %v1791 = vmul.f32 %v464, %v1768
    %v1792 = vmul.f32 %v468, %v1768
    %v1793 = vmul.f32 %v472, %v1768
    %v1794 = vmul.f32 %v476, %v1768
    %v1795 = vmul.f32 %v480, %v1768
    %v1796 = vmul.f32 %v484, %v1768
    %v1797 = vmul.f32 %v488, %v1768
    %v1798 = vmul.f32 %v492, %v1768
    %v1799 = vmul.f32 %v496, %v1772
    %v1800 = vmul.f32 %v500, %v1772
    %v1801 = vmul.f32 %v504, %v1772
    %v1802 = vmul.f32 %v508, %v1772
    %v1803 = vmul.f32 %v512, %v1772
    %v1804 = vmul.f32 %v516, %v1772
    %v1805 = vmul.f32 %v520, %v1772
    %v1806 = vmul.f32 %v524, %v1772
    %1823 = vrot.lane.b32.xlu0 %v1791, 64
    %v1824 = vpop.permute.xlu0 %1823
    %1825 = vrot.lane.b32.xlu0 %v1792, 64
    %v1826 = vpop.permute.xlu0 %1825
    %1827 = vrot.lane.b32.xlu0 %v1793, 64
    %v1828 = vpop.permute.xlu0 %1827
    %1829 = vrot.lane.b32.xlu0 %v1794, 64
    %v1830 = vpop.permute.xlu0 %1829
    %1831 = vrot.lane.b32.xlu0 %v1795, 64
    %v1832 = vpop.permute.xlu0 %1831
    %1833 = vrot.lane.b32.xlu0 %v1796, 64
    %v1834 = vpop.permute.xlu0 %1833
    %1835 = vrot.lane.b32.xlu0 %v1797, 64
    %v1836 = vpop.permute.xlu0 %1835
    %1837 = vrot.lane.b32.xlu0 %v1798, 64
    %v1838 = vpop.permute.xlu0 %1837
    %1839 = vrot.lane.b32.xlu0 %v1799, 64
    %v1840 = vpop.permute.xlu0 %1839
    %1841 = vrot.lane.b32.xlu0 %v1800, 64
    %v1842 = vpop.permute.xlu0 %1841
    %1843 = vrot.lane.b32.xlu0 %v1801, 64
    %v1844 = vpop.permute.xlu0 %1843
    %1845 = vrot.lane.b32.xlu0 %v1802, 64
    %v1846 = vpop.permute.xlu0 %1845
    %1847 = vrot.lane.b32.xlu0 %v1803, 64
    %v1848 = vpop.permute.xlu0 %1847
    %1849 = vrot.lane.b32.xlu0 %v1804, 64
    %v1850 = vpop.permute.xlu0 %1849
    %1851 = vrot.lane.b32.xlu0 %v1805, 64
    %v1852 = vpop.permute.xlu0 %1851
    %1853 = vrot.lane.b32.xlu0 %v1806, 64
    %v1854 = vpop.permute.xlu0 %1853
    %v1871 = vadd.f32 %v1775, %v1824
    %v1872 = vadd.f32 %v1776, %v1826
    %v1873 = vadd.f32 %v1777, %v1828
    %v1874 = vadd.f32 %v1778, %v1830
    %v1875 = vadd.f32 %v1779, %v1832
    %v1876 = vadd.f32 %v1780, %v1834
    %v1877 = vadd.f32 %v1781, %v1836
    %v1878 = vadd.f32 %v1782, %v1838
    %v1879 = vadd.f32 %v1783, %v1840
    %v1880 = vadd.f32 %v1784, %v1842
    %v1881 = vadd.f32 %v1785, %v1844
    %v1882 = vadd.f32 %v1786, %v1846
    %v1883 = vadd.f32 %v1787, %v1848
    %v1884 = vadd.f32 %v1788, %v1850
    %v1885 = vadd.f32 %v1789, %v1852
    %v1886 = vadd.f32 %v1790, %v1854
    %v1889 = vunpack.c.l.s4 1966171168
    %v1890 = vunpack.c.0.s8 %v1889
    %v1891 = vlaneseq
    %v1892 = vshrl.u32 %v1891, 7
    %v1893 = vsub.s32 %v1890, %v1892
    %v1894 = vrot.slane %v1740, %v1893
    %v1895 = vcombine.high %v1894, %v1894
    %v1897 = vunpack.c.l.s4 1966171168
    %v1898 = vunpack.c.0.s8 %v1897
    %v1899 = vlaneseq
    %v1900 = vshrl.u32 %v1899, 7
    %v1901 = vsub.s32 %v1898, %v1900
    %v1902 = vrot.slane %v1894, %v1901
    %v1904 = vunpack.c.l.s4 1966171168
    %v1905 = vunpack.c.0.s8 %v1904
    %v1906 = vlaneseq
    %v1907 = vshrl.u32 %v1906, 7
    %v1908 = vsub.s32 %v1905, %v1907
    %v1909 = vrot.slane %v1895, %v1908
    %v1910 = vlaneseq
    %v1911 = vshrl.u32 %v1910, 7
    %v1912 = vsub.s32 0, %v1911
    %v1913 = vrot.slane %v1902, %v1912
    %v1914 = vlaneseq
    %v1915 = vshrl.u32 %v1914, 7
    %v1916 = vsub.s32 0, %v1915
    %v1917 = vrot.slane %v1909, %v1916
    %v1920 = vmul.f32 %v564, %v1913
    %v1921 = vmul.f32 %v568, %v1913
    %v1922 = vmul.f32 %v572, %v1913
    %v1923 = vmul.f32 %v576, %v1913
    %v1924 = vmul.f32 %v580, %v1913
    %v1925 = vmul.f32 %v584, %v1913
    %v1926 = vmul.f32 %v588, %v1913
    %v1927 = vmul.f32 %v592, %v1913
    %v1928 = vmul.f32 %v596, %v1917
    %v1929 = vmul.f32 %v600, %v1917
    %v1930 = vmul.f32 %v604, %v1917
    %v1931 = vmul.f32 %v608, %v1917
    %v1932 = vmul.f32 %v612, %v1917
    %v1933 = vmul.f32 %v616, %v1917
    %v1934 = vmul.f32 %v620, %v1917
    %v1935 = vmul.f32 %v624, %v1917
    %v1936 = vadd.f32 %v1871, %v1920
    %v1937 = vadd.f32 %v1872, %v1921
    %v1938 = vadd.f32 %v1873, %v1922
    %v1939 = vadd.f32 %v1874, %v1923
    %v1940 = vadd.f32 %v1875, %v1924
    %v1941 = vadd.f32 %v1876, %v1925
    %v1942 = vadd.f32 %v1877, %v1926
    %v1943 = vadd.f32 %v1878, %v1927
    %v1944 = vadd.f32 %v1879, %v1928
    %v1945 = vadd.f32 %v1880, %v1929
    %v1946 = vadd.f32 %v1881, %v1930
    %v1947 = vadd.f32 %v1882, %v1931
    %v1948 = vadd.f32 %v1883, %v1932
    %v1949 = vadd.f32 %v1884, %v1933
    %v1950 = vadd.f32 %v1885, %v1934
    %v1951 = vadd.f32 %v1886, %v1935
    %v1952 = vld [vmem:[#allocation17] sm:$0x1]
    %v1954 = vlaneseq
    %v1955 = vshrl.u32 %v1954, 7
    %v1956 = vsub.s32 0, %v1955
    %v1957 = vrot.slane %v1952, %v1956
    %v1959 = vadd.f32 %v1936, %v1957
    %v1960 = vadd.f32 %v1937, %v1957
    %v1961 = vadd.f32 %v1938, %v1957
    %v1962 = vadd.f32 %v1939, %v1957
    %v1963 = vadd.f32 %v1940, %v1957
    %v1964 = vadd.f32 %v1941, %v1957
    %v1965 = vadd.f32 %v1942, %v1957
    %v1966 = vadd.f32 %v1943, %v1957
    %v1967 = vadd.f32 %v1944, %v1957
    %v1968 = vadd.f32 %v1945, %v1957
    %v1969 = vadd.f32 %v1946, %v1957
    %v1970 = vadd.f32 %v1947, %v1957
    %v1971 = vadd.f32 %v1948, %v1957
    %v1972 = vadd.f32 %v1949, %v1957
    %v1973 = vadd.f32 %v1950, %v1957
    %v1974 = vadd.f32 %v1951, %v1957
    %v1975 = vmax.f32 %v1959, 0.0
    %v1976 = vmax.f32 %v1960, 0.0
    %v1977 = vmax.f32 %v1961, 0.0
    %v1978 = vmax.f32 %v1962, 0.0
    %v1979 = vmax.f32 %v1963, 0.0
    %v1980 = vmax.f32 %v1964, 0.0
    %v1981 = vmax.f32 %v1965, 0.0
    %v1982 = vmax.f32 %v1966, 0.0
    %v1983 = vmax.f32 %v1967, 0.0
    %v1984 = vmax.f32 %v1968, 0.0
    %v1985 = vmax.f32 %v1969, 0.0
    %v1986 = vmax.f32 %v1970, 0.0
    %v1987 = vmax.f32 %v1971, 0.0
    %v1988 = vmax.f32 %v1972, 0.0
    %v1989 = vmax.f32 %v1973, 0.0
    %v1990 = vmax.f32 %v1974, 0.0
    %v1991 = vld [vmem:[#allocation19] sm:$0xff]
    %v1992 = vld [vmem:[#allocation19 + $0x8] sm:$0xff]
    %v1993 = vld [vmem:[#allocation19 + $0x10] sm:$0xff]
    %v1994 = vld [vmem:[#allocation19 + $0x18] sm:$0xff]
    %v1995 = vld [vmem:[#allocation19 + $0x20] sm:$0xff]
    %v1996 = vld [vmem:[#allocation19 + $0x28] sm:$0xff]
    %v1997 = vld [vmem:[#allocation19 + $0x30] sm:$0xff]
    %v1998 = vld [vmem:[#allocation19 + $0x38] sm:$0xff]
    %v1999 = vld [vmem:[#allocation20] sm:$0x1]
    %v2001 = vlaneseq
    %v2002 = vshrl.u32 %v2001, 7
    %v2003 = vsub.s32 0, %v2002
    %v2004 = vrot.slane %v1999, %v2003
    %v2007 = vsel %vm755, %v1975, 0
    %v2010 = vsel %vm755, %v1976, 0
    %v2013 = vsel %vm755, %v1977, 0
    %v2016 = vsel %vm755, %v1978, 0
    %v2019 = vsel %vm755, %v1979, 0
    %v2022 = vsel %vm755, %v1980, 0
    %v2025 = vsel %vm755, %v1981, 0
    %v2028 = vsel %vm755, %v1982, 0
    %v2031 = vsel %vm755, %v1983, 0
    %v2034 = vsel %vm755, %v1984, 0
    %v2037 = vsel %vm755, %v1985, 0
    %v2040 = vsel %vm755, %v1986, 0
    %v2043 = vsel %vm755, %v1987, 0
    %v2046 = vsel %vm755, %v1988, 0
    %v2049 = vsel %vm755, %v1989, 0
    %v2052 = vsel %vm755, %v1990, 0
    %2054 = vmatprep.subr.mxu0 0.0
    %2055 = vmatpush1.msra.mxu0 %v1991
    %2056 = vmatprep.subr.mxu0 0.0
    %2057 = vmatpush1.msra.mxu0 %v1992
    %2058 = vmatprep.subr.mxu0 0.0
    %2059 = vmatpush1.msra.mxu0 %v1993
    %2060 = vmatprep.subr.mxu0 0.0
    %2061 = vmatpush1.msra.mxu0 %v1994
    %2062 = vmatprep.subr.mxu0 0.0
    %2063 = vmatpush1.msra.mxu0 %v1995
    %2064 = vmatprep.subr.mxu0 0.0
    %2065 = vmatpush1.msra.mxu0 %v1996
    %2066 = vmatprep.subr.mxu0 0.0
    %2067 = vmatpush1.msra.mxu0 %v1997
    %2068 = vmatprep.subr.mxu0 0.0
    %2069 = vmatpush1.msra.mxu0 %v1998
    %2070 = vmatprep.subr.mxu0 0.0
    %2071 = vmatpush1.msra.mxu0 0.0
    %2072 = vmatprep.subr.mxu0 0.0
    %2073 = vmatpush1.msra.mxu0 0.0
    %2074 = vmatprep.subr.mxu0 0.0
    %2075 = vmatpush1.msra.mxu0 0.0
    %2076 = vmatprep.subr.mxu0 0.0
    %2077 = vmatpush1.msra.mxu0 0.0
    %2078 = vmatprep.subr.mxu0 0.0
    %2079 = vmatpush1.msra.mxu0 0.0
    %2080 = vmatprep.subr.mxu0 0.0
    %2081 = vmatpush1.msra.mxu0 0.0
    %2082 = vmatprep.subr.mxu0 0.0
    %2083 = vmatpush1.msra.mxu0 0.0
    %2084 = vmatprep.subr.mxu0 0.0
    %2085 = vmatpush1.msra.mxu0 0.0
    %2086 = vmatprep.subr.mxu0 0.0
    %2087 = vmatpush1.msra.mxu0 0.0
    %2088 = vmatprep.subr.mxu0 0.0
    %2089 = vmatpush1.msra.mxu0 0.0
    %2090 = vmatprep.subr.mxu0 0.0
    %2091 = vmatpush1.msra.mxu0 0.0
    %2092 = vmatprep.subr.mxu0 0.0
    %2093 = vmatpush1.msra.mxu0 0.0
    %2094 = vmatprep.subr.mxu0 0.0
    %2095 = vmatpush1.msra.mxu0 0.0
    %2096 = vmatprep.subr.mxu0 0.0
    %2097 = vmatpush1.msra.mxu0 0.0
    %2098 = vmatprep.subr.mxu0 0.0
    %2099 = vmatpush1.msra.mxu0 0.0
    %2100 = vmatprep.subr.mxu0 0.0
    %2101 = vmatpush1.msra.mxu0 0.0
    %2102 = vmatprep.subr.mxu0 0.0
    %2103 = vmatpush1.msra.mxu0 0.0
    %2104 = vmatprep.subr.mxu0 0.0
    %2105 = vmatpush1.msra.mxu0 0.0
    %2106 = vmatprep.subr.mxu0 0.0
    %2107 = vmatpush1.msra.mxu0 0.0
    %2108 = vmatprep.subr.mxu0 0.0
    %2109 = vmatpush1.msra.mxu0 0.0
    %2110 = vmatprep.subr.mxu0 0.0
    %2111 = vmatpush1.msra.mxu0 0.0
    %2112 = vmatprep.subr.mxu0 0.0
    %2113 = vmatpush1.msra.mxu0 0.0
    %2114 = vmatprep.subr.mxu0 0.0
    %2115 = vmatpush1.msra.mxu0 0.0
    %2116 = vmatprep.subr.mxu0 0.0
    %2117 = vmatpush1.msra.mxu0 0.0
    %2118 = vmatprep.mubr.f32.mxu0 0.0
    %2119 = vmatmul.mubr.f32.gmra.mrb[0].mxu0 %v2007
    %v2120 = vpop.f32.mrb[0].mxu0
    %v2121 = vadd.f32 %v2004, %v2120
    %v2122 = vpop.f32.mrb[0].mxu0
    %2123 = vmatprep.mubr.f32.mxu0 0.0
    %2124 = vmatmul.mubr.f32.gmra.mrb[0].mxu0 %v2010
    %v2125 = vpop.f32.mrb[0].mxu0
    %v2126 = vadd.f32 %v2004, %v2125
    %v2127 = vpop.f32.mrb[0].mxu0
    %2128 = vmatprep.mubr.f32.mxu0 0.0
    %2129 = vmatmul.mubr.f32.gmra.mrb[0].mxu0 %v2013
    %v2130 = vpop.f32.mrb[0].mxu0
    %v2131 = vadd.f32 %v2004, %v2130
    %v2132 = vpop.f32.mrb[0].mxu0
    %2133 = vmatprep.mubr.f32.mxu0 0.0
    %2134 = vmatmul.mubr.f32.gmra.mrb[0].mxu0 %v2016
    %v2135 = vpop.f32.mrb[0].mxu0
    %v2136 = vadd.f32 %v2004, %v2135
    %v2137 = vpop.f32.mrb[0].mxu0
    %2138 = vmatprep.mubr.f32.mxu0 0.0
    %2139 = vmatmul.mubr.f32.gmra.mrb[0].mxu0 %v2019
    %v2140 = vpop.f32.mrb[0].mxu0
    %v2141 = vadd.f32 %v2004, %v2140
    %v2142 = vpop.f32.mrb[0].mxu0
    %2143 = vmatprep.mubr.f32.mxu0 0.0
    %2144 = vmatmul.mubr.f32.gmra.mrb[0].mxu0 %v2022
    %v2145 = vpop.f32.mrb[0].mxu0
    %v2146 = vadd.f32 %v2004, %v2145
    %v2147 = vpop.f32.mrb[0].mxu0
    %2148 = vmatprep.mubr.f32.mxu0 0.0
    %2149 = vmatmul.mubr.f32.gmra.mrb[0].mxu0 %v2025
    %v2150 = vpop.f32.mrb[0].mxu0
    %v2151 = vadd.f32 %v2004, %v2150
    %v2152 = vpop.f32.mrb[0].mxu0
    %2153 = vmatprep.mubr.f32.mxu0 0.0
    %2154 = vmatmul.mubr.f32.gmra.mrb[0].mxu0 %v2028
    %v2155 = vpop.f32.mrb[0].mxu0
    %v2156 = vadd.f32 %v2004, %v2155
    %v2157 = vpop.f32.mrb[0].mxu0
    %2158 = vmatprep.mubr.f32.mxu0 0.0
    %2159 = vmatmul.mubr.f32.gmra.mrb[0].mxu0 %v2031
    %v2160 = vpop.f32.mrb[0].mxu0
    %v2161 = vadd.f32 %v2004, %v2160
    %v2162 = vpop.f32.mrb[0].mxu0
    %2163 = vmatprep.mubr.f32.mxu0 0.0
    %2164 = vmatmul.mubr.f32.gmra.mrb[0].mxu0 %v2034
    %v2165 = vpop.f32.mrb[0].mxu0
    %v2166 = vadd.f32 %v2004, %v2165
    %v2167 = vpop.f32.mrb[0].mxu0
    %2168 = vmatprep.mubr.f32.mxu0 0.0
    %2169 = vmatmul.mubr.f32.gmra.mrb[0].mxu0 %v2037
    %v2170 = vpop.f32.mrb[0].mxu0
    %v2171 = vadd.f32 %v2004, %v2170
    %v2172 = vpop.f32.mrb[0].mxu0
    %2173 = vmatprep.mubr.f32.mxu0 0.0
    %2174 = vmatmul.mubr.f32.gmra.mrb[0].mxu0 %v2040
    %v2175 = vpop.f32.mrb[0].mxu0
    %v2176 = vadd.f32 %v2004, %v2175
    %v2177 = vpop.f32.mrb[0].mxu0
    %2178 = vmatprep.mubr.f32.mxu0 0.0
    %2179 = vmatmul.mubr.f32.gmra.mrb[0].mxu0 %v2043
    %v2180 = vpop.f32.mrb[0].mxu0
    %v2181 = vadd.f32 %v2004, %v2180
    %v2182 = vpop.f32.mrb[0].mxu0
    %2183 = vmatprep.mubr.f32.mxu0 0.0
    %2184 = vmatmul.mubr.f32.gmra.mrb[0].mxu0 %v2046
    %v2185 = vpop.f32.mrb[0].mxu0
    %v2186 = vadd.f32 %v2004, %v2185
    %v2187 = vpop.f32.mrb[0].mxu0
    %2188 = vmatprep.mubr.f32.mxu0 0.0
    %2189 = vmatmul.mubr.f32.gmra.mrb[0].mxu0 %v2049
    %v2190 = vpop.f32.mrb[0].mxu0
    %v2191 = vadd.f32 %v2004, %v2190
    %v2192 = vpop.f32.mrb[0].mxu0
    %2193 = vmatprep.mubr.f32.mxu0 0.0
    %2194 = vmatmul.mubr.f32.gmra.mrb[0].mxu0 %v2052
    %v2195 = vpop.f32.mrb[0].mxu0
    %v2196 = vadd.f32 %v2004, %v2195
    %v2197 = vpop.f32.mrb[0].mxu0
    %2198 = vdwg.mxu0
    %v2199 = vmax.f32 %v2121, 0.0
    %v2200 = vmax.f32 %v2126, 0.0
    %v2201 = vmax.f32 %v2131, 0.0
    %v2202 = vmax.f32 %v2136, 0.0
    %v2203 = vmax.f32 %v2141, 0.0
    %v2204 = vmax.f32 %v2146, 0.0
    %v2205 = vmax.f32 %v2151, 0.0
    %v2206 = vmax.f32 %v2156, 0.0
    %v2207 = vmax.f32 %v2161, 0.0
    %v2208 = vmax.f32 %v2166, 0.0
    %v2209 = vmax.f32 %v2171, 0.0
    %v2210 = vmax.f32 %v2176, 0.0
    %v2211 = vmax.f32 %v2181, 0.0
    %v2212 = vmax.f32 %v2186, 0.0
    %v2213 = vmax.f32 %v2191, 0.0
    %v2214 = vmax.f32 %v2196, 0.0
    %v2215 = vld [vmem:[#allocation22] sm:$0xff]
    %v2216 = vld [vmem:[#allocation22 + $0x8] sm:$0xff]
    %v2217 = vld [vmem:[#allocation22 + $0x10] sm:$0xff]
    %v2218 = vld [vmem:[#allocation22 + $0x18] sm:$0xff]
    %v2219 = vld [vmem:[#allocation22 + $0x20] sm:$0xff]
    %v2220 = vld [vmem:[#allocation22 + $0x28] sm:$0xff]
    %v2221 = vld [vmem:[#allocation22 + $0x30] sm:$0xff]
    %v2222 = vld [vmem:[#allocation22 + $0x38] sm:$0xff]
    %v2223 = vld [vmem:[#allocation23] sm:$0x1]
    %v2225 = vlaneseq
    %v2226 = vshrl.u32 %v2225, 7
    %v2227 = vsub.s32 0, %v2226
    %v2228 = vrot.slane %v2223, %v2227
    %v2231 = vsel %vm755, %v2199, 0
    %v2234 = vsel %vm755, %v2200, 0
    %v2237 = vsel %vm755, %v2201, 0
    %v2240 = vsel %vm755, %v2202, 0
    %v2243 = vsel %vm755, %v2203, 0
    %v2246 = vsel %vm755, %v2204, 0
    %v2249 = vsel %vm755, %v2205, 0
    %v2252 = vsel %vm755, %v2206, 0
    %v2255 = vsel %vm755, %v2207, 0
    %v2258 = vsel %vm755, %v2208, 0
    %v2261 = vsel %vm755, %v2209, 0
    %v2264 = vsel %vm755, %v2210, 0
    %v2267 = vsel %vm755, %v2211, 0
    %v2270 = vsel %vm755, %v2212, 0
    %v2273 = vsel %vm755, %v2213, 0
    %v2276 = vsel %vm755, %v2214, 0
    %2278 = vmatprep.subr.mxu0 0.0
    %2279 = vmatpush1.msra.mxu0 %v2215
    %2280 = vmatprep.subr.mxu0 0.0
    %2281 = vmatpush1.msra.mxu0 %v2216
    %2282 = vmatprep.subr.mxu0 0.0
    %2283 = vmatpush1.msra.mxu0 %v2217
    %2284 = vmatprep.subr.mxu0 0.0
    %2285 = vmatpush1.msra.mxu0 %v2218
    %2286 = vmatprep.subr.mxu0 0.0
    %2287 = vmatpush1.msra.mxu0 %v2219
    %2288 = vmatprep.subr.mxu0 0.0
    %2289 = vmatpush1.msra.mxu0 %v2220
    %2290 = vmatprep.subr.mxu0 0.0
    %2291 = vmatpush1.msra.mxu0 %v2221
    %2292 = vmatprep.subr.mxu0 0.0
    %2293 = vmatpush1.msra.mxu0 %v2222
    %2294 = vmatprep.subr.mxu0 0.0
    %2295 = vmatpush1.msra.mxu0 0.0
    %2296 = vmatprep.subr.mxu0 0.0
    %2297 = vmatpush1.msra.mxu0 0.0
    %2298 = vmatprep.subr.mxu0 0.0
    %2299 = vmatpush1.msra.mxu0 0.0
    %2300 = vmatprep.subr.mxu0 0.0
    %2301 = vmatpush1.msra.mxu0 0.0
    %2302 = vmatprep.subr.mxu0 0.0
    %2303 = vmatpush1.msra.mxu0 0.0
    %2304 = vmatprep.subr.mxu0 0.0
    %2305 = vmatpush1.msra.mxu0 0.0
    %2306 = vmatprep.subr.mxu0 0.0
    %2307 = vmatpush1.msra.mxu0 0.0
    %2308 = vmatprep.subr.mxu0 0.0
    %2309 = vmatpush1.msra.mxu0 0.0
    %2310 = vmatprep.subr.mxu0 0.0
    %2311 = vmatpush1.msra.mxu0 0.0
    %2312 = vmatprep.subr.mxu0 0.0
    %2313 = vmatpush1.msra.mxu0 0.0
    %2314 = vmatprep.subr.mxu0 0.0
    %2315 = vmatpush1.msra.mxu0 0.0
    %2316 = vmatprep.subr.mxu0 0.0
    %2317 = vmatpush1.msra.mxu0 0.0
    %2318 = vmatprep.subr.mxu0 0.0
    %2319 = vmatpush1.msra.mxu0 0.0
    %2320 = vmatprep.subr.mxu0 0.0
    %2321 = vmatpush1.msra.mxu0 0.0
    %2322 = vmatprep.subr.mxu0 0.0
    %2323 = vmatpush1.msra.mxu0 0.0
    %2324 = vmatprep.subr.mxu0 0.0
    %2325 = vmatpush1.msra.mxu0 0.0
    %2326 = vmatprep.subr.mxu0 0.0
    %2327 = vmatpush1.msra.mxu0 0.0
    %2328 = vmatprep.subr.mxu0 0.0
    %2329 = vmatpush1.msra.mxu0 0.0
    %2330 = vmatprep.subr.mxu0 0.0
    %2331 = vmatpush1.msra.mxu0 0.0
    %2332 = vmatprep.subr.mxu0 0.0
    %2333 = vmatpush1.msra.mxu0 0.0
    %2334 = vmatprep.subr.mxu0 0.0
    %2335 = vmatpush1.msra.mxu0 0.0
    %2336 = vmatprep.subr.mxu0 0.0
    %2337 = vmatpush1.msra.mxu0 0.0
    %2338 = vmatprep.subr.mxu0 0.0
    %2339 = vmatpush1.msra.mxu0 0.0
    %2340 = vmatprep.subr.mxu0 0.0
    %2341 = vmatpush1.msra.mxu0 0.0
    %2342 = vmatprep.mubr.f32.mxu0 0.0
    %2343 = vmatmul.mubr.f32.gmra.mrb[0].mxu0 %v2231
    %v2344 = vpop.f32.mrb[0].mxu0
    %v2345 = vadd.f32 %v2228, %v2344
    %v2346 = vpop.f32.mrb[0].mxu0
    %2347 = vmatprep.mubr.f32.mxu0 0.0
    %2348 = vmatmul.mubr.f32.gmra.mrb[0].mxu0 %v2234
    %v2349 = vpop.f32.mrb[0].mxu0
    %v2350 = vadd.f32 %v2228, %v2349
    %v2351 = vpop.f32.mrb[0].mxu0
    %2352 = vmatprep.mubr.f32.mxu0 0.0
    %2353 = vmatmul.mubr.f32.gmra.mrb[0].mxu0 %v2237
    %v2354 = vpop.f32.mrb[0].mxu0
    %v2355 = vadd.f32 %v2228, %v2354
    %v2356 = vpop.f32.mrb[0].mxu0
    %2357 = vmatprep.mubr.f32.mxu0 0.0
    %2358 = vmatmul.mubr.f32.gmra.mrb[0].mxu0 %v2240
    %v2359 = vpop.f32.mrb[0].mxu0
    %v2360 = vadd.f32 %v2228, %v2359
    %v2361 = vpop.f32.mrb[0].mxu0
    %2362 = vmatprep.mubr.f32.mxu0 0.0
    %2363 = vmatmul.mubr.f32.gmra.mrb[0].mxu0 %v2243
    %v2364 = vpop.f32.mrb[0].mxu0
    %v2365 = vadd.f32 %v2228, %v2364
    %v2366 = vpop.f32.mrb[0].mxu0
    %2367 = vmatprep.mubr.f32.mxu0 0.0
    %2368 = vmatmul.mubr.f32.gmra.mrb[0].mxu0 %v2246
    %v2369 = vpop.f32.mrb[0].mxu0
    %v2370 = vadd.f32 %v2228, %v2369
    %v2371 = vpop.f32.mrb[0].mxu0
    %2372 = vmatprep.mubr.f32.mxu0 0.0
    %2373 = vmatmul.mubr.f32.gmra.mrb[0].mxu0 %v2249
    %v2374 = vpop.f32.mrb[0].mxu0
    %v2375 = vadd.f32 %v2228, %v2374
    %v2376 = vpop.f32.mrb[0].mxu0
    %2377 = vmatprep.mubr.f32.mxu0 0.0
    %2378 = vmatmul.mubr.f32.gmra.mrb[0].mxu0 %v2252
    %v2379 = vpop.f32.mrb[0].mxu0
    %v2380 = vadd.f32 %v2228, %v2379
    %v2381 = vpop.f32.mrb[0].mxu0
    %2382 = vmatprep.mubr.f32.mxu0 0.0
    %2383 = vmatmul.mubr.f32.gmra.mrb[0].mxu0 %v2255
    %v2384 = vpop.f32.mrb[0].mxu0
    %v2385 = vadd.f32 %v2228, %v2384
    %v2386 = vpop.f32.mrb[0].mxu0
    %2387 = vmatprep.mubr.f32.mxu0 0.0
    %2388 = vmatmul.mubr.f32.gmra.mrb[0].mxu0 %v2258
    %v2389 = vpop.f32.mrb[0].mxu0
    %v2390 = vadd.f32 %v2228, %v2389
    %v2391 = vpop.f32.mrb[0].mxu0
    %2392 = vmatprep.mubr.f32.mxu0 0.0
    %2393 = vmatmul.mubr.f32.gmra.mrb[0].mxu0 %v2261
    %v2394 = vpop.f32.mrb[0].mxu0
    %v2395 = vadd.f32 %v2228, %v2394
    %v2396 = vpop.f32.mrb[0].mxu0
    %2397 = vmatprep.mubr.f32.mxu0 0.0
    %2398 = vmatmul.mubr.f32.gmra.mrb[0].mxu0 %v2264
    %v2399 = vpop.f32.mrb[0].mxu0
    %v2400 = vadd.f32 %v2228, %v2399
    %v2401 = vpop.f32.mrb[0].mxu0
    %2402 = vmatprep.mubr.f32.mxu0 0.0
    %2403 = vmatmul.mubr.f32.gmra.mrb[0].mxu0 %v2267
    %v2404 = vpop.f32.mrb[0].mxu0
    %v2405 = vadd.f32 %v2228, %v2404
    %v2406 = vpop.f32.mrb[0].mxu0
    %2407 = vmatprep.mubr.f32.mxu0 0.0
    %2408 = vmatmul.mubr.f32.gmra.mrb[0].mxu0 %v2270
    %v2409 = vpop.f32.mrb[0].mxu0
    %v2410 = vadd.f32 %v2228, %v2409
    %v2411 = vpop.f32.mrb[0].mxu0
    %2412 = vmatprep.mubr.f32.mxu0 0.0
    %2413 = vmatmul.mubr.f32.gmra.mrb[0].mxu0 %v2273
    %v2414 = vpop.f32.mrb[0].mxu0
    %v2415 = vadd.f32 %v2228, %v2414
    %v2416 = vpop.f32.mrb[0].mxu0
    %2417 = vmatprep.mubr.f32.mxu0 0.0
    %2418 = vmatmul.mubr.f32.gmra.mrb[0].mxu0 %v2276
    %v2419 = vpop.f32.mrb[0].mxu0
    %v2420 = vadd.f32 %v2228, %v2419
    %v2421 = vpop.f32.mrb[0].mxu0
    %2422 = vdwg.mxu0
    %v2423 = vmax.f32 %v2345, 0.0
    %v2424 = vmax.f32 %v2350, 0.0
    %v2425 = vmax.f32 %v2355, 0.0
    %v2426 = vmax.f32 %v2360, 0.0
    %v2427 = vmax.f32 %v2365, 0.0
    %v2428 = vmax.f32 %v2370, 0.0
    %v2429 = vmax.f32 %v2375, 0.0
    %v2430 = vmax.f32 %v2380, 0.0
    %v2431 = vmax.f32 %v2385, 0.0
    %v2432 = vmax.f32 %v2390, 0.0
    %v2433 = vmax.f32 %v2395, 0.0
    %v2434 = vmax.f32 %v2400, 0.0
    %v2435 = vmax.f32 %v2405, 0.0
    %v2436 = vmax.f32 %v2410, 0.0
    %v2437 = vmax.f32 %v2415, 0.0
    %v2438 = vmax.f32 %v2420, 0.0
    %v2439 = vld [vmem:[#allocation25] sm:$0xff]
    %v2440 = vld [vmem:[#allocation25 + $0x8] sm:$0xff]
    %v2441 = vld [vmem:[#allocation25 + $0x10] sm:$0xff]
    %v2442 = vld [vmem:[#allocation25 + $0x18] sm:$0xff]
    %v2443 = vld [vmem:[#allocation25 + $0x20] sm:$0xff]
    %v2444 = vld [vmem:[#allocation25 + $0x28] sm:$0xff]
    %v2445 = vld [vmem:[#allocation25 + $0x30] sm:$0xff]
    %v2446 = vld [vmem:[#allocation25 + $0x38] sm:$0xff]
    %v2447 = vld [vmem:[#allocation25 + $0x40] sm:$0xff]
    %v2448 = vld [vmem:[#allocation25 + $0x48] sm:$0xff]
    %v2449 = vld [vmem:[#allocation25 + $0x50] sm:$0xff]
    %v2450 = vld [vmem:[#allocation25 + $0x58] sm:$0xff]
    %v2451 = vld [vmem:[#allocation25 + $0x60] sm:$0xff]
    %v2452 = vld [vmem:[#allocation25 + $0x68] sm:$0xff]
    %v2453 = vld [vmem:[#allocation25 + $0x70] sm:$0xff]
    %v2454 = vld [vmem:[#allocation25 + $0x78] sm:$0xff]
    %v2455 = vld [vmem:[#allocation25 + $0x80] sm:$0xff]
    %v2456 = vld [vmem:[#allocation25 + $0x88] sm:$0xff]
    %v2457 = vld [vmem:[#allocation25 + $0x90] sm:$0xff]
    %v2458 = vld [vmem:[#allocation25 + $0x98] sm:$0xff]
    %v2459 = vld [vmem:[#allocation25 + $0xa0] sm:$0xff]
    %v2460 = vld [vmem:[#allocation25 + $0xa8] sm:$0xff]
    %v2461 = vld [vmem:[#allocation25 + $0xb0] sm:$0xff]
    %v2462 = vld [vmem:[#allocation25 + $0xb8] sm:$0xff]
    %v2463 = vld [vmem:[#allocation25 + $0xc0] sm:$0xff]
    %v2464 = vld [vmem:[#allocation25 + $0xc8] sm:$0xff]
    %v2465 = vld [vmem:[#allocation25 + $0xd0] sm:$0xff]
    %v2466 = vld [vmem:[#allocation25 + $0xd8] sm:$0xff]
    %v2467 = vld [vmem:[#allocation25 + $0xe0] sm:$0xff]
    %v2468 = vld [vmem:[#allocation25 + $0xe8] sm:$0xff]
    %v2469 = vld [vmem:[#allocation25 + $0xf0] sm:$0xff]
    %v2470 = vld [vmem:[#allocation25 + $0xf8] sm:$0xff]
    %v2471 = vld [vmem:[#allocation26] sm:$0xf]
    %v2473 = vlaneseq
    %v2474 = vshrl.u32 %v2473, 7
    %v2475 = vsub.s32 0, %v2474
    %v2476 = vrot.slane %v2471, %v2475
    %v2477 = vlaneseq
    %v2478 = vshrl.u32 %v2477, 7
    %v2479 = vsub.s32 1, %v2478
    %v2480 = vrot.slane %v2471, %v2479
    %v2481 = vlaneseq
    %v2482 = vshrl.u32 %v2481, 7
    %v2483 = vsub.s32 2, %v2482
    %v2484 = vrot.slane %v2471, %v2483
    %v2485 = vlaneseq
    %v2486 = vshrl.u32 %v2485, 7
    %v2487 = vsub.s32 3, %v2486
    %v2488 = vrot.slane %v2471, %v2487
    %v2494 = vsel %vm755, %v2423, 0
    %v2497 = vsel %vm755, %v2424, 0
    %v2500 = vsel %vm755, %v2425, 0
    %v2503 = vsel %vm755, %v2426, 0
    %v2506 = vsel %vm755, %v2427, 0
    %v2509 = vsel %vm755, %v2428, 0
    %v2512 = vsel %vm755, %v2429, 0
    %v2515 = vsel %vm755, %v2430, 0
    %v2518 = vsel %vm755, %v2431, 0
    %v2521 = vsel %vm755, %v2432, 0
    %v2524 = vsel %vm755, %v2433, 0
    %v2527 = vsel %vm755, %v2434, 0
    %v2530 = vsel %vm755, %v2435, 0
    %v2533 = vsel %vm755, %v2436, 0
    %v2536 = vsel %vm755, %v2437, 0
    %v2539 = vsel %vm755, %v2438, 0
    %2541 = vmatprep.subr.mxu0 %v2440
    %2542 = vmatpush1.msra.mxu0 %v2439
    %2543 = vmatprep.subr.mxu0 %v2444
    %2544 = vmatpush1.msra.mxu0 %v2443
    %2545 = vmatprep.subr.mxu0 %v2448
    %2546 = vmatpush1.msra.mxu0 %v2447
    %2547 = vmatprep.subr.mxu0 %v2452
    %2548 = vmatpush1.msra.mxu0 %v2451
    %2549 = vmatprep.subr.mxu0 %v2456
    %2550 = vmatpush1.msra.mxu0 %v2455
    %2551 = vmatprep.subr.mxu0 %v2460
    %2552 = vmatpush1.msra.mxu0 %v2459
    %2553 = vmatprep.subr.mxu0 %v2464
    %2554 = vmatpush1.msra.mxu0 %v2463
    %2555 = vmatprep.subr.mxu0 %v2468
    %2556 = vmatpush1.msra.mxu0 %v2467
    %2557 = vmatprep.subr.mxu0 0.0
    %2558 = vmatpush1.msra.mxu0 0.0
    %2559 = vmatprep.subr.mxu0 0.0
    %2560 = vmatpush1.msra.mxu0 0.0
    %2561 = vmatprep.subr.mxu0 0.0
    %2562 = vmatpush1.msra.mxu0 0.0
    %2563 = vmatprep.subr.mxu0 0.0
    %2564 = vmatpush1.msra.mxu0 0.0
    %2565 = vmatprep.subr.mxu0 0.0
    %2566 = vmatpush1.msra.mxu0 0.0
    %2567 = vmatprep.subr.mxu0 0.0
    %2568 = vmatpush1.msra.mxu0 0.0
    %2569 = vmatprep.subr.mxu0 0.0
    %2570 = vmatpush1.msra.mxu0 0.0
    %2571 = vmatprep.subr.mxu0 0.0
    %2572 = vmatpush1.msra.mxu0 0.0
    %2573 = vmatprep.subr.mxu0 0.0
    %2574 = vmatpush1.msra.mxu0 0.0
    %2575 = vmatprep.subr.mxu0 0.0
    %2576 = vmatpush1.msra.mxu0 0.0
    %2577 = vmatprep.subr.mxu0 0.0
    %2578 = vmatpush1.msra.mxu0 0.0
    %2579 = vmatprep.subr.mxu0 0.0
    %2580 = vmatpush1.msra.mxu0 0.0
    %2581 = vmatprep.subr.mxu0 0.0
    %2582 = vmatpush1.msra.mxu0 0.0
    %2583 = vmatprep.subr.mxu0 0.0
    %2584 = vmatpush1.msra.mxu0 0.0
    %2585 = vmatprep.subr.mxu0 0.0
    %2586 = vmatpush1.msra.mxu0 0.0
    %2587 = vmatprep.subr.mxu0 0.0
    %2588 = vmatpush1.msra.mxu0 0.0
    %2589 = vmatprep.subr.mxu0 0.0
    %2590 = vmatpush1.msra.mxu0 0.0
    %2591 = vmatprep.subr.mxu0 0.0
    %2592 = vmatpush1.msra.mxu0 0.0
    %2593 = vmatprep.subr.mxu0 0.0
    %2594 = vmatpush1.msra.mxu0 0.0
    %2595 = vmatprep.subr.mxu0 0.0
    %2596 = vmatpush1.msra.mxu0 0.0
    %2597 = vmatprep.subr.mxu0 0.0
    %2598 = vmatpush1.msra.mxu0 0.0
    %2599 = vmatprep.subr.mxu0 0.0
    %2600 = vmatpush1.msra.mxu0 0.0
    %2601 = vmatprep.subr.mxu0 0.0
    %2602 = vmatpush1.msra.mxu0 0.0
    %2603 = vmatprep.subr.mxu0 0.0
    %2604 = vmatpush1.msra.mxu0 0.0
    %2605 = vmatprep.mubr.f32.mxu0 0.0
    %2606 = vmatmul.mubr.f32.gmra.mrb[0].mxu0 %v2494
    %v2607 = vpop.f32.mrb[0].mxu0
    %v2608 = vadd.f32 %v2476, %v2607
    %v2609 = vpop.f32.mrb[0].mxu0
    %v2610 = vadd.f32 %v2480, %v2609
    %2611 = vmatprep.mubr.f32.mxu0 0.0
    %2612 = vmatmul.mubr.f32.gmra.mrb[0].mxu0 %v2497
    %v2613 = vpop.f32.mrb[0].mxu0
    %v2614 = vadd.f32 %v2476, %v2613
    %v2615 = vpop.f32.mrb[0].mxu0
    %v2616 = vadd.f32 %v2480, %v2615
    %2617 = vmatprep.mubr.f32.mxu0 0.0
    %2618 = vmatmul.mubr.f32.gmra.mrb[0].mxu0 %v2500
    %v2619 = vpop.f32.mrb[0].mxu0
    %v2620 = vadd.f32 %v2476, %v2619
    %v2621 = vpop.f32.mrb[0].mxu0
    %v2622 = vadd.f32 %v2480, %v2621
    %2623 = vmatprep.mubr.f32.mxu0 0.0
    %2624 = vmatmul.mubr.f32.gmra.mrb[0].mxu0 %v2503
    %v2625 = vpop.f32.mrb[0].mxu0
    %v2626 = vadd.f32 %v2476, %v2625
    %v2627 = vpop.f32.mrb[0].mxu0
    %v2628 = vadd.f32 %v2480, %v2627
    %2629 = vmatprep.mubr.f32.mxu0 0.0
    %2630 = vmatmul.mubr.f32.gmra.mrb[0].mxu0 %v2506
    %v2631 = vpop.f32.mrb[0].mxu0
    %v2632 = vadd.f32 %v2476, %v2631
    %v2633 = vpop.f32.mrb[0].mxu0
    %v2634 = vadd.f32 %v2480, %v2633
    %2635 = vmatprep.mubr.f32.mxu0 0.0
    %2636 = vmatmul.mubr.f32.gmra.mrb[0].mxu0 %v2509
    %v2637 = vpop.f32.mrb[0].mxu0
    %v2638 = vadd.f32 %v2476, %v2637
    %v2639 = vpop.f32.mrb[0].mxu0
    %v2640 = vadd.f32 %v2480, %v2639
    %2641 = vmatprep.mubr.f32.mxu0 0.0
    %2642 = vmatmul.mubr.f32.gmra.mrb[0].mxu0 %v2512
    %v2643 = vpop.f32.mrb[0].mxu0
    %v2644 = vadd.f32 %v2476, %v2643
    %v2645 = vpop.f32.mrb[0].mxu0
    %v2646 = vadd.f32 %v2480, %v2645
    %2647 = vmatprep.mubr.f32.mxu0 0.0
    %2648 = vmatmul.mubr.f32.gmra.mrb[0].mxu0 %v2515
    %v2649 = vpop.f32.mrb[0].mxu0
    %v2650 = vadd.f32 %v2476, %v2649
    %v2651 = vpop.f32.mrb[0].mxu0
    %v2652 = vadd.f32 %v2480, %v2651
    %2653 = vmatprep.mubr.f32.mxu0 0.0
    %2654 = vmatmul.mubr.f32.gmra.mrb[0].mxu0 %v2518
    %v2655 = vpop.f32.mrb[0].mxu0
    %v2656 = vadd.f32 %v2476, %v2655
    %v2657 = vpop.f32.mrb[0].mxu0
    %v2658 = vadd.f32 %v2480, %v2657
    %2659 = vmatprep.mubr.f32.mxu0 0.0
    %2660 = vmatmul.mubr.f32.gmra.mrb[0].mxu0 %v2521
    %v2661 = vpop.f32.mrb[0].mxu0
    %v2662 = vadd.f32 %v2476, %v2661
    %v2663 = vpop.f32.mrb[0].mxu0
    %v2664 = vadd.f32 %v2480, %v2663
    %2665 = vmatprep.mubr.f32.mxu0 0.0
    %2666 = vmatmul.mubr.f32.gmra.mrb[0].mxu0 %v2524
    %v2667 = vpop.f32.mrb[0].mxu0
    %v2668 = vadd.f32 %v2476, %v2667
    %v2669 = vpop.f32.mrb[0].mxu0
    %v2670 = vadd.f32 %v2480, %v2669
    %2671 = vmatprep.mubr.f32.mxu0 0.0
    %2672 = vmatmul.mubr.f32.gmra.mrb[0].mxu0 %v2527
    %v2673 = vpop.f32.mrb[0].mxu0
    %v2674 = vadd.f32 %v2476, %v2673
    %v2675 = vpop.f32.mrb[0].mxu0
    %v2676 = vadd.f32 %v2480, %v2675
    %2677 = vmatprep.mubr.f32.mxu0 0.0
    %2678 = vmatmul.mubr.f32.gmra.mrb[0].mxu0 %v2530
    %v2679 = vpop.f32.mrb[0].mxu0
    %v2680 = vadd.f32 %v2476, %v2679
    %v2681 = vpop.f32.mrb[0].mxu0
    %v2682 = vadd.f32 %v2480, %v2681
    %2683 = vmatprep.mubr.f32.mxu0 0.0
    %2684 = vmatmul.mubr.f32.gmra.mrb[0].mxu0 %v2533
    %v2685 = vpop.f32.mrb[0].mxu0
    %v2686 = vadd.f32 %v2476, %v2685
    %v2687 = vpop.f32.mrb[0].mxu0
    %v2688 = vadd.f32 %v2480, %v2687
    %2689 = vmatprep.mubr.f32.mxu0 0.0
    %2690 = vmatmul.mubr.f32.gmra.mrb[0].mxu0 %v2536
    %v2691 = vpop.f32.mrb[0].mxu0
    %v2692 = vadd.f32 %v2476, %v2691
    %v2693 = vpop.f32.mrb[0].mxu0
    %v2694 = vadd.f32 %v2480, %v2693
    %2695 = vmatprep.mubr.f32.mxu0 0.0
    %2696 = vmatmul.mubr.f32.gmra.mrb[0].mxu0 %v2539
    %v2697 = vpop.f32.mrb[0].mxu0
    %v2698 = vadd.f32 %v2476, %v2697
    %v2699 = vpop.f32.mrb[0].mxu0
    %v2700 = vadd.f32 %v2480, %v2699
    %2701 = vdwg.mxu0
    %2702 = vmatprep.subr.mxu0 %v2442
    %2703 = vmatpush1.msra.mxu0 %v2441
    %2704 = vmatprep.subr.mxu0 %v2446
    %2705 = vmatpush1.msra.mxu0 %v2445
    %2706 = vmatprep.subr.mxu0 %v2450
    %2707 = vmatpush1.msra.mxu0 %v2449
    %2708 = vmatprep.subr.mxu0 %v2454
    %2709 = vmatpush1.msra.mxu0 %v2453
    %2710 = vmatprep.subr.mxu0 %v2458
    %2711 = vmatpush1.msra.mxu0 %v2457
    %2712 = vmatprep.subr.mxu0 %v2462
    %2713 = vmatpush1.msra.mxu0 %v2461
    %2714 = vmatprep.subr.mxu0 %v2466
    %2715 = vmatpush1.msra.mxu0 %v2465
    %2716 = vmatprep.subr.mxu0 %v2470
    %2717 = vmatpush1.msra.mxu0 %v2469
    %2718 = vmatprep.subr.mxu0 0.0
    %2719 = vmatpush1.msra.mxu0 0.0
    %2720 = vmatprep.subr.mxu0 0.0
    %2721 = vmatpush1.msra.mxu0 0.0
    %2722 = vmatprep.subr.mxu0 0.0
    %2723 = vmatpush1.msra.mxu0 0.0
    %2724 = vmatprep.subr.mxu0 0.0
    %2725 = vmatpush1.msra.mxu0 0.0
    %2726 = vmatprep.subr.mxu0 0.0
    %2727 = vmatpush1.msra.mxu0 0.0
    %2728 = vmatprep.subr.mxu0 0.0
    %2729 = vmatpush1.msra.mxu0 0.0
    %2730 = vmatprep.subr.mxu0 0.0
    %2731 = vmatpush1.msra.mxu0 0.0
    %2732 = vmatprep.subr.mxu0 0.0
    %2733 = vmatpush1.msra.mxu0 0.0
    %2734 = vmatprep.subr.mxu0 0.0
    %2735 = vmatpush1.msra.mxu0 0.0
    %2736 = vmatprep.subr.mxu0 0.0
    %2737 = vmatpush1.msra.mxu0 0.0
    %2738 = vmatprep.subr.mxu0 0.0
    %2739 = vmatpush1.msra.mxu0 0.0
    %2740 = vmatprep.subr.mxu0 0.0
    %2741 = vmatpush1.msra.mxu0 0.0
    %2742 = vmatprep.subr.mxu0 0.0
    %2743 = vmatpush1.msra.mxu0 0.0
    %2744 = vmatprep.subr.mxu0 0.0
    %2745 = vmatpush1.msra.mxu0 0.0
    %2746 = vmatprep.subr.mxu0 0.0
    %2747 = vmatpush1.msra.mxu0 0.0
    %2748 = vmatprep.subr.mxu0 0.0
    %2749 = vmatpush1.msra.mxu0 0.0
    %2750 = vmatprep.subr.mxu0 0.0
    %2751 = vmatpush1.msra.mxu0 0.0
    %2752 = vmatprep.subr.mxu0 0.0
    %2753 = vmatpush1.msra.mxu0 0.0
    %2754 = vmatprep.subr.mxu0 0.0
    %2755 = vmatpush1.msra.mxu0 0.0
    %2756 = vmatprep.subr.mxu0 0.0
    %2757 = vmatpush1.msra.mxu0 0.0
    %2758 = vmatprep.subr.mxu0 0.0
    %2759 = vmatpush1.msra.mxu0 0.0
    %2760 = vmatprep.subr.mxu0 0.0
    %2761 = vmatpush1.msra.mxu0 0.0
    %2762 = vmatprep.subr.mxu0 0.0
    %2763 = vmatpush1.msra.mxu0 0.0
    %2764 = vmatprep.subr.mxu0 0.0
    %2765 = vmatpush1.msra.mxu0 0.0
    %2766 = vmatprep.mubr.f32.mxu0 0.0
    %2767 = vmatmul.mubr.f32.gmra.mrb[0].mxu0 %v2494
    %v2768 = vpop.f32.mrb[0].mxu0
    %v2769 = vadd.f32 %v2484, %v2768
    %v2770 = vpop.f32.mrb[0].mxu0
    %v2771 = vadd.f32 %v2488, %v2770
    %2772 = vmatprep.mubr.f32.mxu0 0.0
    %2773 = vmatmul.mubr.f32.gmra.mrb[0].mxu0 %v2497
    %v2774 = vpop.f32.mrb[0].mxu0
    %v2775 = vadd.f32 %v2484, %v2774
    %v2776 = vpop.f32.mrb[0].mxu0
    %v2777 = vadd.f32 %v2488, %v2776
    %2778 = vmatprep.mubr.f32.mxu0 0.0
    %2779 = vmatmul.mubr.f32.gmra.mrb[0].mxu0 %v2500
    %v2780 = vpop.f32.mrb[0].mxu0
    %v2781 = vadd.f32 %v2484, %v2780
    %v2782 = vpop.f32.mrb[0].mxu0
    %v2783 = vadd.f32 %v2488, %v2782
    %2784 = vmatprep.mubr.f32.mxu0 0.0
    %2785 = vmatmul.mubr.f32.gmra.mrb[0].mxu0 %v2503
    %v2786 = vpop.f32.mrb[0].mxu0
    %v2787 = vadd.f32 %v2484, %v2786
    %v2788 = vpop.f32.mrb[0].mxu0
    %v2789 = vadd.f32 %v2488, %v2788
    %2790 = vmatprep.mubr.f32.mxu0 0.0
    %2791 = vmatmul.mubr.f32.gmra.mrb[0].mxu0 %v2506
    %v2792 = vpop.f32.mrb[0].mxu0
    %v2793 = vadd.f32 %v2484, %v2792
    %v2794 = vpop.f32.mrb[0].mxu0
    %v2795 = vadd.f32 %v2488, %v2794
    %2796 = vmatprep.mubr.f32.mxu0 0.0
    %2797 = vmatmul.mubr.f32.gmra.mrb[0].mxu0 %v2509
    %v2798 = vpop.f32.mrb[0].mxu0
    %v2799 = vadd.f32 %v2484, %v2798
    %v2800 = vpop.f32.mrb[0].mxu0
    %v2801 = vadd.f32 %v2488, %v2800
    %2802 = vmatprep.mubr.f32.mxu0 0.0
    %2803 = vmatmul.mubr.f32.gmra.mrb[0].mxu0 %v2512
    %v2804 = vpop.f32.mrb[0].mxu0
    %v2805 = vadd.f32 %v2484, %v2804
    %v2806 = vpop.f32.mrb[0].mxu0
    %v2807 = vadd.f32 %v2488, %v2806
    %2808 = vmatprep.mubr.f32.mxu0 0.0
    %2809 = vmatmul.mubr.f32.gmra.mrb[0].mxu0 %v2515
    %v2810 = vpop.f32.mrb[0].mxu0
    %v2811 = vadd.f32 %v2484, %v2810
    %v2812 = vpop.f32.mrb[0].mxu0
    %v2813 = vadd.f32 %v2488, %v2812
    %2814 = vmatprep.mubr.f32.mxu0 0.0
    %2815 = vmatmul.mubr.f32.gmra.mrb[0].mxu0 %v2518
    %v2816 = vpop.f32.mrb[0].mxu0
    %v2817 = vadd.f32 %v2484, %v2816
    %v2818 = vpop.f32.mrb[0].mxu0
    %v2819 = vadd.f32 %v2488, %v2818
    %2820 = vmatprep.mubr.f32.mxu0 0.0
    %2821 = vmatmul.mubr.f32.gmra.mrb[0].mxu0 %v2521
    %v2822 = vpop.f32.mrb[0].mxu0
    %v2823 = vadd.f32 %v2484, %v2822
    %v2824 = vpop.f32.mrb[0].mxu0
    %v2825 = vadd.f32 %v2488, %v2824
    %2826 = vmatprep.mubr.f32.mxu0 0.0
    %2827 = vmatmul.mubr.f32.gmra.mrb[0].mxu0 %v2524
    %v2828 = vpop.f32.mrb[0].mxu0
    %v2829 = vadd.f32 %v2484, %v2828
    %v2830 = vpop.f32.mrb[0].mxu0
    %v2831 = vadd.f32 %v2488, %v2830
    %2832 = vmatprep.mubr.f32.mxu0 0.0
    %2833 = vmatmul.mubr.f32.gmra.mrb[0].mxu0 %v2527
    %v2834 = vpop.f32.mrb[0].mxu0
    %v2835 = vadd.f32 %v2484, %v2834
    %v2836 = vpop.f32.mrb[0].mxu0
    %v2837 = vadd.f32 %v2488, %v2836
    %2838 = vmatprep.mubr.f32.mxu0 0.0
    %2839 = vmatmul.mubr.f32.gmra.mrb[0].mxu0 %v2530
    %v2840 = vpop.f32.mrb[0].mxu0
    %v2841 = vadd.f32 %v2484, %v2840
    %v2842 = vpop.f32.mrb[0].mxu0
    %v2843 = vadd.f32 %v2488, %v2842
    %2844 = vmatprep.mubr.f32.mxu0 0.0
    %2845 = vmatmul.mubr.f32.gmra.mrb[0].mxu0 %v2533
    %v2846 = vpop.f32.mrb[0].mxu0
    %v2847 = vadd.f32 %v2484, %v2846
    %v2848 = vpop.f32.mrb[0].mxu0
    %v2849 = vadd.f32 %v2488, %v2848
    %2850 = vmatprep.mubr.f32.mxu0 0.0
    %2851 = vmatmul.mubr.f32.gmra.mrb[0].mxu0 %v2536
    %v2852 = vpop.f32.mrb[0].mxu0
    %v2853 = vadd.f32 %v2484, %v2852
    %v2854 = vpop.f32.mrb[0].mxu0
    %v2855 = vadd.f32 %v2488, %v2854
    %2856 = vmatprep.mubr.f32.mxu0 0.0
    %2857 = vmatmul.mubr.f32.gmra.mrb[0].mxu0 %v2539
    %v2858 = vpop.f32.mrb[0].mxu0
    %v2859 = vadd.f32 %v2484, %v2858
    %v2860 = vpop.f32.mrb[0].mxu0
    %v2861 = vadd.f32 %v2488, %v2860
    %2862 = vdwg.mxu0
    %v2863 = vmax.f32 %v2608, 0.0
    %v2864 = vmax.f32 %v2610, 0.0
    %v2865 = vmax.f32 %v2769, 0.0
    %v2866 = vmax.f32 %v2771, 0.0
    %v2867 = vmax.f32 %v2614, 0.0
    %v2868 = vmax.f32 %v2616, 0.0
    %v2869 = vmax.f32 %v2775, 0.0
    %v2870 = vmax.f32 %v2777, 0.0
    %v2871 = vmax.f32 %v2620, 0.0
    %v2872 = vmax.f32 %v2622, 0.0
    %v2873 = vmax.f32 %v2781, 0.0
    %v2874 = vmax.f32 %v2783, 0.0
    %v2875 = vmax.f32 %v2626, 0.0
    %v2876 = vmax.f32 %v2628, 0.0
    %v2877 = vmax.f32 %v2787, 0.0
    %v2878 = vmax.f32 %v2789, 0.0
    %v2879 = vmax.f32 %v2632, 0.0
    %v2880 = vmax.f32 %v2634, 0.0
    %v2881 = vmax.f32 %v2793, 0.0
    %v2882 = vmax.f32 %v2795, 0.0
    %v2883 = vmax.f32 %v2638, 0.0
    %v2884 = vmax.f32 %v2640, 0.0
    %v2885 = vmax.f32 %v2799, 0.0
    %v2886 = vmax.f32 %v2801, 0.0
    %v2887 = vmax.f32 %v2644, 0.0
    %v2888 = vmax.f32 %v2646, 0.0
    %v2889 = vmax.f32 %v2805, 0.0
    %v2890 = vmax.f32 %v2807, 0.0
    %v2891 = vmax.f32 %v2650, 0.0
    %v2892 = vmax.f32 %v2652, 0.0
    %v2893 = vmax.f32 %v2811, 0.0
    %v2894 = vmax.f32 %v2813, 0.0
    %v2895 = vmax.f32 %v2656, 0.0
    %v2896 = vmax.f32 %v2658, 0.0
    %v2897 = vmax.f32 %v2817, 0.0
    %v2898 = vmax.f32 %v2819, 0.0
    %v2899 = vmax.f32 %v2662, 0.0
    %v2900 = vmax.f32 %v2664, 0.0
    %v2901 = vmax.f32 %v2823, 0.0
    %v2902 = vmax.f32 %v2825, 0.0
    %v2903 = vmax.f32 %v2668, 0.0
    %v2904 = vmax.f32 %v2670, 0.0
    %v2905 = vmax.f32 %v2829, 0.0
    %v2906 = vmax.f32 %v2831, 0.0
    %v2907 = vmax.f32 %v2674, 0.0
    %v2908 = vmax.f32 %v2676, 0.0
    %v2909 = vmax.f32 %v2835, 0.0
    %v2910 = vmax.f32 %v2837, 0.0
    %v2911 = vmax.f32 %v2680, 0.0
    %v2912 = vmax.f32 %v2682, 0.0
    %v2913 = vmax.f32 %v2841, 0.0
    %v2914 = vmax.f32 %v2843, 0.0
    %v2915 = vmax.f32 %v2686, 0.0
    %v2916 = vmax.f32 %v2688, 0.0
    %v2917 = vmax.f32 %v2847, 0.0
    %v2918 = vmax.f32 %v2849, 0.0
    %v2919 = vmax.f32 %v2692, 0.0
    %v2920 = vmax.f32 %v2694, 0.0
    %v2921 = vmax.f32 %v2853, 0.0
    %v2922 = vmax.f32 %v2855, 0.0
    %v2923 = vmax.f32 %v2698, 0.0
    %v2924 = vmax.f32 %v2700, 0.0
    %v2925 = vmax.f32 %v2859, 0.0
    %v2926 = vmax.f32 %v2861, 0.0
    %v2927 = vmax.f32 %v2863, %v2867
    %v2928 = vmax.f32 %v2927, %v2871
    %v2929 = vmax.f32 %v2928, %v2875
    %v2930 = vmax.f32 %v2929, %v2879
    %v2931 = vmax.f32 %v2930, %v2883
    %v2932 = vmax.f32 %v2931, %v2887
    %v2933 = vmax.f32 %v2932, %v2891
    %v2934 = vrot.slane %v2933, 4
    %v2935 = vmax.f32 %v2933, %v2934
    %v2936 = vrot.slane %v2935, 2
    %v2937 = vmax.f32 %v2935, %v2936
    %v2938 = vrot.slane %v2937, 1
    %v2939 = vmax.f32 %v2937, %v2938
    %v2940 = vmax.f32 %v2864, %v2868
    %v2941 = vmax.f32 %v2940, %v2872
    %v2942 = vmax.f32 %v2941, %v2876
    %v2943 = vmax.f32 %v2942, %v2880
    %v2944 = vmax.f32 %v2943, %v2884
    %v2945 = vmax.f32 %v2944, %v2888
    %v2946 = vmax.f32 %v2945, %v2892
    %v2947 = vrot.slane %v2946, 4
    %v2948 = vmax.f32 %v2946, %v2947
    %v2949 = vrot.slane %v2948, 2
    %v2950 = vmax.f32 %v2948, %v2949
    %v2951 = vrot.slane %v2950, 1
    %v2952 = vmax.f32 %v2950, %v2951
    %v2953 = vmax.f32 %v2865, %v2869
    %v2954 = vmax.f32 %v2953, %v2873
    %v2955 = vmax.f32 %v2954, %v2877
    %v2956 = vmax.f32 %v2955, %v2881
    %v2957 = vmax.f32 %v2956, %v2885
    %v2958 = vmax.f32 %v2957, %v2889
    %v2959 = vmax.f32 %v2958, %v2893
    %v2960 = vrot.slane %v2959, 4
    %v2961 = vmax.f32 %v2959, %v2960
    %v2962 = vrot.slane %v2961, 2
    %v2963 = vmax.f32 %v2961, %v2962
    %v2964 = vrot.slane %v2963, 1
    %v2965 = vmax.f32 %v2963, %v2964
    %v2966 = vmax.f32 %v2866, %v2870
    %v2967 = vmax.f32 %v2966, %v2874
    %v2968 = vmax.f32 %v2967, %v2878
    %v2969 = vmax.f32 %v2968, %v2882
    %v2970 = vmax.f32 %v2969, %v2886
    %v2971 = vmax.f32 %v2970, %v2890
    %v2972 = vmax.f32 %v2971, %v2894
    %v2973 = vrot.slane %v2972, 4
    %v2974 = vmax.f32 %v2972, %v2973
    %v2975 = vrot.slane %v2974, 2
    %v2976 = vmax.f32 %v2974, %v2975
    %v2977 = vrot.slane %v2976, 1
    %v2978 = vmax.f32 %v2976, %v2977
    %v2979 = vmax.f32 %v2895, %v2899
    %v2980 = vmax.f32 %v2979, %v2903
    %v2981 = vmax.f32 %v2980, %v2907
    %v2982 = vmax.f32 %v2981, %v2911
    %v2983 = vmax.f32 %v2982, %v2915
    %v2984 = vmax.f32 %v2983, %v2919
    %v2985 = vmax.f32 %v2984, %v2923
    %v2986 = vrot.slane %v2985, 4
    %v2987 = vmax.f32 %v2985, %v2986
    %v2988 = vrot.slane %v2987, 2
    %v2989 = vmax.f32 %v2987, %v2988
    %v2990 = vrot.slane %v2989, 1
    %v2991 = vmax.f32 %v2989, %v2990
    %v2992 = vmax.f32 %v2896, %v2900
    %v2993 = vmax.f32 %v2992, %v2904
    %v2994 = vmax.f32 %v2993, %v2908
    %v2995 = vmax.f32 %v2994, %v2912
    %v2996 = vmax.f32 %v2995, %v2916
    %v2997 = vmax.f32 %v2996, %v2920
    %v2998 = vmax.f32 %v2997, %v2924
    %v2999 = vrot.slane %v2998, 4
    %v3000 = vmax.f32 %v2998, %v2999
    %v3001 = vrot.slane %v3000, 2
    %v3002 = vmax.f32 %v3000, %v3001
    %v3003 = vrot.slane %v3002, 1
    %v3004 = vmax.f32 %v3002, %v3003
    %v3005 = vmax.f32 %v2897, %v2901
    %v3006 = vmax.f32 %v3005, %v2905
    %v3007 = vmax.f32 %v3006, %v2909
    %v3008 = vmax.f32 %v3007, %v2913
    %v3009 = vmax.f32 %v3008, %v2917
    %v3010 = vmax.f32 %v3009, %v2921
    %v3011 = vmax.f32 %v3010, %v2925
    %v3012 = vrot.slane %v3011, 4
    %v3013 = vmax.f32 %v3011, %v3012
    %v3014 = vrot.slane %v3013, 2
    %v3015 = vmax.f32 %v3013, %v3014
    %v3016 = vrot.slane %v3015, 1
    %v3017 = vmax.f32 %v3015, %v3016
    %v3018 = vmax.f32 %v2898, %v2902
    %v3019 = vmax.f32 %v3018, %v2906
    %v3020 = vmax.f32 %v3019, %v2910
    %v3021 = vmax.f32 %v3020, %v2914
    %v3022 = vmax.f32 %v3021, %v2918
    %v3023 = vmax.f32 %v3022, %v2922
    %v3024 = vmax.f32 %v3023, %v2926
    %v3025 = vrot.slane %v3024, 4
    %v3026 = vmax.f32 %v3024, %v3025
    %v3027 = vrot.slane %v3026, 2
    %v3028 = vmax.f32 %v3026, %v3027
    %v3029 = vrot.slane %v3028, 1
    %v3030 = vmax.f32 %v3028, %v3029
    %s3031 = smul.u32 8, 64
    %s3032 = smul.u32 %s3031, 2
    %s3033 = sshll.u32 %s3032, 4
    %3034 = dma.done [#allocation4], %s3033
    %v3035 = vld [vmem:[#allocation2] sm:$0xff]
    %v3036 = vld [vmem:[#allocation2 + $0x8] sm:$0xff]
    %v3037 = vld [vmem:[#allocation2 + $0x10] sm:$0xff]
    %v3038 = vld [vmem:[#allocation2 + $0x18] sm:$0xff]
    %v3039 = vld [vmem:[#allocation2 + $0x20] sm:$0xff]
    %v3040 = vld [vmem:[#allocation2 + $0x28] sm:$0xff]
    %v3041 = vld [vmem:[#allocation2 + $0x30] sm:$0xff]
    %v3042 = vld [vmem:[#allocation2 + $0x38] sm:$0xff]
    %v3043 = vld [vmem:[#allocation2 + $0x40] sm:$0xff]
    %v3044 = vld [vmem:[#allocation2 + $0x48] sm:$0xff]
    %v3045 = vld [vmem:[#allocation2 + $0x50] sm:$0xff]
    %v3046 = vld [vmem:[#allocation2 + $0x58] sm:$0xff]
    %v3047 = vld [vmem:[#allocation2 + $0x60] sm:$0xff]
    %v3048 = vld [vmem:[#allocation2 + $0x68] sm:$0xff]
    %v3049 = vld [vmem:[#allocation2 + $0x70] sm:$0xff]
    %v3050 = vld [vmem:[#allocation2 + $0x78] sm:$0xff]
    %v3051 = vld [vmem:[#allocation2 + $0x80] sm:$0xff]
    %v3052 = vld [vmem:[#allocation2 + $0x88] sm:$0xff]
    %v3053 = vld [vmem:[#allocation2 + $0x90] sm:$0xff]
    %v3054 = vld [vmem:[#allocation2 + $0x98] sm:$0xff]
    %v3055 = vld [vmem:[#allocation2 + $0xa0] sm:$0xff]
    %v3056 = vld [vmem:[#allocation2 + $0xa8] sm:$0xff]
    %v3057 = vld [vmem:[#allocation2 + $0xb0] sm:$0xff]
    %v3058 = vld [vmem:[#allocation2 + $0xb8] sm:$0xff]
    %v3059 = vld [vmem:[#allocation2 + $0xc0] sm:$0xff]
    %v3060 = vld [vmem:[#allocation2 + $0xc8] sm:$0xff]
    %v3061 = vld [vmem:[#allocation2 + $0xd0] sm:$0xff]
    %v3062 = vld [vmem:[#allocation2 + $0xd8] sm:$0xff]
    %v3063 = vld [vmem:[#allocation2 + $0xe0] sm:$0xff]
    %v3064 = vld [vmem:[#allocation2 + $0xe8] sm:$0xff]
    %v3065 = vld [vmem:[#allocation2 + $0xf0] sm:$0xff]
    %v3066 = vld [vmem:[#allocation2 + $0xf8] sm:$0xff]
    %v3067 = vld [vmem:[#allocation2 + $0x100] sm:$0xff]
    %v3068 = vld [vmem:[#allocation2 + $0x108] sm:$0xff]
    %v3069 = vld [vmem:[#allocation2 + $0x110] sm:$0xff]
    %v3070 = vld [vmem:[#allocation2 + $0x118] sm:$0xff]
    %v3071 = vld [vmem:[#allocation2 + $0x120] sm:$0xff]
    %v3072 = vld [vmem:[#allocation2 + $0x128] sm:$0xff]
    %v3073 = vld [vmem:[#allocation2 + $0x130] sm:$0xff]
    %v3074 = vld [vmem:[#allocation2 + $0x138] sm:$0xff]
    %v3075 = vld [vmem:[#allocation2 + $0x140] sm:$0xff]
    %v3076 = vld [vmem:[#allocation2 + $0x148] sm:$0xff]
    %v3077 = vld [vmem:[#allocation2 + $0x150] sm:$0xff]
    %v3078 = vld [vmem:[#allocation2 + $0x158] sm:$0xff]
    %v3079 = vld [vmem:[#allocation2 + $0x160] sm:$0xff]
    %v3080 = vld [vmem:[#allocation2 + $0x168] sm:$0xff]
    %v3081 = vld [vmem:[#allocation2 + $0x170] sm:$0xff]
    %v3082 = vld [vmem:[#allocation2 + $0x178] sm:$0xff]
    %v3083 = vld [vmem:[#allocation2 + $0x180] sm:$0xff]
    %v3084 = vld [vmem:[#allocation2 + $0x188] sm:$0xff]
    %v3085 = vld [vmem:[#allocation2 + $0x190] sm:$0xff]
    %v3086 = vld [vmem:[#allocation2 + $0x198] sm:$0xff]
    %v3087 = vld [vmem:[#allocation2 + $0x1a0] sm:$0xff]
    %v3088 = vld [vmem:[#allocation2 + $0x1a8] sm:$0xff]
    %v3089 = vld [vmem:[#allocation2 + $0x1b0] sm:$0xff]
    %v3090 = vld [vmem:[#allocation2 + $0x1b8] sm:$0xff]
    %v3091 = vld [vmem:[#allocation2 + $0x1c0] sm:$0xff]
    %v3092 = vld [vmem:[#allocation2 + $0x1c8] sm:$0xff]
    %v3093 = vld [vmem:[#allocation2 + $0x1d0] sm:$0xff]
    %v3094 = vld [vmem:[#allocation2 + $0x1d8] sm:$0xff]
    %v3095 = vld [vmem:[#allocation2 + $0x1e0] sm:$0xff]
    %v3096 = vld [vmem:[#allocation2 + $0x1e8] sm:$0xff]
    %v3097 = vld [vmem:[#allocation2 + $0x1f0] sm:$0xff]
    %v3098 = vld [vmem:[#allocation2 + $0x1f8] sm:$0xff]
    %v3099 = vld [vmem:[#allocation2 + $0x200] sm:$0xff]
    %v3100 = vld [vmem:[#allocation2 + $0x208] sm:$0xff]
    %v3101 = vld [vmem:[#allocation2 + $0x210] sm:$0xff]
    %v3102 = vld [vmem:[#allocation2 + $0x218] sm:$0xff]
    %v3103 = vld [vmem:[#allocation2 + $0x220] sm:$0xff]
    %v3104 = vld [vmem:[#allocation2 + $0x228] sm:$0xff]
    %v3105 = vld [vmem:[#allocation2 + $0x230] sm:$0xff]
    %v3106 = vld [vmem:[#allocation2 + $0x238] sm:$0xff]
    %v3107 = vld [vmem:[#allocation2 + $0x240] sm:$0xff]
    %v3108 = vld [vmem:[#allocation2 + $0x248] sm:$0xff]
    %v3109 = vld [vmem:[#allocation2 + $0x250] sm:$0xff]
    %v3110 = vld [vmem:[#allocation2 + $0x258] sm:$0xff]
    %v3111 = vld [vmem:[#allocation2 + $0x260] sm:$0xff]
    %v3112 = vld [vmem:[#allocation2 + $0x268] sm:$0xff]
    %v3113 = vld [vmem:[#allocation2 + $0x270] sm:$0xff]
    %v3114 = vld [vmem:[#allocation2 + $0x278] sm:$0xff]
    %v3115 = vld [vmem:[#allocation2 + $0x280] sm:$0xff]
    %v3116 = vld [vmem:[#allocation2 + $0x288] sm:$0xff]
    %v3117 = vld [vmem:[#allocation2 + $0x290] sm:$0xff]
    %v3118 = vld [vmem:[#allocation2 + $0x298] sm:$0xff]
    %v3119 = vld [vmem:[#allocation2 + $0x2a0] sm:$0xff]
    %v3120 = vld [vmem:[#allocation2 + $0x2a8] sm:$0xff]
    %v3121 = vld [vmem:[#allocation2 + $0x2b0] sm:$0xff]
    %v3122 = vld [vmem:[#allocation2 + $0x2b8] sm:$0xff]
    %v3123 = vld [vmem:[#allocation2 + $0x2c0] sm:$0xff]
    %v3124 = vld [vmem:[#allocation2 + $0x2c8] sm:$0xff]
    %v3125 = vld [vmem:[#allocation2 + $0x2d0] sm:$0xff]
    %v3126 = vld [vmem:[#allocation2 + $0x2d8] sm:$0xff]
    %v3127 = vld [vmem:[#allocation2 + $0x2e0] sm:$0xff]
    %v3128 = vld [vmem:[#allocation2 + $0x2e8] sm:$0xff]
    %v3129 = vld [vmem:[#allocation2 + $0x2f0] sm:$0xff]
    %v3130 = vld [vmem:[#allocation2 + $0x2f8] sm:$0xff]
    %v3131 = vld [vmem:[#allocation2 + $0x300] sm:$0xff]
    %v3132 = vld [vmem:[#allocation2 + $0x308] sm:$0xff]
    %v3133 = vld [vmem:[#allocation2 + $0x310] sm:$0xff]
    %v3134 = vld [vmem:[#allocation2 + $0x318] sm:$0xff]
    %v3135 = vld [vmem:[#allocation2 + $0x320] sm:$0xff]
    %v3136 = vld [vmem:[#allocation2 + $0x328] sm:$0xff]
    %v3137 = vld [vmem:[#allocation2 + $0x330] sm:$0xff]
    %v3138 = vld [vmem:[#allocation2 + $0x338] sm:$0xff]
    %v3139 = vld [vmem:[#allocation2 + $0x340] sm:$0xff]
    %v3140 = vld [vmem:[#allocation2 + $0x348] sm:$0xff]
    %v3141 = vld [vmem:[#allocation2 + $0x350] sm:$0xff]
    %v3142 = vld [vmem:[#allocation2 + $0x358] sm:$0xff]
    %v3143 = vld [vmem:[#allocation2 + $0x360] sm:$0xff]
    %v3144 = vld [vmem:[#allocation2 + $0x368] sm:$0xff]
    %v3145 = vld [vmem:[#allocation2 + $0x370] sm:$0xff]
    %v3146 = vld [vmem:[#allocation2 + $0x378] sm:$0xff]
    %v3147 = vld [vmem:[#allocation2 + $0x380] sm:$0xff]
    %v3148 = vld [vmem:[#allocation2 + $0x388] sm:$0xff]
    %v3149 = vld [vmem:[#allocation2 + $0x390] sm:$0xff]
    %v3150 = vld [vmem:[#allocation2 + $0x398] sm:$0xff]
    %v3151 = vld [vmem:[#allocation2 + $0x3a0] sm:$0xff]
    %v3152 = vld [vmem:[#allocation2 + $0x3a8] sm:$0xff]
    %v3153 = vld [vmem:[#allocation2 + $0x3b0] sm:$0xff]
    %v3154 = vld [vmem:[#allocation2 + $0x3b8] sm:$0xff]
    %v3155 = vld [vmem:[#allocation2 + $0x3c0] sm:$0xff]
    %v3156 = vld [vmem:[#allocation2 + $0x3c8] sm:$0xff]
    %v3157 = vld [vmem:[#allocation2 + $0x3d0] sm:$0xff]
    %v3158 = vld [vmem:[#allocation2 + $0x3d8] sm:$0xff]
    %v3159 = vld [vmem:[#allocation2 + $0x3e0] sm:$0xff]
    %v3160 = vld [vmem:[#allocation2 + $0x3e8] sm:$0xff]
    %v3161 = vld [vmem:[#allocation2 + $0x3f0] sm:$0xff]
    %v3162 = vld [vmem:[#allocation2 + $0x3f8] sm:$0xff]
    %v3163 = vld [vmem:[#allocation28] sm:$0x3]
    %v3165 = vlaneseq
    %v3166 = vshrl.u32 %v3165, 7
    %v3167 = vsub.s32 0, %v3166
    %v3168 = vrot.slane %v3163, %v3167
    %v3169 = vlaneseq
    %v3170 = vshrl.u32 %v3169, 7
    %v3171 = vsub.s32 1, %v3170
    %v3172 = vrot.slane %v3163, %v3171
    %v3183 = vsel %vm1442, %v2991, %v2939
    %v3184 = vsel %vm1442, %v3004, %v2952
    %v3185 = vsel %vm1442, %v3017, %v2965
    %v3186 = vsel %vm1442, %v3030, %v2978
    %3191 = vmatprep.subr.mxu0 %v3036
    %3192 = vmatpush1.msra.mxu0 %v3035
    %3193 = vmatprep.subr.mxu0 %v3038
    %3194 = vmatpush1.msra.mxu0 %v3037
    %3195 = vmatprep.subr.mxu0 %v3040
    %3196 = vmatpush1.msra.mxu0 %v3039
    %3197 = vmatprep.subr.mxu0 %v3042
    %3198 = vmatpush1.msra.mxu0 %v3041
    %3199 = vmatprep.subr.mxu0 %v3044
    %3200 = vmatpush1.msra.mxu0 %v3043
    %3201 = vmatprep.subr.mxu0 %v3046
    %3202 = vmatpush1.msra.mxu0 %v3045
    %3203 = vmatprep.subr.mxu0 %v3048
    %3204 = vmatpush1.msra.mxu0 %v3047
    %3205 = vmatprep.subr.mxu0 %v3050
    %3206 = vmatpush1.msra.mxu0 %v3049
    %3207 = vmatprep.subr.mxu0 %v3052
    %3208 = vmatpush1.msra.mxu0 %v3051
    %3209 = vmatprep.subr.mxu0 %v3054
    %3210 = vmatpush1.msra.mxu0 %v3053
    %3211 = vmatprep.subr.mxu0 %v3056
    %3212 = vmatpush1.msra.mxu0 %v3055
    %3213 = vmatprep.subr.mxu0 %v3058
    %3214 = vmatpush1.msra.mxu0 %v3057
    %3215 = vmatprep.subr.mxu0 %v3060
    %3216 = vmatpush1.msra.mxu0 %v3059
    %3217 = vmatprep.subr.mxu0 %v3062
    %3218 = vmatpush1.msra.mxu0 %v3061
    %3219 = vmatprep.subr.mxu0 %v3064
    %3220 = vmatpush1.msra.mxu0 %v3063
    %3221 = vmatprep.subr.mxu0 %v3066
    %3222 = vmatpush1.msra.mxu0 %v3065
    %3223 = vmatprep.subr.mxu0 %v3068
    %3224 = vmatpush1.msra.mxu0 %v3067
    %3225 = vmatprep.subr.mxu0 %v3070
    %3226 = vmatpush1.msra.mxu0 %v3069
    %3227 = vmatprep.subr.mxu0 %v3072
    %3228 = vmatpush1.msra.mxu0 %v3071
    %3229 = vmatprep.subr.mxu0 %v3074
    %3230 = vmatpush1.msra.mxu0 %v3073
    %3231 = vmatprep.subr.mxu0 %v3076
    %3232 = vmatpush1.msra.mxu0 %v3075
    %3233 = vmatprep.subr.mxu0 %v3078
    %3234 = vmatpush1.msra.mxu0 %v3077
    %3235 = vmatprep.subr.mxu0 %v3080
    %3236 = vmatpush1.msra.mxu0 %v3079
    %3237 = vmatprep.subr.mxu0 %v3082
    %3238 = vmatpush1.msra.mxu0 %v3081
    %3239 = vmatprep.subr.mxu0 %v3084
    %3240 = vmatpush1.msra.mxu0 %v3083
    %3241 = vmatprep.subr.mxu0 %v3086
    %3242 = vmatpush1.msra.mxu0 %v3085
    %3243 = vmatprep.subr.mxu0 %v3088
    %3244 = vmatpush1.msra.mxu0 %v3087
    %3245 = vmatprep.subr.mxu0 %v3090
    %3246 = vmatpush1.msra.mxu0 %v3089
    %3247 = vmatprep.subr.mxu0 %v3092
    %3248 = vmatpush1.msra.mxu0 %v3091
    %3249 = vmatprep.subr.mxu0 %v3094
    %3250 = vmatpush1.msra.mxu0 %v3093
    %3251 = vmatprep.subr.mxu0 %v3096
    %3252 = vmatpush1.msra.mxu0 %v3095
    %3253 = vmatprep.subr.mxu0 %v3098
    %3254 = vmatpush1.msra.mxu0 %v3097
    %3255 = vmatprep.mubr.f32.mxu0 %v3184
    %3256 = vmatmul.mubr.f32.gmra.mrb[0].mxu0 %v3183
    %v3257 = vpop.f32.mrb[0].mxu0
    %v3258 = vadd.f32 %v3168, %v3257
    %v3259 = vpop.f32.mrb[0].mxu0
    %v3260 = vadd.f32 %v3172, %v3259
    %3261 = vdwg.mxu0
    %3262 = vmatprep.subr.mxu0 %v3100
    %3263 = vmatpush1.msra.mxu0 %v3099
    %3264 = vmatprep.subr.mxu0 %v3102
    %3265 = vmatpush1.msra.mxu0 %v3101
    %3266 = vmatprep.subr.mxu0 %v3104
    %3267 = vmatpush1.msra.mxu0 %v3103
    %3268 = vmatprep.subr.mxu0 %v3106
    %3269 = vmatpush1.msra.mxu0 %v3105
    %3270 = vmatprep.subr.mxu0 %v3108
    %3271 = vmatpush1.msra.mxu0 %v3107
    %3272 = vmatprep.subr.mxu0 %v3110
    %3273 = vmatpush1.msra.mxu0 %v3109
    %3274 = vmatprep.subr.mxu0 %v3112
    %3275 = vmatpush1.msra.mxu0 %v3111
    %3276 = vmatprep.subr.mxu0 %v3114
    %3277 = vmatpush1.msra.mxu0 %v3113
    %3278 = vmatprep.subr.mxu0 %v3116
    %3279 = vmatpush1.msra.mxu0 %v3115
    %3280 = vmatprep.subr.mxu0 %v3118
    %3281 = vmatpush1.msra.mxu0 %v3117
    %3282 = vmatprep.subr.mxu0 %v3120
    %3283 = vmatpush1.msra.mxu0 %v3119
    %3284 = vmatprep.subr.mxu0 %v3122
    %3285 = vmatpush1.msra.mxu0 %v3121
    %3286 = vmatprep.subr.mxu0 %v3124
    %3287 = vmatpush1.msra.mxu0 %v3123
    %3288 = vmatprep.subr.mxu0 %v3126
    %3289 = vmatpush1.msra.mxu0 %v3125
    %3290 = vmatprep.subr.mxu0 %v3128
    %3291 = vmatpush1.msra.mxu0 %v3127
    %3292 = vmatprep.subr.mxu0 %v3130
    %3293 = vmatpush1.msra.mxu0 %v3129
    %3294 = vmatprep.subr.mxu0 %v3132
    %3295 = vmatpush1.msra.mxu0 %v3131
    %3296 = vmatprep.subr.mxu0 %v3134
    %3297 = vmatpush1.msra.mxu0 %v3133
    %3298 = vmatprep.subr.mxu0 %v3136
    %3299 = vmatpush1.msra.mxu0 %v3135
    %3300 = vmatprep.subr.mxu0 %v3138
    %3301 = vmatpush1.msra.mxu0 %v3137
    %3302 = vmatprep.subr.mxu0 %v3140
    %3303 = vmatpush1.msra.mxu0 %v3139
    %3304 = vmatprep.subr.mxu0 %v3142
    %3305 = vmatpush1.msra.mxu0 %v3141
    %3306 = vmatprep.subr.mxu0 %v3144
    %3307 = vmatpush1.msra.mxu0 %v3143
    %3308 = vmatprep.subr.mxu0 %v3146
    %3309 = vmatpush1.msra.mxu0 %v3145
    %3310 = vmatprep.subr.mxu0 %v3148
    %3311 = vmatpush1.msra.mxu0 %v3147
    %3312 = vmatprep.subr.mxu0 %v3150
    %3313 = vmatpush1.msra.mxu0 %v3149
    %3314 = vmatprep.subr.mxu0 %v3152
    %3315 = vmatpush1.msra.mxu0 %v3151
    %3316 = vmatprep.subr.mxu0 %v3154
    %3317 = vmatpush1.msra.mxu0 %v3153
    %3318 = vmatprep.subr.mxu0 %v3156
    %3319 = vmatpush1.msra.mxu0 %v3155
    %3320 = vmatprep.subr.mxu0 %v3158
    %3321 = vmatpush1.msra.mxu0 %v3157
    %3322 = vmatprep.subr.mxu0 %v3160
    %3323 = vmatpush1.msra.mxu0 %v3159
    %3324 = vmatprep.subr.mxu0 %v3162
    %3325 = vmatpush1.msra.mxu0 %v3161
    %3326 = vmatprep.mubr.f32.mxu0 %v3186
    %3327 = vmatmul.mubr.f32.gmra.mrb[0].mxu0 %v3185
    %v3328 = vpop.f32.mrb[0].mxu0
    %v3329 = vadd.f32 %v3258, %v3328
    %v3330 = vpop.f32.mrb[0].mxu0
    %v3331 = vadd.f32 %v3260, %v3330
    %3332 = vdwg.mxu0
    %v3333 = vmax.f32 %v3329, 0.0
    %v3334 = vmax.f32 %v3331, 0.0
    %s3335 = smul.u32 8, 32
    %s3336 = smul.u32 %s3335, 32
    %s3337 = sshll.u32 %s3336, 4
    %3338 = dma.done %s333, %s3337
    %v3339 = vld [vmem:[#allocation3] sm:$0xff]
    %v3340 = vld [vmem:[#allocation3 + $0x8] sm:$0xff]
    %v3341 = vld [vmem:[#allocation3 + $0x10] sm:$0xff]
    %v3342 = vld [vmem:[#allocation3 + $0x18] sm:$0xff]
    %v3343 = vld [vmem:[#allocation3 + $0x20] sm:$0xff]
    %v3344 = vld [vmem:[#allocation3 + $0x28] sm:$0xff]
    %v3345 = vld [vmem:[#allocation3 + $0x30] sm:$0xff]
    %v3346 = vld [vmem:[#allocation3 + $0x38] sm:$0xff]
    %v3347 = vld [vmem:[#allocation3 + $0x40] sm:$0xff]
    %v3348 = vld [vmem:[#allocation3 + $0x48] sm:$0xff]
    %v3349 = vld [vmem:[#allocation3 + $0x50] sm:$0xff]
    %v3350 = vld [vmem:[#allocation3 + $0x58] sm:$0xff]
    %v3351 = vld [vmem:[#allocation3 + $0x60] sm:$0xff]
    %v3352 = vld [vmem:[#allocation3 + $0x68] sm:$0xff]
    %v3353 = vld [vmem:[#allocation3 + $0x70] sm:$0xff]
    %v3354 = vld [vmem:[#allocation3 + $0x78] sm:$0xff]
    %v3355 = vld [vmem:[#allocation3 + $0x80] sm:$0xff]
    %v3356 = vld [vmem:[#allocation3 + $0x88] sm:$0xff]
    %v3357 = vld [vmem:[#allocation3 + $0x90] sm:$0xff]
    %v3358 = vld [vmem:[#allocation3 + $0x98] sm:$0xff]
    %v3359 = vld [vmem:[#allocation3 + $0xa0] sm:$0xff]
    %v3360 = vld [vmem:[#allocation3 + $0xa8] sm:$0xff]
    %v3361 = vld [vmem:[#allocation3 + $0xb0] sm:$0xff]
    %v3362 = vld [vmem:[#allocation3 + $0xb8] sm:$0xff]
    %v3363 = vld [vmem:[#allocation3 + $0xc0] sm:$0xff]
    %v3364 = vld [vmem:[#allocation3 + $0xc8] sm:$0xff]
    %v3365 = vld [vmem:[#allocation3 + $0xd0] sm:$0xff]
    %v3366 = vld [vmem:[#allocation3 + $0xd8] sm:$0xff]
    %v3367 = vld [vmem:[#allocation3 + $0xe0] sm:$0xff]
    %v3368 = vld [vmem:[#allocation3 + $0xe8] sm:$0xff]
    %v3369 = vld [vmem:[#allocation3 + $0xf0] sm:$0xff]
    %v3370 = vld [vmem:[#allocation3 + $0xf8] sm:$0xff]
    %v3371 = vld [vmem:[#allocation3 + $0x100] sm:$0xff]
    %v3372 = vld [vmem:[#allocation3 + $0x108] sm:$0xff]
    %v3373 = vld [vmem:[#allocation3 + $0x110] sm:$0xff]
    %v3374 = vld [vmem:[#allocation3 + $0x118] sm:$0xff]
    %v3375 = vld [vmem:[#allocation3 + $0x120] sm:$0xff]
    %v3376 = vld [vmem:[#allocation3 + $0x128] sm:$0xff]
    %v3377 = vld [vmem:[#allocation3 + $0x130] sm:$0xff]
    %v3378 = vld [vmem:[#allocation3 + $0x138] sm:$0xff]
    %v3379 = vld [vmem:[#allocation3 + $0x140] sm:$0xff]
    %v3380 = vld [vmem:[#allocation3 + $0x148] sm:$0xff]
    %v3381 = vld [vmem:[#allocation3 + $0x150] sm:$0xff]
    %v3382 = vld [vmem:[#allocation3 + $0x158] sm:$0xff]
    %v3383 = vld [vmem:[#allocation3 + $0x160] sm:$0xff]
    %v3384 = vld [vmem:[#allocation3 + $0x168] sm:$0xff]
    %v3385 = vld [vmem:[#allocation3 + $0x170] sm:$0xff]
    %v3386 = vld [vmem:[#allocation3 + $0x178] sm:$0xff]
    %v3387 = vld [vmem:[#allocation3 + $0x180] sm:$0xff]
    %v3388 = vld [vmem:[#allocation3 + $0x188] sm:$0xff]
    %v3389 = vld [vmem:[#allocation3 + $0x190] sm:$0xff]
    %v3390 = vld [vmem:[#allocation3 + $0x198] sm:$0xff]
    %v3391 = vld [vmem:[#allocation3 + $0x1a0] sm:$0xff]
    %v3392 = vld [vmem:[#allocation3 + $0x1a8] sm:$0xff]
    %v3393 = vld [vmem:[#allocation3 + $0x1b0] sm:$0xff]
    %v3394 = vld [vmem:[#allocation3 + $0x1b8] sm:$0xff]
    %v3395 = vld [vmem:[#allocation3 + $0x1c0] sm:$0xff]
    %v3396 = vld [vmem:[#allocation3 + $0x1c8] sm:$0xff]
    %v3397 = vld [vmem:[#allocation3 + $0x1d0] sm:$0xff]
    %v3398 = vld [vmem:[#allocation3 + $0x1d8] sm:$0xff]
    %v3399 = vld [vmem:[#allocation3 + $0x1e0] sm:$0xff]
    %v3400 = vld [vmem:[#allocation3 + $0x1e8] sm:$0xff]
    %v3401 = vld [vmem:[#allocation3 + $0x1f0] sm:$0xff]
    %v3402 = vld [vmem:[#allocation3 + $0x1f8] sm:$0xff]
    %v3403 = vld [vmem:[#allocation3 + $0x200] sm:$0xff]
    %v3404 = vld [vmem:[#allocation3 + $0x208] sm:$0xff]
    %v3405 = vld [vmem:[#allocation3 + $0x210] sm:$0xff]
    %v3406 = vld [vmem:[#allocation3 + $0x218] sm:$0xff]
    %v3407 = vld [vmem:[#allocation3 + $0x220] sm:$0xff]
    %v3408 = vld [vmem:[#allocation3 + $0x228] sm:$0xff]
    %v3409 = vld [vmem:[#allocation3 + $0x230] sm:$0xff]
    %v3410 = vld [vmem:[#allocation3 + $0x238] sm:$0xff]
    %v3411 = vld [vmem:[#allocation3 + $0x240] sm:$0xff]
    %v3412 = vld [vmem:[#allocation3 + $0x248] sm:$0xff]
    %v3413 = vld [vmem:[#allocation3 + $0x250] sm:$0xff]
    %v3414 = vld [vmem:[#allocation3 + $0x258] sm:$0xff]
    %v3415 = vld [vmem:[#allocation3 + $0x260] sm:$0xff]
    %v3416 = vld [vmem:[#allocation3 + $0x268] sm:$0xff]
    %v3417 = vld [vmem:[#allocation3 + $0x270] sm:$0xff]
    %v3418 = vld [vmem:[#allocation3 + $0x278] sm:$0xff]
    %v3419 = vld [vmem:[#allocation3 + $0x280] sm:$0xff]
    %v3420 = vld [vmem:[#allocation3 + $0x288] sm:$0xff]
    %v3421 = vld [vmem:[#allocation3 + $0x290] sm:$0xff]
    %v3422 = vld [vmem:[#allocation3 + $0x298] sm:$0xff]
    %v3423 = vld [vmem:[#allocation3 + $0x2a0] sm:$0xff]
    %v3424 = vld [vmem:[#allocation3 + $0x2a8] sm:$0xff]
    %v3425 = vld [vmem:[#allocation3 + $0x2b0] sm:$0xff]
    %v3426 = vld [vmem:[#allocation3 + $0x2b8] sm:$0xff]
    %v3427 = vld [vmem:[#allocation3 + $0x2c0] sm:$0xff]
    %v3428 = vld [vmem:[#allocation3 + $0x2c8] sm:$0xff]
    %v3429 = vld [vmem:[#allocation3 + $0x2d0] sm:$0xff]
    %v3430 = vld [vmem:[#allocation3 + $0x2d8] sm:$0xff]
    %v3431 = vld [vmem:[#allocation3 + $0x2e0] sm:$0xff]
    %v3432 = vld [vmem:[#allocation3 + $0x2e8] sm:$0xff]
    %v3433 = vld [vmem:[#allocation3 + $0x2f0] sm:$0xff]
    %v3434 = vld [vmem:[#allocation3 + $0x2f8] sm:$0xff]
    %v3435 = vld [vmem:[#allocation3 + $0x300] sm:$0xff]
    %v3436 = vld [vmem:[#allocation3 + $0x308] sm:$0xff]
    %v3437 = vld [vmem:[#allocation3 + $0x310] sm:$0xff]
    %v3438 = vld [vmem:[#allocation3 + $0x318] sm:$0xff]
    %v3439 = vld [vmem:[#allocation3 + $0x320] sm:$0xff]
    %v3440 = vld [vmem:[#allocation3 + $0x328] sm:$0xff]
    %v3441 = vld [vmem:[#allocation3 + $0x330] sm:$0xff]
    %v3442 = vld [vmem:[#allocation3 + $0x338] sm:$0xff]
    %v3443 = vld [vmem:[#allocation3 + $0x340] sm:$0xff]
    %v3444 = vld [vmem:[#allocation3 + $0x348] sm:$0xff]
    %v3445 = vld [vmem:[#allocation3 + $0x350] sm:$0xff]
    %v3446 = vld [vmem:[#allocation3 + $0x358] sm:$0xff]
    %v3447 = vld [vmem:[#allocation3 + $0x360] sm:$0xff]
    %v3448 = vld [vmem:[#allocation3 + $0x368] sm:$0xff]
    %v3449 = vld [vmem:[#allocation3 + $0x370] sm:$0xff]
    %v3450 = vld [vmem:[#allocation3 + $0x378] sm:$0xff]
    %v3451 = vld [vmem:[#allocation3 + $0x380] sm:$0xff]
    %v3452 = vld [vmem:[#allocation3 + $0x388] sm:$0xff]
    %v3453 = vld [vmem:[#allocation3 + $0x390] sm:$0xff]
    %v3454 = vld [vmem:[#allocation3 + $0x398] sm:$0xff]
    %v3455 = vld [vmem:[#allocation3 + $0x3a0] sm:$0xff]
    %v3456 = vld [vmem:[#allocation3 + $0x3a8] sm:$0xff]
    %v3457 = vld [vmem:[#allocation3 + $0x3b0] sm:$0xff]
    %v3458 = vld [vmem:[#allocation3 + $0x3b8] sm:$0xff]
    %v3459 = vld [vmem:[#allocation3 + $0x3c0] sm:$0xff]
    %v3460 = vld [vmem:[#allocation3 + $0x3c8] sm:$0xff]
    %v3461 = vld [vmem:[#allocation3 + $0x3d0] sm:$0xff]
    %v3462 = vld [vmem:[#allocation3 + $0x3d8] sm:$0xff]
    %v3463 = vld [vmem:[#allocation3 + $0x3e0] sm:$0xff]
    %v3464 = vld [vmem:[#allocation3 + $0x3e8] sm:$0xff]
    %v3465 = vld [vmem:[#allocation3 + $0x3f0] sm:$0xff]
    %v3466 = vld [vmem:[#allocation3 + $0x3f8] sm:$0xff]
    %v3467 = vld [vmem:[#allocation3 + $0x400] sm:$0xff]
    %v3468 = vld [vmem:[#allocation3 + $0x408] sm:$0xff]
    %v3469 = vld [vmem:[#allocation3 + $0x410] sm:$0xff]
    %v3470 = vld [vmem:[#allocation3 + $0x418] sm:$0xff]
    %v3471 = vld [vmem:[#allocation3 + $0x420] sm:$0xff]
    %v3472 = vld [vmem:[#allocation3 + $0x428] sm:$0xff]
    %v3473 = vld [vmem:[#allocation3 + $0x430] sm:$0xff]
    %v3474 = vld [vmem:[#allocation3 + $0x438] sm:$0xff]
    %v3475 = vld [vmem:[#allocation3 + $0x440] sm:$0xff]
    %v3476 = vld [vmem:[#allocation3 + $0x448] sm:$0xff]
    %v3477 = vld [vmem:[#allocation3 + $0x450] sm:$0xff]
    %v3478 = vld [vmem:[#allocation3 + $0x458] sm:$0xff]
    %v3479 = vld [vmem:[#allocation3 + $0x460] sm:$0xff]
    %v3480 = vld [vmem:[#allocation3 + $0x468] sm:$0xff]
    %v3481 = vld [vmem:[#allocation3 + $0x470] sm:$0xff]
    %v3482 = vld [vmem:[#allocation3 + $0x478] sm:$0xff]
    %v3483 = vld [vmem:[#allocation3 + $0x480] sm:$0xff]
    %v3484 = vld [vmem:[#allocation3 + $0x488] sm:$0xff]
    %v3485 = vld [vmem:[#allocation3 + $0x490] sm:$0xff]
    %v3486 = vld [vmem:[#allocation3 + $0x498] sm:$0xff]
    %v3487 = vld [vmem:[#allocation3 + $0x4a0] sm:$0xff]
    %v3488 = vld [vmem:[#allocation3 + $0x4a8] sm:$0xff]
    %v3489 = vld [vmem:[#allocation3 + $0x4b0] sm:$0xff]
    %v3490 = vld [vmem:[#allocation3 + $0x4b8] sm:$0xff]
    %v3491 = vld [vmem:[#allocation3 + $0x4c0] sm:$0xff]
    %v3492 = vld [vmem:[#allocation3 + $0x4c8] sm:$0xff]
    %v3493 = vld [vmem:[#allocation3 + $0x4d0] sm:$0xff]
    %v3494 = vld [vmem:[#allocation3 + $0x4d8] sm:$0xff]
    %v3495 = vld [vmem:[#allocation3 + $0x4e0] sm:$0xff]
    %v3496 = vld [vmem:[#allocation3 + $0x4e8] sm:$0xff]
    %v3497 = vld [vmem:[#allocation3 + $0x4f0] sm:$0xff]
    %v3498 = vld [vmem:[#allocation3 + $0x4f8] sm:$0xff]
    %v3499 = vld [vmem:[#allocation3 + $0x500] sm:$0xff]
    %v3500 = vld [vmem:[#allocation3 + $0x508] sm:$0xff]
    %v3501 = vld [vmem:[#allocation3 + $0x510] sm:$0xff]
    %v3502 = vld [vmem:[#allocation3 + $0x518] sm:$0xff]
    %v3503 = vld [vmem:[#allocation3 + $0x520] sm:$0xff]
    %v3504 = vld [vmem:[#allocation3 + $0x528] sm:$0xff]
    %v3505 = vld [vmem:[#allocation3 + $0x530] sm:$0xff]
    %v3506 = vld [vmem:[#allocation3 + $0x538] sm:$0xff]
    %v3507 = vld [vmem:[#allocation3 + $0x540] sm:$0xff]
    %v3508 = vld [vmem:[#allocation3 + $0x548] sm:$0xff]
    %v3509 = vld [vmem:[#allocation3 + $0x550] sm:$0xff]
    %v3510 = vld [vmem:[#allocation3 + $0x558] sm:$0xff]
    %v3511 = vld [vmem:[#allocation3 + $0x560] sm:$0xff]
    %v3512 = vld [vmem:[#allocation3 + $0x568] sm:$0xff]
    %v3513 = vld [vmem:[#allocation3 + $0x570] sm:$0xff]
    %v3514 = vld [vmem:[#allocation3 + $0x578] sm:$0xff]
    %v3515 = vld [vmem:[#allocation3 + $0x580] sm:$0xff]
    %v3516 = vld [vmem:[#allocation3 + $0x588] sm:$0xff]
    %v3517 = vld [vmem:[#allocation3 + $0x590] sm:$0xff]
    %v3518 = vld [vmem:[#allocation3 + $0x598] sm:$0xff]
    %v3519 = vld [vmem:[#allocation3 + $0x5a0] sm:$0xff]
    %v3520 = vld [vmem:[#allocation3 + $0x5a8] sm:$0xff]
    %v3521 = vld [vmem:[#allocation3 + $0x5b0] sm:$0xff]
    %v3522 = vld [vmem:[#allocation3 + $0x5b8] sm:$0xff]
    %v3523 = vld [vmem:[#allocation3 + $0x5c0] sm:$0xff]
    %v3524 = vld [vmem:[#allocation3 + $0x5c8] sm:$0xff]
    %v3525 = vld [vmem:[#allocation3 + $0x5d0] sm:$0xff]
    %v3526 = vld [vmem:[#allocation3 + $0x5d8] sm:$0xff]
    %v3527 = vld [vmem:[#allocation3 + $0x5e0] sm:$0xff]
    %v3528 = vld [vmem:[#allocation3 + $0x5e8] sm:$0xff]
    %v3529 = vld [vmem:[#allocation3 + $0x5f0] sm:$0xff]
    %v3530 = vld [vmem:[#allocation3 + $0x5f8] sm:$0xff]
    %v3531 = vld [vmem:[#allocation3 + $0x600] sm:$0xff]
    %v3532 = vld [vmem:[#allocation3 + $0x608] sm:$0xff]
    %v3533 = vld [vmem:[#allocation3 + $0x610] sm:$0xff]
    %v3534 = vld [vmem:[#allocation3 + $0x618] sm:$0xff]
    %v3535 = vld [vmem:[#allocation3 + $0x620] sm:$0xff]
    %v3536 = vld [vmem:[#allocation3 + $0x628] sm:$0xff]
    %v3537 = vld [vmem:[#allocation3 + $0x630] sm:$0xff]
    %v3538 = vld [vmem:[#allocation3 + $0x638] sm:$0xff]
    %v3539 = vld [vmem:[#allocation3 + $0x640] sm:$0xff]
    %v3540 = vld [vmem:[#allocation3 + $0x648] sm:$0xff]
    %v3541 = vld [vmem:[#allocation3 + $0x650] sm:$0xff]
    %v3542 = vld [vmem:[#allocation3 + $0x658] sm:$0xff]
    %v3543 = vld [vmem:[#allocation3 + $0x660] sm:$0xff]
    %v3544 = vld [vmem:[#allocation3 + $0x668] sm:$0xff]
    %v3545 = vld [vmem:[#allocation3 + $0x670] sm:$0xff]
    %v3546 = vld [vmem:[#allocation3 + $0x678] sm:$0xff]
    %v3547 = vld [vmem:[#allocation3 + $0x680] sm:$0xff]
    %v3548 = vld [vmem:[#allocation3 + $0x688] sm:$0xff]
    %v3549 = vld [vmem:[#allocation3 + $0x690] sm:$0xff]
    %v3550 = vld [vmem:[#allocation3 + $0x698] sm:$0xff]
    %v3551 = vld [vmem:[#allocation3 + $0x6a0] sm:$0xff]
    %v3552 = vld [vmem:[#allocation3 + $0x6a8] sm:$0xff]
    %v3553 = vld [vmem:[#allocation3 + $0x6b0] sm:$0xff]
    %v3554 = vld [vmem:[#allocation3 + $0x6b8] sm:$0xff]
    %v3555 = vld [vmem:[#allocation3 + $0x6c0] sm:$0xff]
    %v3556 = vld [vmem:[#allocation3 + $0x6c8] sm:$0xff]
    %v3557 = vld [vmem:[#allocation3 + $0x6d0] sm:$0xff]
    %v3558 = vld [vmem:[#allocation3 + $0x6d8] sm:$0xff]
    %v3559 = vld [vmem:[#allocation3 + $0x6e0] sm:$0xff]
    %v3560 = vld [vmem:[#allocation3 + $0x6e8] sm:$0xff]
    %v3561 = vld [vmem:[#allocation3 + $0x6f0] sm:$0xff]
    %v3562 = vld [vmem:[#allocation3 + $0x6f8] sm:$0xff]
    %v3563 = vld [vmem:[#allocation3 + $0x700] sm:$0xff]
    %v3564 = vld [vmem:[#allocation3 + $0x708] sm:$0xff]
    %v3565 = vld [vmem:[#allocation3 + $0x710] sm:$0xff]
    %v3566 = vld [vmem:[#allocation3 + $0x718] sm:$0xff]
    %v3567 = vld [vmem:[#allocation3 + $0x720] sm:$0xff]
    %v3568 = vld [vmem:[#allocation3 + $0x728] sm:$0xff]
    %v3569 = vld [vmem:[#allocation3 + $0x730] sm:$0xff]
    %v3570 = vld [vmem:[#allocation3 + $0x738] sm:$0xff]
    %v3571 = vld [vmem:[#allocation3 + $0x740] sm:$0xff]
    %v3572 = vld [vmem:[#allocation3 + $0x748] sm:$0xff]
    %v3573 = vld [vmem:[#allocation3 + $0x750] sm:$0xff]
    %v3574 = vld [vmem:[#allocation3 + $0x758] sm:$0xff]
    %v3575 = vld [vmem:[#allocation3 + $0x760] sm:$0xff]
    %v3576 = vld [vmem:[#allocation3 + $0x768] sm:$0xff]
    %v3577 = vld [vmem:[#allocation3 + $0x770] sm:$0xff]
    %v3578 = vld [vmem:[#allocation3 + $0x778] sm:$0xff]
    %v3579 = vld [vmem:[#allocation3 + $0x780] sm:$0xff]
    %v3580 = vld [vmem:[#allocation3 + $0x788] sm:$0xff]
    %v3581 = vld [vmem:[#allocation3 + $0x790] sm:$0xff]
    %v3582 = vld [vmem:[#allocation3 + $0x798] sm:$0xff]
    %v3583 = vld [vmem:[#allocation3 + $0x7a0] sm:$0xff]
    %v3584 = vld [vmem:[#allocation3 + $0x7a8] sm:$0xff]
    %v3585 = vld [vmem:[#allocation3 + $0x7b0] sm:$0xff]
    %v3586 = vld [vmem:[#allocation3 + $0x7b8] sm:$0xff]
    %v3587 = vld [vmem:[#allocation3 + $0x7c0] sm:$0xff]
    %v3588 = vld [vmem:[#allocation3 + $0x7c8] sm:$0xff]
    %v3589 = vld [vmem:[#allocation3 + $0x7d0] sm:$0xff]
    %v3590 = vld [vmem:[#allocation3 + $0x7d8] sm:$0xff]
    %v3591 = vld [vmem:[#allocation3 + $0x7e0] sm:$0xff]
    %v3592 = vld [vmem:[#allocation3 + $0x7e8] sm:$0xff]
    %v3593 = vld [vmem:[#allocation3 + $0x7f0] sm:$0xff]
    %v3594 = vld [vmem:[#allocation3 + $0x7f8] sm:$0xff]
    %v3595 = vld [vmem:[#allocation3 + $0x800] sm:$0xff]
    %v3596 = vld [vmem:[#allocation3 + $0x808] sm:$0xff]
    %v3597 = vld [vmem:[#allocation3 + $0x810] sm:$0xff]
    %v3598 = vld [vmem:[#allocation3 + $0x818] sm:$0xff]
    %v3599 = vld [vmem:[#allocation3 + $0x820] sm:$0xff]
    %v3600 = vld [vmem:[#allocation3 + $0x828] sm:$0xff]
    %v3601 = vld [vmem:[#allocation3 + $0x830] sm:$0xff]
    %v3602 = vld [vmem:[#allocation3 + $0x838] sm:$0xff]
    %v3603 = vld [vmem:[#allocation3 + $0x840] sm:$0xff]
    %v3604 = vld [vmem:[#allocation3 + $0x848] sm:$0xff]
    %v3605 = vld [vmem:[#allocation3 + $0x850] sm:$0xff]
    %v3606 = vld [vmem:[#allocation3 + $0x858] sm:$0xff]
    %v3607 = vld [vmem:[#allocation3 + $0x860] sm:$0xff]
    %v3608 = vld [vmem:[#allocation3 + $0x868] sm:$0xff]
    %v3609 = vld [vmem:[#allocation3 + $0x870] sm:$0xff]
    %v3610 = vld [vmem:[#allocation3 + $0x878] sm:$0xff]
    %v3611 = vld [vmem:[#allocation3 + $0x880] sm:$0xff]
    %v3612 = vld [vmem:[#allocation3 + $0x888] sm:$0xff]
    %v3613 = vld [vmem:[#allocation3 + $0x890] sm:$0xff]
    %v3614 = vld [vmem:[#allocation3 + $0x898] sm:$0xff]
    %v3615 = vld [vmem:[#allocation3 + $0x8a0] sm:$0xff]
    %v3616 = vld [vmem:[#allocation3 + $0x8a8] sm:$0xff]
    %v3617 = vld [vmem:[#allocation3 + $0x8b0] sm:$0xff]
    %v3618 = vld [vmem:[#allocation3 + $0x8b8] sm:$0xff]
    %v3619 = vld [vmem:[#allocation3 + $0x8c0] sm:$0xff]
    %v3620 = vld [vmem:[#allocation3 + $0x8c8] sm:$0xff]
    %v3621 = vld [vmem:[#allocation3 + $0x8d0] sm:$0xff]
    %v3622 = vld [vmem:[#allocation3 + $0x8d8] sm:$0xff]
    %v3623 = vld [vmem:[#allocation3 + $0x8e0] sm:$0xff]
    %v3624 = vld [vmem:[#allocation3 + $0x8e8] sm:$0xff]
    %v3625 = vld [vmem:[#allocation3 + $0x8f0] sm:$0xff]
    %v3626 = vld [vmem:[#allocation3 + $0x8f8] sm:$0xff]
    %v3627 = vld [vmem:[#allocation3 + $0x900] sm:$0xff]
    %v3628 = vld [vmem:[#allocation3 + $0x908] sm:$0xff]
    %v3629 = vld [vmem:[#allocation3 + $0x910] sm:$0xff]
    %v3630 = vld [vmem:[#allocation3 + $0x918] sm:$0xff]
    %v3631 = vld [vmem:[#allocation3 + $0x920] sm:$0xff]
    %v3632 = vld [vmem:[#allocation3 + $0x928] sm:$0xff]
    %v3633 = vld [vmem:[#allocation3 + $0x930] sm:$0xff]
    %v3634 = vld [vmem:[#allocation3 + $0x938] sm:$0xff]
    %v3635 = vld [vmem:[#allocation3 + $0x940] sm:$0xff]
    %v3636 = vld [vmem:[#allocation3 + $0x948] sm:$0xff]
    %v3637 = vld [vmem:[#allocation3 + $0x950] sm:$0xff]
    %v3638 = vld [vmem:[#allocation3 + $0x958] sm:$0xff]
    %v3639 = vld [vmem:[#allocation3 + $0x960] sm:$0xff]
    %v3640 = vld [vmem:[#allocation3 + $0x968] sm:$0xff]
    %v3641 = vld [vmem:[#allocation3 + $0x970] sm:$0xff]
    %v3642 = vld [vmem:[#allocation3 + $0x978] sm:$0xff]
    %v3643 = vld [vmem:[#allocation3 + $0x980] sm:$0xff]
    %v3644 = vld [vmem:[#allocation3 + $0x988] sm:$0xff]
    %v3645 = vld [vmem:[#allocation3 + $0x990] sm:$0xff]
    %v3646 = vld [vmem:[#allocation3 + $0x998] sm:$0xff]
    %v3647 = vld [vmem:[#allocation3 + $0x9a0] sm:$0xff]
    %v3648 = vld [vmem:[#allocation3 + $0x9a8] sm:$0xff]
    %v3649 = vld [vmem:[#allocation3 + $0x9b0] sm:$0xff]
    %v3650 = vld [vmem:[#allocation3 + $0x9b8] sm:$0xff]
    %v3651 = vld [vmem:[#allocation3 + $0x9c0] sm:$0xff]
    %v3652 = vld [vmem:[#allocation3 + $0x9c8] sm:$0xff]
    %v3653 = vld [vmem:[#allocation3 + $0x9d0] sm:$0xff]
    %v3654 = vld [vmem:[#allocation3 + $0x9d8] sm:$0xff]
    %v3655 = vld [vmem:[#allocation3 + $0x9e0] sm:$0xff]
    %v3656 = vld [vmem:[#allocation3 + $0x9e8] sm:$0xff]
    %v3657 = vld [vmem:[#allocation3 + $0x9f0] sm:$0xff]
    %v3658 = vld [vmem:[#allocation3 + $0x9f8] sm:$0xff]
    %v3659 = vld [vmem:[#allocation3 + $0xa00] sm:$0xff]
    %v3660 = vld [vmem:[#allocation3 + $0xa08] sm:$0xff]
    %v3661 = vld [vmem:[#allocation3 + $0xa10] sm:$0xff]
    %v3662 = vld [vmem:[#allocation3 + $0xa18] sm:$0xff]
    %v3663 = vld [vmem:[#allocation3 + $0xa20] sm:$0xff]
    %v3664 = vld [vmem:[#allocation3 + $0xa28] sm:$0xff]
    %v3665 = vld [vmem:[#allocation3 + $0xa30] sm:$0xff]
    %v3666 = vld [vmem:[#allocation3 + $0xa38] sm:$0xff]
    %v3667 = vld [vmem:[#allocation3 + $0xa40] sm:$0xff]
    %v3668 = vld [vmem:[#allocation3 + $0xa48] sm:$0xff]
    %v3669 = vld [vmem:[#allocation3 + $0xa50] sm:$0xff]
    %v3670 = vld [vmem:[#allocation3 + $0xa58] sm:$0xff]
    %v3671 = vld [vmem:[#allocation3 + $0xa60] sm:$0xff]
    %v3672 = vld [vmem:[#allocation3 + $0xa68] sm:$0xff]
    %v3673 = vld [vmem:[#allocation3 + $0xa70] sm:$0xff]
    %v3674 = vld [vmem:[#allocation3 + $0xa78] sm:$0xff]
    %v3675 = vld [vmem:[#allocation3 + $0xa80] sm:$0xff]
    %v3676 = vld [vmem:[#allocation3 + $0xa88] sm:$0xff]
    %v3677 = vld [vmem:[#allocation3 + $0xa90] sm:$0xff]
    %v3678 = vld [vmem:[#allocation3 + $0xa98] sm:$0xff]
    %v3679 = vld [vmem:[#allocation3 + $0xaa0] sm:$0xff]
    %v3680 = vld [vmem:[#allocation3 + $0xaa8] sm:$0xff]
    %v3681 = vld [vmem:[#allocation3 + $0xab0] sm:$0xff]
    %v3682 = vld [vmem:[#allocation3 + $0xab8] sm:$0xff]
    %v3683 = vld [vmem:[#allocation3 + $0xac0] sm:$0xff]
    %v3684 = vld [vmem:[#allocation3 + $0xac8] sm:$0xff]
    %v3685 = vld [vmem:[#allocation3 + $0xad0] sm:$0xff]
    %v3686 = vld [vmem:[#allocation3 + $0xad8] sm:$0xff]
    %v3687 = vld [vmem:[#allocation3 + $0xae0] sm:$0xff]
    %v3688 = vld [vmem:[#allocation3 + $0xae8] sm:$0xff]
    %v3689 = vld [vmem:[#allocation3 + $0xaf0] sm:$0xff]
    %v3690 = vld [vmem:[#allocation3 + $0xaf8] sm:$0xff]
    %v3691 = vld [vmem:[#allocation3 + $0xb00] sm:$0xff]
    %v3692 = vld [vmem:[#allocation3 + $0xb08] sm:$0xff]
    %v3693 = vld [vmem:[#allocation3 + $0xb10] sm:$0xff]
    %v3694 = vld [vmem:[#allocation3 + $0xb18] sm:$0xff]
    %v3695 = vld [vmem:[#allocation3 + $0xb20] sm:$0xff]
    %v3696 = vld [vmem:[#allocation3 + $0xb28] sm:$0xff]
    %v3697 = vld [vmem:[#allocation3 + $0xb30] sm:$0xff]
    %v3698 = vld [vmem:[#allocation3 + $0xb38] sm:$0xff]
    %v3699 = vld [vmem:[#allocation3 + $0xb40] sm:$0xff]
    %v3700 = vld [vmem:[#allocation3 + $0xb48] sm:$0xff]
    %v3701 = vld [vmem:[#allocation3 + $0xb50] sm:$0xff]
    %v3702 = vld [vmem:[#allocation3 + $0xb58] sm:$0xff]
    %v3703 = vld [vmem:[#allocation3 + $0xb60] sm:$0xff]
    %v3704 = vld [vmem:[#allocation3 + $0xb68] sm:$0xff]
    %v3705 = vld [vmem:[#allocation3 + $0xb70] sm:$0xff]
    %v3706 = vld [vmem:[#allocation3 + $0xb78] sm:$0xff]
    %v3707 = vld [vmem:[#allocation3 + $0xb80] sm:$0xff]
    %v3708 = vld [vmem:[#allocation3 + $0xb88] sm:$0xff]
    %v3709 = vld [vmem:[#allocation3 + $0xb90] sm:$0xff]
    %v3710 = vld [vmem:[#allocation3 + $0xb98] sm:$0xff]
    %v3711 = vld [vmem:[#allocation3 + $0xba0] sm:$0xff]
    %v3712 = vld [vmem:[#allocation3 + $0xba8] sm:$0xff]
    %v3713 = vld [vmem:[#allocation3 + $0xbb0] sm:$0xff]
    %v3714 = vld [vmem:[#allocation3 + $0xbb8] sm:$0xff]
    %v3715 = vld [vmem:[#allocation3 + $0xbc0] sm:$0xff]
    %v3716 = vld [vmem:[#allocation3 + $0xbc8] sm:$0xff]
    %v3717 = vld [vmem:[#allocation3 + $0xbd0] sm:$0xff]
    %v3718 = vld [vmem:[#allocation3 + $0xbd8] sm:$0xff]
    %v3719 = vld [vmem:[#allocation3 + $0xbe0] sm:$0xff]
    %v3720 = vld [vmem:[#allocation3 + $0xbe8] sm:$0xff]
    %v3721 = vld [vmem:[#allocation3 + $0xbf0] sm:$0xff]
    %v3722 = vld [vmem:[#allocation3 + $0xbf8] sm:$0xff]
    %v3723 = vld [vmem:[#allocation3 + $0xc00] sm:$0xff]
    %v3724 = vld [vmem:[#allocation3 + $0xc08] sm:$0xff]
    %v3725 = vld [vmem:[#allocation3 + $0xc10] sm:$0xff]
    %v3726 = vld [vmem:[#allocation3 + $0xc18] sm:$0xff]
    %v3727 = vld [vmem:[#allocation3 + $0xc20] sm:$0xff]
    %v3728 = vld [vmem:[#allocation3 + $0xc28] sm:$0xff]
    %v3729 = vld [vmem:[#allocation3 + $0xc30] sm:$0xff]
    %v3730 = vld [vmem:[#allocation3 + $0xc38] sm:$0xff]
    %v3731 = vld [vmem:[#allocation3 + $0xc40] sm:$0xff]
    %v3732 = vld [vmem:[#allocation3 + $0xc48] sm:$0xff]
    %v3733 = vld [vmem:[#allocation3 + $0xc50] sm:$0xff]
    %v3734 = vld [vmem:[#allocation3 + $0xc58] sm:$0xff]
    %v3735 = vld [vmem:[#allocation3 + $0xc60] sm:$0xff]
    %v3736 = vld [vmem:[#allocation3 + $0xc68] sm:$0xff]
    %v3737 = vld [vmem:[#allocation3 + $0xc70] sm:$0xff]
    %v3738 = vld [vmem:[#allocation3 + $0xc78] sm:$0xff]
    %v3739 = vld [vmem:[#allocation3 + $0xc80] sm:$0xff]
    %v3740 = vld [vmem:[#allocation3 + $0xc88] sm:$0xff]
    %v3741 = vld [vmem:[#allocation3 + $0xc90] sm:$0xff]
    %v3742 = vld [vmem:[#allocation3 + $0xc98] sm:$0xff]
    %v3743 = vld [vmem:[#allocation3 + $0xca0] sm:$0xff]
    %v3744 = vld [vmem:[#allocation3 + $0xca8] sm:$0xff]
    %v3745 = vld [vmem:[#allocation3 + $0xcb0] sm:$0xff]
    %v3746 = vld [vmem:[#allocation3 + $0xcb8] sm:$0xff]
    %v3747 = vld [vmem:[#allocation3 + $0xcc0] sm:$0xff]
    %v3748 = vld [vmem:[#allocation3 + $0xcc8] sm:$0xff]
    %v3749 = vld [vmem:[#allocation3 + $0xcd0] sm:$0xff]
    %v3750 = vld [vmem:[#allocation3 + $0xcd8] sm:$0xff]
    %v3751 = vld [vmem:[#allocation3 + $0xce0] sm:$0xff]
    %v3752 = vld [vmem:[#allocation3 + $0xce8] sm:$0xff]
    %v3753 = vld [vmem:[#allocation3 + $0xcf0] sm:$0xff]
    %v3754 = vld [vmem:[#allocation3 + $0xcf8] sm:$0xff]
    %v3755 = vld [vmem:[#allocation3 + $0xd00] sm:$0xff]
    %v3756 = vld [vmem:[#allocation3 + $0xd08] sm:$0xff]
    %v3757 = vld [vmem:[#allocation3 + $0xd10] sm:$0xff]
    %v3758 = vld [vmem:[#allocation3 + $0xd18] sm:$0xff]
    %v3759 = vld [vmem:[#allocation3 + $0xd20] sm:$0xff]
    %v3760 = vld [vmem:[#allocation3 + $0xd28] sm:$0xff]
    %v3761 = vld [vmem:[#allocation3 + $0xd30] sm:$0xff]
    %v3762 = vld [vmem:[#allocation3 + $0xd38] sm:$0xff]
    %v3763 = vld [vmem:[#allocation3 + $0xd40] sm:$0xff]
    %v3764 = vld [vmem:[#allocation3 + $0xd48] sm:$0xff]
    %v3765 = vld [vmem:[#allocation3 + $0xd50] sm:$0xff]
    %v3766 = vld [vmem:[#allocation3 + $0xd58] sm:$0xff]
    %v3767 = vld [vmem:[#allocation3 + $0xd60] sm:$0xff]
    %v3768 = vld [vmem:[#allocation3 + $0xd68] sm:$0xff]
    %v3769 = vld [vmem:[#allocation3 + $0xd70] sm:$0xff]
    %v3770 = vld [vmem:[#allocation3 + $0xd78] sm:$0xff]
    %v3771 = vld [vmem:[#allocation3 + $0xd80] sm:$0xff]
    %v3772 = vld [vmem:[#allocation3 + $0xd88] sm:$0xff]
    %v3773 = vld [vmem:[#allocation3 + $0xd90] sm:$0xff]
    %v3774 = vld [vmem:[#allocation3 + $0xd98] sm:$0xff]
    %v3775 = vld [vmem:[#allocation3 + $0xda0] sm:$0xff]
    %v3776 = vld [vmem:[#allocation3 + $0xda8] sm:$0xff]
    %v3777 = vld [vmem:[#allocation3 + $0xdb0] sm:$0xff]
    %v3778 = vld [vmem:[#allocation3 + $0xdb8] sm:$0xff]
    %v3779 = vld [vmem:[#allocation3 + $0xdc0] sm:$0xff]
    %v3780 = vld [vmem:[#allocation3 + $0xdc8] sm:$0xff]
    %v3781 = vld [vmem:[#allocation3 + $0xdd0] sm:$0xff]
    %v3782 = vld [vmem:[#allocation3 + $0xdd8] sm:$0xff]
    %v3783 = vld [vmem:[#allocation3 + $0xde0] sm:$0xff]
    %v3784 = vld [vmem:[#allocation3 + $0xde8] sm:$0xff]
    %v3785 = vld [vmem:[#allocation3 + $0xdf0] sm:$0xff]
    %v3786 = vld [vmem:[#allocation3 + $0xdf8] sm:$0xff]
    %v3787 = vld [vmem:[#allocation3 + $0xe00] sm:$0xff]
    %v3788 = vld [vmem:[#allocation3 + $0xe08] sm:$0xff]
    %v3789 = vld [vmem:[#allocation3 + $0xe10] sm:$0xff]
    %v3790 = vld [vmem:[#allocation3 + $0xe18] sm:$0xff]
    %v3791 = vld [vmem:[#allocation3 + $0xe20] sm:$0xff]
    %v3792 = vld [vmem:[#allocation3 + $0xe28] sm:$0xff]
    %v3793 = vld [vmem:[#allocation3 + $0xe30] sm:$0xff]
    %v3794 = vld [vmem:[#allocation3 + $0xe38] sm:$0xff]
    %v3795 = vld [vmem:[#allocation3 + $0xe40] sm:$0xff]
    %v3796 = vld [vmem:[#allocation3 + $0xe48] sm:$0xff]
    %v3797 = vld [vmem:[#allocation3 + $0xe50] sm:$0xff]
    %v3798 = vld [vmem:[#allocation3 + $0xe58] sm:$0xff]
    %v3799 = vld [vmem:[#allocation3 + $0xe60] sm:$0xff]
    %v3800 = vld [vmem:[#allocation3 + $0xe68] sm:$0xff]
    %v3801 = vld [vmem:[#allocation3 + $0xe70] sm:$0xff]
    %v3802 = vld [vmem:[#allocation3 + $0xe78] sm:$0xff]
    %v3803 = vld [vmem:[#allocation3 + $0xe80] sm:$0xff]
    %v3804 = vld [vmem:[#allocation3 + $0xe88] sm:$0xff]
    %v3805 = vld [vmem:[#allocation3 + $0xe90] sm:$0xff]
    %v3806 = vld [vmem:[#allocation3 + $0xe98] sm:$0xff]
    %v3807 = vld [vmem:[#allocation3 + $0xea0] sm:$0xff]
    %v3808 = vld [vmem:[#allocation3 + $0xea8] sm:$0xff]
    %v3809 = vld [vmem:[#allocation3 + $0xeb0] sm:$0xff]
    %v3810 = vld [vmem:[#allocation3 + $0xeb8] sm:$0xff]
    %v3811 = vld [vmem:[#allocation3 + $0xec0] sm:$0xff]
    %v3812 = vld [vmem:[#allocation3 + $0xec8] sm:$0xff]
    %v3813 = vld [vmem:[#allocation3 + $0xed0] sm:$0xff]
    %v3814 = vld [vmem:[#allocation3 + $0xed8] sm:$0xff]
    %v3815 = vld [vmem:[#allocation3 + $0xee0] sm:$0xff]
    %v3816 = vld [vmem:[#allocation3 + $0xee8] sm:$0xff]
    %v3817 = vld [vmem:[#allocation3 + $0xef0] sm:$0xff]
    %v3818 = vld [vmem:[#allocation3 + $0xef8] sm:$0xff]
    %v3819 = vld [vmem:[#allocation3 + $0xf00] sm:$0xff]
    %v3820 = vld [vmem:[#allocation3 + $0xf08] sm:$0xff]
    %v3821 = vld [vmem:[#allocation3 + $0xf10] sm:$0xff]
    %v3822 = vld [vmem:[#allocation3 + $0xf18] sm:$0xff]
    %v3823 = vld [vmem:[#allocation3 + $0xf20] sm:$0xff]
    %v3824 = vld [vmem:[#allocation3 + $0xf28] sm:$0xff]
    %v3825 = vld [vmem:[#allocation3 + $0xf30] sm:$0xff]
    %v3826 = vld [vmem:[#allocation3 + $0xf38] sm:$0xff]
    %v3827 = vld [vmem:[#allocation3 + $0xf40] sm:$0xff]
    %v3828 = vld [vmem:[#allocation3 + $0xf48] sm:$0xff]
    %v3829 = vld [vmem:[#allocation3 + $0xf50] sm:$0xff]
    %v3830 = vld [vmem:[#allocation3 + $0xf58] sm:$0xff]
    %v3831 = vld [vmem:[#allocation3 + $0xf60] sm:$0xff]
    %v3832 = vld [vmem:[#allocation3 + $0xf68] sm:$0xff]
    %v3833 = vld [vmem:[#allocation3 + $0xf70] sm:$0xff]
    %v3834 = vld [vmem:[#allocation3 + $0xf78] sm:$0xff]
    %v3835 = vld [vmem:[#allocation3 + $0xf80] sm:$0xff]
    %v3836 = vld [vmem:[#allocation3 + $0xf88] sm:$0xff]
    %v3837 = vld [vmem:[#allocation3 + $0xf90] sm:$0xff]
    %v3838 = vld [vmem:[#allocation3 + $0xf98] sm:$0xff]
    %v3839 = vld [vmem:[#allocation3 + $0xfa0] sm:$0xff]
    %v3840 = vld [vmem:[#allocation3 + $0xfa8] sm:$0xff]
    %v3841 = vld [vmem:[#allocation3 + $0xfb0] sm:$0xff]
    %v3842 = vld [vmem:[#allocation3 + $0xfb8] sm:$0xff]
    %v3843 = vld [vmem:[#allocation3 + $0xfc0] sm:$0xff]
    %v3844 = vld [vmem:[#allocation3 + $0xfc8] sm:$0xff]
    %v3845 = vld [vmem:[#allocation3 + $0xfd0] sm:$0xff]
    %v3846 = vld [vmem:[#allocation3 + $0xfd8] sm:$0xff]
    %v3847 = vld [vmem:[#allocation3 + $0xfe0] sm:$0xff]
    %v3848 = vld [vmem:[#allocation3 + $0xfe8] sm:$0xff]
    %v3849 = vld [vmem:[#allocation3 + $0xff0] sm:$0xff]
    %v3850 = vld [vmem:[#allocation3 + $0xff8] sm:$0xff]
    %v3851 = vld [vmem:[#allocation3 + $0x1000] sm:$0xff]
    %v3852 = vld [vmem:[#allocation3 + $0x1008] sm:$0xff]
    %v3853 = vld [vmem:[#allocation3 + $0x1010] sm:$0xff]
    %v3854 = vld [vmem:[#allocation3 + $0x1018] sm:$0xff]
    %v3855 = vld [vmem:[#allocation3 + $0x1020] sm:$0xff]
    %v3856 = vld [vmem:[#allocation3 + $0x1028] sm:$0xff]
    %v3857 = vld [vmem:[#allocation3 + $0x1030] sm:$0xff]
    %v3858 = vld [vmem:[#allocation3 + $0x1038] sm:$0xff]
    %v3859 = vld [vmem:[#allocation3 + $0x1040] sm:$0xff]
    %v3860 = vld [vmem:[#allocation3 + $0x1048] sm:$0xff]
    %v3861 = vld [vmem:[#allocation3 + $0x1050] sm:$0xff]
    %v3862 = vld [vmem:[#allocation3 + $0x1058] sm:$0xff]
    %v3863 = vld [vmem:[#allocation3 + $0x1060] sm:$0xff]
    %v3864 = vld [vmem:[#allocation3 + $0x1068] sm:$0xff]
    %v3865 = vld [vmem:[#allocation3 + $0x1070] sm:$0xff]
    %v3866 = vld [vmem:[#allocation3 + $0x1078] sm:$0xff]
    %v3867 = vld [vmem:[#allocation3 + $0x1080] sm:$0xff]
    %v3868 = vld [vmem:[#allocation3 + $0x1088] sm:$0xff]
    %v3869 = vld [vmem:[#allocation3 + $0x1090] sm:$0xff]
    %v3870 = vld [vmem:[#allocation3 + $0x1098] sm:$0xff]
    %v3871 = vld [vmem:[#allocation3 + $0x10a0] sm:$0xff]
    %v3872 = vld [vmem:[#allocation3 + $0x10a8] sm:$0xff]
    %v3873 = vld [vmem:[#allocation3 + $0x10b0] sm:$0xff]
    %v3874 = vld [vmem:[#allocation3 + $0x10b8] sm:$0xff]
    %v3875 = vld [vmem:[#allocation3 + $0x10c0] sm:$0xff]
    %v3876 = vld [vmem:[#allocation3 + $0x10c8] sm:$0xff]
    %v3877 = vld [vmem:[#allocation3 + $0x10d0] sm:$0xff]
    %v3878 = vld [vmem:[#allocation3 + $0x10d8] sm:$0xff]
    %v3879 = vld [vmem:[#allocation3 + $0x10e0] sm:$0xff]
    %v3880 = vld [vmem:[#allocation3 + $0x10e8] sm:$0xff]
    %v3881 = vld [vmem:[#allocation3 + $0x10f0] sm:$0xff]
    %v3882 = vld [vmem:[#allocation3 + $0x10f8] sm:$0xff]
    %v3883 = vld [vmem:[#allocation3 + $0x1100] sm:$0xff]
    %v3884 = vld [vmem:[#allocation3 + $0x1108] sm:$0xff]
    %v3885 = vld [vmem:[#allocation3 + $0x1110] sm:$0xff]
    %v3886 = vld [vmem:[#allocation3 + $0x1118] sm:$0xff]
    %v3887 = vld [vmem:[#allocation3 + $0x1120] sm:$0xff]
    %v3888 = vld [vmem:[#allocation3 + $0x1128] sm:$0xff]
    %v3889 = vld [vmem:[#allocation3 + $0x1130] sm:$0xff]
    %v3890 = vld [vmem:[#allocation3 + $0x1138] sm:$0xff]
    %v3891 = vld [vmem:[#allocation3 + $0x1140] sm:$0xff]
    %v3892 = vld [vmem:[#allocation3 + $0x1148] sm:$0xff]
    %v3893 = vld [vmem:[#allocation3 + $0x1150] sm:$0xff]
    %v3894 = vld [vmem:[#allocation3 + $0x1158] sm:$0xff]
    %v3895 = vld [vmem:[#allocation3 + $0x1160] sm:$0xff]
    %v3896 = vld [vmem:[#allocation3 + $0x1168] sm:$0xff]
    %v3897 = vld [vmem:[#allocation3 + $0x1170] sm:$0xff]
    %v3898 = vld [vmem:[#allocation3 + $0x1178] sm:$0xff]
    %v3899 = vld [vmem:[#allocation3 + $0x1180] sm:$0xff]
    %v3900 = vld [vmem:[#allocation3 + $0x1188] sm:$0xff]
    %v3901 = vld [vmem:[#allocation3 + $0x1190] sm:$0xff]
    %v3902 = vld [vmem:[#allocation3 + $0x1198] sm:$0xff]
    %v3903 = vld [vmem:[#allocation3 + $0x11a0] sm:$0xff]
    %v3904 = vld [vmem:[#allocation3 + $0x11a8] sm:$0xff]
    %v3905 = vld [vmem:[#allocation3 + $0x11b0] sm:$0xff]
    %v3906 = vld [vmem:[#allocation3 + $0x11b8] sm:$0xff]
    %v3907 = vld [vmem:[#allocation3 + $0x11c0] sm:$0xff]
    %v3908 = vld [vmem:[#allocation3 + $0x11c8] sm:$0xff]
    %v3909 = vld [vmem:[#allocation3 + $0x11d0] sm:$0xff]
    %v3910 = vld [vmem:[#allocation3 + $0x11d8] sm:$0xff]
    %v3911 = vld [vmem:[#allocation3 + $0x11e0] sm:$0xff]
    %v3912 = vld [vmem:[#allocation3 + $0x11e8] sm:$0xff]
    %v3913 = vld [vmem:[#allocation3 + $0x11f0] sm:$0xff]
    %v3914 = vld [vmem:[#allocation3 + $0x11f8] sm:$0xff]
    %v3915 = vld [vmem:[#allocation3 + $0x1200] sm:$0xff]
    %v3916 = vld [vmem:[#allocation3 + $0x1208] sm:$0xff]
    %v3917 = vld [vmem:[#allocation3 + $0x1210] sm:$0xff]
    %v3918 = vld [vmem:[#allocation3 + $0x1218] sm:$0xff]
    %v3919 = vld [vmem:[#allocation3 + $0x1220] sm:$0xff]
    %v3920 = vld [vmem:[#allocation3 + $0x1228] sm:$0xff]
    %v3921 = vld [vmem:[#allocation3 + $0x1230] sm:$0xff]
    %v3922 = vld [vmem:[#allocation3 + $0x1238] sm:$0xff]
    %v3923 = vld [vmem:[#allocation3 + $0x1240] sm:$0xff]
    %v3924 = vld [vmem:[#allocation3 + $0x1248] sm:$0xff]
    %v3925 = vld [vmem:[#allocation3 + $0x1250] sm:$0xff]
    %v3926 = vld [vmem:[#allocation3 + $0x1258] sm:$0xff]
    %v3927 = vld [vmem:[#allocation3 + $0x1260] sm:$0xff]
    %v3928 = vld [vmem:[#allocation3 + $0x1268] sm:$0xff]
    %v3929 = vld [vmem:[#allocation3 + $0x1270] sm:$0xff]
    %v3930 = vld [vmem:[#allocation3 + $0x1278] sm:$0xff]
    %v3931 = vld [vmem:[#allocation3 + $0x1280] sm:$0xff]
    %v3932 = vld [vmem:[#allocation3 + $0x1288] sm:$0xff]
    %v3933 = vld [vmem:[#allocation3 + $0x1290] sm:$0xff]
    %v3934 = vld [vmem:[#allocation3 + $0x1298] sm:$0xff]
    %v3935 = vld [vmem:[#allocation3 + $0x12a0] sm:$0xff]
    %v3936 = vld [vmem:[#allocation3 + $0x12a8] sm:$0xff]
    %v3937 = vld [vmem:[#allocation3 + $0x12b0] sm:$0xff]
    %v3938 = vld [vmem:[#allocation3 + $0x12b8] sm:$0xff]
    %v3939 = vld [vmem:[#allocation3 + $0x12c0] sm:$0xff]
    %v3940 = vld [vmem:[#allocation3 + $0x12c8] sm:$0xff]
    %v3941 = vld [vmem:[#allocation3 + $0x12d0] sm:$0xff]
    %v3942 = vld [vmem:[#allocation3 + $0x12d8] sm:$0xff]
    %v3943 = vld [vmem:[#allocation3 + $0x12e0] sm:$0xff]
    %v3944 = vld [vmem:[#allocation3 + $0x12e8] sm:$0xff]
    %v3945 = vld [vmem:[#allocation3 + $0x12f0] sm:$0xff]
    %v3946 = vld [vmem:[#allocation3 + $0x12f8] sm:$0xff]
    %v3947 = vld [vmem:[#allocation3 + $0x1300] sm:$0xff]
    %v3948 = vld [vmem:[#allocation3 + $0x1308] sm:$0xff]
    %v3949 = vld [vmem:[#allocation3 + $0x1310] sm:$0xff]
    %v3950 = vld [vmem:[#allocation3 + $0x1318] sm:$0xff]
    %v3951 = vld [vmem:[#allocation3 + $0x1320] sm:$0xff]
    %v3952 = vld [vmem:[#allocation3 + $0x1328] sm:$0xff]
    %v3953 = vld [vmem:[#allocation3 + $0x1330] sm:$0xff]
    %v3954 = vld [vmem:[#allocation3 + $0x1338] sm:$0xff]
    %v3955 = vld [vmem:[#allocation3 + $0x1340] sm:$0xff]
    %v3956 = vld [vmem:[#allocation3 + $0x1348] sm:$0xff]
    %v3957 = vld [vmem:[#allocation3 + $0x1350] sm:$0xff]
    %v3958 = vld [vmem:[#allocation3 + $0x1358] sm:$0xff]
    %v3959 = vld [vmem:[#allocation3 + $0x1360] sm:$0xff]
    %v3960 = vld [vmem:[#allocation3 + $0x1368] sm:$0xff]
    %v3961 = vld [vmem:[#allocation3 + $0x1370] sm:$0xff]
    %v3962 = vld [vmem:[#allocation3 + $0x1378] sm:$0xff]
    %v3963 = vld [vmem:[#allocation3 + $0x1380] sm:$0xff]
    %v3964 = vld [vmem:[#allocation3 + $0x1388] sm:$0xff]
    %v3965 = vld [vmem:[#allocation3 + $0x1390] sm:$0xff]
    %v3966 = vld [vmem:[#allocation3 + $0x1398] sm:$0xff]
    %v3967 = vld [vmem:[#allocation3 + $0x13a0] sm:$0xff]
    %v3968 = vld [vmem:[#allocation3 + $0x13a8] sm:$0xff]
    %v3969 = vld [vmem:[#allocation3 + $0x13b0] sm:$0xff]
    %v3970 = vld [vmem:[#allocation3 + $0x13b8] sm:$0xff]
    %v3971 = vld [vmem:[#allocation3 + $0x13c0] sm:$0xff]
    %v3972 = vld [vmem:[#allocation3 + $0x13c8] sm:$0xff]
    %v3973 = vld [vmem:[#allocation3 + $0x13d0] sm:$0xff]
    %v3974 = vld [vmem:[#allocation3 + $0x13d8] sm:$0xff]
    %v3975 = vld [vmem:[#allocation3 + $0x13e0] sm:$0xff]
    %v3976 = vld [vmem:[#allocation3 + $0x13e8] sm:$0xff]
    %v3977 = vld [vmem:[#allocation3 + $0x13f0] sm:$0xff]
    %v3978 = vld [vmem:[#allocation3 + $0x13f8] sm:$0xff]
    %v3979 = vld [vmem:[#allocation3 + $0x1400] sm:$0xff]
    %v3980 = vld [vmem:[#allocation3 + $0x1408] sm:$0xff]
    %v3981 = vld [vmem:[#allocation3 + $0x1410] sm:$0xff]
    %v3982 = vld [vmem:[#allocation3 + $0x1418] sm:$0xff]
    %v3983 = vld [vmem:[#allocation3 + $0x1420] sm:$0xff]
    %v3984 = vld [vmem:[#allocation3 + $0x1428] sm:$0xff]
    %v3985 = vld [vmem:[#allocation3 + $0x1430] sm:$0xff]
    %v3986 = vld [vmem:[#allocation3 + $0x1438] sm:$0xff]
    %v3987 = vld [vmem:[#allocation3 + $0x1440] sm:$0xff]
    %v3988 = vld [vmem:[#allocation3 + $0x1448] sm:$0xff]
    %v3989 = vld [vmem:[#allocation3 + $0x1450] sm:$0xff]
    %v3990 = vld [vmem:[#allocation3 + $0x1458] sm:$0xff]
    %v3991 = vld [vmem:[#allocation3 + $0x1460] sm:$0xff]
    %v3992 = vld [vmem:[#allocation3 + $0x1468] sm:$0xff]
    %v3993 = vld [vmem:[#allocation3 + $0x1470] sm:$0xff]
    %v3994 = vld [vmem:[#allocation3 + $0x1478] sm:$0xff]
    %v3995 = vld [vmem:[#allocation3 + $0x1480] sm:$0xff]
    %v3996 = vld [vmem:[#allocation3 + $0x1488] sm:$0xff]
    %v3997 = vld [vmem:[#allocation3 + $0x1490] sm:$0xff]
    %v3998 = vld [vmem:[#allocation3 + $0x1498] sm:$0xff]
    %v3999 = vld [vmem:[#allocation3 + $0x14a0] sm:$0xff]
    %v4000 = vld [vmem:[#allocation3 + $0x14a8] sm:$0xff]
    %v4001 = vld [vmem:[#allocation3 + $0x14b0] sm:$0xff]
    %v4002 = vld [vmem:[#allocation3 + $0x14b8] sm:$0xff]
    %v4003 = vld [vmem:[#allocation3 + $0x14c0] sm:$0xff]
    %v4004 = vld [vmem:[#allocation3 + $0x14c8] sm:$0xff]
    %v4005 = vld [vmem:[#allocation3 + $0x14d0] sm:$0xff]
    %v4006 = vld [vmem:[#allocation3 + $0x14d8] sm:$0xff]
    %v4007 = vld [vmem:[#allocation3 + $0x14e0] sm:$0xff]
    %v4008 = vld [vmem:[#allocation3 + $0x14e8] sm:$0xff]
    %v4009 = vld [vmem:[#allocation3 + $0x14f0] sm:$0xff]
    %v4010 = vld [vmem:[#allocation3 + $0x14f8] sm:$0xff]
    %v4011 = vld [vmem:[#allocation3 + $0x1500] sm:$0xff]
    %v4012 = vld [vmem:[#allocation3 + $0x1508] sm:$0xff]
    %v4013 = vld [vmem:[#allocation3 + $0x1510] sm:$0xff]
    %v4014 = vld [vmem:[#allocation3 + $0x1518] sm:$0xff]
    %v4015 = vld [vmem:[#allocation3 + $0x1520] sm:$0xff]
    %v4016 = vld [vmem:[#allocation3 + $0x1528] sm:$0xff]
    %v4017 = vld [vmem:[#allocation3 + $0x1530] sm:$0xff]
    %v4018 = vld [vmem:[#allocation3 + $0x1538] sm:$0xff]
    %v4019 = vld [vmem:[#allocation3 + $0x1540] sm:$0xff]
    %v4020 = vld [vmem:[#allocation3 + $0x1548] sm:$0xff]
    %v4021 = vld [vmem:[#allocation3 + $0x1550] sm:$0xff]
    %v4022 = vld [vmem:[#allocation3 + $0x1558] sm:$0xff]
    %v4023 = vld [vmem:[#allocation3 + $0x1560] sm:$0xff]
    %v4024 = vld [vmem:[#allocation3 + $0x1568] sm:$0xff]
    %v4025 = vld [vmem:[#allocation3 + $0x1570] sm:$0xff]
    %v4026 = vld [vmem:[#allocation3 + $0x1578] sm:$0xff]
    %v4027 = vld [vmem:[#allocation3 + $0x1580] sm:$0xff]
    %v4028 = vld [vmem:[#allocation3 + $0x1588] sm:$0xff]
    %v4029 = vld [vmem:[#allocation3 + $0x1590] sm:$0xff]
    %v4030 = vld [vmem:[#allocation3 + $0x1598] sm:$0xff]
    %v4031 = vld [vmem:[#allocation3 + $0x15a0] sm:$0xff]
    %v4032 = vld [vmem:[#allocation3 + $0x15a8] sm:$0xff]
    %v4033 = vld [vmem:[#allocation3 + $0x15b0] sm:$0xff]
    %v4034 = vld [vmem:[#allocation3 + $0x15b8] sm:$0xff]
    %v4035 = vld [vmem:[#allocation3 + $0x15c0] sm:$0xff]
    %v4036 = vld [vmem:[#allocation3 + $0x15c8] sm:$0xff]
    %v4037 = vld [vmem:[#allocation3 + $0x15d0] sm:$0xff]
    %v4038 = vld [vmem:[#allocation3 + $0x15d8] sm:$0xff]
    %v4039 = vld [vmem:[#allocation3 + $0x15e0] sm:$0xff]
    %v4040 = vld [vmem:[#allocation3 + $0x15e8] sm:$0xff]
    %v4041 = vld [vmem:[#allocation3 + $0x15f0] sm:$0xff]
    %v4042 = vld [vmem:[#allocation3 + $0x15f8] sm:$0xff]
    %v4043 = vld [vmem:[#allocation3 + $0x1600] sm:$0xff]
    %v4044 = vld [vmem:[#allocation3 + $0x1608] sm:$0xff]
    %v4045 = vld [vmem:[#allocation3 + $0x1610] sm:$0xff]
    %v4046 = vld [vmem:[#allocation3 + $0x1618] sm:$0xff]
    %v4047 = vld [vmem:[#allocation3 + $0x1620] sm:$0xff]
    %v4048 = vld [vmem:[#allocation3 + $0x1628] sm:$0xff]
    %v4049 = vld [vmem:[#allocation3 + $0x1630] sm:$0xff]
    %v4050 = vld [vmem:[#allocation3 + $0x1638] sm:$0xff]
    %v4051 = vld [vmem:[#allocation3 + $0x1640] sm:$0xff]
    %v4052 = vld [vmem:[#allocation3 + $0x1648] sm:$0xff]
    %v4053 = vld [vmem:[#allocation3 + $0x1650] sm:$0xff]
    %v4054 = vld [vmem:[#allocation3 + $0x1658] sm:$0xff]
    %v4055 = vld [vmem:[#allocation3 + $0x1660] sm:$0xff]
    %v4056 = vld [vmem:[#allocation3 + $0x1668] sm:$0xff]
    %v4057 = vld [vmem:[#allocation3 + $0x1670] sm:$0xff]
    %v4058 = vld [vmem:[#allocation3 + $0x1678] sm:$0xff]
    %v4059 = vld [vmem:[#allocation3 + $0x1680] sm:$0xff]
    %v4060 = vld [vmem:[#allocation3 + $0x1688] sm:$0xff]
    %v4061 = vld [vmem:[#allocation3 + $0x1690] sm:$0xff]
    %v4062 = vld [vmem:[#allocation3 + $0x1698] sm:$0xff]
    %v4063 = vld [vmem:[#allocation3 + $0x16a0] sm:$0xff]
    %v4064 = vld [vmem:[#allocation3 + $0x16a8] sm:$0xff]
    %v4065 = vld [vmem:[#allocation3 + $0x16b0] sm:$0xff]
    %v4066 = vld [vmem:[#allocation3 + $0x16b8] sm:$0xff]
    %v4067 = vld [vmem:[#allocation3 + $0x16c0] sm:$0xff]
    %v4068 = vld [vmem:[#allocation3 + $0x16c8] sm:$0xff]
    %v4069 = vld [vmem:[#allocation3 + $0x16d0] sm:$0xff]
    %v4070 = vld [vmem:[#allocation3 + $0x16d8] sm:$0xff]
    %v4071 = vld [vmem:[#allocation3 + $0x16e0] sm:$0xff]
    %v4072 = vld [vmem:[#allocation3 + $0x16e8] sm:$0xff]
    %v4073 = vld [vmem:[#allocation3 + $0x16f0] sm:$0xff]
    %v4074 = vld [vmem:[#allocation3 + $0x16f8] sm:$0xff]
    %v4075 = vld [vmem:[#allocation3 + $0x1700] sm:$0xff]
    %v4076 = vld [vmem:[#allocation3 + $0x1708] sm:$0xff]
    %v4077 = vld [vmem:[#allocation3 + $0x1710] sm:$0xff]
    %v4078 = vld [vmem:[#allocation3 + $0x1718] sm:$0xff]
    %v4079 = vld [vmem:[#allocation3 + $0x1720] sm:$0xff]
    %v4080 = vld [vmem:[#allocation3 + $0x1728] sm:$0xff]
    %v4081 = vld [vmem:[#allocation3 + $0x1730] sm:$0xff]
    %v4082 = vld [vmem:[#allocation3 + $0x1738] sm:$0xff]
    %v4083 = vld [vmem:[#allocation3 + $0x1740] sm:$0xff]
    %v4084 = vld [vmem:[#allocation3 + $0x1748] sm:$0xff]
    %v4085 = vld [vmem:[#allocation3 + $0x1750] sm:$0xff]
    %v4086 = vld [vmem:[#allocation3 + $0x1758] sm:$0xff]
    %v4087 = vld [vmem:[#allocation3 + $0x1760] sm:$0xff]
    %v4088 = vld [vmem:[#allocation3 + $0x1768] sm:$0xff]
    %v4089 = vld [vmem:[#allocation3 + $0x1770] sm:$0xff]
    %v4090 = vld [vmem:[#allocation3 + $0x1778] sm:$0xff]
    %v4091 = vld [vmem:[#allocation3 + $0x1780] sm:$0xff]
    %v4092 = vld [vmem:[#allocation3 + $0x1788] sm:$0xff]
    %v4093 = vld [vmem:[#allocation3 + $0x1790] sm:$0xff]
    %v4094 = vld [vmem:[#allocation3 + $0x1798] sm:$0xff]
    %v4095 = vld [vmem:[#allocation3 + $0x17a0] sm:$0xff]
    %v4096 = vld [vmem:[#allocation3 + $0x17a8] sm:$0xff]
    %v4097 = vld [vmem:[#allocation3 + $0x17b0] sm:$0xff]
    %v4098 = vld [vmem:[#allocation3 + $0x17b8] sm:$0xff]
    %v4099 = vld [vmem:[#allocation3 + $0x17c0] sm:$0xff]
    %v4100 = vld [vmem:[#allocation3 + $0x17c8] sm:$0xff]
    %v4101 = vld [vmem:[#allocation3 + $0x17d0] sm:$0xff]
    %v4102 = vld [vmem:[#allocation3 + $0x17d8] sm:$0xff]
    %v4103 = vld [vmem:[#allocation3 + $0x17e0] sm:$0xff]
    %v4104 = vld [vmem:[#allocation3 + $0x17e8] sm:$0xff]
    %v4105 = vld [vmem:[#allocation3 + $0x17f0] sm:$0xff]
    %v4106 = vld [vmem:[#allocation3 + $0x17f8] sm:$0xff]
    %v4107 = vld [vmem:[#allocation3 + $0x1800] sm:$0xff]
    %v4108 = vld [vmem:[#allocation3 + $0x1808] sm:$0xff]
    %v4109 = vld [vmem:[#allocation3 + $0x1810] sm:$0xff]
    %v4110 = vld [vmem:[#allocation3 + $0x1818] sm:$0xff]
    %v4111 = vld [vmem:[#allocation3 + $0x1820] sm:$0xff]
    %v4112 = vld [vmem:[#allocation3 + $0x1828] sm:$0xff]
    %v4113 = vld [vmem:[#allocation3 + $0x1830] sm:$0xff]
    %v4114 = vld [vmem:[#allocation3 + $0x1838] sm:$0xff]
    %v4115 = vld [vmem:[#allocation3 + $0x1840] sm:$0xff]
    %v4116 = vld [vmem:[#allocation3 + $0x1848] sm:$0xff]
    %v4117 = vld [vmem:[#allocation3 + $0x1850] sm:$0xff]
    %v4118 = vld [vmem:[#allocation3 + $0x1858] sm:$0xff]
    %v4119 = vld [vmem:[#allocation3 + $0x1860] sm:$0xff]
    %v4120 = vld [vmem:[#allocation3 + $0x1868] sm:$0xff]
    %v4121 = vld [vmem:[#allocation3 + $0x1870] sm:$0xff]
    %v4122 = vld [vmem:[#allocation3 + $0x1878] sm:$0xff]
    %v4123 = vld [vmem:[#allocation3 + $0x1880] sm:$0xff]
    %v4124 = vld [vmem:[#allocation3 + $0x1888] sm:$0xff]
    %v4125 = vld [vmem:[#allocation3 + $0x1890] sm:$0xff]
    %v4126 = vld [vmem:[#allocation3 + $0x1898] sm:$0xff]
    %v4127 = vld [vmem:[#allocation3 + $0x18a0] sm:$0xff]
    %v4128 = vld [vmem:[#allocation3 + $0x18a8] sm:$0xff]
    %v4129 = vld [vmem:[#allocation3 + $0x18b0] sm:$0xff]
    %v4130 = vld [vmem:[#allocation3 + $0x18b8] sm:$0xff]
    %v4131 = vld [vmem:[#allocation3 + $0x18c0] sm:$0xff]
    %v4132 = vld [vmem:[#allocation3 + $0x18c8] sm:$0xff]
    %v4133 = vld [vmem:[#allocation3 + $0x18d0] sm:$0xff]
    %v4134 = vld [vmem:[#allocation3 + $0x18d8] sm:$0xff]
    %v4135 = vld [vmem:[#allocation3 + $0x18e0] sm:$0xff]
    %v4136 = vld [vmem:[#allocation3 + $0x18e8] sm:$0xff]
    %v4137 = vld [vmem:[#allocation3 + $0x18f0] sm:$0xff]
    %v4138 = vld [vmem:[#allocation3 + $0x18f8] sm:$0xff]
    %v4139 = vld [vmem:[#allocation3 + $0x1900] sm:$0xff]
    %v4140 = vld [vmem:[#allocation3 + $0x1908] sm:$0xff]
    %v4141 = vld [vmem:[#allocation3 + $0x1910] sm:$0xff]
    %v4142 = vld [vmem:[#allocation3 + $0x1918] sm:$0xff]
    %v4143 = vld [vmem:[#allocation3 + $0x1920] sm:$0xff]
    %v4144 = vld [vmem:[#allocation3 + $0x1928] sm:$0xff]
    %v4145 = vld [vmem:[#allocation3 + $0x1930] sm:$0xff]
    %v4146 = vld [vmem:[#allocation3 + $0x1938] sm:$0xff]
    %v4147 = vld [vmem:[#allocation3 + $0x1940] sm:$0xff]
    %v4148 = vld [vmem:[#allocation3 + $0x1948] sm:$0xff]
    %v4149 = vld [vmem:[#allocation3 + $0x1950] sm:$0xff]
    %v4150 = vld [vmem:[#allocation3 + $0x1958] sm:$0xff]
    %v4151 = vld [vmem:[#allocation3 + $0x1960] sm:$0xff]
    %v4152 = vld [vmem:[#allocation3 + $0x1968] sm:$0xff]
    %v4153 = vld [vmem:[#allocation3 + $0x1970] sm:$0xff]
    %v4154 = vld [vmem:[#allocation3 + $0x1978] sm:$0xff]
    %v4155 = vld [vmem:[#allocation3 + $0x1980] sm:$0xff]
    %v4156 = vld [vmem:[#allocation3 + $0x1988] sm:$0xff]
    %v4157 = vld [vmem:[#allocation3 + $0x1990] sm:$0xff]
    %v4158 = vld [vmem:[#allocation3 + $0x1998] sm:$0xff]
    %v4159 = vld [vmem:[#allocation3 + $0x19a0] sm:$0xff]
    %v4160 = vld [vmem:[#allocation3 + $0x19a8] sm:$0xff]
    %v4161 = vld [vmem:[#allocation3 + $0x19b0] sm:$0xff]
    %v4162 = vld [vmem:[#allocation3 + $0x19b8] sm:$0xff]
    %v4163 = vld [vmem:[#allocation3 + $0x19c0] sm:$0xff]
    %v4164 = vld [vmem:[#allocation3 + $0x19c8] sm:$0xff]
    %v4165 = vld [vmem:[#allocation3 + $0x19d0] sm:$0xff]
    %v4166 = vld [vmem:[#allocation3 + $0x19d8] sm:$0xff]
    %v4167 = vld [vmem:[#allocation3 + $0x19e0] sm:$0xff]
    %v4168 = vld [vmem:[#allocation3 + $0x19e8] sm:$0xff]
    %v4169 = vld [vmem:[#allocation3 + $0x19f0] sm:$0xff]
    %v4170 = vld [vmem:[#allocation3 + $0x19f8] sm:$0xff]
    %v4171 = vld [vmem:[#allocation3 + $0x1a00] sm:$0xff]
    %v4172 = vld [vmem:[#allocation3 + $0x1a08] sm:$0xff]
    %v4173 = vld [vmem:[#allocation3 + $0x1a10] sm:$0xff]
    %v4174 = vld [vmem:[#allocation3 + $0x1a18] sm:$0xff]
    %v4175 = vld [vmem:[#allocation3 + $0x1a20] sm:$0xff]
    %v4176 = vld [vmem:[#allocation3 + $0x1a28] sm:$0xff]
    %v4177 = vld [vmem:[#allocation3 + $0x1a30] sm:$0xff]
    %v4178 = vld [vmem:[#allocation3 + $0x1a38] sm:$0xff]
    %v4179 = vld [vmem:[#allocation3 + $0x1a40] sm:$0xff]
    %v4180 = vld [vmem:[#allocation3 + $0x1a48] sm:$0xff]
    %v4181 = vld [vmem:[#allocation3 + $0x1a50] sm:$0xff]
    %v4182 = vld [vmem:[#allocation3 + $0x1a58] sm:$0xff]
    %v4183 = vld [vmem:[#allocation3 + $0x1a60] sm:$0xff]
    %v4184 = vld [vmem:[#allocation3 + $0x1a68] sm:$0xff]
    %v4185 = vld [vmem:[#allocation3 + $0x1a70] sm:$0xff]
    %v4186 = vld [vmem:[#allocation3 + $0x1a78] sm:$0xff]
    %v4187 = vld [vmem:[#allocation3 + $0x1a80] sm:$0xff]
    %v4188 = vld [vmem:[#allocation3 + $0x1a88] sm:$0xff]
    %v4189 = vld [vmem:[#allocation3 + $0x1a90] sm:$0xff]
    %v4190 = vld [vmem:[#allocation3 + $0x1a98] sm:$0xff]
    %v4191 = vld [vmem:[#allocation3 + $0x1aa0] sm:$0xff]
    %v4192 = vld [vmem:[#allocation3 + $0x1aa8] sm:$0xff]
    %v4193 = vld [vmem:[#allocation3 + $0x1ab0] sm:$0xff]
    %v4194 = vld [vmem:[#allocation3 + $0x1ab8] sm:$0xff]
    %v4195 = vld [vmem:[#allocation3 + $0x1ac0] sm:$0xff]
    %v4196 = vld [vmem:[#allocation3 + $0x1ac8] sm:$0xff]
    %v4197 = vld [vmem:[#allocation3 + $0x1ad0] sm:$0xff]
    %v4198 = vld [vmem:[#allocation3 + $0x1ad8] sm:$0xff]
    %v4199 = vld [vmem:[#allocation3 + $0x1ae0] sm:$0xff]
    %v4200 = vld [vmem:[#allocation3 + $0x1ae8] sm:$0xff]
    %v4201 = vld [vmem:[#allocation3 + $0x1af0] sm:$0xff]
    %v4202 = vld [vmem:[#allocation3 + $0x1af8] sm:$0xff]
    %v4203 = vld [vmem:[#allocation3 + $0x1b00] sm:$0xff]
    %v4204 = vld [vmem:[#allocation3 + $0x1b08] sm:$0xff]
    %v4205 = vld [vmem:[#allocation3 + $0x1b10] sm:$0xff]
    %v4206 = vld [vmem:[#allocation3 + $0x1b18] sm:$0xff]
    %v4207 = vld [vmem:[#allocation3 + $0x1b20] sm:$0xff]
    %v4208 = vld [vmem:[#allocation3 + $0x1b28] sm:$0xff]
    %v4209 = vld [vmem:[#allocation3 + $0x1b30] sm:$0xff]
    %v4210 = vld [vmem:[#allocation3 + $0x1b38] sm:$0xff]
    %v4211 = vld [vmem:[#allocation3 + $0x1b40] sm:$0xff]
    %v4212 = vld [vmem:[#allocation3 + $0x1b48] sm:$0xff]
    %v4213 = vld [vmem:[#allocation3 + $0x1b50] sm:$0xff]
    %v4214 = vld [vmem:[#allocation3 + $0x1b58] sm:$0xff]
    %v4215 = vld [vmem:[#allocation3 + $0x1b60] sm:$0xff]
    %v4216 = vld [vmem:[#allocation3 + $0x1b68] sm:$0xff]
    %v4217 = vld [vmem:[#allocation3 + $0x1b70] sm:$0xff]
    %v4218 = vld [vmem:[#allocation3 + $0x1b78] sm:$0xff]
    %v4219 = vld [vmem:[#allocation3 + $0x1b80] sm:$0xff]
    %v4220 = vld [vmem:[#allocation3 + $0x1b88] sm:$0xff]
    %v4221 = vld [vmem:[#allocation3 + $0x1b90] sm:$0xff]
    %v4222 = vld [vmem:[#allocation3 + $0x1b98] sm:$0xff]
    %v4223 = vld [vmem:[#allocation3 + $0x1ba0] sm:$0xff]
    %v4224 = vld [vmem:[#allocation3 + $0x1ba8] sm:$0xff]
    %v4225 = vld [vmem:[#allocation3 + $0x1bb0] sm:$0xff]
    %v4226 = vld [vmem:[#allocation3 + $0x1bb8] sm:$0xff]
    %v4227 = vld [vmem:[#allocation3 + $0x1bc0] sm:$0xff]
    %v4228 = vld [vmem:[#allocation3 + $0x1bc8] sm:$0xff]
    %v4229 = vld [vmem:[#allocation3 + $0x1bd0] sm:$0xff]
    %v4230 = vld [vmem:[#allocation3 + $0x1bd8] sm:$0xff]
    %v4231 = vld [vmem:[#allocation3 + $0x1be0] sm:$0xff]
    %v4232 = vld [vmem:[#allocation3 + $0x1be8] sm:$0xff]
    %v4233 = vld [vmem:[#allocation3 + $0x1bf0] sm:$0xff]
    %v4234 = vld [vmem:[#allocation3 + $0x1bf8] sm:$0xff]
    %v4235 = vld [vmem:[#allocation3 + $0x1c00] sm:$0xff]
    %v4236 = vld [vmem:[#allocation3 + $0x1c08] sm:$0xff]
    %v4237 = vld [vmem:[#allocation3 + $0x1c10] sm:$0xff]
    %v4238 = vld [vmem:[#allocation3 + $0x1c18] sm:$0xff]
    %v4239 = vld [vmem:[#allocation3 + $0x1c20] sm:$0xff]
    %v4240 = vld [vmem:[#allocation3 + $0x1c28] sm:$0xff]
    %v4241 = vld [vmem:[#allocation3 + $0x1c30] sm:$0xff]
    %v4242 = vld [vmem:[#allocation3 + $0x1c38] sm:$0xff]
    %v4243 = vld [vmem:[#allocation3 + $0x1c40] sm:$0xff]
    %v4244 = vld [vmem:[#allocation3 + $0x1c48] sm:$0xff]
    %v4245 = vld [vmem:[#allocation3 + $0x1c50] sm:$0xff]
    %v4246 = vld [vmem:[#allocation3 + $0x1c58] sm:$0xff]
    %v4247 = vld [vmem:[#allocation3 + $0x1c60] sm:$0xff]
    %v4248 = vld [vmem:[#allocation3 + $0x1c68] sm:$0xff]
    %v4249 = vld [vmem:[#allocation3 + $0x1c70] sm:$0xff]
    %v4250 = vld [vmem:[#allocation3 + $0x1c78] sm:$0xff]
    %v4251 = vld [vmem:[#allocation3 + $0x1c80] sm:$0xff]
    %v4252 = vld [vmem:[#allocation3 + $0x1c88] sm:$0xff]
    %v4253 = vld [vmem:[#allocation3 + $0x1c90] sm:$0xff]
    %v4254 = vld [vmem:[#allocation3 + $0x1c98] sm:$0xff]
    %v4255 = vld [vmem:[#allocation3 + $0x1ca0] sm:$0xff]
    %v4256 = vld [vmem:[#allocation3 + $0x1ca8] sm:$0xff]
    %v4257 = vld [vmem:[#allocation3 + $0x1cb0] sm:$0xff]
    %v4258 = vld [vmem:[#allocation3 + $0x1cb8] sm:$0xff]
    %v4259 = vld [vmem:[#allocation3 + $0x1cc0] sm:$0xff]
    %v4260 = vld [vmem:[#allocation3 + $0x1cc8] sm:$0xff]
    %v4261 = vld [vmem:[#allocation3 + $0x1cd0] sm:$0xff]
    %v4262 = vld [vmem:[#allocation3 + $0x1cd8] sm:$0xff]
    %v4263 = vld [vmem:[#allocation3 + $0x1ce0] sm:$0xff]
    %v4264 = vld [vmem:[#allocation3 + $0x1ce8] sm:$0xff]
    %v4265 = vld [vmem:[#allocation3 + $0x1cf0] sm:$0xff]
    %v4266 = vld [vmem:[#allocation3 + $0x1cf8] sm:$0xff]
    %v4267 = vld [vmem:[#allocation3 + $0x1d00] sm:$0xff]
    %v4268 = vld [vmem:[#allocation3 + $0x1d08] sm:$0xff]
    %v4269 = vld [vmem:[#allocation3 + $0x1d10] sm:$0xff]
    %v4270 = vld [vmem:[#allocation3 + $0x1d18] sm:$0xff]
    %v4271 = vld [vmem:[#allocation3 + $0x1d20] sm:$0xff]
    %v4272 = vld [vmem:[#allocation3 + $0x1d28] sm:$0xff]
    %v4273 = vld [vmem:[#allocation3 + $0x1d30] sm:$0xff]
    %v4274 = vld [vmem:[#allocation3 + $0x1d38] sm:$0xff]
    %v4275 = vld [vmem:[#allocation3 + $0x1d40] sm:$0xff]
    %v4276 = vld [vmem:[#allocation3 + $0x1d48] sm:$0xff]
    %v4277 = vld [vmem:[#allocation3 + $0x1d50] sm:$0xff]
    %v4278 = vld [vmem:[#allocation3 + $0x1d58] sm:$0xff]
    %v4279 = vld [vmem:[#allocation3 + $0x1d60] sm:$0xff]
    %v4280 = vld [vmem:[#allocation3 + $0x1d68] sm:$0xff]
    %v4281 = vld [vmem:[#allocation3 + $0x1d70] sm:$0xff]
    %v4282 = vld [vmem:[#allocation3 + $0x1d78] sm:$0xff]
    %v4283 = vld [vmem:[#allocation3 + $0x1d80] sm:$0xff]
    %v4284 = vld [vmem:[#allocation3 + $0x1d88] sm:$0xff]
    %v4285 = vld [vmem:[#allocation3 + $0x1d90] sm:$0xff]
    %v4286 = vld [vmem:[#allocation3 + $0x1d98] sm:$0xff]
    %v4287 = vld [vmem:[#allocation3 + $0x1da0] sm:$0xff]
    %v4288 = vld [vmem:[#allocation3 + $0x1da8] sm:$0xff]
    %v4289 = vld [vmem:[#allocation3 + $0x1db0] sm:$0xff]
    %v4290 = vld [vmem:[#allocation3 + $0x1db8] sm:$0xff]
    %v4291 = vld [vmem:[#allocation3 + $0x1dc0] sm:$0xff]
    %v4292 = vld [vmem:[#allocation3 + $0x1dc8] sm:$0xff]
    %v4293 = vld [vmem:[#allocation3 + $0x1dd0] sm:$0xff]
    %v4294 = vld [vmem:[#allocation3 + $0x1dd8] sm:$0xff]
    %v4295 = vld [vmem:[#allocation3 + $0x1de0] sm:$0xff]
    %v4296 = vld [vmem:[#allocation3 + $0x1de8] sm:$0xff]
    %v4297 = vld [vmem:[#allocation3 + $0x1df0] sm:$0xff]
    %v4298 = vld [vmem:[#allocation3 + $0x1df8] sm:$0xff]
    %v4299 = vld [vmem:[#allocation3 + $0x1e00] sm:$0xff]
    %v4300 = vld [vmem:[#allocation3 + $0x1e08] sm:$0xff]
    %v4301 = vld [vmem:[#allocation3 + $0x1e10] sm:$0xff]
    %v4302 = vld [vmem:[#allocation3 + $0x1e18] sm:$0xff]
    %v4303 = vld [vmem:[#allocation3 + $0x1e20] sm:$0xff]
    %v4304 = vld [vmem:[#allocation3 + $0x1e28] sm:$0xff]
    %v4305 = vld [vmem:[#allocation3 + $0x1e30] sm:$0xff]
    %v4306 = vld [vmem:[#allocation3 + $0x1e38] sm:$0xff]
    %v4307 = vld [vmem:[#allocation3 + $0x1e40] sm:$0xff]
    %v4308 = vld [vmem:[#allocation3 + $0x1e48] sm:$0xff]
    %v4309 = vld [vmem:[#allocation3 + $0x1e50] sm:$0xff]
    %v4310 = vld [vmem:[#allocation3 + $0x1e58] sm:$0xff]
    %v4311 = vld [vmem:[#allocation3 + $0x1e60] sm:$0xff]
    %v4312 = vld [vmem:[#allocation3 + $0x1e68] sm:$0xff]
    %v4313 = vld [vmem:[#allocation3 + $0x1e70] sm:$0xff]
    %v4314 = vld [vmem:[#allocation3 + $0x1e78] sm:$0xff]
    %v4315 = vld [vmem:[#allocation3 + $0x1e80] sm:$0xff]
    %v4316 = vld [vmem:[#allocation3 + $0x1e88] sm:$0xff]
    %v4317 = vld [vmem:[#allocation3 + $0x1e90] sm:$0xff]
    %v4318 = vld [vmem:[#allocation3 + $0x1e98] sm:$0xff]
    %v4319 = vld [vmem:[#allocation3 + $0x1ea0] sm:$0xff]
    %v4320 = vld [vmem:[#allocation3 + $0x1ea8] sm:$0xff]
    %v4321 = vld [vmem:[#allocation3 + $0x1eb0] sm:$0xff]
    %v4322 = vld [vmem:[#allocation3 + $0x1eb8] sm:$0xff]
    %v4323 = vld [vmem:[#allocation3 + $0x1ec0] sm:$0xff]
    %v4324 = vld [vmem:[#allocation3 + $0x1ec8] sm:$0xff]
    %v4325 = vld [vmem:[#allocation3 + $0x1ed0] sm:$0xff]
    %v4326 = vld [vmem:[#allocation3 + $0x1ed8] sm:$0xff]
    %v4327 = vld [vmem:[#allocation3 + $0x1ee0] sm:$0xff]
    %v4328 = vld [vmem:[#allocation3 + $0x1ee8] sm:$0xff]
    %v4329 = vld [vmem:[#allocation3 + $0x1ef0] sm:$0xff]
    %v4330 = vld [vmem:[#allocation3 + $0x1ef8] sm:$0xff]
    %v4331 = vld [vmem:[#allocation3 + $0x1f00] sm:$0xff]
    %v4332 = vld [vmem:[#allocation3 + $0x1f08] sm:$0xff]
    %v4333 = vld [vmem:[#allocation3 + $0x1f10] sm:$0xff]
    %v4334 = vld [vmem:[#allocation3 + $0x1f18] sm:$0xff]
    %v4335 = vld [vmem:[#allocation3 + $0x1f20] sm:$0xff]
    %v4336 = vld [vmem:[#allocation3 + $0x1f28] sm:$0xff]
    %v4337 = vld [vmem:[#allocation3 + $0x1f30] sm:$0xff]
    %v4338 = vld [vmem:[#allocation3 + $0x1f38] sm:$0xff]
    %v4339 = vld [vmem:[#allocation3 + $0x1f40] sm:$0xff]
    %v4340 = vld [vmem:[#allocation3 + $0x1f48] sm:$0xff]
    %v4341 = vld [vmem:[#allocation3 + $0x1f50] sm:$0xff]
    %v4342 = vld [vmem:[#allocation3 + $0x1f58] sm:$0xff]
    %v4343 = vld [vmem:[#allocation3 + $0x1f60] sm:$0xff]
    %v4344 = vld [vmem:[#allocation3 + $0x1f68] sm:$0xff]
    %v4345 = vld [vmem:[#allocation3 + $0x1f70] sm:$0xff]
    %v4346 = vld [vmem:[#allocation3 + $0x1f78] sm:$0xff]
    %v4347 = vld [vmem:[#allocation3 + $0x1f80] sm:$0xff]
    %v4348 = vld [vmem:[#allocation3 + $0x1f88] sm:$0xff]
    %v4349 = vld [vmem:[#allocation3 + $0x1f90] sm:$0xff]
    %v4350 = vld [vmem:[#allocation3 + $0x1f98] sm:$0xff]
    %v4351 = vld [vmem:[#allocation3 + $0x1fa0] sm:$0xff]
    %v4352 = vld [vmem:[#allocation3 + $0x1fa8] sm:$0xff]
    %v4353 = vld [vmem:[#allocation3 + $0x1fb0] sm:$0xff]
    %v4354 = vld [vmem:[#allocation3 + $0x1fb8] sm:$0xff]
    %v4355 = vld [vmem:[#allocation3 + $0x1fc0] sm:$0xff]
    %v4356 = vld [vmem:[#allocation3 + $0x1fc8] sm:$0xff]
    %v4357 = vld [vmem:[#allocation3 + $0x1fd0] sm:$0xff]
    %v4358 = vld [vmem:[#allocation3 + $0x1fd8] sm:$0xff]
    %v4359 = vld [vmem:[#allocation3 + $0x1fe0] sm:$0xff]
    %v4360 = vld [vmem:[#allocation3 + $0x1fe8] sm:$0xff]
    %v4361 = vld [vmem:[#allocation3 + $0x1ff0] sm:$0xff]
    %v4362 = vld [vmem:[#allocation3 + $0x1ff8] sm:$0xff]
    %v4363 = vld [vmem:[#allocation29] sm:$0xff]
    %v4364 = vld [vmem:[#allocation29 + $0x8] sm:$0xff]
    %v4365 = vld [vmem:[#allocation29 + $0x10] sm:$0xff]
    %v4366 = vld [vmem:[#allocation29 + $0x18] sm:$0xff]
    %v4371 = vlaneseq
    %v4372 = vshrl.u32 %v4371, 7
    %v4373 = vsub.s32 0, %v4372
    %v4374 = vrot.slane %v4363, %v4373
    %v4375 = vlaneseq
    %v4376 = vshrl.u32 %v4375, 7
    %v4377 = vsub.s32 1, %v4376
    %v4378 = vrot.slane %v4363, %v4377
    %v4379 = vlaneseq
    %v4380 = vshrl.u32 %v4379, 7
    %v4381 = vsub.s32 2, %v4380
    %v4382 = vrot.slane %v4363, %v4381
    %v4383 = vlaneseq
    %v4384 = vshrl.u32 %v4383, 7
    %v4385 = vsub.s32 3, %v4384
    %v4386 = vrot.slane %v4363, %v4385
    %v4387 = vlaneseq
    %v4388 = vshrl.u32 %v4387, 7
    %v4389 = vsub.s32 4, %v4388
    %v4390 = vrot.slane %v4363, %v4389
    %v4391 = vlaneseq
    %v4392 = vshrl.u32 %v4391, 7
    %v4393 = vsub.s32 5, %v4392
    %v4394 = vrot.slane %v4363, %v4393
    %v4395 = vlaneseq
    %v4396 = vshrl.u32 %v4395, 7
    %v4397 = vsub.s32 6, %v4396
    %v4398 = vrot.slane %v4363, %v4397
    %v4399 = vlaneseq
    %v4400 = vshrl.u32 %v4399, 7
    %v4401 = vsub.s32 7, %v4400
    %v4402 = vrot.slane %v4363, %v4401
    %v4403 = vlaneseq
    %v4404 = vshrl.u32 %v4403, 7
    %v4405 = vsub.s32 0, %v4404
    %v4406 = vrot.slane %v4364, %v4405
    %v4407 = vlaneseq
    %v4408 = vshrl.u32 %v4407, 7
    %v4409 = vsub.s32 1, %v4408
    %v4410 = vrot.slane %v4364, %v4409
    %v4411 = vlaneseq
    %v4412 = vshrl.u32 %v4411, 7
    %v4413 = vsub.s32 2, %v4412
    %v4414 = vrot.slane %v4364, %v4413
    %v4415 = vlaneseq
    %v4416 = vshrl.u32 %v4415, 7
    %v4417 = vsub.s32 3, %v4416
    %v4418 = vrot.slane %v4364, %v4417
    %v4419 = vlaneseq
    %v4420 = vshrl.u32 %v4419, 7
    %v4421 = vsub.s32 4, %v4420
    %v4422 = vrot.slane %v4364, %v4421
    %v4423 = vlaneseq
    %v4424 = vshrl.u32 %v4423, 7
    %v4425 = vsub.s32 5, %v4424
    %v4426 = vrot.slane %v4364, %v4425
    %v4427 = vlaneseq
    %v4428 = vshrl.u32 %v4427, 7
    %v4429 = vsub.s32 6, %v4428
    %v4430 = vrot.slane %v4364, %v4429
    %v4431 = vlaneseq
    %v4432 = vshrl.u32 %v4431, 7
    %v4433 = vsub.s32 7, %v4432
    %v4434 = vrot.slane %v4364, %v4433
    %v4435 = vlaneseq
    %v4436 = vshrl.u32 %v4435, 7
    %v4437 = vsub.s32 0, %v4436
    %v4438 = vrot.slane %v4365, %v4437
    %v4439 = vlaneseq
    %v4440 = vshrl.u32 %v4439, 7
    %v4441 = vsub.s32 1, %v4440
    %v4442 = vrot.slane %v4365, %v4441
    %v4443 = vlaneseq
    %v4444 = vshrl.u32 %v4443, 7
    %v4445 = vsub.s32 2, %v4444
    %v4446 = vrot.slane %v4365, %v4445
    %v4447 = vlaneseq
    %v4448 = vshrl.u32 %v4447, 7
    %v4449 = vsub.s32 3, %v4448
    %v4450 = vrot.slane %v4365, %v4449
    %v4451 = vlaneseq
    %v4452 = vshrl.u32 %v4451, 7
    %v4453 = vsub.s32 4, %v4452
    %v4454 = vrot.slane %v4365, %v4453
    %v4455 = vlaneseq
    %v4456 = vshrl.u32 %v4455, 7
    %v4457 = vsub.s32 5, %v4456
    %v4458 = vrot.slane %v4365, %v4457
    %v4459 = vlaneseq
    %v4460 = vshrl.u32 %v4459, 7
    %v4461 = vsub.s32 6, %v4460
    %v4462 = vrot.slane %v4365, %v4461
    %v4463 = vlaneseq
    %v4464 = vshrl.u32 %v4463, 7
    %v4465 = vsub.s32 7, %v4464
    %v4466 = vrot.slane %v4365, %v4465
    %v4467 = vlaneseq
    %v4468 = vshrl.u32 %v4467, 7
    %v4469 = vsub.s32 0, %v4468
    %v4470 = vrot.slane %v4366, %v4469
    %v4471 = vlaneseq
    %v4472 = vshrl.u32 %v4471, 7
    %v4473 = vsub.s32 1, %v4472
    %v4474 = vrot.slane %v4366, %v4473
    %v4475 = vlaneseq
    %v4476 = vshrl.u32 %v4475, 7
    %v4477 = vsub.s32 2, %v4476
    %v4478 = vrot.slane %v4366, %v4477
    %v4479 = vlaneseq
    %v4480 = vshrl.u32 %v4479, 7
    %v4481 = vsub.s32 3, %v4480
    %v4482 = vrot.slane %v4366, %v4481
    %v4483 = vlaneseq
    %v4484 = vshrl.u32 %v4483, 7
    %v4485 = vsub.s32 4, %v4484
    %v4486 = vrot.slane %v4366, %v4485
    %v4487 = vlaneseq
    %v4488 = vshrl.u32 %v4487, 7
    %v4489 = vsub.s32 5, %v4488
    %v4490 = vrot.slane %v4366, %v4489
    %v4491 = vlaneseq
    %v4492 = vshrl.u32 %v4491, 7
    %v4493 = vsub.s32 6, %v4492
    %v4494 = vrot.slane %v4366, %v4493
    %v4495 = vlaneseq
    %v4496 = vshrl.u32 %v4495, 7
    %v4497 = vsub.s32 7, %v4496
    %v4498 = vrot.slane %v4366, %v4497
    %4531 = vmatprep.subr.mxu0 %v3340
    %4532 = vmatpush1.msra.mxu0 %v3339
    %4533 = vmatprep.subr.mxu0 %v3372
    %4534 = vmatpush1.msra.mxu0 %v3371
    %4535 = vmatprep.subr.mxu0 %v3404
    %4536 = vmatpush1.msra.mxu0 %v3403
    %4537 = vmatprep.subr.mxu0 %v3436
    %4538 = vmatpush1.msra.mxu0 %v3435
    %4539 = vmatprep.subr.mxu0 %v3468
    %4540 = vmatpush1.msra.mxu0 %v3467
    %4541 = vmatprep.subr.mxu0 %v3500
    %4542 = vmatpush1.msra.mxu0 %v3499
    %4543 = vmatprep.subr.mxu0 %v3532
    %4544 = vmatpush1.msra.mxu0 %v3531
    %4545 = vmatprep.subr.mxu0 %v3564
    %4546 = vmatpush1.msra.mxu0 %v3563
    %4547 = vmatprep.subr.mxu0 %v3596
    %4548 = vmatpush1.msra.mxu0 %v3595
    %4549 = vmatprep.subr.mxu0 %v3628
    %4550 = vmatpush1.msra.mxu0 %v3627
    %4551 = vmatprep.subr.mxu0 %v3660
    %4552 = vmatpush1.msra.mxu0 %v3659
    %4553 = vmatprep.subr.mxu0 %v3692
    %4554 = vmatpush1.msra.mxu0 %v3691
    %4555 = vmatprep.subr.mxu0 %v3724
    %4556 = vmatpush1.msra.mxu0 %v3723
    %4557 = vmatprep.subr.mxu0 %v3756
    %4558 = vmatpush1.msra.mxu0 %v3755
    %4559 = vmatprep.subr.mxu0 %v3788
    %4560 = vmatpush1.msra.mxu0 %v3787
    %4561 = vmatprep.subr.mxu0 %v3820
    %4562 = vmatpush1.msra.mxu0 %v3819
    %4563 = vmatprep.subr.mxu0 %v3852
    %4564 = vmatpush1.msra.mxu0 %v3851
    %4565 = vmatprep.subr.mxu0 %v3884
    %4566 = vmatpush1.msra.mxu0 %v3883
    %4567 = vmatprep.subr.mxu0 %v3916
    %4568 = vmatpush1.msra.mxu0 %v3915
    %4569 = vmatprep.subr.mxu0 %v3948
    %4570 = vmatpush1.msra.mxu0 %v3947
    %4571 = vmatprep.subr.mxu0 %v3980
    %4572 = vmatpush1.msra.mxu0 %v3979
    %4573 = vmatprep.subr.mxu0 %v4012
    %4574 = vmatpush1.msra.mxu0 %v4011
    %4575 = vmatprep.subr.mxu0 %v4044
    %4576 = vmatpush1.msra.mxu0 %v4043
    %4577 = vmatprep.subr.mxu0 %v4076
    %4578 = vmatpush1.msra.mxu0 %v4075
    %4579 = vmatprep.subr.mxu0 %v4108
    %4580 = vmatpush1.msra.mxu0 %v4107
    %4581 = vmatprep.subr.mxu0 %v4140
    %4582 = vmatpush1.msra.mxu0 %v4139
    %4583 = vmatprep.subr.mxu0 %v4172
    %4584 = vmatpush1.msra.mxu0 %v4171
    %4585 = vmatprep.subr.mxu0 %v4204
    %4586 = vmatpush1.msra.mxu0 %v4203
    %4587 = vmatprep.subr.mxu0 %v4236
    %4588 = vmatpush1.msra.mxu0 %v4235
    %4589 = vmatprep.subr.mxu0 %v4268
    %4590 = vmatpush1.msra.mxu0 %v4267
    %4591 = vmatprep.subr.mxu0 %v4300
    %4592 = vmatpush1.msra.mxu0 %v4299
    %4593 = vmatprep.subr.mxu0 %v4332
    %4594 = vmatpush1.msra.mxu0 %v4331
    %4595 = vmatprep.mubr.f32.mxu0 %v3334
    %4596 = vmatmul.mubr.f32.gmra.mrb[0].mxu0 %v3333
    %v4597 = vpop.f32.mrb[0].mxu0
    %v4598 = vadd.f32 %v4374, %v4597
    %v4599 = vpop.f32.mrb[0].mxu0
    %v4600 = vadd.f32 %v4378, %v4599
    %4601 = vdwg.mxu0
    %4602 = vmatprep.subr.mxu0 %v3342
    %4603 = vmatpush1.msra.mxu0 %v3341
    %4604 = vmatprep.subr.mxu0 %v3374
    %4605 = vmatpush1.msra.mxu0 %v3373
    %4606 = vmatprep.subr.mxu0 %v3406
    %4607 = vmatpush1.msra.mxu0 %v3405
    %4608 = vmatprep.subr.mxu0 %v3438
    %4609 = vmatpush1.msra.mxu0 %v3437
    %4610 = vmatprep.subr.mxu0 %v3470
    %4611 = vmatpush1.msra.mxu0 %v3469
    %4612 = vmatprep.subr.mxu0 %v3502
    %4613 = vmatpush1.msra.mxu0 %v3501
    %4614 = vmatprep.subr.mxu0 %v3534
    %4615 = vmatpush1.msra.mxu0 %v3533
    %4616 = vmatprep.subr.mxu0 %v3566
    %4617 = vmatpush1.msra.mxu0 %v3565
    %4618 = vmatprep.subr.mxu0 %v3598
    %4619 = vmatpush1.msra.mxu0 %v3597
    %4620 = vmatprep.subr.mxu0 %v3630
    %4621 = vmatpush1.msra.mxu0 %v3629
    %4622 = vmatprep.subr.mxu0 %v3662
    %4623 = vmatpush1.msra.mxu0 %v3661
    %4624 = vmatprep.subr.mxu0 %v3694
    %4625 = vmatpush1.msra.mxu0 %v3693
    %4626 = vmatprep.subr.mxu0 %v3726
    %4627 = vmatpush1.msra.mxu0 %v3725
    %4628 = vmatprep.subr.mxu0 %v3758
    %4629 = vmatpush1.msra.mxu0 %v3757
    %4630 = vmatprep.subr.mxu0 %v3790
    %4631 = vmatpush1.msra.mxu0 %v3789
    %4632 = vmatprep.subr.mxu0 %v3822
    %4633 = vmatpush1.msra.mxu0 %v3821
    %4634 = vmatprep.subr.mxu0 %v3854
    %4635 = vmatpush1.msra.mxu0 %v3853
    %4636 = vmatprep.subr.mxu0 %v3886
    %4637 = vmatpush1.msra.mxu0 %v3885
    %4638 = vmatprep.subr.mxu0 %v3918
    %4639 = vmatpush1.msra.mxu0 %v3917
    %4640 = vmatprep.subr.mxu0 %v3950
    %4641 = vmatpush1.msra.mxu0 %v3949
    %4642 = vmatprep.subr.mxu0 %v3982
    %4643 = vmatpush1.msra.mxu0 %v3981
    %4644 = vmatprep.subr.mxu0 %v4014
    %4645 = vmatpush1.msra.mxu0 %v4013
    %4646 = vmatprep.subr.mxu0 %v4046
    %4647 = vmatpush1.msra.mxu0 %v4045
    %4648 = vmatprep.subr.mxu0 %v4078
    %4649 = vmatpush1.msra.mxu0 %v4077
    %4650 = vmatprep.subr.mxu0 %v4110
    %4651 = vmatpush1.msra.mxu0 %v4109
    %4652 = vmatprep.subr.mxu0 %v4142
    %4653 = vmatpush1.msra.mxu0 %v4141
    %4654 = vmatprep.subr.mxu0 %v4174
    %4655 = vmatpush1.msra.mxu0 %v4173
    %4656 = vmatprep.subr.mxu0 %v4206
    %4657 = vmatpush1.msra.mxu0 %v4205
    %4658 = vmatprep.subr.mxu0 %v4238
    %4659 = vmatpush1.msra.mxu0 %v4237
    %4660 = vmatprep.subr.mxu0 %v4270
    %4661 = vmatpush1.msra.mxu0 %v4269
    %4662 = vmatprep.subr.mxu0 %v4302
    %4663 = vmatpush1.msra.mxu0 %v4301
    %4664 = vmatprep.subr.mxu0 %v4334
    %4665 = vmatpush1.msra.mxu0 %v4333
    %4666 = vmatprep.mubr.f32.mxu0 %v3334
    %4667 = vmatmul.mubr.f32.gmra.mrb[0].mxu0 %v3333
    %v4668 = vpop.f32.mrb[0].mxu0
    %v4669 = vadd.f32 %v4382, %v4668
    %v4670 = vpop.f32.mrb[0].mxu0
    %v4671 = vadd.f32 %v4386, %v4670
    %4672 = vdwg.mxu0
    %4673 = vmatprep.subr.mxu0 %v3344
    %4674 = vmatpush1.msra.mxu0 %v3343
    %4675 = vmatprep.subr.mxu0 %v3376
    %4676 = vmatpush1.msra.mxu0 %v3375
    %4677 = vmatprep.subr.mxu0 %v3408
    %4678 = vmatpush1.msra.mxu0 %v3407
    %4679 = vmatprep.subr.mxu0 %v3440
    %4680 = vmatpush1.msra.mxu0 %v3439
    %4681 = vmatprep.subr.mxu0 %v3472
    %4682 = vmatpush1.msra.mxu0 %v3471
    %4683 = vmatprep.subr.mxu0 %v3504
    %4684 = vmatpush1.msra.mxu0 %v3503
    %4685 = vmatprep.subr.mxu0 %v3536
    %4686 = vmatpush1.msra.mxu0 %v3535
    %4687 = vmatprep.subr.mxu0 %v3568
    %4688 = vmatpush1.msra.mxu0 %v3567
    %4689 = vmatprep.subr.mxu0 %v3600
    %4690 = vmatpush1.msra.mxu0 %v3599
    %4691 = vmatprep.subr.mxu0 %v3632
    %4692 = vmatpush1.msra.mxu0 %v3631
    %4693 = vmatprep.subr.mxu0 %v3664
    %4694 = vmatpush1.msra.mxu0 %v3663
    %4695 = vmatprep.subr.mxu0 %v3696
    %4696 = vmatpush1.msra.mxu0 %v3695
    %4697 = vmatprep.subr.mxu0 %v3728
    %4698 = vmatpush1.msra.mxu0 %v3727
    %4699 = vmatprep.subr.mxu0 %v3760
    %4700 = vmatpush1.msra.mxu0 %v3759
    %4701 = vmatprep.subr.mxu0 %v3792
    %4702 = vmatpush1.msra.mxu0 %v3791
    %4703 = vmatprep.subr.mxu0 %v3824
    %4704 = vmatpush1.msra.mxu0 %v3823
    %4705 = vmatprep.subr.mxu0 %v3856
    %4706 = vmatpush1.msra.mxu0 %v3855
    %4707 = vmatprep.subr.mxu0 %v3888
    %4708 = vmatpush1.msra.mxu0 %v3887
    %4709 = vmatprep.subr.mxu0 %v3920
    %4710 = vmatpush1.msra.mxu0 %v3919
    %4711 = vmatprep.subr.mxu0 %v3952
    %4712 = vmatpush1.msra.mxu0 %v3951
    %4713 = vmatprep.subr.mxu0 %v3984
    %4714 = vmatpush1.msra.mxu0 %v3983
    %4715 = vmatprep.subr.mxu0 %v4016
    %4716 = vmatpush1.msra.mxu0 %v4015
    %4717 = vmatprep.subr.mxu0 %v4048
    %4718 = vmatpush1.msra.mxu0 %v4047
    %4719 = vmatprep.subr.mxu0 %v4080
    %4720 = vmatpush1.msra.mxu0 %v4079
    %4721 = vmatprep.subr.mxu0 %v4112
    %4722 = vmatpush1.msra.mxu0 %v4111
    %4723 = vmatprep.subr.mxu0 %v4144
    %4724 = vmatpush1.msra.mxu0 %v4143
    %4725 = vmatprep.subr.mxu0 %v4176
    %4726 = vmatpush1.msra.mxu0 %v4175
    %4727 = vmatprep.subr.mxu0 %v4208
    %4728 = vmatpush1.msra.mxu0 %v4207
    %4729 = vmatprep.subr.mxu0 %v4240
    %4730 = vmatpush1.msra.mxu0 %v4239
    %4731 = vmatprep.subr.mxu0 %v4272
    %4732 = vmatpush1.msra.mxu0 %v4271
    %4733 = vmatprep.subr.mxu0 %v4304
    %4734 = vmatpush1.msra.mxu0 %v4303
    %4735 = vmatprep.subr.mxu0 %v4336
    %4736 = vmatpush1.msra.mxu0 %v4335
    %4737 = vmatprep.mubr.f32.mxu0 %v3334
    %4738 = vmatmul.mubr.f32.gmra.mrb[0].mxu0 %v3333
    %v4739 = vpop.f32.mrb[0].mxu0
    %v4740 = vadd.f32 %v4390, %v4739
    %v4741 = vpop.f32.mrb[0].mxu0
    %v4742 = vadd.f32 %v4394, %v4741
    %4743 = vdwg.mxu0
    %4744 = vmatprep.subr.mxu0 %v3346
    %4745 = vmatpush1.msra.mxu0 %v3345
    %4746 = vmatprep.subr.mxu0 %v3378
    %4747 = vmatpush1.msra.mxu0 %v3377
    %4748 = vmatprep.subr.mxu0 %v3410
    %4749 = vmatpush1.msra.mxu0 %v3409
    %4750 = vmatprep.subr.mxu0 %v3442
    %4751 = vmatpush1.msra.mxu0 %v3441
    %4752 = vmatprep.subr.mxu0 %v3474
    %4753 = vmatpush1.msra.mxu0 %v3473
    %4754 = vmatprep.subr.mxu0 %v3506
    %4755 = vmatpush1.msra.mxu0 %v3505
    %4756 = vmatprep.subr.mxu0 %v3538
    %4757 = vmatpush1.msra.mxu0 %v3537
    %4758 = vmatprep.subr.mxu0 %v3570
    %4759 = vmatpush1.msra.mxu0 %v3569
    %4760 = vmatprep.subr.mxu0 %v3602
    %4761 = vmatpush1.msra.mxu0 %v3601
    %4762 = vmatprep.subr.mxu0 %v3634
    %4763 = vmatpush1.msra.mxu0 %v3633
    %4764 = vmatprep.subr.mxu0 %v3666
    %4765 = vmatpush1.msra.mxu0 %v3665
    %4766 = vmatprep.subr.mxu0 %v3698
    %4767 = vmatpush1.msra.mxu0 %v3697
    %4768 = vmatprep.subr.mxu0 %v3730
    %4769 = vmatpush1.msra.mxu0 %v3729
    %4770 = vmatprep.subr.mxu0 %v3762
    %4771 = vmatpush1.msra.mxu0 %v3761
    %4772 = vmatprep.subr.mxu0 %v3794
    %4773 = vmatpush1.msra.mxu0 %v3793
    %4774 = vmatprep.subr.mxu0 %v3826
    %4775 = vmatpush1.msra.mxu0 %v3825
    %4776 = vmatprep.subr.mxu0 %v3858
    %4777 = vmatpush1.msra.mxu0 %v3857
    %4778 = vmatprep.subr.mxu0 %v3890
    %4779 = vmatpush1.msra.mxu0 %v3889
    %4780 = vmatprep.subr.mxu0 %v3922
    %4781 = vmatpush1.msra.mxu0 %v3921
    %4782 = vmatprep.subr.mxu0 %v3954
    %4783 = vmatpush1.msra.mxu0 %v3953
    %4784 = vmatprep.subr.mxu0 %v3986
    %4785 = vmatpush1.msra.mxu0 %v3985
    %4786 = vmatprep.subr.mxu0 %v4018
    %4787 = vmatpush1.msra.mxu0 %v4017
    %4788 = vmatprep.subr.mxu0 %v4050
    %4789 = vmatpush1.msra.mxu0 %v4049
    %4790 = vmatprep.subr.mxu0 %v4082
    %4791 = vmatpush1.msra.mxu0 %v4081
    %4792 = vmatprep.subr.mxu0 %v4114
    %4793 = vmatpush1.msra.mxu0 %v4113
    %4794 = vmatprep.subr.mxu0 %v4146
    %4795 = vmatpush1.msra.mxu0 %v4145
    %4796 = vmatprep.subr.mxu0 %v4178
    %4797 = vmatpush1.msra.mxu0 %v4177
    %4798 = vmatprep.subr.mxu0 %v4210
    %4799 = vmatpush1.msra.mxu0 %v4209
    %4800 = vmatprep.subr.mxu0 %v4242
    %4801 = vmatpush1.msra.mxu0 %v4241
    %4802 = vmatprep.subr.mxu0 %v4274
    %4803 = vmatpush1.msra.mxu0 %v4273
    %4804 = vmatprep.subr.mxu0 %v4306
    %4805 = vmatpush1.msra.mxu0 %v4305
    %4806 = vmatprep.subr.mxu0 %v4338
    %4807 = vmatpush1.msra.mxu0 %v4337
    %4808 = vmatprep.mubr.f32.mxu0 %v3334
    %4809 = vmatmul.mubr.f32.gmra.mrb[0].mxu0 %v3333
    %v4810 = vpop.f32.mrb[0].mxu0
    %v4811 = vadd.f32 %v4398, %v4810
    %v4812 = vpop.f32.mrb[0].mxu0
    %v4813 = vadd.f32 %v4402, %v4812
    %4814 = vdwg.mxu0
    %4815 = vmatprep.subr.mxu0 %v3348
    %4816 = vmatpush1.msra.mxu0 %v3347
    %4817 = vmatprep.subr.mxu0 %v3380
    %4818 = vmatpush1.msra.mxu0 %v3379
    %4819 = vmatprep.subr.mxu0 %v3412
    %4820 = vmatpush1.msra.mxu0 %v3411
    %4821 = vmatprep.subr.mxu0 %v3444
    %4822 = vmatpush1.msra.mxu0 %v3443
    %4823 = vmatprep.subr.mxu0 %v3476
    %4824 = vmatpush1.msra.mxu0 %v3475
    %4825 = vmatprep.subr.mxu0 %v3508
    %4826 = vmatpush1.msra.mxu0 %v3507
    %4827 = vmatprep.subr.mxu0 %v3540
    %4828 = vmatpush1.msra.mxu0 %v3539
    %4829 = vmatprep.subr.mxu0 %v3572
    %4830 = vmatpush1.msra.mxu0 %v3571
    %4831 = vmatprep.subr.mxu0 %v3604
    %4832 = vmatpush1.msra.mxu0 %v3603
    %4833 = vmatprep.subr.mxu0 %v3636
    %4834 = vmatpush1.msra.mxu0 %v3635
    %4835 = vmatprep.subr.mxu0 %v3668
    %4836 = vmatpush1.msra.mxu0 %v3667
    %4837 = vmatprep.subr.mxu0 %v3700
    %4838 = vmatpush1.msra.mxu0 %v3699
    %4839 = vmatprep.subr.mxu0 %v3732
    %4840 = vmatpush1.msra.mxu0 %v3731
    %4841 = vmatprep.subr.mxu0 %v3764
    %4842 = vmatpush1.msra.mxu0 %v3763
    %4843 = vmatprep.subr.mxu0 %v3796
    %4844 = vmatpush1.msra.mxu0 %v3795
    %4845 = vmatprep.subr.mxu0 %v3828
    %4846 = vmatpush1.msra.mxu0 %v3827
    %4847 = vmatprep.subr.mxu0 %v3860
    %4848 = vmatpush1.msra.mxu0 %v3859
    %4849 = vmatprep.subr.mxu0 %v3892
    %4850 = vmatpush1.msra.mxu0 %v3891
    %4851 = vmatprep.subr.mxu0 %v3924
    %4852 = vmatpush1.msra.mxu0 %v3923
    %4853 = vmatprep.subr.mxu0 %v3956
    %4854 = vmatpush1.msra.mxu0 %v3955
    %4855 = vmatprep.subr.mxu0 %v3988
    %4856 = vmatpush1.msra.mxu0 %v3987
    %4857 = vmatprep.subr.mxu0 %v4020
    %4858 = vmatpush1.msra.mxu0 %v4019
    %4859 = vmatprep.subr.mxu0 %v4052
    %4860 = vmatpush1.msra.mxu0 %v4051
    %4861 = vmatprep.subr.mxu0 %v4084
    %4862 = vmatpush1.msra.mxu0 %v4083
    %4863 = vmatprep.subr.mxu0 %v4116
    %4864 = vmatpush1.msra.mxu0 %v4115
    %4865 = vmatprep.subr.mxu0 %v4148
    %4866 = vmatpush1.msra.mxu0 %v4147
    %4867 = vmatprep.subr.mxu0 %v4180
    %4868 = vmatpush1.msra.mxu0 %v4179
    %4869 = vmatprep.subr.mxu0 %v4212
    %4870 = vmatpush1.msra.mxu0 %v4211
    %4871 = vmatprep.subr.mxu0 %v4244
    %4872 = vmatpush1.msra.mxu0 %v4243
    %4873 = vmatprep.subr.mxu0 %v4276
    %4874 = vmatpush1.msra.mxu0 %v4275
    %4875 = vmatprep.subr.mxu0 %v4308
    %4876 = vmatpush1.msra.mxu0 %v4307
    %4877 = vmatprep.subr.mxu0 %v4340
    %4878 = vmatpush1.msra.mxu0 %v4339
    %4879 = vmatprep.mubr.f32.mxu0 %v3334
    %4880 = vmatmul.mubr.f32.gmra.mrb[0].mxu0 %v3333
    %v4881 = vpop.f32.mrb[0].mxu0
    %v4882 = vadd.f32 %v4406, %v4881
    %v4883 = vpop.f32.mrb[0].mxu0
    %v4884 = vadd.f32 %v4410, %v4883
    %4885 = vdwg.mxu0
    %4886 = vmatprep.subr.mxu0 %v3350
    %4887 = vmatpush1.msra.mxu0 %v3349
    %4888 = vmatprep.subr.mxu0 %v3382
    %4889 = vmatpush1.msra.mxu0 %v3381
    %4890 = vmatprep.subr.mxu0 %v3414
    %4891 = vmatpush1.msra.mxu0 %v3413
    %4892 = vmatprep.subr.mxu0 %v3446
    %4893 = vmatpush1.msra.mxu0 %v3445
    %4894 = vmatprep.subr.mxu0 %v3478
    %4895 = vmatpush1.msra.mxu0 %v3477
    %4896 = vmatprep.subr.mxu0 %v3510
    %4897 = vmatpush1.msra.mxu0 %v3509
    %4898 = vmatprep.subr.mxu0 %v3542
    %4899 = vmatpush1.msra.mxu0 %v3541
    %4900 = vmatprep.subr.mxu0 %v3574
    %4901 = vmatpush1.msra.mxu0 %v3573
    %4902 = vmatprep.subr.mxu0 %v3606
    %4903 = vmatpush1.msra.mxu0 %v3605
    %4904 = vmatprep.subr.mxu0 %v3638
    %4905 = vmatpush1.msra.mxu0 %v3637
    %4906 = vmatprep.subr.mxu0 %v3670
    %4907 = vmatpush1.msra.mxu0 %v3669
    %4908 = vmatprep.subr.mxu0 %v3702
    %4909 = vmatpush1.msra.mxu0 %v3701
    %4910 = vmatprep.subr.mxu0 %v3734
    %4911 = vmatpush1.msra.mxu0 %v3733
    %4912 = vmatprep.subr.mxu0 %v3766
    %4913 = vmatpush1.msra.mxu0 %v3765
    %4914 = vmatprep.subr.mxu0 %v3798
    %4915 = vmatpush1.msra.mxu0 %v3797
    %4916 = vmatprep.subr.mxu0 %v3830
    %4917 = vmatpush1.msra.mxu0 %v3829
    %4918 = vmatprep.subr.mxu0 %v3862
    %4919 = vmatpush1.msra.mxu0 %v3861
    %4920 = vmatprep.subr.mxu0 %v3894
    %4921 = vmatpush1.msra.mxu0 %v3893
    %4922 = vmatprep.subr.mxu0 %v3926
    %4923 = vmatpush1.msra.mxu0 %v3925
    %4924 = vmatprep.subr.mxu0 %v3958
    %4925 = vmatpush1.msra.mxu0 %v3957
    %4926 = vmatprep.subr.mxu0 %v3990
    %4927 = vmatpush1.msra.mxu0 %v3989
    %4928 = vmatprep.subr.mxu0 %v4022
    %4929 = vmatpush1.msra.mxu0 %v4021
    %4930 = vmatprep.subr.mxu0 %v4054
    %4931 = vmatpush1.msra.mxu0 %v4053
    %4932 = vmatprep.subr.mxu0 %v4086
    %4933 = vmatpush1.msra.mxu0 %v4085
    %4934 = vmatprep.subr.mxu0 %v4118
    %4935 = vmatpush1.msra.mxu0 %v4117
    %4936 = vmatprep.subr.mxu0 %v4150
    %4937 = vmatpush1.msra.mxu0 %v4149
    %4938 = vmatprep.subr.mxu0 %v4182
    %4939 = vmatpush1.msra.mxu0 %v4181
    %4940 = vmatprep.subr.mxu0 %v4214
    %4941 = vmatpush1.msra.mxu0 %v4213
    %4942 = vmatprep.subr.mxu0 %v4246
    %4943 = vmatpush1.msra.mxu0 %v4245
    %4944 = vmatprep.subr.mxu0 %v4278
    %4945 = vmatpush1.msra.mxu0 %v4277
    %4946 = vmatprep.subr.mxu0 %v4310
    %4947 = vmatpush1.msra.mxu0 %v4309
    %4948 = vmatprep.subr.mxu0 %v4342
    %4949 = vmatpush1.msra.mxu0 %v4341
    %4950 = vmatprep.mubr.f32.mxu0 %v3334
    %4951 = vmatmul.mubr.f32.gmra.mrb[0].mxu0 %v3333
    %v4952 = vpop.f32.mrb[0].mxu0
    %v4953 = vadd.f32 %v4414, %v4952
    %v4954 = vpop.f32.mrb[0].mxu0
    %v4955 = vadd.f32 %v4418, %v4954
    %4956 = vdwg.mxu0
    %4957 = vmatprep.subr.mxu0 %v3352
    %4958 = vmatpush1.msra.mxu0 %v3351
    %4959 = vmatprep.subr.mxu0 %v3384
    %4960 = vmatpush1.msra.mxu0 %v3383
    %4961 = vmatprep.subr.mxu0 %v3416
    %4962 = vmatpush1.msra.mxu0 %v3415
    %4963 = vmatprep.subr.mxu0 %v3448
    %4964 = vmatpush1.msra.mxu0 %v3447
    %4965 = vmatprep.subr.mxu0 %v3480
    %4966 = vmatpush1.msra.mxu0 %v3479
    %4967 = vmatprep.subr.mxu0 %v3512
    %4968 = vmatpush1.msra.mxu0 %v3511
    %4969 = vmatprep.subr.mxu0 %v3544
    %4970 = vmatpush1.msra.mxu0 %v3543
    %4971 = vmatprep.subr.mxu0 %v3576
    %4972 = vmatpush1.msra.mxu0 %v3575
    %4973 = vmatprep.subr.mxu0 %v3608
    %4974 = vmatpush1.msra.mxu0 %v3607
    %4975 = vmatprep.subr.mxu0 %v3640
    %4976 = vmatpush1.msra.mxu0 %v3639
    %4977 = vmatprep.subr.mxu0 %v3672
    %4978 = vmatpush1.msra.mxu0 %v3671
    %4979 = vmatprep.subr.mxu0 %v3704
    %4980 = vmatpush1.msra.mxu0 %v3703
    %4981 = vmatprep.subr.mxu0 %v3736
    %4982 = vmatpush1.msra.mxu0 %v3735
    %4983 = vmatprep.subr.mxu0 %v3768
    %4984 = vmatpush1.msra.mxu0 %v3767
    %4985 = vmatprep.subr.mxu0 %v3800
    %4986 = vmatpush1.msra.mxu0 %v3799
    %4987 = vmatprep.subr.mxu0 %v3832
    %4988 = vmatpush1.msra.mxu0 %v3831
    %4989 = vmatprep.subr.mxu0 %v3864
    %4990 = vmatpush1.msra.mxu0 %v3863
    %4991 = vmatprep.subr.mxu0 %v3896
    %4992 = vmatpush1.msra.mxu0 %v3895
    %4993 = vmatprep.subr.mxu0 %v3928
    %4994 = vmatpush1.msra.mxu0 %v3927
    %4995 = vmatprep.subr.mxu0 %v3960
    %4996 = vmatpush1.msra.mxu0 %v3959
    %4997 = vmatprep.subr.mxu0 %v3992
    %4998 = vmatpush1.msra.mxu0 %v3991
    %4999 = vmatprep.subr.mxu0 %v4024
    %5000 = vmatpush1.msra.mxu0 %v4023
    %5001 = vmatprep.subr.mxu0 %v4056
    %5002 = vmatpush1.msra.mxu0 %v4055
    %5003 = vmatprep.subr.mxu0 %v4088
    %5004 = vmatpush1.msra.mxu0 %v4087
    %5005 = vmatprep.subr.mxu0 %v4120
    %5006 = vmatpush1.msra.mxu0 %v4119
    %5007 = vmatprep.subr.mxu0 %v4152
    %5008 = vmatpush1.msra.mxu0 %v4151
    %5009 = vmatprep.subr.mxu0 %v4184
    %5010 = vmatpush1.msra.mxu0 %v4183
    %5011 = vmatprep.subr.mxu0 %v4216
    %5012 = vmatpush1.msra.mxu0 %v4215
    %5013 = vmatprep.subr.mxu0 %v4248
    %5014 = vmatpush1.msra.mxu0 %v4247
    %5015 = vmatprep.subr.mxu0 %v4280
    %5016 = vmatpush1.msra.mxu0 %v4279
    %5017 = vmatprep.subr.mxu0 %v4312
    %5018 = vmatpush1.msra.mxu0 %v4311
    %5019 = vmatprep.subr.mxu0 %v4344
    %5020 = vmatpush1.msra.mxu0 %v4343
    %5021 = vmatprep.mubr.f32.mxu0 %v3334
    %5022 = vmatmul.mubr.f32.gmra.mrb[0].mxu0 %v3333
    %v5023 = vpop.f32.mrb[0].mxu0
    %v5024 = vadd.f32 %v4422, %v5023
    %v5025 = vpop.f32.mrb[0].mxu0
    %v5026 = vadd.f32 %v4426, %v5025
    %5027 = vdwg.mxu0
    %5028 = vmatprep.subr.mxu0 %v3354
    %5029 = vmatpush1.msra.mxu0 %v3353
    %5030 = vmatprep.subr.mxu0 %v3386
    %5031 = vmatpush1.msra.mxu0 %v3385
    %5032 = vmatprep.subr.mxu0 %v3418
    %5033 = vmatpush1.msra.mxu0 %v3417
    %5034 = vmatprep.subr.mxu0 %v3450
    %5035 = vmatpush1.msra.mxu0 %v3449
    %5036 = vmatprep.subr.mxu0 %v3482
    %5037 = vmatpush1.msra.mxu0 %v3481
    %5038 = vmatprep.subr.mxu0 %v3514
    %5039 = vmatpush1.msra.mxu0 %v3513
    %5040 = vmatprep.subr.mxu0 %v3546
    %5041 = vmatpush1.msra.mxu0 %v3545
    %5042 = vmatprep.subr.mxu0 %v3578
    %5043 = vmatpush1.msra.mxu0 %v3577
    %5044 = vmatprep.subr.mxu0 %v3610
    %5045 = vmatpush1.msra.mxu0 %v3609
    %5046 = vmatprep.subr.mxu0 %v3642
    %5047 = vmatpush1.msra.mxu0 %v3641
    %5048 = vmatprep.subr.mxu0 %v3674
    %5049 = vmatpush1.msra.mxu0 %v3673
    %5050 = vmatprep.subr.mxu0 %v3706
    %5051 = vmatpush1.msra.mxu0 %v3705
    %5052 = vmatprep.subr.mxu0 %v3738
    %5053 = vmatpush1.msra.mxu0 %v3737
    %5054 = vmatprep.subr.mxu0 %v3770
    %5055 = vmatpush1.msra.mxu0 %v3769
    %5056 = vmatprep.subr.mxu0 %v3802
    %5057 = vmatpush1.msra.mxu0 %v3801
    %5058 = vmatprep.subr.mxu0 %v3834
    %5059 = vmatpush1.msra.mxu0 %v3833
    %5060 = vmatprep.subr.mxu0 %v3866
    %5061 = vmatpush1.msra.mxu0 %v3865
    %5062 = vmatprep.subr.mxu0 %v3898
    %5063 = vmatpush1.msra.mxu0 %v3897
    %5064 = vmatprep.subr.mxu0 %v3930
    %5065 = vmatpush1.msra.mxu0 %v3929
    %5066 = vmatprep.subr.mxu0 %v3962
    %5067 = vmatpush1.msra.mxu0 %v3961
    %5068 = vmatprep.subr.mxu0 %v3994
    %5069 = vmatpush1.msra.mxu0 %v3993
    %5070 = vmatprep.subr.mxu0 %v4026
    %5071 = vmatpush1.msra.mxu0 %v4025
    %5072 = vmatprep.subr.mxu0 %v4058
    %5073 = vmatpush1.msra.mxu0 %v4057
    %5074 = vmatprep.subr.mxu0 %v4090
    %5075 = vmatpush1.msra.mxu0 %v4089
    %5076 = vmatprep.subr.mxu0 %v4122
    %5077 = vmatpush1.msra.mxu0 %v4121
    %5078 = vmatprep.subr.mxu0 %v4154
    %5079 = vmatpush1.msra.mxu0 %v4153
    %5080 = vmatprep.subr.mxu0 %v4186
    %5081 = vmatpush1.msra.mxu0 %v4185
    %5082 = vmatprep.subr.mxu0 %v4218
    %5083 = vmatpush1.msra.mxu0 %v4217
    %5084 = vmatprep.subr.mxu0 %v4250
    %5085 = vmatpush1.msra.mxu0 %v4249
    %5086 = vmatprep.subr.mxu0 %v4282
    %5087 = vmatpush1.msra.mxu0 %v4281
    %5088 = vmatprep.subr.mxu0 %v4314
    %5089 = vmatpush1.msra.mxu0 %v4313
    %5090 = vmatprep.subr.mxu0 %v4346
    %5091 = vmatpush1.msra.mxu0 %v4345
    %5092 = vmatprep.mubr.f32.mxu0 %v3334
    %5093 = vmatmul.mubr.f32.gmra.mrb[0].mxu0 %v3333
    %v5094 = vpop.f32.mrb[0].mxu0
    %v5095 = vadd.f32 %v4430, %v5094
    %v5096 = vpop.f32.mrb[0].mxu0
    %v5097 = vadd.f32 %v4434, %v5096
    %5098 = vdwg.mxu0
    %5099 = vmatprep.subr.mxu0 %v3356
    %5100 = vmatpush1.msra.mxu0 %v3355
    %5101 = vmatprep.subr.mxu0 %v3388
    %5102 = vmatpush1.msra.mxu0 %v3387
    %5103 = vmatprep.subr.mxu0 %v3420
    %5104 = vmatpush1.msra.mxu0 %v3419
    %5105 = vmatprep.subr.mxu0 %v3452
    %5106 = vmatpush1.msra.mxu0 %v3451
    %5107 = vmatprep.subr.mxu0 %v3484
    %5108 = vmatpush1.msra.mxu0 %v3483
    %5109 = vmatprep.subr.mxu0 %v3516
    %5110 = vmatpush1.msra.mxu0 %v3515
    %5111 = vmatprep.subr.mxu0 %v3548
    %5112 = vmatpush1.msra.mxu0 %v3547
    %5113 = vmatprep.subr.mxu0 %v3580
    %5114 = vmatpush1.msra.mxu0 %v3579
    %5115 = vmatprep.subr.mxu0 %v3612
    %5116 = vmatpush1.msra.mxu0 %v3611
    %5117 = vmatprep.subr.mxu0 %v3644
    %5118 = vmatpush1.msra.mxu0 %v3643
    %5119 = vmatprep.subr.mxu0 %v3676
    %5120 = vmatpush1.msra.mxu0 %v3675
    %5121 = vmatprep.subr.mxu0 %v3708
    %5122 = vmatpush1.msra.mxu0 %v3707
    %5123 = vmatprep.subr.mxu0 %v3740
    %5124 = vmatpush1.msra.mxu0 %v3739
    %5125 = vmatprep.subr.mxu0 %v3772
    %5126 = vmatpush1.msra.mxu0 %v3771
    %5127 = vmatprep.subr.mxu0 %v3804
    %5128 = vmatpush1.msra.mxu0 %v3803
    %5129 = vmatprep.subr.mxu0 %v3836
    %5130 = vmatpush1.msra.mxu0 %v3835
    %5131 = vmatprep.subr.mxu0 %v3868
    %5132 = vmatpush1.msra.mxu0 %v3867
    %5133 = vmatprep.subr.mxu0 %v3900
    %5134 = vmatpush1.msra.mxu0 %v3899
    %5135 = vmatprep.subr.mxu0 %v3932
    %5136 = vmatpush1.msra.mxu0 %v3931
    %5137 = vmatprep.subr.mxu0 %v3964
    %5138 = vmatpush1.msra.mxu0 %v3963
    %5139 = vmatprep.subr.mxu0 %v3996
    %5140 = vmatpush1.msra.mxu0 %v3995
    %5141 = vmatprep.subr.mxu0 %v4028
    %5142 = vmatpush1.msra.mxu0 %v4027
    %5143 = vmatprep.subr.mxu0 %v4060
    %5144 = vmatpush1.msra.mxu0 %v4059
    %5145 = vmatprep.subr.mxu0 %v4092
    %5146 = vmatpush1.msra.mxu0 %v4091
    %5147 = vmatprep.subr.mxu0 %v4124
    %5148 = vmatpush1.msra.mxu0 %v4123
    %5149 = vmatprep.subr.mxu0 %v4156
    %5150 = vmatpush1.msra.mxu0 %v4155
    %5151 = vmatprep.subr.mxu0 %v4188
    %5152 = vmatpush1.msra.mxu0 %v4187
    %5153 = vmatprep.subr.mxu0 %v4220
    %5154 = vmatpush1.msra.mxu0 %v4219
    %5155 = vmatprep.subr.mxu0 %v4252
    %5156 = vmatpush1.msra.mxu0 %v4251
    %5157 = vmatprep.subr.mxu0 %v4284
    %5158 = vmatpush1.msra.mxu0 %v4283
    %5159 = vmatprep.subr.mxu0 %v4316
    %5160 = vmatpush1.msra.mxu0 %v4315
    %5161 = vmatprep.subr.mxu0 %v4348
    %5162 = vmatpush1.msra.mxu0 %v4347
    %5163 = vmatprep.mubr.f32.mxu0 %v3334
    %5164 = vmatmul.mubr.f32.gmra.mrb[0].mxu0 %v3333
    %v5165 = vpop.f32.mrb[0].mxu0
    %v5166 = vadd.f32 %v4438, %v5165
    %v5167 = vpop.f32.mrb[0].mxu0
    %v5168 = vadd.f32 %v4442, %v5167
    %5169 = vdwg.mxu0
    %5170 = vmatprep.subr.mxu0 %v3358
    %5171 = vmatpush1.msra.mxu0 %v3357
    %5172 = vmatprep.subr.mxu0 %v3390
    %5173 = vmatpush1.msra.mxu0 %v3389
    %5174 = vmatprep.subr.mxu0 %v3422
    %5175 = vmatpush1.msra.mxu0 %v3421
    %5176 = vmatprep.subr.mxu0 %v3454
    %5177 = vmatpush1.msra.mxu0 %v3453
    %5178 = vmatprep.subr.mxu0 %v3486
    %5179 = vmatpush1.msra.mxu0 %v3485
    %5180 = vmatprep.subr.mxu0 %v3518
    %5181 = vmatpush1.msra.mxu0 %v3517
    %5182 = vmatprep.subr.mxu0 %v3550
    %5183 = vmatpush1.msra.mxu0 %v3549
    %5184 = vmatprep.subr.mxu0 %v3582
    %5185 = vmatpush1.msra.mxu0 %v3581
    %5186 = vmatprep.subr.mxu0 %v3614
    %5187 = vmatpush1.msra.mxu0 %v3613
    %5188 = vmatprep.subr.mxu0 %v3646
    %5189 = vmatpush1.msra.mxu0 %v3645
    %5190 = vmatprep.subr.mxu0 %v3678
    %5191 = vmatpush1.msra.mxu0 %v3677
    %5192 = vmatprep.subr.mxu0 %v3710
    %5193 = vmatpush1.msra.mxu0 %v3709
    %5194 = vmatprep.subr.mxu0 %v3742
    %5195 = vmatpush1.msra.mxu0 %v3741
    %5196 = vmatprep.subr.mxu0 %v3774
    %5197 = vmatpush1.msra.mxu0 %v3773
    %5198 = vmatprep.subr.mxu0 %v3806
    %5199 = vmatpush1.msra.mxu0 %v3805
    %5200 = vmatprep.subr.mxu0 %v3838
    %5201 = vmatpush1.msra.mxu0 %v3837
    %5202 = vmatprep.subr.mxu0 %v3870
    %5203 = vmatpush1.msra.mxu0 %v3869
    %5204 = vmatprep.subr.mxu0 %v3902
    %5205 = vmatpush1.msra.mxu0 %v3901
    %5206 = vmatprep.subr.mxu0 %v3934
    %5207 = vmatpush1.msra.mxu0 %v3933
    %5208 = vmatprep.subr.mxu0 %v3966
    %5209 = vmatpush1.msra.mxu0 %v3965
    %5210 = vmatprep.subr.mxu0 %v3998
    %5211 = vmatpush1.msra.mxu0 %v3997
    %5212 = vmatprep.subr.mxu0 %v4030
    %5213 = vmatpush1.msra.mxu0 %v4029
    %5214 = vmatprep.subr.mxu0 %v4062
    %5215 = vmatpush1.msra.mxu0 %v4061
    %5216 = vmatprep.subr.mxu0 %v4094
    %5217 = vmatpush1.msra.mxu0 %v4093
    %5218 = vmatprep.subr.mxu0 %v4126
    %5219 = vmatpush1.msra.mxu0 %v4125
    %5220 = vmatprep.subr.mxu0 %v4158
    %5221 = vmatpush1.msra.mxu0 %v4157
    %5222 = vmatprep.subr.mxu0 %v4190
    %5223 = vmatpush1.msra.mxu0 %v4189
    %5224 = vmatprep.subr.mxu0 %v4222
    %5225 = vmatpush1.msra.mxu0 %v4221
    %5226 = vmatprep.subr.mxu0 %v4254
    %5227 = vmatpush1.msra.mxu0 %v4253
    %5228 = vmatprep.subr.mxu0 %v4286
    %5229 = vmatpush1.msra.mxu0 %v4285
    %5230 = vmatprep.subr.mxu0 %v4318
    %5231 = vmatpush1.msra.mxu0 %v4317
    %5232 = vmatprep.subr.mxu0 %v4350
    %5233 = vmatpush1.msra.mxu0 %v4349
    %5234 = vmatprep.mubr.f32.mxu0 %v3334
    %5235 = vmatmul.mubr.f32.gmra.mrb[0].mxu0 %v3333
    %v5236 = vpop.f32.mrb[0].mxu0
    %v5237 = vadd.f32 %v4446, %v5236
    %v5238 = vpop.f32.mrb[0].mxu0
    %v5239 = vadd.f32 %v4450, %v5238
    %5240 = vdwg.mxu0
    %5241 = vmatprep.subr.mxu0 %v3360
    %5242 = vmatpush1.msra.mxu0 %v3359
    %5243 = vmatprep.subr.mxu0 %v3392
    %5244 = vmatpush1.msra.mxu0 %v3391
    %5245 = vmatprep.subr.mxu0 %v3424
    %5246 = vmatpush1.msra.mxu0 %v3423
    %5247 = vmatprep.subr.mxu0 %v3456
    %5248 = vmatpush1.msra.mxu0 %v3455
    %5249 = vmatprep.subr.mxu0 %v3488
    %5250 = vmatpush1.msra.mxu0 %v3487
    %5251 = vmatprep.subr.mxu0 %v3520
    %5252 = vmatpush1.msra.mxu0 %v3519
    %5253 = vmatprep.subr.mxu0 %v3552
    %5254 = vmatpush1.msra.mxu0 %v3551
    %5255 = vmatprep.subr.mxu0 %v3584
    %5256 = vmatpush1.msra.mxu0 %v3583
    %5257 = vmatprep.subr.mxu0 %v3616
    %5258 = vmatpush1.msra.mxu0 %v3615
    %5259 = vmatprep.subr.mxu0 %v3648
    %5260 = vmatpush1.msra.mxu0 %v3647
    %5261 = vmatprep.subr.mxu0 %v3680
    %5262 = vmatpush1.msra.mxu0 %v3679
    %5263 = vmatprep.subr.mxu0 %v3712
    %5264 = vmatpush1.msra.mxu0 %v3711
    %5265 = vmatprep.subr.mxu0 %v3744
    %5266 = vmatpush1.msra.mxu0 %v3743
    %5267 = vmatprep.subr.mxu0 %v3776
    %5268 = vmatpush1.msra.mxu0 %v3775
    %5269 = vmatprep.subr.mxu0 %v3808
    %5270 = vmatpush1.msra.mxu0 %v3807
    %5271 = vmatprep.subr.mxu0 %v3840
    %5272 = vmatpush1.msra.mxu0 %v3839
    %5273 = vmatprep.subr.mxu0 %v3872
    %5274 = vmatpush1.msra.mxu0 %v3871
    %5275 = vmatprep.subr.mxu0 %v3904
    %5276 = vmatpush1.msra.mxu0 %v3903
    %5277 = vmatprep.subr.mxu0 %v3936
    %5278 = vmatpush1.msra.mxu0 %v3935
    %5279 = vmatprep.subr.mxu0 %v3968
    %5280 = vmatpush1.msra.mxu0 %v3967
    %5281 = vmatprep.subr.mxu0 %v4000
    %5282 = vmatpush1.msra.mxu0 %v3999
    %5283 = vmatprep.subr.mxu0 %v4032
    %5284 = vmatpush1.msra.mxu0 %v4031
    %5285 = vmatprep.subr.mxu0 %v4064
    %5286 = vmatpush1.msra.mxu0 %v4063
    %5287 = vmatprep.subr.mxu0 %v4096
    %5288 = vmatpush1.msra.mxu0 %v4095
    %5289 = vmatprep.subr.mxu0 %v4128
    %5290 = vmatpush1.msra.mxu0 %v4127
    %5291 = vmatprep.subr.mxu0 %v4160
    %5292 = vmatpush1.msra.mxu0 %v4159
    %5293 = vmatprep.subr.mxu0 %v4192
    %5294 = vmatpush1.msra.mxu0 %v4191
    %5295 = vmatprep.subr.mxu0 %v4224
    %5296 = vmatpush1.msra.mxu0 %v4223
    %5297 = vmatprep.subr.mxu0 %v4256
    %5298 = vmatpush1.msra.mxu0 %v4255
    %5299 = vmatprep.subr.mxu0 %v4288
    %5300 = vmatpush1.msra.mxu0 %v4287
    %5301 = vmatprep.subr.mxu0 %v4320
    %5302 = vmatpush1.msra.mxu0 %v4319
    %5303 = vmatprep.subr.mxu0 %v4352
    %5304 = vmatpush1.msra.mxu0 %v4351
    %5305 = vmatprep.mubr.f32.mxu0 %v3334
    %5306 = vmatmul.mubr.f32.gmra.mrb[0].mxu0 %v3333
    %v5307 = vpop.f32.mrb[0].mxu0
    %v5308 = vadd.f32 %v4454, %v5307
    %v5309 = vpop.f32.mrb[0].mxu0
    %v5310 = vadd.f32 %v4458, %v5309
    %5311 = vdwg.mxu0
    %5312 = vmatprep.subr.mxu0 %v3362
    %5313 = vmatpush1.msra.mxu0 %v3361
    %5314 = vmatprep.subr.mxu0 %v3394
    %5315 = vmatpush1.msra.mxu0 %v3393
    %5316 = vmatprep.subr.mxu0 %v3426
    %5317 = vmatpush1.msra.mxu0 %v3425
    %5318 = vmatprep.subr.mxu0 %v3458
    %5319 = vmatpush1.msra.mxu0 %v3457
    %5320 = vmatprep.subr.mxu0 %v3490
    %5321 = vmatpush1.msra.mxu0 %v3489
    %5322 = vmatprep.subr.mxu0 %v3522
    %5323 = vmatpush1.msra.mxu0 %v3521
    %5324 = vmatprep.subr.mxu0 %v3554
    %5325 = vmatpush1.msra.mxu0 %v3553
    %5326 = vmatprep.subr.mxu0 %v3586
    %5327 = vmatpush1.msra.mxu0 %v3585
    %5328 = vmatprep.subr.mxu0 %v3618
    %5329 = vmatpush1.msra.mxu0 %v3617
    %5330 = vmatprep.subr.mxu0 %v3650
    %5331 = vmatpush1.msra.mxu0 %v3649
    %5332 = vmatprep.subr.mxu0 %v3682
    %5333 = vmatpush1.msra.mxu0 %v3681
    %5334 = vmatprep.subr.mxu0 %v3714
    %5335 = vmatpush1.msra.mxu0 %v3713
    %5336 = vmatprep.subr.mxu0 %v3746
    %5337 = vmatpush1.msra.mxu0 %v3745
    %5338 = vmatprep.subr.mxu0 %v3778
    %5339 = vmatpush1.msra.mxu0 %v3777
    %5340 = vmatprep.subr.mxu0 %v3810
    %5341 = vmatpush1.msra.mxu0 %v3809
    %5342 = vmatprep.subr.mxu0 %v3842
    %5343 = vmatpush1.msra.mxu0 %v3841
    %5344 = vmatprep.subr.mxu0 %v3874
    %5345 = vmatpush1.msra.mxu0 %v3873
    %5346 = vmatprep.subr.mxu0 %v3906
    %5347 = vmatpush1.msra.mxu0 %v3905
    %5348 = vmatprep.subr.mxu0 %v3938
    %5349 = vmatpush1.msra.mxu0 %v3937
    %5350 = vmatprep.subr.mxu0 %v3970
    %5351 = vmatpush1.msra.mxu0 %v3969
    %5352 = vmatprep.subr.mxu0 %v4002
    %5353 = vmatpush1.msra.mxu0 %v4001
    %5354 = vmatprep.subr.mxu0 %v4034
    %5355 = vmatpush1.msra.mxu0 %v4033
    %5356 = vmatprep.subr.mxu0 %v4066
    %5357 = vmatpush1.msra.mxu0 %v4065
    %5358 = vmatprep.subr.mxu0 %v4098
    %5359 = vmatpush1.msra.mxu0 %v4097
    %5360 = vmatprep.subr.mxu0 %v4130
    %5361 = vmatpush1.msra.mxu0 %v4129
    %5362 = vmatprep.subr.mxu0 %v4162
    %5363 = vmatpush1.msra.mxu0 %v4161
    %5364 = vmatprep.subr.mxu0 %v4194
    %5365 = vmatpush1.msra.mxu0 %v4193
    %5366 = vmatprep.subr.mxu0 %v4226
    %5367 = vmatpush1.msra.mxu0 %v4225
    %5368 = vmatprep.subr.mxu0 %v4258
    %5369 = vmatpush1.msra.mxu0 %v4257
    %5370 = vmatprep.subr.mxu0 %v4290
    %5371 = vmatpush1.msra.mxu0 %v4289
    %5372 = vmatprep.subr.mxu0 %v4322
    %5373 = vmatpush1.msra.mxu0 %v4321
    %5374 = vmatprep.subr.mxu0 %v4354
    %5375 = vmatpush1.msra.mxu0 %v4353
    %5376 = vmatprep.mubr.f32.mxu0 %v3334
    %5377 = vmatmul.mubr.f32.gmra.mrb[0].mxu0 %v3333
    %v5378 = vpop.f32.mrb[0].mxu0
    %v5379 = vadd.f32 %v4462, %v5378
    %v5380 = vpop.f32.mrb[0].mxu0
    %v5381 = vadd.f32 %v4466, %v5380
    %5382 = vdwg.mxu0
    %5383 = vmatprep.subr.mxu0 %v3364
    %5384 = vmatpush1.msra.mxu0 %v3363
    %5385 = vmatprep.subr.mxu0 %v3396
    %5386 = vmatpush1.msra.mxu0 %v3395
    %5387 = vmatprep.subr.mxu0 %v3428
    %5388 = vmatpush1.msra.mxu0 %v3427
    %5389 = vmatprep.subr.mxu0 %v3460
    %5390 = vmatpush1.msra.mxu0 %v3459
    %5391 = vmatprep.subr.mxu0 %v3492
    %5392 = vmatpush1.msra.mxu0 %v3491
    %5393 = vmatprep.subr.mxu0 %v3524
    %5394 = vmatpush1.msra.mxu0 %v3523
    %5395 = vmatprep.subr.mxu0 %v3556
    %5396 = vmatpush1.msra.mxu0 %v3555
    %5397 = vmatprep.subr.mxu0 %v3588
    %5398 = vmatpush1.msra.mxu0 %v3587
    %5399 = vmatprep.subr.mxu0 %v3620
    %5400 = vmatpush1.msra.mxu0 %v3619
    %5401 = vmatprep.subr.mxu0 %v3652
    %5402 = vmatpush1.msra.mxu0 %v3651
    %5403 = vmatprep.subr.mxu0 %v3684
    %5404 = vmatpush1.msra.mxu0 %v3683
    %5405 = vmatprep.subr.mxu0 %v3716
    %5406 = vmatpush1.msra.mxu0 %v3715
    %5407 = vmatprep.subr.mxu0 %v3748
    %5408 = vmatpush1.msra.mxu0 %v3747
    %5409 = vmatprep.subr.mxu0 %v3780
    %5410 = vmatpush1.msra.mxu0 %v3779
    %5411 = vmatprep.subr.mxu0 %v3812
    %5412 = vmatpush1.msra.mxu0 %v3811
    %5413 = vmatprep.subr.mxu0 %v3844
    %5414 = vmatpush1.msra.mxu0 %v3843
    %5415 = vmatprep.subr.mxu0 %v3876
    %5416 = vmatpush1.msra.mxu0 %v3875
    %5417 = vmatprep.subr.mxu0 %v3908
    %5418 = vmatpush1.msra.mxu0 %v3907
    %5419 = vmatprep.subr.mxu0 %v3940
    %5420 = vmatpush1.msra.mxu0 %v3939
    %5421 = vmatprep.subr.mxu0 %v3972
    %5422 = vmatpush1.msra.mxu0 %v3971
    %5423 = vmatprep.subr.mxu0 %v4004
    %5424 = vmatpush1.msra.mxu0 %v4003
    %5425 = vmatprep.subr.mxu0 %v4036
    %5426 = vmatpush1.msra.mxu0 %v4035
    %5427 = vmatprep.subr.mxu0 %v4068
    %5428 = vmatpush1.msra.mxu0 %v4067
    %5429 = vmatprep.subr.mxu0 %v4100
    %5430 = vmatpush1.msra.mxu0 %v4099
    %5431 = vmatprep.subr.mxu0 %v4132
    %5432 = vmatpush1.msra.mxu0 %v4131
    %5433 = vmatprep.subr.mxu0 %v4164
    %5434 = vmatpush1.msra.mxu0 %v4163
    %5435 = vmatprep.subr.mxu0 %v4196
    %5436 = vmatpush1.msra.mxu0 %v4195
    %5437 = vmatprep.subr.mxu0 %v4228
    %5438 = vmatpush1.msra.mxu0 %v4227
    %5439 = vmatprep.subr.mxu0 %v4260
    %5440 = vmatpush1.msra.mxu0 %v4259
    %5441 = vmatprep.subr.mxu0 %v4292
    %5442 = vmatpush1.msra.mxu0 %v4291
    %5443 = vmatprep.subr.mxu0 %v4324
    %5444 = vmatpush1.msra.mxu0 %v4323
    %5445 = vmatprep.subr.mxu0 %v4356
    %5446 = vmatpush1.msra.mxu0 %v4355
    %5447 = vmatprep.mubr.f32.mxu0 %v3334
    %5448 = vmatmul.mubr.f32.gmra.mrb[0].mxu0 %v3333
    %v5449 = vpop.f32.mrb[0].mxu0
    %v5450 = vadd.f32 %v4470, %v5449
    %v5451 = vpop.f32.mrb[0].mxu0
    %v5452 = vadd.f32 %v4474, %v5451
    %5453 = vdwg.mxu0
    %5454 = vmatprep.subr.mxu0 %v3366
    %5455 = vmatpush1.msra.mxu0 %v3365
    %5456 = vmatprep.subr.mxu0 %v3398
    %5457 = vmatpush1.msra.mxu0 %v3397
    %5458 = vmatprep.subr.mxu0 %v3430
    %5459 = vmatpush1.msra.mxu0 %v3429
    %5460 = vmatprep.subr.mxu0 %v3462
    %5461 = vmatpush1.msra.mxu0 %v3461
    %5462 = vmatprep.subr.mxu0 %v3494
    %5463 = vmatpush1.msra.mxu0 %v3493
    %5464 = vmatprep.subr.mxu0 %v3526
    %5465 = vmatpush1.msra.mxu0 %v3525
    %5466 = vmatprep.subr.mxu0 %v3558
    %5467 = vmatpush1.msra.mxu0 %v3557
    %5468 = vmatprep.subr.mxu0 %v3590
    %5469 = vmatpush1.msra.mxu0 %v3589
    %5470 = vmatprep.subr.mxu0 %v3622
    %5471 = vmatpush1.msra.mxu0 %v3621
    %5472 = vmatprep.subr.mxu0 %v3654
    %5473 = vmatpush1.msra.mxu0 %v3653
    %5474 = vmatprep.subr.mxu0 %v3686
    %5475 = vmatpush1.msra.mxu0 %v3685
    %5476 = vmatprep.subr.mxu0 %v3718
    %5477 = vmatpush1.msra.mxu0 %v3717
    %5478 = vmatprep.subr.mxu0 %v3750
    %5479 = vmatpush1.msra.mxu0 %v3749
    %5480 = vmatprep.subr.mxu0 %v3782
    %5481 = vmatpush1.msra.mxu0 %v3781
    %5482 = vmatprep.subr.mxu0 %v3814
    %5483 = vmatpush1.msra.mxu0 %v3813
    %5484 = vmatprep.subr.mxu0 %v3846
    %5485 = vmatpush1.msra.mxu0 %v3845
    %5486 = vmatprep.subr.mxu0 %v3878
    %5487 = vmatpush1.msra.mxu0 %v3877
    %5488 = vmatprep.subr.mxu0 %v3910
    %5489 = vmatpush1.msra.mxu0 %v3909
    %5490 = vmatprep.subr.mxu0 %v3942
    %5491 = vmatpush1.msra.mxu0 %v3941
    %5492 = vmatprep.subr.mxu0 %v3974
    %5493 = vmatpush1.msra.mxu0 %v3973
    %5494 = vmatprep.subr.mxu0 %v4006
    %5495 = vmatpush1.msra.mxu0 %v4005
    %5496 = vmatprep.subr.mxu0 %v4038
    %5497 = vmatpush1.msra.mxu0 %v4037
    %5498 = vmatprep.subr.mxu0 %v4070
    %5499 = vmatpush1.msra.mxu0 %v4069
    %5500 = vmatprep.subr.mxu0 %v4102
    %5501 = vmatpush1.msra.mxu0 %v4101
    %5502 = vmatprep.subr.mxu0 %v4134
    %5503 = vmatpush1.msra.mxu0 %v4133
    %5504 = vmatprep.subr.mxu0 %v4166
    %5505 = vmatpush1.msra.mxu0 %v4165
    %5506 = vmatprep.subr.mxu0 %v4198
    %5507 = vmatpush1.msra.mxu0 %v4197
    %5508 = vmatprep.subr.mxu0 %v4230
    %5509 = vmatpush1.msra.mxu0 %v4229
    %5510 = vmatprep.subr.mxu0 %v4262
    %5511 = vmatpush1.msra.mxu0 %v4261
    %5512 = vmatprep.subr.mxu0 %v4294
    %5513 = vmatpush1.msra.mxu0 %v4293
    %5514 = vmatprep.subr.mxu0 %v4326
    %5515 = vmatpush1.msra.mxu0 %v4325
    %5516 = vmatprep.subr.mxu0 %v4358
    %5517 = vmatpush1.msra.mxu0 %v4357
    %5518 = vmatprep.mubr.f32.mxu0 %v3334
    %5519 = vmatmul.mubr.f32.gmra.mrb[0].mxu0 %v3333
    %v5520 = vpop.f32.mrb[0].mxu0
    %v5521 = vadd.f32 %v4478, %v5520
    %v5522 = vpop.f32.mrb[0].mxu0
    %v5523 = vadd.f32 %v4482, %v5522
    %5524 = vdwg.mxu0
    %5525 = vmatprep.subr.mxu0 %v3368
    %5526 = vmatpush1.msra.mxu0 %v3367
    %5527 = vmatprep.subr.mxu0 %v3400
    %5528 = vmatpush1.msra.mxu0 %v3399
    %5529 = vmatprep.subr.mxu0 %v3432
    %5530 = vmatpush1.msra.mxu0 %v3431
    %5531 = vmatprep.subr.mxu0 %v3464
    %5532 = vmatpush1.msra.mxu0 %v3463
    %5533 = vmatprep.subr.mxu0 %v3496
    %5534 = vmatpush1.msra.mxu0 %v3495
    %5535 = vmatprep.subr.mxu0 %v3528
    %5536 = vmatpush1.msra.mxu0 %v3527
    %5537 = vmatprep.subr.mxu0 %v3560
    %5538 = vmatpush1.msra.mxu0 %v3559
    %5539 = vmatprep.subr.mxu0 %v3592
    %5540 = vmatpush1.msra.mxu0 %v3591
    %5541 = vmatprep.subr.mxu0 %v3624
    %5542 = vmatpush1.msra.mxu0 %v3623
    %5543 = vmatprep.subr.mxu0 %v3656
    %5544 = vmatpush1.msra.mxu0 %v3655
    %5545 = vmatprep.subr.mxu0 %v3688
    %5546 = vmatpush1.msra.mxu0 %v3687
    %5547 = vmatprep.subr.mxu0 %v3720
    %5548 = vmatpush1.msra.mxu0 %v3719
    %5549 = vmatprep.subr.mxu0 %v3752
    %5550 = vmatpush1.msra.mxu0 %v3751
    %5551 = vmatprep.subr.mxu0 %v3784
    %5552 = vmatpush1.msra.mxu0 %v3783
    %5553 = vmatprep.subr.mxu0 %v3816
    %5554 = vmatpush1.msra.mxu0 %v3815
    %5555 = vmatprep.subr.mxu0 %v3848
    %5556 = vmatpush1.msra.mxu0 %v3847
    %5557 = vmatprep.subr.mxu0 %v3880
    %5558 = vmatpush1.msra.mxu0 %v3879
    %5559 = vmatprep.subr.mxu0 %v3912
    %5560 = vmatpush1.msra.mxu0 %v3911
    %5561 = vmatprep.subr.mxu0 %v3944
    %5562 = vmatpush1.msra.mxu0 %v3943
    %5563 = vmatprep.subr.mxu0 %v3976
    %5564 = vmatpush1.msra.mxu0 %v3975
    %5565 = vmatprep.subr.mxu0 %v4008
    %5566 = vmatpush1.msra.mxu0 %v4007
    %5567 = vmatprep.subr.mxu0 %v4040
    %5568 = vmatpush1.msra.mxu0 %v4039
    %5569 = vmatprep.subr.mxu0 %v4072
    %5570 = vmatpush1.msra.mxu0 %v4071
    %5571 = vmatprep.subr.mxu0 %v4104
    %5572 = vmatpush1.msra.mxu0 %v4103
    %5573 = vmatprep.subr.mxu0 %v4136
    %5574 = vmatpush1.msra.mxu0 %v4135
    %5575 = vmatprep.subr.mxu0 %v4168
    %5576 = vmatpush1.msra.mxu0 %v4167
    %5577 = vmatprep.subr.mxu0 %v4200
    %5578 = vmatpush1.msra.mxu0 %v4199
    %5579 = vmatprep.subr.mxu0 %v4232
    %5580 = vmatpush1.msra.mxu0 %v4231
    %5581 = vmatprep.subr.mxu0 %v4264
    %5582 = vmatpush1.msra.mxu0 %v4263
    %5583 = vmatprep.subr.mxu0 %v4296
    %5584 = vmatpush1.msra.mxu0 %v4295
    %5585 = vmatprep.subr.mxu0 %v4328
    %5586 = vmatpush1.msra.mxu0 %v4327
    %5587 = vmatprep.subr.mxu0 %v4360
    %5588 = vmatpush1.msra.mxu0 %v4359
    %5589 = vmatprep.mubr.f32.mxu0 %v3334
    %5590 = vmatmul.mubr.f32.gmra.mrb[0].mxu0 %v3333
    %v5591 = vpop.f32.mrb[0].mxu0
    %v5592 = vadd.f32 %v4486, %v5591
    %v5593 = vpop.f32.mrb[0].mxu0
    %v5594 = vadd.f32 %v4490, %v5593
    %5595 = vdwg.mxu0
    %5596 = vmatprep.subr.mxu0 %v3370
    %5597 = vmatpush1.msra.mxu0 %v3369
    %5598 = vmatprep.subr.mxu0 %v3402
    %5599 = vmatpush1.msra.mxu0 %v3401
    %5600 = vmatprep.subr.mxu0 %v3434
    %5601 = vmatpush1.msra.mxu0 %v3433
    %5602 = vmatprep.subr.mxu0 %v3466
    %5603 = vmatpush1.msra.mxu0 %v3465
    %5604 = vmatprep.subr.mxu0 %v3498
    %5605 = vmatpush1.msra.mxu0 %v3497
    %5606 = vmatprep.subr.mxu0 %v3530
    %5607 = vmatpush1.msra.mxu0 %v3529
    %5608 = vmatprep.subr.mxu0 %v3562
    %5609 = vmatpush1.msra.mxu0 %v3561
    %5610 = vmatprep.subr.mxu0 %v3594
    %5611 = vmatpush1.msra.mxu0 %v3593
    %5612 = vmatprep.subr.mxu0 %v3626
    %5613 = vmatpush1.msra.mxu0 %v3625
    %5614 = vmatprep.subr.mxu0 %v3658
    %5615 = vmatpush1.msra.mxu0 %v3657
    %5616 = vmatprep.subr.mxu0 %v3690
    %5617 = vmatpush1.msra.mxu0 %v3689
    %5618 = vmatprep.subr.mxu0 %v3722
    %5619 = vmatpush1.msra.mxu0 %v3721
    %5620 = vmatprep.subr.mxu0 %v3754
    %5621 = vmatpush1.msra.mxu0 %v3753
    %5622 = vmatprep.subr.mxu0 %v3786
    %5623 = vmatpush1.msra.mxu0 %v3785
    %5624 = vmatprep.subr.mxu0 %v3818
    %5625 = vmatpush1.msra.mxu0 %v3817
    %5626 = vmatprep.subr.mxu0 %v3850
    %5627 = vmatpush1.msra.mxu0 %v3849
    %5628 = vmatprep.subr.mxu0 %v3882
    %5629 = vmatpush1.msra.mxu0 %v3881
    %5630 = vmatprep.subr.mxu0 %v3914
    %5631 = vmatpush1.msra.mxu0 %v3913
    %5632 = vmatprep.subr.mxu0 %v3946
    %5633 = vmatpush1.msra.mxu0 %v3945
    %5634 = vmatprep.subr.mxu0 %v3978
    %5635 = vmatpush1.msra.mxu0 %v3977
    %5636 = vmatprep.subr.mxu0 %v4010
    %5637 = vmatpush1.msra.mxu0 %v4009
    %5638 = vmatprep.subr.mxu0 %v4042
    %5639 = vmatpush1.msra.mxu0 %v4041
    %5640 = vmatprep.subr.mxu0 %v4074
    %5641 = vmatpush1.msra.mxu0 %v4073
    %5642 = vmatprep.subr.mxu0 %v4106
    %5643 = vmatpush1.msra.mxu0 %v4105
    %5644 = vmatprep.subr.mxu0 %v4138
    %5645 = vmatpush1.msra.mxu0 %v4137
    %5646 = vmatprep.subr.mxu0 %v4170
    %5647 = vmatpush1.msra.mxu0 %v4169
    %5648 = vmatprep.subr.mxu0 %v4202
    %5649 = vmatpush1.msra.mxu0 %v4201
    %5650 = vmatprep.subr.mxu0 %v4234
    %5651 = vmatpush1.msra.mxu0 %v4233
    %5652 = vmatprep.subr.mxu0 %v4266
    %5653 = vmatpush1.msra.mxu0 %v4265
    %5654 = vmatprep.subr.mxu0 %v4298
    %5655 = vmatpush1.msra.mxu0 %v4297
    %5656 = vmatprep.subr.mxu0 %v4330
    %5657 = vmatpush1.msra.mxu0 %v4329
    %5658 = vmatprep.subr.mxu0 %v4362
    %5659 = vmatpush1.msra.mxu0 %v4361
    %5660 = vmatprep.mubr.f32.mxu0 %v3334
    %5661 = vmatmul.mubr.f32.gmra.mrb[0].mxu0 %v3333
    %v5662 = vpop.f32.mrb[0].mxu0
    %v5663 = vadd.f32 %v4494, %v5662
    %v5664 = vpop.f32.mrb[0].mxu0
    %v5665 = vadd.f32 %v4498, %v5664
    %5666 = vdwg.mxu0
    %vm5667 = vcmask 516096
    %5668 = vst.msk [vmem:[#allocation38] sm:$0x1] %vm5667, %v4598
    %5670 = vrot.lane.b32.xlu0 %v4598, 64
    %v5671 = vpop.permute.xlu0 %5670
    %5673 = vst.msk [vmem:[#allocation38 + $0x1] sm:$0x1] %vm5667, %v5671
    %5674 = vst.msk [vmem:[#allocation38 + $0x2] sm:$0x1] %vm5667, %v4600
    %5676 = vrot.lane.b32.xlu0 %v4600, 64
    %v5677 = vpop.permute.xlu0 %5676
    %5679 = vst.msk [vmem:[#allocation38 + $0x3] sm:$0x1] %vm5667, %v5677
    %5680 = vst.msk [vmem:[#allocation38 + $0x4] sm:$0x1] %vm5667, %v4669
    %5682 = vrot.lane.b32.xlu0 %v4669, 64
    %v5683 = vpop.permute.xlu0 %5682
    %5685 = vst.msk [vmem:[#allocation38 + $0x5] sm:$0x1] %vm5667, %v5683
    %5686 = vst.msk [vmem:[#allocation38 + $0x6] sm:$0x1] %vm5667, %v4671
    %5688 = vrot.lane.b32.xlu0 %v4671, 64
    %v5689 = vpop.permute.xlu0 %5688
    %5691 = vst.msk [vmem:[#allocation38 + $0x7] sm:$0x1] %vm5667, %v5689
    %5692 = vst.msk [vmem:[#allocation38 + $0x8] sm:$0x1] %vm5667, %v4740
    %5694 = vrot.lane.b32.xlu0 %v4740, 64
    %v5695 = vpop.permute.xlu0 %5694
    %5697 = vst.msk [vmem:[#allocation38 + $0x9] sm:$0x1] %vm5667, %v5695
    %5698 = vst.msk [vmem:[#allocation38 + $0xa] sm:$0x1] %vm5667, %v4742
    %5700 = vrot.lane.b32.xlu0 %v4742, 64
    %v5701 = vpop.permute.xlu0 %5700
    %5703 = vst.msk [vmem:[#allocation38 + $0xb] sm:$0x1] %vm5667, %v5701
    %5704 = vst.msk [vmem:[#allocation38 + $0xc] sm:$0x1] %vm5667, %v4811
    %5706 = vrot.lane.b32.xlu0 %v4811, 64
    %v5707 = vpop.permute.xlu0 %5706
    %5709 = vst.msk [vmem:[#allocation38 + $0xd] sm:$0x1] %vm5667, %v5707
    %5710 = vst.msk [vmem:[#allocation38 + $0xe] sm:$0x1] %vm5667, %v4813
    %5712 = vrot.lane.b32.xlu0 %v4813, 64
    %v5713 = vpop.permute.xlu0 %5712
    %5715 = vst.msk [vmem:[#allocation38 + $0xf] sm:$0x1] %vm5667, %v5713
    %5716 = vst.msk [vmem:[#allocation38 + $0x10] sm:$0x1] %vm5667, %v4882
    %5718 = vrot.lane.b32.xlu0 %v4882, 64
    %v5719 = vpop.permute.xlu0 %5718
    %5721 = vst.msk [vmem:[#allocation38 + $0x11] sm:$0x1] %vm5667, %v5719
    %5722 = vst.msk [vmem:[#allocation38 + $0x12] sm:$0x1] %vm5667, %v4884
    %5724 = vrot.lane.b32.xlu0 %v4884, 64
    %v5725 = vpop.permute.xlu0 %5724
    %5727 = vst.msk [vmem:[#allocation38 + $0x13] sm:$0x1] %vm5667, %v5725
    %5728 = vst.msk [vmem:[#allocation38 + $0x14] sm:$0x1] %vm5667, %v4953
    %5730 = vrot.lane.b32.xlu0 %v4953, 64
    %v5731 = vpop.permute.xlu0 %5730
    %5733 = vst.msk [vmem:[#allocation38 + $0x15] sm:$0x1] %vm5667, %v5731
    %5734 = vst.msk [vmem:[#allocation38 + $0x16] sm:$0x1] %vm5667, %v4955
    %5736 = vrot.lane.b32.xlu0 %v4955, 64
    %v5737 = vpop.permute.xlu0 %5736
    %5739 = vst.msk [vmem:[#allocation38 + $0x17] sm:$0x1] %vm5667, %v5737
    %5740 = vst.msk [vmem:[#allocation38 + $0x18] sm:$0x1] %vm5667, %v5024
    %5742 = vrot.lane.b32.xlu0 %v5024, 64
    %v5743 = vpop.permute.xlu0 %5742
    %5745 = vst.msk [vmem:[#allocation38 + $0x19] sm:$0x1] %vm5667, %v5743
    %5746 = vst.msk [vmem:[#allocation38 + $0x1a] sm:$0x1] %vm5667, %v5026
    %5748 = vrot.lane.b32.xlu0 %v5026, 64
    %v5749 = vpop.permute.xlu0 %5748
    %5751 = vst.msk [vmem:[#allocation38 + $0x1b] sm:$0x1] %vm5667, %v5749
    %5752 = vst.msk [vmem:[#allocation38 + $0x1c] sm:$0x1] %vm5667, %v5095
    %5754 = vrot.lane.b32.xlu0 %v5095, 64
    %v5755 = vpop.permute.xlu0 %5754
    %5757 = vst.msk [vmem:[#allocation38 + $0x1d] sm:$0x1] %vm5667, %v5755
    %5758 = vst.msk [vmem:[#allocation38 + $0x1e] sm:$0x1] %vm5667, %v5097
    %5760 = vrot.lane.b32.xlu0 %v5097, 64
    %v5761 = vpop.permute.xlu0 %5760
    %5763 = vst.msk [vmem:[#allocation38 + $0x1f] sm:$0x1] %vm5667, %v5761
    %5764 = vst.msk [vmem:[#allocation38 + $0x20] sm:$0x1] %vm5667, %v5166
    %5766 = vrot.lane.b32.xlu0 %v5166, 64
    %v5767 = vpop.permute.xlu0 %5766
    %5769 = vst.msk [vmem:[#allocation38 + $0x21] sm:$0x1] %vm5667, %v5767
    %5770 = vst.msk [vmem:[#allocation38 + $0x22] sm:$0x1] %vm5667, %v5168
    %5772 = vrot.lane.b32.xlu0 %v5168, 64
    %v5773 = vpop.permute.xlu0 %5772
    %5775 = vst.msk [vmem:[#allocation38 + $0x23] sm:$0x1] %vm5667, %v5773
    %5776 = vst.msk [vmem:[#allocation38 + $0x24] sm:$0x1] %vm5667, %v5237
    %5778 = vrot.lane.b32.xlu0 %v5237, 64
    %v5779 = vpop.permute.xlu0 %5778
    %5781 = vst.msk [vmem:[#allocation38 + $0x25] sm:$0x1] %vm5667, %v5779
    %5782 = vst.msk [vmem:[#allocation38 + $0x26] sm:$0x1] %vm5667, %v5239
    %5784 = vrot.lane.b32.xlu0 %v5239, 64
    %v5785 = vpop.permute.xlu0 %5784
    %5787 = vst.msk [vmem:[#allocation38 + $0x27] sm:$0x1] %vm5667, %v5785
    %5788 = vst.msk [vmem:[#allocation38 + $0x28] sm:$0x1] %vm5667, %v5308
    %5790 = vrot.lane.b32.xlu0 %v5308, 64
    %v5791 = vpop.permute.xlu0 %5790
    %5793 = vst.msk [vmem:[#allocation38 + $0x29] sm:$0x1] %vm5667, %v5791
    %5794 = vst.msk [vmem:[#allocation38 + $0x2a] sm:$0x1] %vm5667, %v5310
    %5796 = vrot.lane.b32.xlu0 %v5310, 64
    %v5797 = vpop.permute.xlu0 %5796
    %5799 = vst.msk [vmem:[#allocation38 + $0x2b] sm:$0x1] %vm5667, %v5797
    %5800 = vst.msk [vmem:[#allocation38 + $0x2c] sm:$0x1] %vm5667, %v5379
    %5802 = vrot.lane.b32.xlu0 %v5379, 64
    %v5803 = vpop.permute.xlu0 %5802
    %5805 = vst.msk [vmem:[#allocation38 + $0x2d] sm:$0x1] %vm5667, %v5803
    %5806 = vst.msk [vmem:[#allocation38 + $0x2e] sm:$0x1] %vm5667, %v5381
    %5808 = vrot.lane.b32.xlu0 %v5381, 64
    %v5809 = vpop.permute.xlu0 %5808
    %5811 = vst.msk [vmem:[#allocation38 + $0x2f] sm:$0x1] %vm5667, %v5809
    %5812 = vst.msk [vmem:[#allocation38 + $0x30] sm:$0x1] %vm5667, %v5450
    %5814 = vrot.lane.b32.xlu0 %v5450, 64
    %v5815 = vpop.permute.xlu0 %5814
    %5817 = vst.msk [vmem:[#allocation38 + $0x31] sm:$0x1] %vm5667, %v5815
    %5818 = vst.msk [vmem:[#allocation38 + $0x32] sm:$0x1] %vm5667, %v5452
    %5820 = vrot.lane.b32.xlu0 %v5452, 64
    %v5821 = vpop.permute.xlu0 %5820
    %5823 = vst.msk [vmem:[#allocation38 + $0x33] sm:$0x1] %vm5667, %v5821
    %5824 = vst.msk [vmem:[#allocation38 + $0x34] sm:$0x1] %vm5667, %v5521
    %5826 = vrot.lane.b32.xlu0 %v5521, 64
    %v5827 = vpop.permute.xlu0 %5826
    %5829 = vst.msk [vmem:[#allocation38 + $0x35] sm:$0x1] %vm5667, %v5827
    %5830 = vst.msk [vmem:[#allocation38 + $0x36] sm:$0x1] %vm5667, %v5523
    %5832 = vrot.lane.b32.xlu0 %v5523, 64
    %v5833 = vpop.permute.xlu0 %5832
    %5835 = vst.msk [vmem:[#allocation38 + $0x37] sm:$0x1] %vm5667, %v5833
    %5836 = vst.msk [vmem:[#allocation38 + $0x38] sm:$0x1] %vm5667, %v5592
    %5838 = vrot.lane.b32.xlu0 %v5592, 64
    %v5839 = vpop.permute.xlu0 %5838
    %5841 = vst.msk [vmem:[#allocation38 + $0x39] sm:$0x1] %vm5667, %v5839
    %5842 = vst.msk [vmem:[#allocation38 + $0x3a] sm:$0x1] %vm5667, %v5594
    %5844 = vrot.lane.b32.xlu0 %v5594, 64
    %v5845 = vpop.permute.xlu0 %5844
    %5847 = vst.msk [vmem:[#allocation38 + $0x3b] sm:$0x1] %vm5667, %v5845
    %5848 = vst.msk [vmem:[#allocation38 + $0x3c] sm:$0x1] %vm5667, %v5663
    %5850 = vrot.lane.b32.xlu0 %v5663, 64
    %v5851 = vpop.permute.xlu0 %5850
    %5853 = vst.msk [vmem:[#allocation38 + $0x3d] sm:$0x1] %vm5667, %v5851
    %5854 = vst.msk [vmem:[#allocation38 + $0x3e] sm:$0x1] %vm5667, %v5665
    %5856 = vrot.lane.b32.xlu0 %v5665, 64
    %v5857 = vpop.permute.xlu0 %5856
    %5859 = vst.msk [vmem:[#allocation38 + $0x3f] sm:$0x1] %vm5667, %v5857
    %s5860 = scalar_lea.vmem [#allocation38], 64
    %vm5861 = vcmask 517121
    %5862 = vst.msk [vmem:[%s5860 - $0x1] sm:$0x2] %vm5861, %v4598
    %5863 = vst.msk [vmem:[%s5860] sm:$0x2] %vm5861, %v5671
    %5864 = vst.msk [vmem:[%s5860 + $0x1] sm:$0x2] %vm5861, %v4600
    %5865 = vst.msk [vmem:[%s5860 + $0x2] sm:$0x2] %vm5861, %v5677
    %5866 = vst.msk [vmem:[%s5860 + $0x3] sm:$0x2] %vm5861, %v4669
    %5867 = vst.msk [vmem:[%s5860 + $0x4] sm:$0x2] %vm5861, %v5683
    %5868 = vst.msk [vmem:[%s5860 + $0x5] sm:$0x2] %vm5861, %v4671
    %5869 = vst.msk [vmem:[%s5860 + $0x6] sm:$0x2] %vm5861, %v5689
    %5870 = vst.msk [vmem:[%s5860 + $0x7] sm:$0x2] %vm5861, %v4740
    %5871 = vst.msk [vmem:[%s5860 + $0x8] sm:$0x2] %vm5861, %v5695
    %5872 = vst.msk [vmem:[%s5860 + $0x9] sm:$0x2] %vm5861, %v4742
    %5873 = vst.msk [vmem:[%s5860 + $0xa] sm:$0x2] %vm5861, %v5701
    %5874 = vst.msk [vmem:[%s5860 + $0xb] sm:$0x2] %vm5861, %v4811
    %5875 = vst.msk [vmem:[%s5860 + $0xc] sm:$0x2] %vm5861, %v5707
    %5876 = vst.msk [vmem:[%s5860 + $0xd] sm:$0x2] %vm5861, %v4813
    %5877 = vst.msk [vmem:[%s5860 + $0xe] sm:$0x2] %vm5861, %v5713
    %5878 = vst.msk [vmem:[%s5860 + $0xf] sm:$0x2] %vm5861, %v4882
    %5879 = vst.msk [vmem:[%s5860 + $0x10] sm:$0x2] %vm5861, %v5719
    %5880 = vst.msk [vmem:[%s5860 + $0x11] sm:$0x2] %vm5861, %v4884
    %5881 = vst.msk [vmem:[%s5860 + $0x12] sm:$0x2] %vm5861, %v5725
    %5882 = vst.msk [vmem:[%s5860 + $0x13] sm:$0x2] %vm5861, %v4953
    %5883 = vst.msk [vmem:[%s5860 + $0x14] sm:$0x2] %vm5861, %v5731
    %5884 = vst.msk [vmem:[%s5860 + $0x15] sm:$0x2] %vm5861, %v4955
    %5885 = vst.msk [vmem:[%s5860 + $0x16] sm:$0x2] %vm5861, %v5737
    %5886 = vst.msk [vmem:[%s5860 + $0x17] sm:$0x2] %vm5861, %v5024
    %5887 = vst.msk [vmem:[%s5860 + $0x18] sm:$0x2] %vm5861, %v5743
    %5888 = vst.msk [vmem:[%s5860 + $0x19] sm:$0x2] %vm5861, %v5026
    %5889 = vst.msk [vmem:[%s5860 + $0x1a] sm:$0x2] %vm5861, %v5749
    %5890 = vst.msk [vmem:[%s5860 + $0x1b] sm:$0x2] %vm5861, %v5095
    %5891 = vst.msk [vmem:[%s5860 + $0x1c] sm:$0x2] %vm5861, %v5755
    %5892 = vst.msk [vmem:[%s5860 + $0x1d] sm:$0x2] %vm5861, %v5097
    %5893 = vst.msk [vmem:[%s5860 + $0x1e] sm:$0x2] %vm5861, %v5761
    %5894 = vst.msk [vmem:[%s5860 + $0x1f] sm:$0x2] %vm5861, %v5166
    %5895 = vst.msk [vmem:[%s5860 + $0x20] sm:$0x2] %vm5861, %v5767
    %5896 = vst.msk [vmem:[%s5860 + $0x21] sm:$0x2] %vm5861, %v5168
    %5897 = vst.msk [vmem:[%s5860 + $0x22] sm:$0x2] %vm5861, %v5773
    %5898 = vst.msk [vmem:[%s5860 + $0x23] sm:$0x2] %vm5861, %v5237
    %5899 = vst.msk [vmem:[%s5860 + $0x24] sm:$0x2] %vm5861, %v5779
    %5900 = vst.msk [vmem:[%s5860 + $0x25] sm:$0x2] %vm5861, %v5239
    %5901 = vst.msk [vmem:[%s5860 + $0x26] sm:$0x2] %vm5861, %v5785
    %5902 = vst.msk [vmem:[%s5860 + $0x27] sm:$0x2] %vm5861, %v5308
    %5903 = vst.msk [vmem:[%s5860 + $0x28] sm:$0x2] %vm5861, %v5791
    %5904 = vst.msk [vmem:[%s5860 + $0x29] sm:$0x2] %vm5861, %v5310
    %5905 = vst.msk [vmem:[%s5860 + $0x2a] sm:$0x2] %vm5861, %v5797
    %5906 = vst.msk [vmem:[%s5860 + $0x2b] sm:$0x2] %vm5861, %v5379
    %5907 = vst.msk [vmem:[%s5860 + $0x2c] sm:$0x2] %vm5861, %v5803
    %5908 = vst.msk [vmem:[%s5860 + $0x2d] sm:$0x2] %vm5861, %v5381
    %5909 = vst.msk [vmem:[%s5860 + $0x2e] sm:$0x2] %vm5861, %v5809
    %5910 = vst.msk [vmem:[%s5860 + $0x2f] sm:$0x2] %vm5861, %v5450
    %5911 = vst.msk [vmem:[%s5860 + $0x30] sm:$0x2] %vm5861, %v5815
    %5912 = vst.msk [vmem:[%s5860 + $0x31] sm:$0x2] %vm5861, %v5452
    %5913 = vst.msk [vmem:[%s5860 + $0x32] sm:$0x2] %vm5861, %v5821
    %5914 = vst.msk [vmem:[%s5860 + $0x33] sm:$0x2] %vm5861, %v5521
    %5915 = vst.msk [vmem:[%s5860 + $0x34] sm:$0x2] %vm5861, %v5827
    %5916 = vst.msk [vmem:[%s5860 + $0x35] sm:$0x2] %vm5861, %v5523
    %5917 = vst.msk [vmem:[%s5860 + $0x36] sm:$0x2] %vm5861, %v5833
    %5918 = vst.msk [vmem:[%s5860 + $0x37] sm:$0x2] %vm5861, %v5592
    %5919 = vst.msk [vmem:[%s5860 + $0x38] sm:$0x2] %vm5861, %v5839
    %5920 = vst.msk [vmem:[%s5860 + $0x39] sm:$0x2] %vm5861, %v5594
    %5921 = vst.msk [vmem:[%s5860 + $0x3a] sm:$0x2] %vm5861, %v5845
    %5922 = vst.msk [vmem:[%s5860 + $0x3b] sm:$0x2] %vm5861, %v5663
    %5923 = vst.msk [vmem:[%s5860 + $0x3c] sm:$0x2] %vm5861, %v5851
    %5924 = vst.msk [vmem:[%s5860 + $0x3d] sm:$0x2] %vm5861, %v5665
    %5925 = vst.msk [vmem:[%s5860 + $0x3e] sm:$0x2] %vm5861, %v5857
    %v5926 = vld [vmem:[#allocation32] sm:$0x1]
    %v5927 = vld [vmem:[#allocation34] sm:$0xff]
    %v5928 = vld [vmem:[#allocation34 + $0x8] sm:$0xff]
    %v5929 = vld [vmem:[#allocation34 + $0x10] sm:$0xff]
    %v5930 = vld [vmem:[#allocation34 + $0x18] sm:$0xff]
    %v5931 = vld [vmem:[#allocation34 + $0x20] sm:$0xff]
    %v5932 = vld [vmem:[#allocation34 + $0x28] sm:$0xff]
    %v5933 = vld [vmem:[#allocation34 + $0x30] sm:$0xff]
    %v5934 = vld [vmem:[#allocation34 + $0x38] sm:$0xff]
    %v5935 = vld [vmem:[#allocation35] sm:$0x1]
    %v5936 = vld [vmem:[#allocation38] sm:$0xff]
    %v5937 = vld [vmem:[#allocation38 + $0x8] sm:$0xff]
    %v5938 = vld [vmem:[#allocation38 + $0x10] sm:$0xff]
    %v5939 = vld [vmem:[#allocation38 + $0x18] sm:$0xff]
    %v5940 = vld [vmem:[#allocation38 + $0x20] sm:$0xff]
    %v5941 = vld [vmem:[#allocation38 + $0x28] sm:$0xff]
    %v5942 = vld [vmem:[#allocation38 + $0x30] sm:$0xff]
    %v5943 = vld [vmem:[#allocation38 + $0x38] sm:$0xff]
    %v5944 = vld [vmem:[#allocation31] sm:$0xff]
    %v5945 = vld [vmem:[#allocation31 + $0x8] sm:$0xff]
    %v5946 = vld [vmem:[#allocation31 + $0x10] sm:$0xff]
    %v5947 = vld [vmem:[#allocation31 + $0x18] sm:$0xff]
    %v5948 = vld [vmem:[#allocation31 + $0x20] sm:$0xff]
    %v5949 = vld [vmem:[#allocation31 + $0x28] sm:$0xff]
    %v5950 = vld [vmem:[#allocation31 + $0x30] sm:$0xff]
    %v5951 = vld [vmem:[#allocation31 + $0x38] sm:$0xff]
    %v5953 = vsel %vm755, %v5936, 0
    %v5956 = vsel %vm755, %v5937, 0
    %v5959 = vsel %vm755, %v5938, 0
    %v5962 = vsel %vm755, %v5939, 0
    %v5965 = vsel %vm755, %v5940, 0
    %v5968 = vsel %vm755, %v5941, 0
    %v5971 = vsel %vm755, %v5942, 0
    %v5974 = vsel %vm755, %v5943, 0
    %5976 = vmatprep.subr.mxu0 0.0
    %5977 = vmatpush1.msra.mxu0 %v5944
    %5978 = vmatprep.subr.mxu0 0.0
    %5979 = vmatpush1.msra.mxu0 %v5945
    %5980 = vmatprep.subr.mxu0 0.0
    %5981 = vmatpush1.msra.mxu0 %v5946
    %5982 = vmatprep.subr.mxu0 0.0
    %5983 = vmatpush1.msra.mxu0 %v5947
    %5984 = vmatprep.subr.mxu0 0.0
    %5985 = vmatpush1.msra.mxu0 %v5948
    %5986 = vmatprep.subr.mxu0 0.0
    %5987 = vmatpush1.msra.mxu0 %v5949
    %5988 = vmatprep.subr.mxu0 0.0
    %5989 = vmatpush1.msra.mxu0 %v5950
    %5990 = vmatprep.subr.mxu0 0.0
    %5991 = vmatpush1.msra.mxu0 %v5951
    %5992 = vmatprep.subr.mxu0 0.0
    %5993 = vmatpush1.msra.mxu0 0.0
    %5994 = vmatprep.subr.mxu0 0.0
    %5995 = vmatpush1.msra.mxu0 0.0
    %5996 = vmatprep.subr.mxu0 0.0
    %5997 = vmatpush1.msra.mxu0 0.0
    %5998 = vmatprep.subr.mxu0 0.0
    %5999 = vmatpush1.msra.mxu0 0.0
    %6000 = vmatprep.subr.mxu0 0.0
    %6001 = vmatpush1.msra.mxu0 0.0
    %6002 = vmatprep.subr.mxu0 0.0
    %6003 = vmatpush1.msra.mxu0 0.0
    %6004 = vmatprep.subr.mxu0 0.0
    %6005 = vmatpush1.msra.mxu0 0.0
    %6006 = vmatprep.subr.mxu0 0.0
    %6007 = vmatpush1.msra.mxu0 0.0
    %6008 = vmatprep.subr.mxu0 0.0
    %6009 = vmatpush1.msra.mxu0 0.0
    %6010 = vmatprep.subr.mxu0 0.0
    %6011 = vmatpush1.msra.mxu0 0.0
    %6012 = vmatprep.subr.mxu0 0.0
    %6013 = vmatpush1.msra.mxu0 0.0
    %6014 = vmatprep.subr.mxu0 0.0
    %6015 = vmatpush1.msra.mxu0 0.0
    %6016 = vmatprep.subr.mxu0 0.0
    %6017 = vmatpush1.msra.mxu0 0.0
    %6018 = vmatprep.subr.mxu0 0.0
    %6019 = vmatpush1.msra.mxu0 0.0
    %6020 = vmatprep.subr.mxu0 0.0
    %6021 = vmatpush1.msra.mxu0 0.0
    %6022 = vmatprep.subr.mxu0 0.0
    %6023 = vmatpush1.msra.mxu0 0.0
    %6024 = vmatprep.subr.mxu0 0.0
    %6025 = vmatpush1.msra.mxu0 0.0
    %6026 = vmatprep.subr.mxu0 0.0
    %6027 = vmatpush1.msra.mxu0 0.0
    %6028 = vmatprep.subr.mxu0 0.0
    %6029 = vmatpush1.msra.mxu0 0.0
    %6030 = vmatprep.subr.mxu0 0.0
    %6031 = vmatpush1.msra.mxu0 0.0
    %6032 = vmatprep.subr.mxu0 0.0
    %6033 = vmatpush1.msra.mxu0 0.0
    %6034 = vmatprep.subr.mxu0 0.0
    %6035 = vmatpush1.msra.mxu0 0.0
    %6036 = vmatprep.subr.mxu0 0.0
    %6037 = vmatpush1.msra.mxu0 0.0
    %6038 = vmatprep.subr.mxu0 0.0
    %6039 = vmatpush1.msra.mxu0 0.0
    %6040 = vmatprep.mubr.f32.mxu0 0.0
    %6041 = vmatmul.mubr.f32.gmra.mrb[0].mxu0 %v5953
    %v6042 = vpop.f32.mrb[0].mxu0
    %v6043 = vadd.f32 0.0, %v6042
    %v6044 = vpop.f32.mrb[0].mxu0
    %6045 = vmatprep.mubr.f32.mxu0 0.0
    %6046 = vmatmul.mubr.f32.gmra.mrb[0].mxu0 %v5956
    %v6047 = vpop.f32.mrb[0].mxu0
    %v6048 = vadd.f32 0.0, %v6047
    %v6049 = vpop.f32.mrb[0].mxu0
    %6050 = vmatprep.mubr.f32.mxu0 0.0
    %6051 = vmatmul.mubr.f32.gmra.mrb[0].mxu0 %v5959
    %v6052 = vpop.f32.mrb[0].mxu0
    %v6053 = vadd.f32 0.0, %v6052
    %v6054 = vpop.f32.mrb[0].mxu0
    %6055 = vmatprep.mubr.f32.mxu0 0.0
    %6056 = vmatmul.mubr.f32.gmra.mrb[0].mxu0 %v5962
    %v6057 = vpop.f32.mrb[0].mxu0
    %v6058 = vadd.f32 0.0, %v6057
    %v6059 = vpop.f32.mrb[0].mxu0
    %6060 = vmatprep.mubr.f32.mxu0 0.0
    %6061 = vmatmul.mubr.f32.gmra.mrb[0].mxu0 %v5965
    %v6062 = vpop.f32.mrb[0].mxu0
    %v6063 = vadd.f32 0.0, %v6062
    %v6064 = vpop.f32.mrb[0].mxu0
    %6065 = vmatprep.mubr.f32.mxu0 0.0
    %6066 = vmatmul.mubr.f32.gmra.mrb[0].mxu0 %v5968
    %v6067 = vpop.f32.mrb[0].mxu0
    %v6068 = vadd.f32 0.0, %v6067
    %v6069 = vpop.f32.mrb[0].mxu0
    %6070 = vmatprep.mubr.f32.mxu0 0.0
    %6071 = vmatmul.mubr.f32.gmra.mrb[0].mxu0 %v5971
    %v6072 = vpop.f32.mrb[0].mxu0
    %v6073 = vadd.f32 0.0, %v6072
    %v6074 = vpop.f32.mrb[0].mxu0
    %6075 = vmatprep.mubr.f32.mxu0 0.0
    %6076 = vmatmul.mubr.f32.gmra.mrb[0].mxu0 %v5974
    %v6077 = vpop.f32.mrb[0].mxu0
    %v6078 = vadd.f32 0.0, %v6077
    %v6079 = vpop.f32.mrb[0].mxu0
    %6080 = vdwg.mxu0
    %v6082 = vlaneseq
    %v6083 = vshrl.u32 %v6082, 7
    %v6084 = vsub.s32 0, %v6083
    %v6085 = vrot.slane %v5926, %v6084
    %6087 = vmatprep.subr.mxu0 0.0
    %6088 = vmatpush1.msra.mxu0 %v6043
    %6089 = vmatprep.subr.mxu0 0.0
    %6090 = vmatpush1.msra.mxu0 %v6048
    %6091 = vmatprep.subr.mxu0 0.0
    %6092 = vmatpush1.msra.mxu0 %v6053
    %6093 = vmatprep.subr.mxu0 0.0
    %6094 = vmatpush1.msra.mxu0 %v6058
    %6095 = vmatprep.subr.mxu0 0.0
    %6096 = vmatpush1.msra.mxu0 %v6063
    %6097 = vmatprep.subr.mxu0 0.0
    %6098 = vmatpush1.msra.mxu0 %v6068
    %6099 = vmatprep.subr.mxu0 0.0
    %6100 = vmatpush1.msra.mxu0 %v6073
    %6101 = vmatprep.subr.mxu0 0.0
    %6102 = vmatpush1.msra.mxu0 %v6078
    %6103 = vmatprep.subr.mxu0 0.0
    %6104 = vmatpush1.msra.mxu0 0.0
    %6105 = vmatprep.subr.mxu0 0.0
    %6106 = vmatpush1.msra.mxu0 0.0
    %6107 = vmatprep.subr.mxu0 0.0
    %6108 = vmatpush1.msra.mxu0 0.0
    %6109 = vmatprep.subr.mxu0 0.0
    %6110 = vmatpush1.msra.mxu0 0.0
    %6111 = vmatprep.subr.mxu0 0.0
    %6112 = vmatpush1.msra.mxu0 0.0
    %6113 = vmatprep.subr.mxu0 0.0
    %6114 = vmatpush1.msra.mxu0 0.0
    %6115 = vmatprep.subr.mxu0 0.0
    %6116 = vmatpush1.msra.mxu0 0.0
    %6117 = vmatprep.subr.mxu0 0.0
    %6118 = vmatpush1.msra.mxu0 0.0
    %6119 = vmatprep.subr.mxu0 0.0
    %6120 = vmatpush1.msra.mxu0 0.0
    %6121 = vmatprep.subr.mxu0 0.0
    %6122 = vmatpush1.msra.mxu0 0.0
    %6123 = vmatprep.subr.mxu0 0.0
    %6124 = vmatpush1.msra.mxu0 0.0
    %6125 = vmatprep.subr.mxu0 0.0
    %6126 = vmatpush1.msra.mxu0 0.0
    %6127 = vmatprep.subr.mxu0 0.0
    %6128 = vmatpush1.msra.mxu0 0.0
    %6129 = vmatprep.subr.mxu0 0.0
    %6130 = vmatpush1.msra.mxu0 0.0
    %6131 = vmatprep.subr.mxu0 0.0
    %6132 = vmatpush1.msra.mxu0 0.0
    %6133 = vmatprep.subr.mxu0 0.0
    %6134 = vmatpush1.msra.mxu0 0.0
    %6135 = vmatprep.subr.mxu0 0.0
    %6136 = vmatpush1.msra.mxu0 0.0
    %6137 = vmatprep.subr.mxu0 0.0
    %6138 = vmatpush1.msra.mxu0 0.0
    %6139 = vmatprep.subr.mxu0 0.0
    %6140 = vmatpush1.msra.mxu0 0.0
    %6141 = vmatprep.subr.mxu0 0.0
    %6142 = vmatpush1.msra.mxu0 0.0
    %6143 = vmatprep.subr.mxu0 0.0
    %6144 = vmatpush1.msra.mxu0 0.0
    %6145 = vmatprep.subr.mxu0 0.0
    %6146 = vmatpush1.msra.mxu0 0.0
    %6147 = vmatprep.subr.mxu0 0.0
    %6148 = vmatpush1.msra.mxu0 0.0
    %6149 = vmatprep.subr.mxu0 0.0
    %6150 = vmatpush1.msra.mxu0 0.0
    %6151 = vmatprep.mubr.f32.mxu0 0.0
    %6152 = vmatmul.mubr.f32.gmra.mrb[0].mxu0 %v2231
    %v6153 = vpop.f32.mrb[0].mxu0
    %v6154 = vadd.f32 %v6085, %v6153
    %v6155 = vpop.f32.mrb[0].mxu0
    %6156 = vmatprep.mubr.f32.mxu0 0.0
    %6157 = vmatmul.mubr.f32.gmra.mrb[0].mxu0 %v2234
    %v6158 = vpop.f32.mrb[0].mxu0
    %v6159 = vadd.f32 %v6085, %v6158
    %v6160 = vpop.f32.mrb[0].mxu0
    %6161 = vmatprep.mubr.f32.mxu0 0.0
    %6162 = vmatmul.mubr.f32.gmra.mrb[0].mxu0 %v2237
    %v6163 = vpop.f32.mrb[0].mxu0
    %v6164 = vadd.f32 %v6085, %v6163
    %v6165 = vpop.f32.mrb[0].mxu0
    %6166 = vmatprep.mubr.f32.mxu0 0.0
    %6167 = vmatmul.mubr.f32.gmra.mrb[0].mxu0 %v2240
    %v6168 = vpop.f32.mrb[0].mxu0
    %v6169 = vadd.f32 %v6085, %v6168
    %v6170 = vpop.f32.mrb[0].mxu0
    %6171 = vmatprep.mubr.f32.mxu0 0.0
    %6172 = vmatmul.mubr.f32.gmra.mrb[0].mxu0 %v2243
    %v6173 = vpop.f32.mrb[0].mxu0
    %v6174 = vadd.f32 %v6085, %v6173
    %v6175 = vpop.f32.mrb[0].mxu0
    %6176 = vmatprep.mubr.f32.mxu0 0.0
    %6177 = vmatmul.mubr.f32.gmra.mrb[0].mxu0 %v2246
    %v6178 = vpop.f32.mrb[0].mxu0
    %v6179 = vadd.f32 %v6085, %v6178
    %v6180 = vpop.f32.mrb[0].mxu0
    %6181 = vmatprep.mubr.f32.mxu0 0.0
    %6182 = vmatmul.mubr.f32.gmra.mrb[0].mxu0 %v2249
    %v6183 = vpop.f32.mrb[0].mxu0
    %v6184 = vadd.f32 %v6085, %v6183
    %v6185 = vpop.f32.mrb[0].mxu0
    %6186 = vmatprep.mubr.f32.mxu0 0.0
    %6187 = vmatmul.mubr.f32.gmra.mrb[0].mxu0 %v2252
    %v6188 = vpop.f32.mrb[0].mxu0
    %v6189 = vadd.f32 %v6085, %v6188
    %v6190 = vpop.f32.mrb[0].mxu0
    %6191 = vdwg.mxu0
    %v6192 = vmax.f32 %v6154, 0.0
    %v6193 = vmax.f32 %v6159, 0.0
    %v6194 = vmax.f32 %v6164, 0.0
    %v6195 = vmax.f32 %v6169, 0.0
    %v6196 = vmax.f32 %v6174, 0.0
    %v6197 = vmax.f32 %v6179, 0.0
    %v6198 = vmax.f32 %v6184, 0.0
    %v6199 = vmax.f32 %v6189, 0.0
    %v6201 = vlaneseq
    %v6202 = vshrl.u32 %v6201, 7
    %v6203 = vsub.s32 0, %v6202
    %v6204 = vrot.slane %v5935, %v6203
    %v6207 = vsel %vm755, %v6192, 0
    %v6210 = vsel %vm755, %v6193, 0
    %v6213 = vsel %vm755, %v6194, 0
    %v6216 = vsel %vm755, %v6195, 0
    %v6219 = vsel %vm755, %v6196, 0
    %v6222 = vsel %vm755, %v6197, 0
    %v6225 = vsel %vm755, %v6198, 0
    %v6228 = vsel %vm755, %v6199, 0
    %6230 = vmatprep.subr.mxu0 0.0
    %6231 = vmatpush1.msra.mxu0 %v5927
    %6232 = vmatprep.subr.mxu0 0.0
    %6233 = vmatpush1.msra.mxu0 %v5928
    %6234 = vmatprep.subr.mxu0 0.0
    %6235 = vmatpush1.msra.mxu0 %v5929
    %6236 = vmatprep.subr.mxu0 0.0
    %6237 = vmatpush1.msra.mxu0 %v5930
    %6238 = vmatprep.subr.mxu0 0.0
    %6239 = vmatpush1.msra.mxu0 %v5931
    %6240 = vmatprep.subr.mxu0 0.0
    %6241 = vmatpush1.msra.mxu0 %v5932
    %6242 = vmatprep.subr.mxu0 0.0
    %6243 = vmatpush1.msra.mxu0 %v5933
    %6244 = vmatprep.subr.mxu0 0.0
    %6245 = vmatpush1.msra.mxu0 %v5934
    %6246 = vmatprep.subr.mxu0 0.0
    %6247 = vmatpush1.msra.mxu0 0.0
    %6248 = vmatprep.subr.mxu0 0.0
    %6249 = vmatpush1.msra.mxu0 0.0
    %6250 = vmatprep.subr.mxu0 0.0
    %6251 = vmatpush1.msra.mxu0 0.0
    %6252 = vmatprep.subr.mxu0 0.0
    %6253 = vmatpush1.msra.mxu0 0.0
    %6254 = vmatprep.subr.mxu0 0.0
    %6255 = vmatpush1.msra.mxu0 0.0
    %6256 = vmatprep.subr.mxu0 0.0
    %6257 = vmatpush1.msra.mxu0 0.0
    %6258 = vmatprep.subr.mxu0 0.0
    %6259 = vmatpush1.msra.mxu0 0.0
    %6260 = vmatprep.subr.mxu0 0.0
    %6261 = vmatpush1.msra.mxu0 0.0
    %6262 = vmatprep.subr.mxu0 0.0
    %6263 = vmatpush1.msra.mxu0 0.0
    %6264 = vmatprep.subr.mxu0 0.0
    %6265 = vmatpush1.msra.mxu0 0.0
    %6266 = vmatprep.subr.mxu0 0.0
    %6267 = vmatpush1.msra.mxu0 0.0
    %6268 = vmatprep.subr.mxu0 0.0
    %6269 = vmatpush1.msra.mxu0 0.0
    %6270 = vmatprep.subr.mxu0 0.0
    %6271 = vmatpush1.msra.mxu0 0.0
    %6272 = vmatprep.subr.mxu0 0.0
    %6273 = vmatpush1.msra.mxu0 0.0
    %6274 = vmatprep.subr.mxu0 0.0
    %6275 = vmatpush1.msra.mxu0 0.0
    %6276 = vmatprep.subr.mxu0 0.0
    %6277 = vmatpush1.msra.mxu0 0.0
    %6278 = vmatprep.subr.mxu0 0.0
    %6279 = vmatpush1.msra.mxu0 0.0
    %6280 = vmatprep.subr.mxu0 0.0
    %6281 = vmatpush1.msra.mxu0 0.0
    %6282 = vmatprep.subr.mxu0 0.0
    %6283 = vmatpush1.msra.mxu0 0.0
    %6284 = vmatprep.subr.mxu0 0.0
    %6285 = vmatpush1.msra.mxu0 0.0
    %6286 = vmatprep.subr.mxu0 0.0
    %6287 = vmatpush1.msra.mxu0 0.0
    %6288 = vmatprep.subr.mxu0 0.0
    %6289 = vmatpush1.msra.mxu0 0.0
    %6290 = vmatprep.subr.mxu0 0.0
    %6291 = vmatpush1.msra.mxu0 0.0
    %6292 = vmatprep.subr.mxu0 0.0
    %6293 = vmatpush1.msra.mxu0 0.0
    %6294 = vmatprep.mubr.f32.mxu0 0.0
    %6295 = vmatmul.mubr.f32.gmra.mrb[0].mxu0 %v6207
    %v6296 = vpop.f32.mrb[0].mxu0
    %v6297 = vadd.f32 %v6204, %v6296
    %v6298 = vpop.f32.mrb[0].mxu0
    %6299 = vmatprep.mubr.f32.mxu0 0.0
    %6300 = vmatmul.mubr.f32.gmra.mrb[0].mxu0 %v6210
    %v6301 = vpop.f32.mrb[0].mxu0
    %v6302 = vadd.f32 %v6204, %v6301
    %v6303 = vpop.f32.mrb[0].mxu0
    %6304 = vmatprep.mubr.f32.mxu0 0.0
    %6305 = vmatmul.mubr.f32.gmra.mrb[0].mxu0 %v6213
    %v6306 = vpop.f32.mrb[0].mxu0
    %v6307 = vadd.f32 %v6204, %v6306
    %v6308 = vpop.f32.mrb[0].mxu0
    %6309 = vmatprep.mubr.f32.mxu0 0.0
    %6310 = vmatmul.mubr.f32.gmra.mrb[0].mxu0 %v6216
    %v6311 = vpop.f32.mrb[0].mxu0
    %v6312 = vadd.f32 %v6204, %v6311
    %v6313 = vpop.f32.mrb[0].mxu0
    %6314 = vmatprep.mubr.f32.mxu0 0.0
    %6315 = vmatmul.mubr.f32.gmra.mrb[0].mxu0 %v6219
    %v6316 = vpop.f32.mrb[0].mxu0
    %v6317 = vadd.f32 %v6204, %v6316
    %v6318 = vpop.f32.mrb[0].mxu0
    %6319 = vmatprep.mubr.f32.mxu0 0.0
    %6320 = vmatmul.mubr.f32.gmra.mrb[0].mxu0 %v6222
    %v6321 = vpop.f32.mrb[0].mxu0
    %v6322 = vadd.f32 %v6204, %v6321
    %v6323 = vpop.f32.mrb[0].mxu0
    %6324 = vmatprep.mubr.f32.mxu0 0.0
    %6325 = vmatmul.mubr.f32.gmra.mrb[0].mxu0 %v6225
    %v6326 = vpop.f32.mrb[0].mxu0
    %v6327 = vadd.f32 %v6204, %v6326
    %v6328 = vpop.f32.mrb[0].mxu0
    %6329 = vmatprep.mubr.f32.mxu0 0.0
    %6330 = vmatmul.mubr.f32.gmra.mrb[0].mxu0 %v6228
    %v6331 = vpop.f32.mrb[0].mxu0
    %v6332 = vadd.f32 %v6204, %v6331
    %v6333 = vpop.f32.mrb[0].mxu0
    %6334 = vdwg.mxu0
    %v6335 = vmax.f32 %v6297, 0.0
    %v6336 = vmax.f32 %v6302, 0.0
    %v6337 = vmax.f32 %v6307, 0.0
    %v6338 = vmax.f32 %v6312, 0.0
    %v6339 = vmax.f32 %v6317, 0.0
    %v6340 = vmax.f32 %v6322, 0.0
    %v6341 = vmax.f32 %v6327, 0.0
    %v6342 = vmax.f32 %v6332, 0.0
    %v6343 = vmax.f32 %v6335, %v6339
    %v6344 = vmax.f32 %v6336, %v6340
    %v6345 = vmax.f32 %v6337, %v6341
    %v6346 = vmax.f32 %v6338, %v6342
    %v6347 = vmax.f32 %v6343, %v6344
    %v6348 = vmax.f32 %v6345, %v6346
    %v6349 = vmax.f32 %v6347, %v6348
    %v6350 = vrot.slane %v6349, 4
    %v6351 = vmax.f32 %v6349, %v6350
    %v6352 = vrot.slane %v6351, 2
    %v6353 = vmax.f32 %v6351, %v6352
    %v6354 = vrot.slane %v6353, 1
    %v6355 = vmax.f32 %v6353, %v6354
    %6356 = vst [vmem:[#allocation37] sm:$0x1] %v6355
    %v6357 = vld [vmem:[%s5860] sm:$0xff]
    %v6358 = vld [vmem:[%s5860 + $0x8] sm:$0xff]
    %v6359 = vld [vmem:[%s5860 + $0x10] sm:$0xff]
    %v6360 = vld [vmem:[%s5860 + $0x18] sm:$0xff]
    %v6361 = vld [vmem:[%s5860 + $0x20] sm:$0xff]
    %v6362 = vld [vmem:[%s5860 + $0x28] sm:$0xff]
    %v6363 = vld [vmem:[%s5860 + $0x30] sm:$0xff]
    %v6364 = vld [vmem:[%s5860 + $0x38] sm:$0xff]
    %v6365 = vld [vmem:[#allocation31] sm:$0xff]
    %v6366 = vld [vmem:[#allocation31 + $0x8] sm:$0xff]
    %v6367 = vld [vmem:[#allocation31 + $0x10] sm:$0xff]
    %v6368 = vld [vmem:[#allocation31 + $0x18] sm:$0xff]
    %v6369 = vld [vmem:[#allocation31 + $0x20] sm:$0xff]
    %v6370 = vld [vmem:[#allocation31 + $0x28] sm:$0xff]
    %v6371 = vld [vmem:[#allocation31 + $0x30] sm:$0xff]
    %v6372 = vld [vmem:[#allocation31 + $0x38] sm:$0xff]
    %v6374 = vsel %vm755, %v6357, 0
    %v6377 = vsel %vm755, %v6358, 0
    %v6380 = vsel %vm755, %v6359, 0
    %v6383 = vsel %vm755, %v6360, 0
    %v6386 = vsel %vm755, %v6361, 0
    %v6389 = vsel %vm755, %v6362, 0
    %v6392 = vsel %vm755, %v6363, 0
    %v6395 = vsel %vm755, %v6364, 0
    %6397 = vmatprep.subr.mxu0 0.0
    %6398 = vmatpush1.msra.mxu0 %v6365
    %6399 = vmatprep.subr.mxu0 0.0
    %6400 = vmatpush1.msra.mxu0 %v6366
    %6401 = vmatprep.subr.mxu0 0.0
    %6402 = vmatpush1.msra.mxu0 %v6367
    %6403 = vmatprep.subr.mxu0 0.0
    %6404 = vmatpush1.msra.mxu0 %v6368
    %6405 = vmatprep.subr.mxu0 0.0
    %6406 = vmatpush1.msra.mxu0 %v6369
    %6407 = vmatprep.subr.mxu0 0.0
    %6408 = vmatpush1.msra.mxu0 %v6370
    %6409 = vmatprep.subr.mxu0 0.0
    %6410 = vmatpush1.msra.mxu0 %v6371
    %6411 = vmatprep.subr.mxu0 0.0
    %6412 = vmatpush1.msra.mxu0 %v6372
    %6413 = vmatprep.subr.mxu0 0.0
    %6414 = vmatpush1.msra.mxu0 0.0
    %6415 = vmatprep.subr.mxu0 0.0
    %6416 = vmatpush1.msra.mxu0 0.0
    %6417 = vmatprep.subr.mxu0 0.0
    %6418 = vmatpush1.msra.mxu0 0.0
    %6419 = vmatprep.subr.mxu0 0.0
    %6420 = vmatpush1.msra.mxu0 0.0
    %6421 = vmatprep.subr.mxu0 0.0
    %6422 = vmatpush1.msra.mxu0 0.0
    %6423 = vmatprep.subr.mxu0 0.0
    %6424 = vmatpush1.msra.mxu0 0.0
    %6425 = vmatprep.subr.mxu0 0.0
    %6426 = vmatpush1.msra.mxu0 0.0
    %6427 = vmatprep.subr.mxu0 0.0
    %6428 = vmatpush1.msra.mxu0 0.0
    %6429 = vmatprep.subr.mxu0 0.0
    %6430 = vmatpush1.msra.mxu0 0.0
    %6431 = vmatprep.subr.mxu0 0.0
    %6432 = vmatpush1.msra.mxu0 0.0
    %6433 = vmatprep.subr.mxu0 0.0
    %6434 = vmatpush1.msra.mxu0 0.0
    %6435 = vmatprep.subr.mxu0 0.0
    %6436 = vmatpush1.msra.mxu0 0.0
    %6437 = vmatprep.subr.mxu0 0.0
    %6438 = vmatpush1.msra.mxu0 0.0
    %6439 = vmatprep.subr.mxu0 0.0
    %6440 = vmatpush1.msra.mxu0 0.0
    %6441 = vmatprep.subr.mxu0 0.0
    %6442 = vmatpush1.msra.mxu0 0.0
    %6443 = vmatprep.subr.mxu0 0.0
    %6444 = vmatpush1.msra.mxu0 0.0
    %6445 = vmatprep.subr.mxu0 0.0
    %6446 = vmatpush1.msra.mxu0 0.0
    %6447 = vmatprep.subr.mxu0 0.0
    %6448 = vmatpush1.msra.mxu0 0.0
    %6449 = vmatprep.subr.mxu0 0.0
    %6450 = vmatpush1.msra.mxu0 0.0
    %6451 = vmatprep.subr.mxu0 0.0
    %6452 = vmatpush1.msra.mxu0 0.0
    %6453 = vmatprep.subr.mxu0 0.0
    %6454 = vmatpush1.msra.mxu0 0.0
    %6455 = vmatprep.subr.mxu0 0.0
    %6456 = vmatpush1.msra.mxu0 0.0
    %6457 = vmatprep.subr.mxu0 0.0
    %6458 = vmatpush1.msra.mxu0 0.0
    %6459 = vmatprep.subr.mxu0 0.0
    %6460 = vmatpush1.msra.mxu0 0.0
    %6461 = vmatprep.mubr.f32.mxu0 0.0
    %6462 = vmatmul.mubr.f32.gmra.mrb[0].mxu0 %v6374
    %v6463 = vpop.f32.mrb[0].mxu0
    %v6464 = vadd.f32 0.0, %v6463
    %v6465 = vpop.f32.mrb[0].mxu0
    %6466 = vmatprep.mubr.f32.mxu0 0.0
    %6467 = vmatmul.mubr.f32.gmra.mrb[0].mxu0 %v6377
    %v6468 = vpop.f32.mrb[0].mxu0
    %v6469 = vadd.f32 0.0, %v6468
    %v6470 = vpop.f32.mrb[0].mxu0
    %6471 = vmatprep.mubr.f32.mxu0 0.0
    %6472 = vmatmul.mubr.f32.gmra.mrb[0].mxu0 %v6380
    %v6473 = vpop.f32.mrb[0].mxu0
    %v6474 = vadd.f32 0.0, %v6473
    %v6475 = vpop.f32.mrb[0].mxu0
    %6476 = vmatprep.mubr.f32.mxu0 0.0
    %6477 = vmatmul.mubr.f32.gmra.mrb[0].mxu0 %v6383
    %v6478 = vpop.f32.mrb[0].mxu0
    %v6479 = vadd.f32 0.0, %v6478
    %v6480 = vpop.f32.mrb[0].mxu0
    %6481 = vmatprep.mubr.f32.mxu0 0.0
    %6482 = vmatmul.mubr.f32.gmra.mrb[0].mxu0 %v6386
    %v6483 = vpop.f32.mrb[0].mxu0
    %v6484 = vadd.f32 0.0, %v6483
    %v6485 = vpop.f32.mrb[0].mxu0
    %6486 = vmatprep.mubr.f32.mxu0 0.0
    %6487 = vmatmul.mubr.f32.gmra.mrb[0].mxu0 %v6389
    %v6488 = vpop.f32.mrb[0].mxu0
    %v6489 = vadd.f32 0.0, %v6488
    %v6490 = vpop.f32.mrb[0].mxu0
    %6491 = vmatprep.mubr.f32.mxu0 0.0
    %6492 = vmatmul.mubr.f32.gmra.mrb[0].mxu0 %v6392
    %v6493 = vpop.f32.mrb[0].mxu0
    %v6494 = vadd.f32 0.0, %v6493
    %v6495 = vpop.f32.mrb[0].mxu0
    %6496 = vmatprep.mubr.f32.mxu0 0.0
    %6497 = vmatmul.mubr.f32.gmra.mrb[0].mxu0 %v6395
    %v6498 = vpop.f32.mrb[0].mxu0
    %v6499 = vadd.f32 0.0, %v6498
    %v6500 = vpop.f32.mrb[0].mxu0
    %6501 = vdwg.mxu0
    %6502 = vmatprep.subr.mxu0 0.0
    %6503 = vmatpush1.msra.mxu0 %v6464
    %6504 = vmatprep.subr.mxu0 0.0
    %6505 = vmatpush1.msra.mxu0 %v6469
    %6506 = vmatprep.subr.mxu0 0.0
    %6507 = vmatpush1.msra.mxu0 %v6474
    %6508 = vmatprep.subr.mxu0 0.0
    %6509 = vmatpush1.msra.mxu0 %v6479
    %6510 = vmatprep.subr.mxu0 0.0
    %6511 = vmatpush1.msra.mxu0 %v6484
    %6512 = vmatprep.subr.mxu0 0.0
    %6513 = vmatpush1.msra.mxu0 %v6489
    %6514 = vmatprep.subr.mxu0 0.0
    %6515 = vmatpush1.msra.mxu0 %v6494
    %6516 = vmatprep.subr.mxu0 0.0
    %6517 = vmatpush1.msra.mxu0 %v6499
    %6518 = vmatprep.subr.mxu0 0.0
    %6519 = vmatpush1.msra.mxu0 0.0
    %6520 = vmatprep.subr.mxu0 0.0
    %6521 = vmatpush1.msra.mxu0 0.0
    %6522 = vmatprep.subr.mxu0 0.0
    %6523 = vmatpush1.msra.mxu0 0.0
    %6524 = vmatprep.subr.mxu0 0.0
    %6525 = vmatpush1.msra.mxu0 0.0
    %6526 = vmatprep.subr.mxu0 0.0
    %6527 = vmatpush1.msra.mxu0 0.0
    %6528 = vmatprep.subr.mxu0 0.0
    %6529 = vmatpush1.msra.mxu0 0.0
    %6530 = vmatprep.subr.mxu0 0.0
    %6531 = vmatpush1.msra.mxu0 0.0
    %6532 = vmatprep.subr.mxu0 0.0
    %6533 = vmatpush1.msra.mxu0 0.0
    %6534 = vmatprep.subr.mxu0 0.0
    %6535 = vmatpush1.msra.mxu0 0.0
    %6536 = vmatprep.subr.mxu0 0.0
    %6537 = vmatpush1.msra.mxu0 0.0
    %6538 = vmatprep.subr.mxu0 0.0
    %6539 = vmatpush1.msra.mxu0 0.0
    %6540 = vmatprep.subr.mxu0 0.0
    %6541 = vmatpush1.msra.mxu0 0.0
    %6542 = vmatprep.subr.mxu0 0.0
    %6543 = vmatpush1.msra.mxu0 0.0
    %6544 = vmatprep.subr.mxu0 0.0
    %6545 = vmatpush1.msra.mxu0 0.0
    %6546 = vmatprep.subr.mxu0 0.0
    %6547 = vmatpush1.msra.mxu0 0.0
    %6548 = vmatprep.subr.mxu0 0.0
    %6549 = vmatpush1.msra.mxu0 0.0
    %6550 = vmatprep.subr.mxu0 0.0
    %6551 = vmatpush1.msra.mxu0 0.0
    %6552 = vmatprep.subr.mxu0 0.0
    %6553 = vmatpush1.msra.mxu0 0.0
    %6554 = vmatprep.subr.mxu0 0.0
    %6555 = vmatpush1.msra.mxu0 0.0
    %6556 = vmatprep.subr.mxu0 0.0
    %6557 = vmatpush1.msra.mxu0 0.0
    %6558 = vmatprep.subr.mxu0 0.0
    %6559 = vmatpush1.msra.mxu0 0.0
    %6560 = vmatprep.subr.mxu0 0.0
    %6561 = vmatpush1.msra.mxu0 0.0
    %6562 = vmatprep.subr.mxu0 0.0
    %6563 = vmatpush1.msra.mxu0 0.0
    %6564 = vmatprep.subr.mxu0 0.0
    %6565 = vmatpush1.msra.mxu0 0.0
    %6566 = vmatprep.mubr.f32.mxu0 0.0
    %6567 = vmatmul.mubr.f32.gmra.mrb[0].mxu0 %v2255
    %v6568 = vpop.f32.mrb[0].mxu0
    %v6569 = vadd.f32 %v6085, %v6568
    %v6570 = vpop.f32.mrb[0].mxu0
    %6571 = vmatprep.mubr.f32.mxu0 0.0
    %6572 = vmatmul.mubr.f32.gmra.mrb[0].mxu0 %v2258
    %v6573 = vpop.f32.mrb[0].mxu0
    %v6574 = vadd.f32 %v6085, %v6573
    %v6575 = vpop.f32.mrb[0].mxu0
    %6576 = vmatprep.mubr.f32.mxu0 0.0
    %6577 = vmatmul.mubr.f32.gmra.mrb[0].mxu0 %v2261
    %v6578 = vpop.f32.mrb[0].mxu0
    %v6579 = vadd.f32 %v6085, %v6578
    %v6580 = vpop.f32.mrb[0].mxu0
    %6581 = vmatprep.mubr.f32.mxu0 0.0
    %6582 = vmatmul.mubr.f32.gmra.mrb[0].mxu0 %v2264
    %v6583 = vpop.f32.mrb[0].mxu0
    %v6584 = vadd.f32 %v6085, %v6583
    %v6585 = vpop.f32.mrb[0].mxu0
    %6586 = vmatprep.mubr.f32.mxu0 0.0
    %6587 = vmatmul.mubr.f32.gmra.mrb[0].mxu0 %v2267
    %v6588 = vpop.f32.mrb[0].mxu0
    %v6589 = vadd.f32 %v6085, %v6588
    %v6590 = vpop.f32.mrb[0].mxu0
    %6591 = vmatprep.mubr.f32.mxu0 0.0
    %6592 = vmatmul.mubr.f32.gmra.mrb[0].mxu0 %v2270
    %v6593 = vpop.f32.mrb[0].mxu0
    %v6594 = vadd.f32 %v6085, %v6593
    %v6595 = vpop.f32.mrb[0].mxu0
    %6596 = vmatprep.mubr.f32.mxu0 0.0
    %6597 = vmatmul.mubr.f32.gmra.mrb[0].mxu0 %v2273
    %v6598 = vpop.f32.mrb[0].mxu0
    %v6599 = vadd.f32 %v6085, %v6598
    %v6600 = vpop.f32.mrb[0].mxu0
    %6601 = vmatprep.mubr.f32.mxu0 0.0
    %6602 = vmatmul.mubr.f32.gmra.mrb[0].mxu0 %v2276
    %v6603 = vpop.f32.mrb[0].mxu0
    %v6604 = vadd.f32 %v6085, %v6603
    %v6605 = vpop.f32.mrb[0].mxu0
    %6606 = vdwg.mxu0
    %v6607 = vmax.f32 %v6569, 0.0
    %v6608 = vmax.f32 %v6574, 0.0
    %v6609 = vmax.f32 %v6579, 0.0
    %v6610 = vmax.f32 %v6584, 0.0
    %v6611 = vmax.f32 %v6589, 0.0
    %v6612 = vmax.f32 %v6594, 0.0
    %v6613 = vmax.f32 %v6599, 0.0
    %v6614 = vmax.f32 %v6604, 0.0
    %v6616 = vsel %vm755, %v6607, 0
    %v6619 = vsel %vm755, %v6608, 0
    %v6622 = vsel %vm755, %v6609, 0
    %v6625 = vsel %vm755, %v6610, 0
    %v6628 = vsel %vm755, %v6611, 0
    %v6631 = vsel %vm755, %v6612, 0
    %v6634 = vsel %vm755, %v6613, 0
    %v6637 = vsel %vm755, %v6614, 0
    %6639 = vmatprep.subr.mxu0 0.0
    %6640 = vmatpush1.msra.mxu0 %v5927
    %6641 = vmatprep.subr.mxu0 0.0
    %6642 = vmatpush1.msra.mxu0 %v5928
    %6643 = vmatprep.subr.mxu0 0.0
    %6644 = vmatpush1.msra.mxu0 %v5929
    %6645 = vmatprep.subr.mxu0 0.0
    %6646 = vmatpush1.msra.mxu0 %v5930
    %6647 = vmatprep.subr.mxu0 0.0
    %6648 = vmatpush1.msra.mxu0 %v5931
    %6649 = vmatprep.subr.mxu0 0.0
    %6650 = vmatpush1.msra.mxu0 %v5932
    %6651 = vmatprep.subr.mxu0 0.0
    %6652 = vmatpush1.msra.mxu0 %v5933
    %6653 = vmatprep.subr.mxu0 0.0
    %6654 = vmatpush1.msra.mxu0 %v5934
    %6655 = vmatprep.subr.mxu0 0.0
    %6656 = vmatpush1.msra.mxu0 0.0
    %6657 = vmatprep.subr.mxu0 0.0
    %6658 = vmatpush1.msra.mxu0 0.0
    %6659 = vmatprep.subr.mxu0 0.0
    %6660 = vmatpush1.msra.mxu0 0.0
    %6661 = vmatprep.subr.mxu0 0.0
    %6662 = vmatpush1.msra.mxu0 0.0
    %6663 = vmatprep.subr.mxu0 0.0
    %6664 = vmatpush1.msra.mxu0 0.0
    %6665 = vmatprep.subr.mxu0 0.0
    %6666 = vmatpush1.msra.mxu0 0.0
    %6667 = vmatprep.subr.mxu0 0.0
    %6668 = vmatpush1.msra.mxu0 0.0
    %6669 = vmatprep.subr.mxu0 0.0
    %6670 = vmatpush1.msra.mxu0 0.0
    %6671 = vmatprep.subr.mxu0 0.0
    %6672 = vmatpush1.msra.mxu0 0.0
    %6673 = vmatprep.subr.mxu0 0.0
    %6674 = vmatpush1.msra.mxu0 0.0
    %6675 = vmatprep.subr.mxu0 0.0
    %6676 = vmatpush1.msra.mxu0 0.0
    %6677 = vmatprep.subr.mxu0 0.0
    %6678 = vmatpush1.msra.mxu0 0.0
    %6679 = vmatprep.subr.mxu0 0.0
    %6680 = vmatpush1.msra.mxu0 0.0
    %6681 = vmatprep.subr.mxu0 0.0
    %6682 = vmatpush1.msra.mxu0 0.0
    %6683 = vmatprep.subr.mxu0 0.0
    %6684 = vmatpush1.msra.mxu0 0.0
    %6685 = vmatprep.subr.mxu0 0.0
    %6686 = vmatpush1.msra.mxu0 0.0
    %6687 = vmatprep.subr.mxu0 0.0
    %6688 = vmatpush1.msra.mxu0 0.0
    %6689 = vmatprep.subr.mxu0 0.0
    %6690 = vmatpush1.msra.mxu0 0.0
    %6691 = vmatprep.subr.mxu0 0.0
    %6692 = vmatpush1.msra.mxu0 0.0
    %6693 = vmatprep.subr.mxu0 0.0
    %6694 = vmatpush1.msra.mxu0 0.0
    %6695 = vmatprep.subr.mxu0 0.0
    %6696 = vmatpush1.msra.mxu0 0.0
    %6697 = vmatprep.subr.mxu0 0.0
    %6698 = vmatpush1.msra.mxu0 0.0
    %6699 = vmatprep.subr.mxu0 0.0
    %6700 = vmatpush1.msra.mxu0 0.0
    %6701 = vmatprep.subr.mxu0 0.0
    %6702 = vmatpush1.msra.mxu0 0.0
    %6703 = vmatprep.mubr.f32.mxu0 0.0
    %6704 = vmatmul.mubr.f32.gmra.mrb[0].mxu0 %v6616
    %v6705 = vpop.f32.mrb[0].mxu0
    %v6706 = vadd.f32 %v6204, %v6705
    %v6707 = vpop.f32.mrb[0].mxu0
    %6708 = vmatprep.mubr.f32.mxu0 0.0
    %6709 = vmatmul.mubr.f32.gmra.mrb[0].mxu0 %v6619
    %v6710 = vpop.f32.mrb[0].mxu0
    %v6711 = vadd.f32 %v6204, %v6710
    %v6712 = vpop.f32.mrb[0].mxu0
    %6713 = vmatprep.mubr.f32.mxu0 0.0
    %6714 = vmatmul.mubr.f32.gmra.mrb[0].mxu0 %v6622
    %v6715 = vpop.f32.mrb[0].mxu0
    %v6716 = vadd.f32 %v6204, %v6715
    %v6717 = vpop.f32.mrb[0].mxu0
    %6718 = vmatprep.mubr.f32.mxu0 0.0
    %6719 = vmatmul.mubr.f32.gmra.mrb[0].mxu0 %v6625
    %v6720 = vpop.f32.mrb[0].mxu0
    %v6721 = vadd.f32 %v6204, %v6720
    %v6722 = vpop.f32.mrb[0].mxu0
    %6723 = vmatprep.mubr.f32.mxu0 0.0
    %6724 = vmatmul.mubr.f32.gmra.mrb[0].mxu0 %v6628
    %v6725 = vpop.f32.mrb[0].mxu0
    %v6726 = vadd.f32 %v6204, %v6725
    %v6727 = vpop.f32.mrb[0].mxu0
    %6728 = vmatprep.mubr.f32.mxu0 0.0
    %6729 = vmatmul.mubr.f32.gmra.mrb[0].mxu0 %v6631
    %v6730 = vpop.f32.mrb[0].mxu0
    %v6731 = vadd.f32 %v6204, %v6730
    %v6732 = vpop.f32.mrb[0].mxu0
    %6733 = vmatprep.mubr.f32.mxu0 0.0
    %6734 = vmatmul.mubr.f32.gmra.mrb[0].mxu0 %v6634
    %v6735 = vpop.f32.mrb[0].mxu0
    %v6736 = vadd.f32 %v6204, %v6735
    %v6737 = vpop.f32.mrb[0].mxu0
    %6738 = vmatprep.mubr.f32.mxu0 0.0
    %6739 = vmatmul.mubr.f32.gmra.mrb[0].mxu0 %v6637
    %v6740 = vpop.f32.mrb[0].mxu0
    %v6741 = vadd.f32 %v6204, %v6740
    %v6742 = vpop.f32.mrb[0].mxu0
    %6743 = vdwg.mxu0
    %v6744 = vmax.f32 %v6706, 0.0
    %v6745 = vmax.f32 %v6711, 0.0
    %v6746 = vmax.f32 %v6716, 0.0
    %v6747 = vmax.f32 %v6721, 0.0
    %v6748 = vmax.f32 %v6726, 0.0
    %v6749 = vmax.f32 %v6731, 0.0
    %v6750 = vmax.f32 %v6736, 0.0
    %v6751 = vmax.f32 %v6741, 0.0
    %v6752 = vmax.f32 %v6744, %v6748
    %v6753 = vmax.f32 %v6745, %v6749
    %v6754 = vmax.f32 %v6746, %v6750
    %v6755 = vmax.f32 %v6747, %v6751
    %v6756 = vmax.f32 %v6752, %v6753
    %v6757 = vmax.f32 %v6754, %v6755
    %v6758 = vmax.f32 %v6756, %v6757
    %v6759 = vrot.slane %v6758, 4
    %v6760 = vmax.f32 %v6758, %v6759
    %v6761 = vrot.slane %v6760, 2
    %v6762 = vmax.f32 %v6760, %v6761
    %v6763 = vrot.slane %v6762, 1
    %v6764 = vmax.f32 %v6762, %v6763
    %6765 = vst [vmem:[#allocation37 + $0x1] sm:$0x1] %v6764
    // Predicated region
    $region178: #{base_pointnet_forward.1} parent=1 // pred_check
      _
    $region179: #{base_pointnet_forward.1} parent=1 // pred_check_branch
      %6767 = sbr.rel (0) target = $region181
    $region180: #{base_pointnet_forward.1} parent=1 // pred_region
      %s6769 = ssub.s32 32, 32
      %6770 = vsyncadd [#allocation7], %s6769
      %s6772 = sshll.u32 [#allocation37], 4
      %s6773 = int_to_ptr.vmem [resolvable:$true] %s6772
      %6775 = dma.vmem_to_hbm [thread:$0]  %s6773, 32, %s24, [#allocation7]
    $region181: #{base_pointnet_forward.1} parent=1 // pred_fallthru
      _
    // Predicated region
    $region182: #{base_pointnet_forward.1} parent=1 // pred_check
      _
    $region183: #{base_pointnet_forward.1} parent=1 // pred_check_branch
      %6777 = sbr.rel (0) target = $region185
    $region184: #{base_pointnet_forward.1} parent=1 // pred_region
      %s6779 = ssub.s32 2048, 2048
      %6780 = vsyncadd [#allocation39], %s6779
      %s6781 = sshll.u32 [#allocation38], 4
      %s6782 = int_to_ptr.vmem [resolvable:$true] %s6781
      %6787 = dma.vmem_to_hbm [thread:$0]  %s6782, 2048, %s25, [#allocation39], 128, 128, 8
    $region185: #{base_pointnet_forward.1} parent=1 // pred_fallthru
      _
    // Predicated region
    $region186: #{base_pointnet_forward.1} parent=1 // pred_check
      _
    $region187: #{base_pointnet_forward.1} parent=1 // pred_check_branch
      %6789 = sbr.rel (0) target = $region189
    $region188: #{base_pointnet_forward.1} parent=1 // pred_region
      %6790 = dma.done [#allocation7], 32
    $region189: #{base_pointnet_forward.1} parent=1 // pred_fallthru
      _
    // Predicated region
    $region190: #{base_pointnet_forward.1} parent=1 // pred_check
      _
    $region191: #{base_pointnet_forward.1} parent=1 // pred_check_branch
      %6792 = sbr.rel (0) target = $region193
    $region192: #{base_pointnet_forward.1} parent=1 // pred_region
      %6793 = dma.done [#allocation39], 2048
    $region193: #{base_pointnet_forward.1} parent=1 // pred_fallthru
      _
    %6794 = vsyncpa [#allocation6], 1
    %6795 = vsyncpa [#allocation9], 1
    %6796 = vsyncpa [#allocation12], 1
    %6797 = vsyncpa [#allocation15], 1
    %6798 = vsyncpa [#allocation18], 1
    %6799 = vsyncpa [#allocation21], 1
    %6800 = vsyncpa [#allocation24], 1
    %6801 = vsyncpa [#allocation27], 1
    %6802 = vsyncpa [#allocation30], 1
    %6803 = vsyncpa [#allocation33], 1
    %6804 = vsyncpa [#allocation36], 1
    %6805 = vsyncpa [#allocation7], 1
    %6806 = vsyncpa [#allocation39], 1
  %6807 = vsyncmov [#allocation4]
  %s6808 = vpop.sfrf %6807
  %p6809 = scmp.eq.s32.totalorder %s6808, 0
  %p6810 = pneg %p6809
  %6812 = shalt.err (%p6810)
  %s6813 = scalar_lea.sflag [#allocation4], 1
  %6814 = vsyncmov %s6813
  %s6815 = vpop.sfrf %6814
  %p6816 = scmp.eq.s32.totalorder %s6815, 0
  %p6817 = pneg %p6816
  %6819 = shalt.err (%p6817)

</llo_original>
